<compile_context>
chip_gen: v6e
topology: v6e:2x2x1
jax: 0.10.0
libtpu: 0.0.40
codegen_flags: <defaults>
</compile_context>

<pallas_src>
import functools

import jax
import jax.numpy as jnp
from jax import lax
from jax.experimental import pallas as pl
from jax.experimental.pallas import tpu as pltpu


def _round_up(x, m):
    return (x + m - 1) // m * m


# ---------------------------------------------------------------------------
# Pallas kernel: fused (patches @ weight) + bias + activation
#   a_ref: (tm, Kp) bf16, w_ref: (Kp, Np) bf16, b_ref: (1, Np) f32
# ---------------------------------------------------------------------------
def _matmul_bias_act_kernel(a_ref, w_ref, b_ref, o_ref, *, act):
    acc = jnp.dot(a_ref[...], w_ref[...], preferred_element_type=jnp.float32)
    acc = acc + b_ref[...]
    if act == "relu":
        acc = jnp.maximum(acc, 0.0)
    elif act == "sigmoid":
        acc = jax.nn.sigmoid(acc)
    o_ref[...] = acc.astype(o_ref.dtype)


def matmul_bias_act(a, w_p, b_p, n_out, act, out_dtype):
    """act(a @ W + b).  a: (M, K) bf16; w_p: (Kp, Np) bf16 pre-padded
    (Kp = round_up(K,16), Np = round_up(N,128), padded rows/cols zero);
    b_p: (1, Np) f32 pre-padded.  Returns (M, n_out) out_dtype."""
    M, K = a.shape
    Kp, Np = w_p.shape
    Mp = _round_up(M, 8)
    # Pad only when strictly needed.  With weights pre-padded to K%16==0,
    # only the first layer (K = 27 -> 32) ever pads, and every M here is
    # already a multiple of 8 -> no per-call HBM round trip for the rest.
    if (Mp, Kp) != (M, K):
        a = jnp.pad(a, ((0, Mp - M), (0, Kp - K)))

    # One grid step per layer: per-step pipeline overhead (~0.35 us) is a
    # measurable fraction of these tiny matmuls, and everything fits VMEM
    # comfortably (largest A block: 2048 x 144 bf16 ~= 0.6 MiB, weights
    # <= 0.8 MiB).  Only the biggest layer (d3, M = 2048) is split in two so
    # a v7x megacore can shard it with dimension_semantics=("parallel",);
    # on single-TC v5e/v6e that costs one extra ~0.35 us step on one layer.
    grid_m = 2 if (Mp >= 1024 and (Mp // 2) % 8 == 0) else 1
    tm = Mp // grid_m
    # NOTE: weight/bias blocks have constant index_maps; with grid_m == 1 they
    # are DMA'd exactly once, so pipeline_mode=pl.Buffered(1) would only save
    # a few hundred KiB of VMEM and is intentionally omitted.

    out = pl.pallas_call(
        functools.partial(_matmul_bias_act_kernel, act=act),
        out_shape=jax.ShapeDtypeStruct((Mp, Np), out_dtype),
        grid_spec=pltpu.PrefetchScalarGridSpec(
            num_scalar_prefetch=0,
            grid=(grid_m,),
            in_specs=[
                pl.BlockSpec((tm, Kp), lambda i: (i, 0)),
                pl.BlockSpec((Kp, Np), lambda i: (0, 0)),
                pl.BlockSpec((1, Np), lambda i: (0, 0)),
            ],
            out_specs=pl.BlockSpec((tm, Np), lambda i: (i, 0)),
        ),
        compiler_params=pltpu.CompilerParams(
            dimension_semantics=(
                ("parallel",) if grid_m > 1 else ("arbitrary",))),
    )(a, w_p, b_p)
    return out[:M, :n_out]


# ---------------------------------------------------------------------------
# Layer table (static architecture metadata) and one-time weight packing
# ---------------------------------------------------------------------------
_LAYERS = (
    # name, kind,   k, stride, pad, out_pad, cout, act
    ("e1", "conv",  3, 2, 1, 0, 16, "relu"),
    ("e2", "conv",  3, 2, 1, 0, 32, "relu"),
    ("e3", "conv",  7, 1, 0, 0, 64, "none"),
    ("d1", "convT", 7, 1, 0, 0, 32, "relu"),
    ("d2", "convT", 3, 2, 1, 1, 16, "relu"),
    ("d3", "convT", 3, 2, 1, 1, 3,  "sigmoid"),
)


def prepare_params(params):
    """One-time: transpose/flip weights into (Cin*kh*kw, Cout) matmul form,
    pad K up to a multiple of 16 (bf16 sublane tile) and N up to a multiple
    of 128 (lane-dense output), cast to bf16.  Keeps all repack/pad/cast glue
    out of the jitted forward."""
    prepped = {}
    for name, kind, k, *_rest in _LAYERS:
        w = params[name + "_w"]
        b = params[name + "_b"]
        if kind == "conv":
            w_fwd = w                                         # (Cout,Cin,kh,kw)
        else:
            # ConvTranspose2d weight (Cin,Cout,kh,kw) -> equivalent forward
            # conv weight: swap in/out channels and flip spatially.
            w_fwd = jnp.transpose(w[:, :, ::-1, ::-1], (1, 0, 2, 3))
        cout, cin = w_fwd.shape[0], w_fwd.shape[1]
        # Row ordering (Cin, kh, kw) matches lax.conv_general_dilated_patches
        # (channel-major, then row-major filter position).
        w_mat = jnp.transpose(w_fwd, (1, 2, 3, 0)).reshape(cin * k * k, cout)
        K, N = w_mat.shape
        Kp, Np = _round_up(K, 16), _round_up(N, 128)
        w_p = jnp.zeros((Kp, Np), jnp.bfloat16).at[:K, :N].set(
            w_mat.astype(jnp.bfloat16))
        b_p = jnp.zeros((1, Np), jnp.float32).at[0, :N].set(
            b.astype(jnp.float32))
        prepped[name] = (w_p, b_p)
    return prepped


# ---------------------------------------------------------------------------
# Forward pass (NHWC bf16 activations internally)
# ---------------------------------------------------------------------------
def _extract_patches(x, k, stride, pad_lo, pad_hi, lhs_dil):
    """x: (N,H,W,C) -> (N,Ho,Wo, C*k*k), feature = c*k*k + i*k + j."""
    return lax.conv_general_dilated_patches(
        x, (k, k), (stride, stride),
        padding=[(pad_lo, pad_hi), (pad_lo, pad_hi)],
        lhs_dilation=(lhs_dil, lhs_dil),
        dimension_numbers=("NHWC", "HWIO", "NHWC"))


def _layer(x, w_p, b_p, kind, k, stride, pad, out_pad, cout, act, out_dtype):
    if kind == "conv":
        patches = _extract_patches(x, k, stride, pad, pad, 1)
    else:
        # TODO(synk): stride-2 convT (d2/d3) makes ~75% of these patch columns
        # structurally zero; a sub-pixel (4x stride-1) decomposition would cut
        # K and patch bytes ~4x, but is secondary at batch=2.
        p = k - 1 - pad
        patches = _extract_patches(x, k, 1, p, p + out_pad, stride)
    n, ho, wo, kk = patches.shape
    a = patches.reshape(n * ho * wo, kk)
    out = matmul_bias_act(a, w_p, b_p, cout, act, out_dtype)
    return out.reshape(n, ho, wo, cout)


@jax.jit
def autoencoder_forward(prepped, x_nchw):
    # Cast once to bf16; activations stay bf16 kernel-to-kernel (halves
    # intermediate HBM writeback, removes per-layer standalone cast ops).
    x = jnp.transpose(x_nchw, (0, 2, 3, 1)).astype(jnp.bfloat16)   # NCHW->NHWC
    # TODO(synk): all packed weights (~1.5 MiB bf16) plus every activation fit
    # VMEM on v5e/v6e/v7x, so fusing e3+d1 (or each encoder/decoder half) into
    # one pallas_call would remove launches + HBM round trips; kept one call
    # per layer since fusion needs in-kernel im2col / window scatter-adds.
    last = len(_LAYERS) - 1
    for idx, (name, kind, k, stride, pad, out_pad, cout, act) in enumerate(
            _LAYERS):
        w_p, b_p = prepped[name]
        out_dtype = jnp.float32 if idx == last else jnp.bfloat16
        x = _layer(x, w_p, b_p, kind, k, stride, pad, out_pad, cout, act,
                   out_dtype)
    return jnp.transpose(x, (0, 3, 1, 2))                          # NHWC->NCHW


# ---------------------------------------------------------------------------
# Pure-JAX (lax, f32) reference for correctness check of the Pallas path
# ---------------------------------------------------------------------------
def _ref_act(y, act):
    if act == "relu":
        return jnp.maximum(y, 0.0)
    if act == "sigmoid":
        return jax.nn.sigmoid(y)
    return y


def _ref_conv(x, weight, bias, stride, pad, act):
    kern = jnp.transpose(weight, (2, 3, 1, 0))                # HWIO
    y = lax.conv_general_dilated(
        x, kern, (stride, stride), [(pad, pad), (pad, pad)],
        dimension_numbers=("NHWC", "HWIO", "NHWC"))
    return _ref_act(y + bias, act)


def _ref_convT(x, weight, bias, stride, pad, out_pad, act):
    k = weight.shape[2]
    w_conv = jnp.transpose(weight[:, :, ::-1, ::-1], (1, 0, 2, 3))
    kern = jnp.transpose(w_conv, (2, 3, 1, 0))                # HWIO
    y = lax.conv_general_dilated(
        x, kern, (1, 1),
        [(k - 1 - pad, k - 1 - pad + out_pad)] * 2,
        lhs_dilation=(stride, stride),
        dimension_numbers=("NHWC", "HWIO", "NHWC"))
    return _ref_act(y + bias, act)


def autoencoder_reference(params, x_nchw):
    x = jnp.transpose(x_nchw, (0, 2, 3, 1))
    x = _ref_conv(x, params["e1_w"], params["e1_b"], 2, 1, "relu")
    x = _ref_conv(x, params["e2_w"], params["e2_b"], 2, 1, "relu")
    x = _ref_conv(x, params["e3_w"], params["e3_b"], 1, 0, "none")
    x = _ref_convT(x, params["d1_w"], params["d1_b"], 1, 0, 0, "relu")
    x = _ref_convT(x, params["d2_w"], params["d2_b"], 2, 1, 1, "relu")
    x = _ref_convT(x, params["d3_w"], params["d3_b"], 2, 1, 1, "sigmoid")
    return jnp.transpose(x, (0, 3, 1, 2))


# ---------------------------------------------------------------------------
# Deterministic parameter init (PyTorch module shapes)
# ---------------------------------------------------------------------------
def init_params(key):
    shapes = {
        "e1_w": (16, 3, 3, 3),   "e1_b": (16,),
        "e2_w": (32, 16, 3, 3),  "e2_b": (32,),
        "e3_w": (64, 32, 7, 7),  "e3_b": (64,),
        # ConvTranspose2d weights are (Cin, Cout, kh, kw) in PyTorch
        "d1_w": (64, 32, 7, 7),  "d1_b": (32,),
        "d2_w": (32, 16, 3, 3),  "d2_b": (16,),
        "d3_w": (16, 3, 3, 3),   "d3_b": (3,),
    }
    params = {}
    keys = jax.random.split(key, len(shapes))
    for k_, (name, shp) in zip(keys, sorted(shapes.items())):
        if name.endswith("_w"):
            fan_in = shp[1] * shp[2] * shp[3] if name.startswith("e") \
                else shp[0] * shp[2] * shp[3]
            params[name] = (jax.random.normal(k_, shp, jnp.float32)
                            / jnp.sqrt(float(fan_in)))
        else:
            params[name] = 0.01 * jax.random.normal(k_, shp, jnp.float32)
    return params


if __name__ == "__main__":
    key = jax.random.PRNGKey(0)
    pkey, xkey = jax.random.split(key)
    params = init_params(pkey)
    prepped = prepare_params(params)            # one-time weight repack/pad

    # CIFAR-like input (batch=2, 3 channels, 32x32) — NCHW like PyTorch.
    # NOTE: at batch=2 the matmuls are tiny (e3 has only 8 rows); larger
    # batches amortize launch/DMA overhead far better and still fit VMEM.
    x = jax.random.uniform(xkey, (2, 3, 32, 32), jnp.float32)

    out = jax.block_until_ready(autoencoder_forward(prepped, x))
    assert out.shape == (2, 3, 32, 32), out.shape

    ref = jax.block_until_ready(autoencoder_reference(params, x))
    # bf16 MXU operands + bf16 inter-layer activations (f32 accumulation)
    # vs f32 reference -> loose tolerance.  This check also guards the
    # load-bearing patch/weight row-ordering assumption.
    max_err = float(jnp.max(jnp.abs(out - ref)))
    assert jnp.allclose(out, ref, rtol=5e-2, atol=5e-2), max_err

    print("KERNEL_OK")
</pallas_src>

<mosaic_0001>
module attributes {stable_mosaic.version = 11 : i64} {
  func.func @_matmul_bias_act_kernel(%arg0: i32, %arg1: memref<512x32xbf16, #tpu.memory_space<vmem>>, %arg2: memref<32x128xbf16, #tpu.memory_space<vmem>>, %arg3: memref<1x128xf32, #tpu.memory_space<vmem>>, %arg4: memref<512x128xbf16, #tpu.memory_space<vmem>>) attributes {dimension_semantics = [#tpu.dimension_semantics<arbitrary>], iteration_bounds = array<i64: 1>, scalar_prefetch = 0 : i64, scratch_operands = 0 : i64, tpu.core_type = #tpu.core_type<tc>, window_params = [{transform_indices = @transform_0, window_bounds = array<i64: 512, 32>}, {pipeline_mode = #tpu.pipeline_mode<synchronous>, transform_indices = @transform_1, window_bounds = array<i64: 32, 128>}, {pipeline_mode = #tpu.pipeline_mode<synchronous>, transform_indices = @transform_2, window_bounds = array<i64: 1, 128>}, {transform_indices = @transform_3, window_bounds = array<i64: 512, 128>}]} {
    %c0 = arith.constant 0 : index
    %c0_0 = arith.constant 0 : index
    %0 = vector.load %arg1[%c0, %c0_0] : memref<512x32xbf16, #tpu.memory_space<vmem>>, vector<512x32xbf16>
    %c0_1 = arith.constant 0 : index
    %c0_2 = arith.constant 0 : index
    %1 = vector.load %arg2[%c0_1, %c0_2] : memref<32x128xbf16, #tpu.memory_space<vmem>>, vector<32x128xbf16>
    %cst = arith.constant dense<0.000000e+00> : vector<512x128xf32>
    %2 = tpu.matmul %0, %1, %cst {dimension_numbers = #tpu.dot_dimension_numbers<[1], [0], [0], [1], [0, 0, 1, 1], [], []>} : vector<512x32xbf16>, vector<32x128xbf16>, vector<512x128xf32> -> vector<512x128xf32>
    %c0_3 = arith.constant 0 : index
    %c0_4 = arith.constant 0 : index
    %3 = vector.load %arg3[%c0_3, %c0_4] : memref<1x128xf32, #tpu.memory_space<vmem>>, vector<1x128xf32>
    %4 = vector.broadcast %3 : vector<1x128xf32> to vector<512x128xf32>
    %5 = arith.addf %2, %4 : vector<512x128xf32>
    %cst_5 = arith.constant 0.000000e+00 : f32
    %6 = vector.broadcast %cst_5 : f32 to vector<512x128xf32>
    %7 = arith.maximumf %5, %6 : vector<512x128xf32>
    %8 = arith.truncf %7 : vector<512x128xf32> to vector<512x128xbf16>
    %c0_6 = arith.constant 0 : index
    %c0_7 = arith.constant 0 : index
    %9 = vector.load %arg4[%c0_6, %c0_7] : memref<512x128xbf16, #tpu.memory_space<vmem>>, vector<512x128xbf16>
    tpu.vector_store %arg4[%c0_6, %c0_7], %8 {strides = array<i32>} : memref<512x128xbf16, #tpu.memory_space<vmem>>, vector<512x128xbf16>,
    return
  }
  func.func @transform_0(%arg0: i32) -> (i32, i32) {
    %c0_i32 = arith.constant 0 : i32
    %c0_i32_0 = arith.constant 0 : i32
    return %arg0, %c0_i32 : i32, i32
  }
  func.func @transform_1(%arg0: i32) -> (i32, i32) {
    %c0_i32 = arith.constant 0 : i32
    %c0_i32_0 = arith.constant 0 : i32
    %c0_i32_1 = arith.constant 0 : i32
    return %c0_i32, %c0_i32_0 : i32, i32
  }
  func.func @transform_2(%arg0: i32) -> (i32, i32) {
    %c0_i32 = arith.constant 0 : i32
    %c0_i32_0 = arith.constant 0 : i32
    %c0_i32_1 = arith.constant 0 : i32
    return %c0_i32, %c0_i32_0 : i32, i32
  }
  func.func @transform_3(%arg0: i32) -> (i32, i32) {
    %c0_i32 = arith.constant 0 : i32
    %c0_i32_0 = arith.constant 0 : i32
    return %arg0, %c0_i32 : i32, i32
  }
}

module attributes {stable_mosaic.version = 11 : i64} {
  func.func @_matmul_bias_act_kernel(%arg0: i32, %arg1: memref<128x144xbf16, #tpu.memory_space<vmem>>, %arg2: memref<144x128xbf16, #tpu.memory_space<vmem>>, %arg3: memref<1x128xf32, #tpu.memory_space<vmem>>, %arg4: memref<128x128xbf16, #tpu.memory_space<vmem>>) attributes {dimension_semantics = [#tpu.dimension_semantics<arbitrary>], iteration_bounds = array<i64: 1>, scalar_prefetch = 0 : i64, scratch_operands = 0 : i64, tpu.core_type = #tpu.core_type<tc>, window_params = [{transform_indices = @transform_0, window_bounds = array<i64: 128, 144>}, {pipeline_mode = #tpu.pipeline_mode<synchronous>, transform_indices = @transform_1, window_bounds = array<i64: 144, 128>}, {pipeline_mode = #tpu.pipeline_mode<synchronous>, transform_indices = @transform_2, window_bounds = array<i64: 1, 128>}, {transform_indices = @transform_3, window_bounds = array<i64: 128, 128>}]} {
    %c0 = arith.constant 0 : index
    %c0_0 = arith.constant 0 : index
    %0 = vector.load %arg1[%c0, %c0_0] : memref<128x144xbf16, #tpu.memory_space<vmem>>, vector<128x144xbf16>
    %c0_1 = arith.constant 0 : index
    %c0_2 = arith.constant 0 : index
    %1 = vector.load %arg2[%c0_1, %c0_2] : memref<144x128xbf16, #tpu.memory_space<vmem>>, vector<144x128xbf16>
    %cst = arith.constant dense<0.000000e+00> : vector<128x128xf32>
    %2 = tpu.matmul %0, %1, %cst {dimension_numbers = #tpu.dot_dimension_numbers<[1], [0], [0], [1], [0, 0, 1, 1], [], []>} : vector<128x144xbf16>, vector<144x128xbf16>, vector<128x128xf32> -> vector<128x128xf32>
    %c0_3 = arith.constant 0 : index
    %c0_4 = arith.constant 0 : index
    %3 = vector.load %arg3[%c0_3, %c0_4] : memref<1x128xf32, #tpu.memory_space<vmem>>, vector<1x128xf32>
    %4 = vector.broadcast %3 : vector<1x128xf32> to vector<128x128xf32>
    %5 = arith.addf %2, %4 : vector<128x128xf32>
    %cst_5 = arith.constant 0.000000e+00 : f32
    %6 = vector.broadcast %cst_5 : f32 to vector<128x128xf32>
    %7 = arith.maximumf %5, %6 : vector<128x128xf32>
    %8 = arith.truncf %7 : vector<128x128xf32> to vector<128x128xbf16>
    %c0_6 = arith.constant 0 : index
    %c0_7 = arith.constant 0 : index
    %9 = vector.load %arg4[%c0_6, %c0_7] : memref<128x128xbf16, #tpu.memory_space<vmem>>, vector<128x128xbf16>
    tpu.vector_store %arg4[%c0_6, %c0_7], %8 {strides = array<i32>} : memref<128x128xbf16, #tpu.memory_space<vmem>>, vector<128x128xbf16>,
    return
  }
  func.func @transform_0(%arg0: i32) -> (i32, i32) {
    %c0_i32 = arith.constant 0 : i32
    %c0_i32_0 = arith.constant 0 : i32
    return %arg0, %c0_i32 : i32, i32
  }
  func.func @transform_1(%arg0: i32) -> (i32, i32) {
    %c0_i32 = arith.constant 0 : i32
    %c0_i32_0 = arith.constant 0 : i32
    %c0_i32_1 = arith.constant 0 : i32
    return %c0_i32, %c0_i32_0 : i32, i32
  }
  func.func @transform_2(%arg0: i32) -> (i32, i32) {
    %c0_i32 = arith.constant 0 : i32
    %c0_i32_0 = arith.constant 0 : i32
    %c0_i32_1 = arith.constant 0 : i32
    return %c0_i32, %c0_i32_0 : i32, i32
  }
  func.func @transform_3(%arg0: i32) -> (i32, i32) {
    %c0_i32 = arith.constant 0 : i32
    %c0_i32_0 = arith.constant 0 : i32
    return %arg0, %c0_i32 : i32, i32
  }
}

module attributes {stable_mosaic.version = 11 : i64} {
  func.func @_matmul_bias_act_kernel(%arg0: i32, %arg1: memref<8x1568xbf16, #tpu.memory_space<vmem>>, %arg2: memref<1568x128xbf16, #tpu.memory_space<vmem>>, %arg3: memref<1x128xf32, #tpu.memory_space<vmem>>, %arg4: memref<8x128xbf16, #tpu.memory_space<vmem>>) attributes {dimension_semantics = [#tpu.dimension_semantics<arbitrary>], iteration_bounds = array<i64: 1>, scalar_prefetch = 0 : i64, scratch_operands = 0 : i64, tpu.core_type = #tpu.core_type<tc>, window_params = [{transform_indices = @transform_0, window_bounds = array<i64: 8, 1568>}, {pipeline_mode = #tpu.pipeline_mode<synchronous>, transform_indices = @transform_1, window_bounds = array<i64: 1568, 128>}, {pipeline_mode = #tpu.pipeline_mode<synchronous>, transform_indices = @transform_2, window_bounds = array<i64: 1, 128>}, {transform_indices = @transform_3, window_bounds = array<i64: 8, 128>}]} {
    %c0 = arith.constant 0 : index
    %c0_0 = arith.constant 0 : index
    %0 = vector.load %arg1[%c0, %c0_0] : memref<8x1568xbf16, #tpu.memory_space<vmem>>, vector<8x1568xbf16>
    %c0_1 = arith.constant 0 : index
    %c0_2 = arith.constant 0 : index
    %1 = vector.load %arg2[%c0_1, %c0_2] : memref<1568x128xbf16, #tpu.memory_space<vmem>>, vector<1568x128xbf16>
    %cst = arith.constant dense<0.000000e+00> : vector<8x128xf32>
    %2 = tpu.matmul %0, %1, %cst {dimension_numbers = #tpu.dot_dimension_numbers<[1], [0], [0], [1], [0, 0, 1, 1], [], []>} : vector<8x1568xbf16>, vector<1568x128xbf16>, vector<8x128xf32> -> vector<8x128xf32>
    %c0_3 = arith.constant 0 : index
    %c0_4 = arith.constant 0 : index
    %3 = vector.load %arg3[%c0_3, %c0_4] : memref<1x128xf32, #tpu.memory_space<vmem>>, vector<1x128xf32>
    %4 = vector.broadcast %3 : vector<1x128xf32> to vector<8x128xf32>
    %5 = arith.addf %2, %4 : vector<8x128xf32>
    %6 = arith.truncf %5 : vector<8x128xf32> to vector<8x128xbf16>
    %c0_5 = arith.constant 0 : index
    %c0_6 = arith.constant 0 : index
    %7 = vector.load %arg4[%c0_5, %c0_6] : memref<8x128xbf16, #tpu.memory_space<vmem>>, vector<8x128xbf16>
    tpu.vector_store %arg4[%c0_5, %c0_6], %6 {strides = array<i32>} : memref<8x128xbf16, #tpu.memory_space<vmem>>, vector<8x128xbf16>,
    return
  }
  func.func @transform_0(%arg0: i32) -> (i32, i32) {
    %c0_i32 = arith.constant 0 : i32
    %c0_i32_0 = arith.constant 0 : i32
    return %arg0, %c0_i32 : i32, i32
  }
  func.func @transform_1(%arg0: i32) -> (i32, i32) {
    %c0_i32 = arith.constant 0 : i32
    %c0_i32_0 = arith.constant 0 : i32
    %c0_i32_1 = arith.constant 0 : i32
    return %c0_i32, %c0_i32_0 : i32, i32
  }
  func.func @transform_2(%arg0: i32) -> (i32, i32) {
    %c0_i32 = arith.constant 0 : i32
    %c0_i32_0 = arith.constant 0 : i32
    %c0_i32_1 = arith.constant 0 : i32
    return %c0_i32, %c0_i32_0 : i32, i32
  }
  func.func @transform_3(%arg0: i32) -> (i32, i32) {
    %c0_i32 = arith.constant 0 : i32
    %c0_i32_0 = arith.constant 0 : i32
    return %arg0, %c0_i32 : i32, i32
  }
}

module attributes {stable_mosaic.version = 11 : i64} {
  func.func @_matmul_bias_act_kernel(%arg0: i32, %arg1: memref<128x3136xbf16, #tpu.memory_space<vmem>>, %arg2: memref<3136x128xbf16, #tpu.memory_space<vmem>>, %arg3: memref<1x128xf32, #tpu.memory_space<vmem>>, %arg4: memref<128x128xbf16, #tpu.memory_space<vmem>>) attributes {dimension_semantics = [#tpu.dimension_semantics<arbitrary>], iteration_bounds = array<i64: 1>, scalar_prefetch = 0 : i64, scratch_operands = 0 : i64, tpu.core_type = #tpu.core_type<tc>, window_params = [{transform_indices = @transform_0, window_bounds = array<i64: 128, 3136>}, {pipeline_mode = #tpu.pipeline_mode<synchronous>, transform_indices = @transform_1, window_bounds = array<i64: 3136, 128>}, {pipeline_mode = #tpu.pipeline_mode<synchronous>, transform_indices = @transform_2, window_bounds = array<i64: 1, 128>}, {transform_indices = @transform_3, window_bounds = array<i64: 128, 128>}]} {
    %c0 = arith.constant 0 : index
    %c0_0 = arith.constant 0 : index
    %0 = vector.load %arg1[%c0, %c0_0] : memref<128x3136xbf16, #tpu.memory_space<vmem>>, vector<128x3136xbf16>
    %c0_1 = arith.constant 0 : index
    %c0_2 = arith.constant 0 : index
    %1 = vector.load %arg2[%c0_1, %c0_2] : memref<3136x128xbf16, #tpu.memory_space<vmem>>, vector<3136x128xbf16>
    %cst = arith.constant dense<0.000000e+00> : vector<128x128xf32>
    %2 = tpu.matmul %0, %1, %cst {dimension_numbers = #tpu.dot_dimension_numbers<[1], [0], [0], [1], [0, 0, 1, 1], [], []>} : vector<128x3136xbf16>, vector<3136x128xbf16>, vector<128x128xf32> -> vector<128x128xf32>
    %c0_3 = arith.constant 0 : index
    %c0_4 = arith.constant 0 : index
    %3 = vector.load %arg3[%c0_3, %c0_4] : memref<1x128xf32, #tpu.memory_space<vmem>>, vector<1x128xf32>
    %4 = vector.broadcast %3 : vector<1x128xf32> to vector<128x128xf32>
    %5 = arith.addf %2, %4 : vector<128x128xf32>
    %cst_5 = arith.constant 0.000000e+00 : f32
    %6 = vector.broadcast %cst_5 : f32 to vector<128x128xf32>
    %7 = arith.maximumf %5, %6 : vector<128x128xf32>
    %8 = arith.truncf %7 : vector<128x128xf32> to vector<128x128xbf16>
    %c0_6 = arith.constant 0 : index
    %c0_7 = arith.constant 0 : index
    %9 = vector.load %arg4[%c0_6, %c0_7] : memref<128x128xbf16, #tpu.memory_space<vmem>>, vector<128x128xbf16>
    tpu.vector_store %arg4[%c0_6, %c0_7], %8 {strides = array<i32>} : memref<128x128xbf16, #tpu.memory_space<vmem>>, vector<128x128xbf16>,
    return
  }
  func.func @transform_0(%arg0: i32) -> (i32, i32) {
    %c0_i32 = arith.constant 0 : i32
    %c0_i32_0 = arith.constant 0 : i32
    return %arg0, %c0_i32 : i32, i32
  }
  func.func @transform_1(%arg0: i32) -> (i32, i32) {
    %c0_i32 = arith.constant 0 : i32
    %c0_i32_0 = arith.constant 0 : i32
    %c0_i32_1 = arith.constant 0 : i32
    return %c0_i32, %c0_i32_0 : i32, i32
  }
  func.func @transform_2(%arg0: i32) -> (i32, i32) {
    %c0_i32 = arith.constant 0 : i32
    %c0_i32_0 = arith.constant 0 : i32
    %c0_i32_1 = arith.constant 0 : i32
    return %c0_i32, %c0_i32_0 : i32, i32
  }
  func.func @transform_3(%arg0: i32) -> (i32, i32) {
    %c0_i32 = arith.constant 0 : i32
    %c0_i32_0 = arith.constant 0 : i32
    return %arg0, %c0_i32 : i32, i32
  }
}

module attributes {stable_mosaic.version = 11 : i64} {
  func.func @_matmul_bias_act_kernel(%arg0: i32, %arg1: memref<512x288xbf16, #tpu.memory_space<vmem>>, %arg2: memref<288x128xbf16, #tpu.memory_space<vmem>>, %arg3: memref<1x128xf32, #tpu.memory_space<vmem>>, %arg4: memref<512x128xbf16, #tpu.memory_space<vmem>>) attributes {dimension_semantics = [#tpu.dimension_semantics<arbitrary>], iteration_bounds = array<i64: 1>, scalar_prefetch = 0 : i64, scratch_operands = 0 : i64, tpu.core_type = #tpu.core_type<tc>, window_params = [{transform_indices = @transform_0, window_bounds = array<i64: 512, 288>}, {pipeline_mode = #tpu.pipeline_mode<synchronous>, transform_indices = @transform_1, window_bounds = array<i64: 288, 128>}, {pipeline_mode = #tpu.pipeline_mode<synchronous>, transform_indices = @transform_2, window_bounds = array<i64: 1, 128>}, {transform_indices = @transform_3, window_bounds = array<i64: 512, 128>}]} {
    %c0 = arith.constant 0 : index
    %c0_0 = arith.constant 0 : index
    %0 = vector.load %arg1[%c0, %c0_0] : memref<512x288xbf16, #tpu.memory_space<vmem>>, vector<512x288xbf16>
    %c0_1 = arith.constant 0 : index
    %c0_2 = arith.constant 0 : index
    %1 = vector.load %arg2[%c0_1, %c0_2] : memref<288x128xbf16, #tpu.memory_space<vmem>>, vector<288x128xbf16>
    %cst = arith.constant dense<0.000000e+00> : vector<512x128xf32>
    %2 = tpu.matmul %0, %1, %cst {dimension_numbers = #tpu.dot_dimension_numbers<[1], [0], [0], [1], [0, 0, 1, 1], [], []>} : vector<512x288xbf16>, vector<288x128xbf16>, vector<512x128xf32> -> vector<512x128xf32>
    %c0_3 = arith.constant 0 : index
    %c0_4 = arith.constant 0 : index
    %3 = vector.load %arg3[%c0_3, %c0_4] : memref<1x128xf32, #tpu.memory_space<vmem>>, vector<1x128xf32>
    %4 = vector.broadcast %3 : vector<1x128xf32> to vector<512x128xf32>
    %5 = arith.addf %2, %4 : vector<512x128xf32>
    %cst_5 = arith.constant 0.000000e+00 : f32
    %6 = vector.broadcast %cst_5 : f32 to vector<512x128xf32>
    %7 = arith.maximumf %5, %6 : vector<512x128xf32>
    %8 = arith.truncf %7 : vector<512x128xf32> to vector<512x128xbf16>
    %c0_6 = arith.constant 0 : index
    %c0_7 = arith.constant 0 : index
    %9 = vector.load %arg4[%c0_6, %c0_7] : memref<512x128xbf16, #tpu.memory_space<vmem>>, vector<512x128xbf16>
    tpu.vector_store %arg4[%c0_6, %c0_7], %8 {strides = array<i32>} : memref<512x128xbf16, #tpu.memory_space<vmem>>, vector<512x128xbf16>,
    return
  }
  func.func @transform_0(%arg0: i32) -> (i32, i32) {
    %c0_i32 = arith.constant 0 : i32
    %c0_i32_0 = arith.constant 0 : i32
    return %arg0, %c0_i32 : i32, i32
  }
  func.func @transform_1(%arg0: i32) -> (i32, i32) {
    %c0_i32 = arith.constant 0 : i32
    %c0_i32_0 = arith.constant 0 : i32
    %c0_i32_1 = arith.constant 0 : i32
    return %c0_i32, %c0_i32_0 : i32, i32
  }
  func.func @transform_2(%arg0: i32) -> (i32, i32) {
    %c0_i32 = arith.constant 0 : i32
    %c0_i32_0 = arith.constant 0 : i32
    %c0_i32_1 = arith.constant 0 : i32
    return %c0_i32, %c0_i32_0 : i32, i32
  }
  func.func @transform_3(%arg0: i32) -> (i32, i32) {
    %c0_i32 = arith.constant 0 : i32
    %c0_i32_0 = arith.constant 0 : i32
    return %arg0, %c0_i32 : i32, i32
  }
}

module attributes {stable_mosaic.version = 11 : i64} {
  func.func @_matmul_bias_act_kernel(%arg0: i32, %arg1: memref<1024x144xbf16, #tpu.memory_space<vmem>>, %arg2: memref<144x128xbf16, #tpu.memory_space<vmem>>, %arg3: memref<1x128xf32, #tpu.memory_space<vmem>>, %arg4: memref<1024x128xf32, #tpu.memory_space<vmem>>) attributes {dimension_semantics = [#tpu.dimension_semantics<parallel>], iteration_bounds = array<i64: 2>, scalar_prefetch = 0 : i64, scratch_operands = 0 : i64, tpu.core_type = #tpu.core_type<tc>, window_params = [{transform_indices = @transform_0, window_bounds = array<i64: 1024, 144>}, {pipeline_mode = #tpu.pipeline_mode<synchronous>, transform_indices = @transform_1, window_bounds = array<i64: 144, 128>}, {pipeline_mode = #tpu.pipeline_mode<synchronous>, transform_indices = @transform_2, window_bounds = array<i64: 1, 128>}, {transform_indices = @transform_3, window_bounds = array<i64: 1024, 128>}]} {
    %c0 = arith.constant 0 : index
    %c0_0 = arith.constant 0 : index
    %0 = vector.load %arg1[%c0, %c0_0] : memref<1024x144xbf16, #tpu.memory_space<vmem>>, vector<1024x144xbf16>
    %c0_1 = arith.constant 0 : index
    %c0_2 = arith.constant 0 : index
    %1 = vector.load %arg2[%c0_1, %c0_2] : memref<144x128xbf16, #tpu.memory_space<vmem>>, vector<144x128xbf16>
    %cst = arith.constant dense<0.000000e+00> : vector<1024x128xf32>
    %2 = tpu.matmul %0, %1, %cst {dimension_numbers = #tpu.dot_dimension_numbers<[1], [0], [0], [1], [0, 0, 1, 1], [], []>} : vector<1024x144xbf16>, vector<144x128xbf16>, vector<1024x128xf32> -> vector<1024x128xf32>
    %c0_3 = arith.constant 0 : index
    %c0_4 = arith.constant 0 : index
    %3 = vector.load %arg3[%c0_3, %c0_4] : memref<1x128xf32, #tpu.memory_space<vmem>>, vector<1x128xf32>
    %4 = vector.broadcast %3 : vector<1x128xf32> to vector<1024x128xf32>
    %5 = arith.addf %2, %4 : vector<1024x128xf32>
    %6 = arith.negf %5 : vector<1024x128xf32>
    %7 = math.exp %6 : vector<1024x128xf32>
    %cst_5 = arith.constant 1.000000e+00 : f32
    %8 = vector.broadcast %cst_5 : f32 to vector<1024x128xf32>
    %9 = arith.addf %8, %7 : vector<1024x128xf32>
    %10 = arith.divf %8, %9 : vector<1024x128xf32>
    %c0_6 = arith.constant 0 : index
    %c0_7 = arith.constant 0 : index
    %11 = vector.load %arg4[%c0_6, %c0_7] : memref<1024x128xf32, #tpu.memory_space<vmem>>, vector<1024x128xf32>
    tpu.vector_store %arg4[%c0_6, %c0_7], %10 {strides = array<i32>} : memref<1024x128xf32, #tpu.memory_space<vmem>>, vector<1024x128xf32>,
    return
  }
  func.func @transform_0(%arg0: i32) -> (i32, i32) {
    %c0_i32 = arith.constant 0 : i32
    %c0_i32_0 = arith.constant 0 : i32
    return %arg0, %c0_i32 : i32, i32
  }
  func.func @transform_1(%arg0: i32) -> (i32, i32) {
    %c0_i32 = arith.constant 0 : i32
    %c0_i32_0 = arith.constant 0 : i32
    %c0_i32_1 = arith.constant 0 : i32
    return %c0_i32, %c0_i32_0 : i32, i32
  }
  func.func @transform_2(%arg0: i32) -> (i32, i32) {
    %c0_i32 = arith.constant 0 : i32
    %c0_i32_0 = arith.constant 0 : i32
    %c0_i32_1 = arith.constant 0 : i32
    return %c0_i32, %c0_i32_0 : i32, i32
  }
  func.func @transform_3(%arg0: i32) -> (i32, i32) {
    %c0_i32 = arith.constant 0 : i32
    %c0_i32_0 = arith.constant 0 : i32
    return %arg0, %c0_i32 : i32, i32
  }
}

</mosaic_0001>

<llo_original>
// kernel: autoencoder_forward.6
$region0: #{autoencoder_forward.6}
  #allocation0 [shape = 'u32[]', space=smem, size = 0x4, offset = 0x4, fixed_abs, tag = 'smem constant byte address 0x4 - core index']
  #allocation1 [shape = 'u32[144,128]{1,0:T(1,128)}', space=vmem, size = 0x12000, scoped, tag = 'internal scratch']
  %s0 = inlined_call_operand.vmem [shape: bf16[512,32], index: 0, kind: input, shape index: {}]
  %s1 = inlined_call_operand.hbm [shape: bf16[32,128], index: 1, kind: input, shape index: {}]
  %s2 = inlined_call_operand.hbm [shape: f32[1,128], index: 2, kind: input, shape index: {}]
  %s3 = inlined_call_operand.vmem [shape: bf16[512,128], index: 3, kind: output, shape index: {}]
  %s4 = sld [smem:[#allocation0]]
  $region30: #{autoencoder_forward.6} parent=0
    _
  %s6 = ssub.s32 1, %s4
  %s7 = scalar_select 0, %s6, %s4
  $region1: #{autoencoder_forward.6} parent=0
    #allocation2 [shape = 'u8[8192]{0}', space=vmem, size = 0x2000, scoped, tag = 'input window, operand 1, single buffered']
    #allocation3 [shape = 's32[1]{0}', space=sflag, size = 0x4, scoped, tag = 'scoped memory for autoencoder_forward.6']
    #allocation4 [shape = 'u8[512]{0}', space=vmem, size = 0x400, scoped, tag = 'input window, operand 2, single buffered']
    #allocation5 [shape = 's32[1]{0}', space=sflag, size = 0x4, scoped, tag = 'scoped memory for autoencoder_forward.6']
    %8 = vsyncpa [#allocation3], 0
    %9 = vsyncpa [#allocation5], 0
    // Predicated region
    $region2: #{autoencoder_forward.6} parent=1 // pred_check
      _
    $region3: #{autoencoder_forward.6} parent=1 // pred_check_branch
      %11 = sbr.rel (0) target = $region5
    $region4: #{autoencoder_forward.6} parent=1 // pred_region
      _
    $region5: #{autoencoder_forward.6} parent=1 // pred_fallthru
      _
    // Predicated region
    $region6: #{autoencoder_forward.6} parent=1 // pred_check
      _
    $region7: #{autoencoder_forward.6} parent=1 // pred_check_branch
      %13 = sbr.rel (0) target = $region9
    $region8: #{autoencoder_forward.6} parent=1 // pred_region
      %s15 = ssub.s32 256, 256
      %16 = vsyncadd [#allocation3], %s15
      %s17 = sshll.u32 [#allocation2], 4
      %s18 = int_to_ptr.vmem [resolvable:$true] %s17
      %23 = dma.hbm_to_vmem [thread:$0]  %s1, 256, %s18, [#allocation3], 64, 64, 4
    $region9: #{autoencoder_forward.6} parent=1 // pred_fallthru
      _
    // Predicated region
    $region10: #{autoencoder_forward.6} parent=1 // pred_check
      _
    $region11: #{autoencoder_forward.6} parent=1 // pred_check_branch
      %25 = sbr.rel (0) target = $region13
    $region12: #{autoencoder_forward.6} parent=1 // pred_region
      %s27 = ssub.s32 16, 16
      %28 = vsyncadd [#allocation5], %s27
      %s30 = sshll.u32 [#allocation4], 4
      %s31 = int_to_ptr.vmem [resolvable:$true] %s30
      %33 = dma.hbm_to_vmem [thread:$0]  %s2, 16, %s31, [#allocation5]
    $region13: #{autoencoder_forward.6} parent=1 // pred_fallthru
      _
    // Predicated region
    $region14: #{autoencoder_forward.6} parent=1 // pred_check
      _
    $region15: #{autoencoder_forward.6} parent=1 // pred_check_branch
      %35 = sbr.rel (0) target = $region17
    $region16: #{autoencoder_forward.6} parent=1 // pred_region
      %36 = dma.done [#allocation3], 256
    $region17: #{autoencoder_forward.6} parent=1 // pred_fallthru
      _
    // Predicated region
    $region18: #{autoencoder_forward.6} parent=1 // pred_check
      _
    $region19: #{autoencoder_forward.6} parent=1 // pred_check_branch
      %38 = sbr.rel (0) target = $region21
    $region20: #{autoencoder_forward.6} parent=1 // pred_region
      %39 = dma.done [#allocation5], 16
    $region21: #{autoencoder_forward.6} parent=1 // pred_fallthru
      _
    %v41 = vld [vmem:[%s0] sm:$0xf]
    %v42 = vld [vmem:[%s0 + $0x4] sm:$0xf]
    %v43 = vld [vmem:[%s0 + $0x8] sm:$0xf]
    %v44 = vld [vmem:[%s0 + $0xc] sm:$0xf]
    %v45 = vld [vmem:[%s0 + $0x10] sm:$0xf]
    %v46 = vld [vmem:[%s0 + $0x14] sm:$0xf]
    %v47 = vld [vmem:[%s0 + $0x18] sm:$0xf]
    %v48 = vld [vmem:[%s0 + $0x1c] sm:$0xf]
    %v49 = vld [vmem:[%s0 + $0x20] sm:$0xf]
    %v50 = vld [vmem:[%s0 + $0x24] sm:$0xf]
    %v51 = vld [vmem:[%s0 + $0x28] sm:$0xf]
    %v52 = vld [vmem:[%s0 + $0x2c] sm:$0xf]
    %v53 = vld [vmem:[%s0 + $0x30] sm:$0xf]
    %v54 = vld [vmem:[%s0 + $0x34] sm:$0xf]
    %v55 = vld [vmem:[%s0 + $0x38] sm:$0xf]
    %v56 = vld [vmem:[%s0 + $0x3c] sm:$0xf]
    %v57 = vld [vmem:[%s0 + $0x40] sm:$0xf]
    %v58 = vld [vmem:[%s0 + $0x44] sm:$0xf]
    %v59 = vld [vmem:[%s0 + $0x48] sm:$0xf]
    %v60 = vld [vmem:[%s0 + $0x4c] sm:$0xf]
    %v61 = vld [vmem:[%s0 + $0x50] sm:$0xf]
    %v62 = vld [vmem:[%s0 + $0x54] sm:$0xf]
    %v63 = vld [vmem:[%s0 + $0x58] sm:$0xf]
    %v64 = vld [vmem:[%s0 + $0x5c] sm:$0xf]
    %v65 = vld [vmem:[%s0 + $0x60] sm:$0xf]
    %v66 = vld [vmem:[%s0 + $0x64] sm:$0xf]
    %v67 = vld [vmem:[%s0 + $0x68] sm:$0xf]
    %v68 = vld [vmem:[%s0 + $0x6c] sm:$0xf]
    %v69 = vld [vmem:[%s0 + $0x70] sm:$0xf]
    %v70 = vld [vmem:[%s0 + $0x74] sm:$0xf]
    %v71 = vld [vmem:[%s0 + $0x78] sm:$0xf]
    %v72 = vld [vmem:[%s0 + $0x7c] sm:$0xf]
    %v73 = vld [vmem:[%s0 + $0x80] sm:$0xf]
    %v74 = vld [vmem:[%s0 + $0x84] sm:$0xf]
    %v75 = vld [vmem:[%s0 + $0x88] sm:$0xf]
    %v76 = vld [vmem:[%s0 + $0x8c] sm:$0xf]
    %v77 = vld [vmem:[%s0 + $0x90] sm:$0xf]
    %v78 = vld [vmem:[%s0 + $0x94] sm:$0xf]
    %v79 = vld [vmem:[%s0 + $0x98] sm:$0xf]
    %v80 = vld [vmem:[%s0 + $0x9c] sm:$0xf]
    %v81 = vld [vmem:[%s0 + $0xa0] sm:$0xf]
    %v82 = vld [vmem:[%s0 + $0xa4] sm:$0xf]
    %v83 = vld [vmem:[%s0 + $0xa8] sm:$0xf]
    %v84 = vld [vmem:[%s0 + $0xac] sm:$0xf]
    %v85 = vld [vmem:[%s0 + $0xb0] sm:$0xf]
    %v86 = vld [vmem:[%s0 + $0xb4] sm:$0xf]
    %v87 = vld [vmem:[%s0 + $0xb8] sm:$0xf]
    %v88 = vld [vmem:[%s0 + $0xbc] sm:$0xf]
    %v89 = vld [vmem:[%s0 + $0xc0] sm:$0xf]
    %v90 = vld [vmem:[%s0 + $0xc4] sm:$0xf]
    %v91 = vld [vmem:[%s0 + $0xc8] sm:$0xf]
    %v92 = vld [vmem:[%s0 + $0xcc] sm:$0xf]
    %v93 = vld [vmem:[%s0 + $0xd0] sm:$0xf]
    %v94 = vld [vmem:[%s0 + $0xd4] sm:$0xf]
    %v95 = vld [vmem:[%s0 + $0xd8] sm:$0xf]
    %v96 = vld [vmem:[%s0 + $0xdc] sm:$0xf]
    %v97 = vld [vmem:[%s0 + $0xe0] sm:$0xf]
    %v98 = vld [vmem:[%s0 + $0xe4] sm:$0xf]
    %v99 = vld [vmem:[%s0 + $0xe8] sm:$0xf]
    %v100 = vld [vmem:[%s0 + $0xec] sm:$0xf]
    %v101 = vld [vmem:[%s0 + $0xf0] sm:$0xf]
    %v102 = vld [vmem:[%s0 + $0xf4] sm:$0xf]
    %v103 = vld [vmem:[%s0 + $0xf8] sm:$0xf]
    %v104 = vld [vmem:[%s0 + $0xfc] sm:$0xf]
    %v105 = vld [vmem:[#allocation2] sm:$0xf]
    %v106 = vld [vmem:[#allocation2 + $0x4] sm:$0xf]
    %v107 = vld [vmem:[#allocation2 + $0x8] sm:$0xf]
    %v108 = vld [vmem:[#allocation2 + $0xc] sm:$0xf]
    %v109 = vld [vmem:[#allocation4] sm:$0x1]
    %v111 = vlaneseq
    %v112 = vshrl.u32 %v111, 7
    %v113 = vsub.s32 0, %v112
    %v114 = vrot.slane %v109, %v113
    %v180 = vunpack.c.l.b16 %v41
    %v181 = vunpack.c.l.b16 %v42
    %v182 = vunpack.c.l.b16 %v43
    %v183 = vunpack.c.l.b16 %v44
    %v184 = vunpack.c.l.b16 %v45
    %v185 = vunpack.c.l.b16 %v46
    %v186 = vunpack.c.l.b16 %v47
    %v187 = vunpack.c.l.b16 %v48
    %v188 = vunpack.c.l.b16 %v49
    %v189 = vunpack.c.l.b16 %v50
    %v190 = vunpack.c.l.b16 %v51
    %v191 = vunpack.c.l.b16 %v52
    %v192 = vunpack.c.l.b16 %v53
    %v193 = vunpack.c.l.b16 %v54
    %v194 = vunpack.c.l.b16 %v55
    %v195 = vunpack.c.l.b16 %v56
    %v196 = vunpack.c.l.b16 %v57
    %v197 = vunpack.c.l.b16 %v58
    %v198 = vunpack.c.l.b16 %v59
    %v199 = vunpack.c.l.b16 %v60
    %v200 = vunpack.c.l.b16 %v61
    %v201 = vunpack.c.l.b16 %v62
    %v202 = vunpack.c.l.b16 %v63
    %v203 = vunpack.c.l.b16 %v64
    %v204 = vunpack.c.l.b16 %v65
    %v205 = vunpack.c.l.b16 %v66
    %v206 = vunpack.c.l.b16 %v67
    %v207 = vunpack.c.l.b16 %v68
    %v208 = vunpack.c.l.b16 %v69
    %v209 = vunpack.c.l.b16 %v70
    %v210 = vunpack.c.l.b16 %v71
    %v211 = vunpack.c.l.b16 %v72
    %v212 = vunpack.c.l.b16 %v73
    %v213 = vunpack.c.l.b16 %v74
    %v214 = vunpack.c.l.b16 %v75
    %v215 = vunpack.c.l.b16 %v76
    %v216 = vunpack.c.l.b16 %v77
    %v217 = vunpack.c.l.b16 %v78
    %v218 = vunpack.c.l.b16 %v79
    %v219 = vunpack.c.l.b16 %v80
    %v220 = vunpack.c.l.b16 %v81
    %v221 = vunpack.c.l.b16 %v82
    %v222 = vunpack.c.l.b16 %v83
    %v223 = vunpack.c.l.b16 %v84
    %v224 = vunpack.c.l.b16 %v85
    %v225 = vunpack.c.l.b16 %v86
    %v226 = vunpack.c.l.b16 %v87
    %v227 = vunpack.c.l.b16 %v88
    %v228 = vunpack.c.l.b16 %v89
    %v229 = vunpack.c.l.b16 %v90
    %v230 = vunpack.c.l.b16 %v91
    %v231 = vunpack.c.l.b16 %v92
    %v232 = vunpack.c.l.b16 %v93
    %v233 = vunpack.c.l.b16 %v94
    %v234 = vunpack.c.l.b16 %v95
    %v235 = vunpack.c.l.b16 %v96
    %v236 = vunpack.c.l.b16 %v97
    %v237 = vunpack.c.l.b16 %v98
    %v238 = vunpack.c.l.b16 %v99
    %v239 = vunpack.c.l.b16 %v100
    %v240 = vunpack.c.l.b16 %v101
    %v241 = vunpack.c.l.b16 %v102
    %v242 = vunpack.c.l.b16 %v103
    %v243 = vunpack.c.l.b16 %v104
    %v244 = vpack.c.b16 %v181, %v180
    %v245 = vpack.c.b16 %v183, %v182
    %v246 = vpack.c.b16 %v185, %v184
    %v247 = vpack.c.b16 %v187, %v186
    %v248 = vpack.c.b16 %v189, %v188
    %v249 = vpack.c.b16 %v191, %v190
    %v250 = vpack.c.b16 %v193, %v192
    %v251 = vpack.c.b16 %v195, %v194
    %v252 = vpack.c.b16 %v197, %v196
    %v253 = vpack.c.b16 %v199, %v198
    %v254 = vpack.c.b16 %v201, %v200
    %v255 = vpack.c.b16 %v203, %v202
    %v256 = vpack.c.b16 %v205, %v204
    %v257 = vpack.c.b16 %v207, %v206
    %v258 = vpack.c.b16 %v209, %v208
    %v259 = vpack.c.b16 %v211, %v210
    %v260 = vpack.c.b16 %v213, %v212
    %v261 = vpack.c.b16 %v215, %v214
    %v262 = vpack.c.b16 %v217, %v216
    %v263 = vpack.c.b16 %v219, %v218
    %v264 = vpack.c.b16 %v221, %v220
    %v265 = vpack.c.b16 %v223, %v222
    %v266 = vpack.c.b16 %v225, %v224
    %v267 = vpack.c.b16 %v227, %v226
    %v268 = vpack.c.b16 %v229, %v228
    %v269 = vpack.c.b16 %v231, %v230
    %v270 = vpack.c.b16 %v233, %v232
    %v271 = vpack.c.b16 %v235, %v234
    %v272 = vpack.c.b16 %v237, %v236
    %v273 = vpack.c.b16 %v239, %v238
    %v274 = vpack.c.b16 %v241, %v240
    %v275 = vpack.c.b16 %v243, %v242
    %v280 = vunpack.c.l.b16 %v105
    %v281 = vunpack.c.l.b16 %v106
    %v282 = vunpack.c.l.b16 %v107
    %v283 = vunpack.c.l.b16 %v108
    %v284 = vpack.c.b16 %v281, %v280
    %v285 = vpack.c.b16 %v283, %v282
    %vm288 = vcmask 261120
    %v290 = vsel %vm288, %v244, 0
    %v293 = vsel %vm288, %v245, 0
    %v296 = vsel %vm288, %v246, 0
    %v299 = vsel %vm288, %v247, 0
    %v302 = vsel %vm288, %v248, 0
    %v305 = vsel %vm288, %v249, 0
    %v308 = vsel %vm288, %v250, 0
    %v311 = vsel %vm288, %v251, 0
    %v314 = vsel %vm288, %v252, 0
    %v317 = vsel %vm288, %v253, 0
    %v320 = vsel %vm288, %v254, 0
    %v323 = vsel %vm288, %v255, 0
    %v326 = vsel %vm288, %v256, 0
    %v329 = vsel %vm288, %v257, 0
    %v332 = vsel %vm288, %v258, 0
    %v335 = vsel %vm288, %v259, 0
    %v338 = vsel %vm288, %v260, 0
    %v341 = vsel %vm288, %v261, 0
    %v344 = vsel %vm288, %v262, 0
    %v347 = vsel %vm288, %v263, 0
    %v350 = vsel %vm288, %v264, 0
    %v353 = vsel %vm288, %v265, 0
    %v356 = vsel %vm288, %v266, 0
    %v359 = vsel %vm288, %v267, 0
    %v362 = vsel %vm288, %v268, 0
    %v365 = vsel %vm288, %v269, 0
    %v368 = vsel %vm288, %v270, 0
    %v371 = vsel %vm288, %v271, 0
    %v374 = vsel %vm288, %v272, 0
    %v377 = vsel %vm288, %v273, 0
    %v380 = vsel %vm288, %v274, 0
    %v383 = vsel %vm288, %v275, 0
    %385 = vmatprep.subr.bf16.mxu0 0
    %386 = vmatpush1.bf16.msra.mxu0 0
    %387 = vmatprep.subr.bf16.mxu0 0
    %388 = vmatpush1.bf16.msra.mxu0 0
    %389 = vmatprep.subr.bf16.mxu0 0
    %390 = vmatpush1.bf16.msra.mxu0 0
    %391 = vmatprep.subr.bf16.mxu0 0
    %392 = vmatpush1.bf16.msra.mxu0 0
    %393 = vmatprep.subr.bf16.mxu0 0
    %394 = vmatpush1.bf16.msra.mxu0 0
    %395 = vmatprep.subr.bf16.mxu0 0
    %396 = vmatpush1.bf16.msra.mxu0 0
    %397 = vmatprep.subr.bf16.mxu0 0
    %398 = vmatpush1.bf16.msra.mxu0 %v285
    %399 = vmatprep.subr.bf16.mxu0 0
    %400 = vmatpush1.bf16.msra.mxu0 %v284
    %401 = vmatprep.subr.bf16.mxu0 0
    %402 = vmatpush2.bf16.msra.mxu0 0
    %403 = vmatprep.subr.bf16.mxu0 0
    %404 = vmatpush2.bf16.msra.mxu0 0
    %405 = vmatprep.subr.bf16.mxu0 0
    %406 = vmatpush2.bf16.msra.mxu0 0
    %407 = vmatprep.subr.bf16.mxu0 0
    %408 = vmatpush2.bf16.msra.mxu0 0
    %409 = vmatprep.subr.bf16.mxu0 0
    %410 = vmatpush2.bf16.msra.mxu0 0
    %411 = vmatprep.subr.bf16.mxu0 0
    %412 = vmatpush2.bf16.msra.mxu0 0
    %413 = vmatprep.subr.bf16.mxu0 0
    %414 = vmatpush2.bf16.msra.mxu0 0
    %415 = vmatprep.subr.bf16.mxu0 0
    %416 = vmatpush2.bf16.msra.mxu0 0
    %417 = vmatprep.mubr.bf16.mxu0 0
    %418 = vmatmul.mubr.bf16.gmra.mxu0 %v290
    %v419 = vpop.f32.mrf.mxu0
    %v420 = vadd.f32 %v114, %v419
    %v421 = vpop.f32.mrf.mxu0
    %v422 = vpop.f32.mrf.mxu0
    %v423 = vadd.f32 %v114, %v422
    %v424 = vpop.f32.mrf.mxu0
    %425 = vmatprep.mubr.bf16.mxu0 0
    %426 = vmatmul.mubr.bf16.gmra.mxu0 %v293
    %v427 = vpop.f32.mrf.mxu0
    %v428 = vadd.f32 %v114, %v427
    %v429 = vpop.f32.mrf.mxu0
    %v430 = vpop.f32.mrf.mxu0
    %v431 = vadd.f32 %v114, %v430
    %v432 = vpop.f32.mrf.mxu0
    %433 = vmatprep.mubr.bf16.mxu0 0
    %434 = vmatmul.mubr.bf16.gmra.mxu0 %v296
    %v435 = vpop.f32.mrf.mxu0
    %v436 = vadd.f32 %v114, %v435
    %v437 = vpop.f32.mrf.mxu0
    %v438 = vpop.f32.mrf.mxu0
    %v439 = vadd.f32 %v114, %v438
    %v440 = vpop.f32.mrf.mxu0
    %441 = vmatprep.mubr.bf16.mxu0 0
    %442 = vmatmul.mubr.bf16.gmra.mxu0 %v299
    %v443 = vpop.f32.mrf.mxu0
    %v444 = vadd.f32 %v114, %v443
    %v445 = vpop.f32.mrf.mxu0
    %v446 = vpop.f32.mrf.mxu0
    %v447 = vadd.f32 %v114, %v446
    %v448 = vpop.f32.mrf.mxu0
    %449 = vmatprep.mubr.bf16.mxu0 0
    %450 = vmatmul.mubr.bf16.gmra.mxu0 %v302
    %v451 = vpop.f32.mrf.mxu0
    %v452 = vadd.f32 %v114, %v451
    %v453 = vpop.f32.mrf.mxu0
    %v454 = vpop.f32.mrf.mxu0
    %v455 = vadd.f32 %v114, %v454
    %v456 = vpop.f32.mrf.mxu0
    %457 = vmatprep.mubr.bf16.mxu0 0
    %458 = vmatmul.mubr.bf16.gmra.mxu0 %v305
    %v459 = vpop.f32.mrf.mxu0
    %v460 = vadd.f32 %v114, %v459
    %v461 = vpop.f32.mrf.mxu0
    %v462 = vpop.f32.mrf.mxu0
    %v463 = vadd.f32 %v114, %v462
    %v464 = vpop.f32.mrf.mxu0
    %465 = vmatprep.mubr.bf16.mxu0 0
    %466 = vmatmul.mubr.bf16.gmra.mxu0 %v308
    %v467 = vpop.f32.mrf.mxu0
    %v468 = vadd.f32 %v114, %v467
    %v469 = vpop.f32.mrf.mxu0
    %v470 = vpop.f32.mrf.mxu0
    %v471 = vadd.f32 %v114, %v470
    %v472 = vpop.f32.mrf.mxu0
    %473 = vmatprep.mubr.bf16.mxu0 0
    %474 = vmatmul.mubr.bf16.gmra.mxu0 %v311
    %v475 = vpop.f32.mrf.mxu0
    %v476 = vadd.f32 %v114, %v475
    %v477 = vpop.f32.mrf.mxu0
    %v478 = vpop.f32.mrf.mxu0
    %v479 = vadd.f32 %v114, %v478
    %v480 = vpop.f32.mrf.mxu0
    %481 = vmatprep.mubr.bf16.mxu0 0
    %482 = vmatmul.mubr.bf16.gmra.mxu0 %v314
    %v483 = vpop.f32.mrf.mxu0
    %v484 = vadd.f32 %v114, %v483
    %v485 = vpop.f32.mrf.mxu0
    %v486 = vpop.f32.mrf.mxu0
    %v487 = vadd.f32 %v114, %v486
    %v488 = vpop.f32.mrf.mxu0
    %489 = vmatprep.mubr.bf16.mxu0 0
    %490 = vmatmul.mubr.bf16.gmra.mxu0 %v317
    %v491 = vpop.f32.mrf.mxu0
    %v492 = vadd.f32 %v114, %v491
    %v493 = vpop.f32.mrf.mxu0
    %v494 = vpop.f32.mrf.mxu0
    %v495 = vadd.f32 %v114, %v494
    %v496 = vpop.f32.mrf.mxu0
    %497 = vmatprep.mubr.bf16.mxu0 0
    %498 = vmatmul.mubr.bf16.gmra.mxu0 %v320
    %v499 = vpop.f32.mrf.mxu0
    %v500 = vadd.f32 %v114, %v499
    %v501 = vpop.f32.mrf.mxu0
    %v502 = vpop.f32.mrf.mxu0
    %v503 = vadd.f32 %v114, %v502
    %v504 = vpop.f32.mrf.mxu0
    %505 = vmatprep.mubr.bf16.mxu0 0
    %506 = vmatmul.mubr.bf16.gmra.mxu0 %v323
    %v507 = vpop.f32.mrf.mxu0
    %v508 = vadd.f32 %v114, %v507
    %v509 = vpop.f32.mrf.mxu0
    %v510 = vpop.f32.mrf.mxu0
    %v511 = vadd.f32 %v114, %v510
    %v512 = vpop.f32.mrf.mxu0
    %513 = vmatprep.mubr.bf16.mxu0 0
    %514 = vmatmul.mubr.bf16.gmra.mxu0 %v326
    %v515 = vpop.f32.mrf.mxu0
    %v516 = vadd.f32 %v114, %v515
    %v517 = vpop.f32.mrf.mxu0
    %v518 = vpop.f32.mrf.mxu0
    %v519 = vadd.f32 %v114, %v518
    %v520 = vpop.f32.mrf.mxu0
    %521 = vmatprep.mubr.bf16.mxu0 0
    %522 = vmatmul.mubr.bf16.gmra.mxu0 %v329
    %v523 = vpop.f32.mrf.mxu0
    %v524 = vadd.f32 %v114, %v523
    %v525 = vpop.f32.mrf.mxu0
    %v526 = vpop.f32.mrf.mxu0
    %v527 = vadd.f32 %v114, %v526
    %v528 = vpop.f32.mrf.mxu0
    %529 = vmatprep.mubr.bf16.mxu0 0
    %530 = vmatmul.mubr.bf16.gmra.mxu0 %v332
    %v531 = vpop.f32.mrf.mxu0
    %v532 = vadd.f32 %v114, %v531
    %v533 = vpop.f32.mrf.mxu0
    %v534 = vpop.f32.mrf.mxu0
    %v535 = vadd.f32 %v114, %v534
    %v536 = vpop.f32.mrf.mxu0
    %537 = vmatprep.mubr.bf16.mxu0 0
    %538 = vmatmul.mubr.bf16.gmra.mxu0 %v335
    %v539 = vpop.f32.mrf.mxu0
    %v540 = vadd.f32 %v114, %v539
    %v541 = vpop.f32.mrf.mxu0
    %v542 = vpop.f32.mrf.mxu0
    %v543 = vadd.f32 %v114, %v542
    %v544 = vpop.f32.mrf.mxu0
    %545 = vmatprep.mubr.bf16.mxu0 0
    %546 = vmatmul.mubr.bf16.gmra.mxu0 %v338
    %v547 = vpop.f32.mrf.mxu0
    %v548 = vadd.f32 %v114, %v547
    %v549 = vpop.f32.mrf.mxu0
    %v550 = vpop.f32.mrf.mxu0
    %v551 = vadd.f32 %v114, %v550
    %v552 = vpop.f32.mrf.mxu0
    %553 = vmatprep.mubr.bf16.mxu0 0
    %554 = vmatmul.mubr.bf16.gmra.mxu0 %v341
    %v555 = vpop.f32.mrf.mxu0
    %v556 = vadd.f32 %v114, %v555
    %v557 = vpop.f32.mrf.mxu0
    %v558 = vpop.f32.mrf.mxu0
    %v559 = vadd.f32 %v114, %v558
    %v560 = vpop.f32.mrf.mxu0
    %561 = vmatprep.mubr.bf16.mxu0 0
    %562 = vmatmul.mubr.bf16.gmra.mxu0 %v344
    %v563 = vpop.f32.mrf.mxu0
    %v564 = vadd.f32 %v114, %v563
    %v565 = vpop.f32.mrf.mxu0
    %v566 = vpop.f32.mrf.mxu0
    %v567 = vadd.f32 %v114, %v566
    %v568 = vpop.f32.mrf.mxu0
    %569 = vmatprep.mubr.bf16.mxu0 0
    %570 = vmatmul.mubr.bf16.gmra.mxu0 %v347
    %v571 = vpop.f32.mrf.mxu0
    %v572 = vadd.f32 %v114, %v571
    %v573 = vpop.f32.mrf.mxu0
    %v574 = vpop.f32.mrf.mxu0
    %v575 = vadd.f32 %v114, %v574
    %v576 = vpop.f32.mrf.mxu0
    %577 = vmatprep.mubr.bf16.mxu0 0
    %578 = vmatmul.mubr.bf16.gmra.mxu0 %v350
    %v579 = vpop.f32.mrf.mxu0
    %v580 = vadd.f32 %v114, %v579
    %v581 = vpop.f32.mrf.mxu0
    %v582 = vpop.f32.mrf.mxu0
    %v583 = vadd.f32 %v114, %v582
    %v584 = vpop.f32.mrf.mxu0
    %585 = vmatprep.mubr.bf16.mxu0 0
    %586 = vmatmul.mubr.bf16.gmra.mxu0 %v353
    %v587 = vpop.f32.mrf.mxu0
    %v588 = vadd.f32 %v114, %v587
    %v589 = vpop.f32.mrf.mxu0
    %v590 = vpop.f32.mrf.mxu0
    %v591 = vadd.f32 %v114, %v590
    %v592 = vpop.f32.mrf.mxu0
    %593 = vmatprep.mubr.bf16.mxu0 0
    %594 = vmatmul.mubr.bf16.gmra.mxu0 %v356
    %v595 = vpop.f32.mrf.mxu0
    %v596 = vadd.f32 %v114, %v595
    %v597 = vpop.f32.mrf.mxu0
    %v598 = vpop.f32.mrf.mxu0
    %v599 = vadd.f32 %v114, %v598
    %v600 = vpop.f32.mrf.mxu0
    %601 = vmatprep.mubr.bf16.mxu0 0
    %602 = vmatmul.mubr.bf16.gmra.mxu0 %v359
    %v603 = vpop.f32.mrf.mxu0
    %v604 = vadd.f32 %v114, %v603
    %v605 = vpop.f32.mrf.mxu0
    %v606 = vpop.f32.mrf.mxu0
    %v607 = vadd.f32 %v114, %v606
    %v608 = vpop.f32.mrf.mxu0
    %609 = vmatprep.mubr.bf16.mxu0 0
    %610 = vmatmul.mubr.bf16.gmra.mxu0 %v362
    %v611 = vpop.f32.mrf.mxu0
    %v612 = vadd.f32 %v114, %v611
    %v613 = vpop.f32.mrf.mxu0
    %v614 = vpop.f32.mrf.mxu0
    %v615 = vadd.f32 %v114, %v614
    %v616 = vpop.f32.mrf.mxu0
    %617 = vmatprep.mubr.bf16.mxu0 0
    %618 = vmatmul.mubr.bf16.gmra.mxu0 %v365
    %v619 = vpop.f32.mrf.mxu0
    %v620 = vadd.f32 %v114, %v619
    %v621 = vpop.f32.mrf.mxu0
    %v622 = vpop.f32.mrf.mxu0
    %v623 = vadd.f32 %v114, %v622
    %v624 = vpop.f32.mrf.mxu0
    %625 = vmatprep.mubr.bf16.mxu0 0
    %626 = vmatmul.mubr.bf16.gmra.mxu0 %v368
    %v627 = vpop.f32.mrf.mxu0
    %v628 = vadd.f32 %v114, %v627
    %v629 = vpop.f32.mrf.mxu0
    %v630 = vpop.f32.mrf.mxu0
    %v631 = vadd.f32 %v114, %v630
    %v632 = vpop.f32.mrf.mxu0
    %633 = vmatprep.mubr.bf16.mxu0 0
    %634 = vmatmul.mubr.bf16.gmra.mxu0 %v371
    %v635 = vpop.f32.mrf.mxu0
    %v636 = vadd.f32 %v114, %v635
    %v637 = vpop.f32.mrf.mxu0
    %v638 = vpop.f32.mrf.mxu0
    %v639 = vadd.f32 %v114, %v638
    %v640 = vpop.f32.mrf.mxu0
    %641 = vmatprep.mubr.bf16.mxu0 0
    %642 = vmatmul.mubr.bf16.gmra.mxu0 %v374
    %v643 = vpop.f32.mrf.mxu0
    %v644 = vadd.f32 %v114, %v643
    %v645 = vpop.f32.mrf.mxu0
    %v646 = vpop.f32.mrf.mxu0
    %v647 = vadd.f32 %v114, %v646
    %v648 = vpop.f32.mrf.mxu0
    %649 = vmatprep.mubr.bf16.mxu0 0
    %650 = vmatmul.mubr.bf16.gmra.mxu0 %v377
    %v651 = vpop.f32.mrf.mxu0
    %v652 = vadd.f32 %v114, %v651
    %v653 = vpop.f32.mrf.mxu0
    %v654 = vpop.f32.mrf.mxu0
    %v655 = vadd.f32 %v114, %v654
    %v656 = vpop.f32.mrf.mxu0
    %657 = vmatprep.mubr.bf16.mxu0 0
    %658 = vmatmul.mubr.bf16.gmra.mxu0 %v380
    %v659 = vpop.f32.mrf.mxu0
    %v660 = vadd.f32 %v114, %v659
    %v661 = vpop.f32.mrf.mxu0
    %v662 = vpop.f32.mrf.mxu0
    %v663 = vadd.f32 %v114, %v662
    %v664 = vpop.f32.mrf.mxu0
    %665 = vmatprep.mubr.bf16.mxu0 0
    %666 = vmatmul.mubr.bf16.gmra.mxu0 %v383
    %v667 = vpop.f32.mrf.mxu0
    %v668 = vadd.f32 %v114, %v667
    %v669 = vpop.f32.mrf.mxu0
    %v670 = vpop.f32.mrf.mxu0
    %v671 = vadd.f32 %v114, %v670
    %v672 = vpop.f32.mrf.mxu0
    %673 = vdwg.mxu0
    %v674 = vmax.f32 %v420, 0.0
    %v675 = vmax.f32 %v423, 0.0
    %v676 = vmax.f32 %v428, 0.0
    %v677 = vmax.f32 %v431, 0.0
    %v678 = vmax.f32 %v436, 0.0
    %v679 = vmax.f32 %v439, 0.0
    %v680 = vmax.f32 %v444, 0.0
    %v681 = vmax.f32 %v447, 0.0
    %v682 = vmax.f32 %v452, 0.0
    %v683 = vmax.f32 %v455, 0.0
    %v684 = vmax.f32 %v460, 0.0
    %v685 = vmax.f32 %v463, 0.0
    %v686 = vmax.f32 %v468, 0.0
    %v687 = vmax.f32 %v471, 0.0
    %v688 = vmax.f32 %v476, 0.0
    %v689 = vmax.f32 %v479, 0.0
    %v690 = vmax.f32 %v484, 0.0
    %v691 = vmax.f32 %v487, 0.0
    %v692 = vmax.f32 %v492, 0.0
    %v693 = vmax.f32 %v495, 0.0
    %v694 = vmax.f32 %v500, 0.0
    %v695 = vmax.f32 %v503, 0.0
    %v696 = vmax.f32 %v508, 0.0
    %v697 = vmax.f32 %v511, 0.0
    %v698 = vmax.f32 %v516, 0.0
    %v699 = vmax.f32 %v519, 0.0
    %v700 = vmax.f32 %v524, 0.0
    %v701 = vmax.f32 %v527, 0.0
    %v702 = vmax.f32 %v532, 0.0
    %v703 = vmax.f32 %v535, 0.0
    %v704 = vmax.f32 %v540, 0.0
    %v705 = vmax.f32 %v543, 0.0
    %v706 = vmax.f32 %v548, 0.0
    %v707 = vmax.f32 %v551, 0.0
    %v708 = vmax.f32 %v556, 0.0
    %v709 = vmax.f32 %v559, 0.0
    %v710 = vmax.f32 %v564, 0.0
    %v711 = vmax.f32 %v567, 0.0
    %v712 = vmax.f32 %v572, 0.0
    %v713 = vmax.f32 %v575, 0.0
    %v714 = vmax.f32 %v580, 0.0
    %v715 = vmax.f32 %v583, 0.0
    %v716 = vmax.f32 %v588, 0.0
    %v717 = vmax.f32 %v591, 0.0
    %v718 = vmax.f32 %v596, 0.0
    %v719 = vmax.f32 %v599, 0.0
    %v720 = vmax.f32 %v604, 0.0
    %v721 = vmax.f32 %v607, 0.0
    %v722 = vmax.f32 %v612, 0.0
    %v723 = vmax.f32 %v615, 0.0
    %v724 = vmax.f32 %v620, 0.0
    %v725 = vmax.f32 %v623, 0.0
    %v726 = vmax.f32 %v628, 0.0
    %v727 = vmax.f32 %v631, 0.0
    %v728 = vmax.f32 %v636, 0.0
    %v729 = vmax.f32 %v639, 0.0
    %v730 = vmax.f32 %v644, 0.0
    %v731 = vmax.f32 %v647, 0.0
    %v732 = vmax.f32 %v652, 0.0
    %v733 = vmax.f32 %v655, 0.0
    %v734 = vmax.f32 %v660, 0.0
    %v735 = vmax.f32 %v663, 0.0
    %v736 = vmax.f32 %v668, 0.0
    %v737 = vmax.f32 %v671, 0.0
    %v738 = vpack.c.bf16 %v675, %v674
    %v739 = vpack.c.bf16 %v677, %v676
    %v740 = vpack.c.bf16 %v679, %v678
    %v741 = vpack.c.bf16 %v681, %v680
    %v742 = vpack.c.bf16 %v683, %v682
    %v743 = vpack.c.bf16 %v685, %v684
    %v744 = vpack.c.bf16 %v687, %v686
    %v745 = vpack.c.bf16 %v689, %v688
    %v746 = vpack.c.bf16 %v691, %v690
    %v747 = vpack.c.bf16 %v693, %v692
    %v748 = vpack.c.bf16 %v695, %v694
    %v749 = vpack.c.bf16 %v697, %v696
    %v750 = vpack.c.bf16 %v699, %v698
    %v751 = vpack.c.bf16 %v701, %v700
    %v752 = vpack.c.bf16 %v703, %v702
    %v753 = vpack.c.bf16 %v705, %v704
    %v754 = vpack.c.bf16 %v707, %v706
    %v755 = vpack.c.bf16 %v709, %v708
    %v756 = vpack.c.bf16 %v711, %v710
    %v757 = vpack.c.bf16 %v713, %v712
    %v758 = vpack.c.bf16 %v715, %v714
    %v759 = vpack.c.bf16 %v717, %v716
    %v760 = vpack.c.bf16 %v719, %v718
    %v761 = vpack.c.bf16 %v721, %v720
    %v762 = vpack.c.bf16 %v723, %v722
    %v763 = vpack.c.bf16 %v725, %v724
    %v764 = vpack.c.bf16 %v727, %v726
    %v765 = vpack.c.bf16 %v729, %v728
    %v766 = vpack.c.bf16 %v731, %v730
    %v767 = vpack.c.bf16 %v733, %v732
    %v768 = vpack.c.bf16 %v735, %v734
    %v769 = vpack.c.bf16 %v737, %v736
    %v802 = vunpack.c.l.b16 %v738
    %v803 = vunpack.c.h.b16 %v738
    %v804 = vunpack.c.l.b16 %v739
    %v805 = vunpack.c.h.b16 %v739
    %v806 = vunpack.c.l.b16 %v740
    %v807 = vunpack.c.h.b16 %v740
    %v808 = vunpack.c.l.b16 %v741
    %v809 = vunpack.c.h.b16 %v741
    %v810 = vunpack.c.l.b16 %v742
    %v811 = vunpack.c.h.b16 %v742
    %v812 = vunpack.c.l.b16 %v743
    %v813 = vunpack.c.h.b16 %v743
    %v814 = vunpack.c.l.b16 %v744
    %v815 = vunpack.c.h.b16 %v744
    %v816 = vunpack.c.l.b16 %v745
    %v817 = vunpack.c.h.b16 %v745
    %v818 = vunpack.c.l.b16 %v746
    %v819 = vunpack.c.h.b16 %v746
    %v820 = vunpack.c.l.b16 %v747
    %v821 = vunpack.c.h.b16 %v747
    %v822 = vunpack.c.l.b16 %v748
    %v823 = vunpack.c.h.b16 %v748
    %v824 = vunpack.c.l.b16 %v749
    %v825 = vunpack.c.h.b16 %v749
    %v826 = vunpack.c.l.b16 %v750
    %v827 = vunpack.c.h.b16 %v750
    %v828 = vunpack.c.l.b16 %v751
    %v829 = vunpack.c.h.b16 %v751
    %v830 = vunpack.c.l.b16 %v752
    %v831 = vunpack.c.h.b16 %v752
    %v832 = vunpack.c.l.b16 %v753
    %v833 = vunpack.c.h.b16 %v753
    %v834 = vunpack.c.l.b16 %v754
    %v835 = vunpack.c.h.b16 %v754
    %v836 = vunpack.c.l.b16 %v755
    %v837 = vunpack.c.h.b16 %v755
    %v838 = vunpack.c.l.b16 %v756
    %v839 = vunpack.c.h.b16 %v756
    %v840 = vunpack.c.l.b16 %v757
    %v841 = vunpack.c.h.b16 %v757
    %v842 = vunpack.c.l.b16 %v758
    %v843 = vunpack.c.h.b16 %v758
    %v844 = vunpack.c.l.b16 %v759
    %v845 = vunpack.c.h.b16 %v759
    %v846 = vunpack.c.l.b16 %v760
    %v847 = vunpack.c.h.b16 %v760
    %v848 = vunpack.c.l.b16 %v761
    %v849 = vunpack.c.h.b16 %v761
    %v850 = vunpack.c.l.b16 %v762
    %v851 = vunpack.c.h.b16 %v762
    %v852 = vunpack.c.l.b16 %v763
    %v853 = vunpack.c.h.b16 %v763
    %v854 = vunpack.c.l.b16 %v764
    %v855 = vunpack.c.h.b16 %v764
    %v856 = vunpack.c.l.b16 %v765
    %v857 = vunpack.c.h.b16 %v765
    %v858 = vunpack.c.l.b16 %v766
    %v859 = vunpack.c.h.b16 %v766
    %v860 = vunpack.c.l.b16 %v767
    %v861 = vunpack.c.h.b16 %v767
    %v862 = vunpack.c.l.b16 %v768
    %v863 = vunpack.c.h.b16 %v768
    %v864 = vunpack.c.l.b16 %v769
    %v865 = vunpack.c.h.b16 %v769
    %v866 = vpack.c.b16 %v802, %v802
    %v867 = vpack.c.b16 %v803, %v803
    %v868 = vpack.c.b16 %v804, %v804
    %v869 = vpack.c.b16 %v805, %v805
    %v870 = vpack.c.b16 %v806, %v806
    %v871 = vpack.c.b16 %v807, %v807
    %v872 = vpack.c.b16 %v808, %v808
    %v873 = vpack.c.b16 %v809, %v809
    %v874 = vpack.c.b16 %v810, %v810
    %v875 = vpack.c.b16 %v811, %v811
    %v876 = vpack.c.b16 %v812, %v812
    %v877 = vpack.c.b16 %v813, %v813
    %v878 = vpack.c.b16 %v814, %v814
    %v879 = vpack.c.b16 %v815, %v815
    %v880 = vpack.c.b16 %v816, %v816
    %v881 = vpack.c.b16 %v817, %v817
    %v882 = vpack.c.b16 %v818, %v818
    %v883 = vpack.c.b16 %v819, %v819
    %v884 = vpack.c.b16 %v820, %v820
    %v885 = vpack.c.b16 %v821, %v821
    %v886 = vpack.c.b16 %v822, %v822
    %v887 = vpack.c.b16 %v823, %v823
    %v888 = vpack.c.b16 %v824, %v824
    %v889 = vpack.c.b16 %v825, %v825
    %v890 = vpack.c.b16 %v826, %v826
    %v891 = vpack.c.b16 %v827, %v827
    %v892 = vpack.c.b16 %v828, %v828
    %v893 = vpack.c.b16 %v829, %v829
    %v894 = vpack.c.b16 %v830, %v830
    %v895 = vpack.c.b16 %v831, %v831
    %v896 = vpack.c.b16 %v832, %v832
    %v897 = vpack.c.b16 %v833, %v833
    %v898 = vpack.c.b16 %v834, %v834
    %v899 = vpack.c.b16 %v835, %v835
    %v900 = vpack.c.b16 %v836, %v836
    %v901 = vpack.c.b16 %v837, %v837
    %v902 = vpack.c.b16 %v838, %v838
    %v903 = vpack.c.b16 %v839, %v839
    %v904 = vpack.c.b16 %v840, %v840
    %v905 = vpack.c.b16 %v841, %v841
    %v906 = vpack.c.b16 %v842, %v842
    %v907 = vpack.c.b16 %v843, %v843
    %v908 = vpack.c.b16 %v844, %v844
    %v909 = vpack.c.b16 %v845, %v845
    %v910 = vpack.c.b16 %v846, %v846
    %v911 = vpack.c.b16 %v847, %v847
    %v912 = vpack.c.b16 %v848, %v848
    %v913 = vpack.c.b16 %v849, %v849
    %v914 = vpack.c.b16 %v850, %v850
    %v915 = vpack.c.b16 %v851, %v851
    %v916 = vpack.c.b16 %v852, %v852
    %v917 = vpack.c.b16 %v853, %v853
    %v918 = vpack.c.b16 %v854, %v854
    %v919 = vpack.c.b16 %v855, %v855
    %v920 = vpack.c.b16 %v856, %v856
    %v921 = vpack.c.b16 %v857, %v857
    %v922 = vpack.c.b16 %v858, %v858
    %v923 = vpack.c.b16 %v859, %v859
    %v924 = vpack.c.b16 %v860, %v860
    %v925 = vpack.c.b16 %v861, %v861
    %v926 = vpack.c.b16 %v862, %v862
    %v927 = vpack.c.b16 %v863, %v863
    %v928 = vpack.c.b16 %v864, %v864
    %v929 = vpack.c.b16 %v865, %v865
    %994 = vst [vmem:[%s3] sm:$0xf] %v866
    %995 = vst [vmem:[%s3 + $0x4] sm:$0xf] %v867
    %996 = vst [vmem:[%s3 + $0x8] sm:$0xf] %v868
    %997 = vst [vmem:[%s3 + $0xc] sm:$0xf] %v869
    %998 = vst [vmem:[%s3 + $0x10] sm:$0xf] %v870
    %999 = vst [vmem:[%s3 + $0x14] sm:$0xf] %v871
    %1000 = vst [vmem:[%s3 + $0x18] sm:$0xf] %v872
    %1001 = vst [vmem:[%s3 + $0x1c] sm:$0xf] %v873
    %1002 = vst [vmem:[%s3 + $0x20] sm:$0xf] %v874
    %1003 = vst [vmem:[%s3 + $0x24] sm:$0xf] %v875
    %1004 = vst [vmem:[%s3 + $0x28] sm:$0xf] %v876
    %1005 = vst [vmem:[%s3 + $0x2c] sm:$0xf] %v877
    %1006 = vst [vmem:[%s3 + $0x30] sm:$0xf] %v878
    %1007 = vst [vmem:[%s3 + $0x34] sm:$0xf] %v879
    %1008 = vst [vmem:[%s3 + $0x38] sm:$0xf] %v880
    %1009 = vst [vmem:[%s3 + $0x3c] sm:$0xf] %v881
    %1010 = vst [vmem:[%s3 + $0x40] sm:$0xf] %v882
    %1011 = vst [vmem:[%s3 + $0x44] sm:$0xf] %v883
    %1012 = vst [vmem:[%s3 + $0x48] sm:$0xf] %v884
    %1013 = vst [vmem:[%s3 + $0x4c] sm:$0xf] %v885
    %1014 = vst [vmem:[%s3 + $0x50] sm:$0xf] %v886
    %1015 = vst [vmem:[%s3 + $0x54] sm:$0xf] %v887
    %1016 = vst [vmem:[%s3 + $0x58] sm:$0xf] %v888
    %1017 = vst [vmem:[%s3 + $0x5c] sm:$0xf] %v889
    %1018 = vst [vmem:[%s3 + $0x60] sm:$0xf] %v890
    %1019 = vst [vmem:[%s3 + $0x64] sm:$0xf] %v891
    %1020 = vst [vmem:[%s3 + $0x68] sm:$0xf] %v892
    %1021 = vst [vmem:[%s3 + $0x6c] sm:$0xf] %v893
    %1022 = vst [vmem:[%s3 + $0x70] sm:$0xf] %v894
    %1023 = vst [vmem:[%s3 + $0x74] sm:$0xf] %v895
    %1024 = vst [vmem:[%s3 + $0x78] sm:$0xf] %v896
    %1025 = vst [vmem:[%s3 + $0x7c] sm:$0xf] %v897
    %1026 = vst [vmem:[%s3 + $0x80] sm:$0xf] %v898
    %1027 = vst [vmem:[%s3 + $0x84] sm:$0xf] %v899
    %1028 = vst [vmem:[%s3 + $0x88] sm:$0xf] %v900
    %1029 = vst [vmem:[%s3 + $0x8c] sm:$0xf] %v901
    %1030 = vst [vmem:[%s3 + $0x90] sm:$0xf] %v902
    %1031 = vst [vmem:[%s3 + $0x94] sm:$0xf] %v903
    %1032 = vst [vmem:[%s3 + $0x98] sm:$0xf] %v904
    %1033 = vst [vmem:[%s3 + $0x9c] sm:$0xf] %v905
    %1034 = vst [vmem:[%s3 + $0xa0] sm:$0xf] %v906
    %1035 = vst [vmem:[%s3 + $0xa4] sm:$0xf] %v907
    %1036 = vst [vmem:[%s3 + $0xa8] sm:$0xf] %v908
    %1037 = vst [vmem:[%s3 + $0xac] sm:$0xf] %v909
    %1038 = vst [vmem:[%s3 + $0xb0] sm:$0xf] %v910
    %1039 = vst [vmem:[%s3 + $0xb4] sm:$0xf] %v911
    %1040 = vst [vmem:[%s3 + $0xb8] sm:$0xf] %v912
    %1041 = vst [vmem:[%s3 + $0xbc] sm:$0xf] %v913
    %1042 = vst [vmem:[%s3 + $0xc0] sm:$0xf] %v914
    %1043 = vst [vmem:[%s3 + $0xc4] sm:$0xf] %v915
    %1044 = vst [vmem:[%s3 + $0xc8] sm:$0xf] %v916
    %1045 = vst [vmem:[%s3 + $0xcc] sm:$0xf] %v917
    %1046 = vst [vmem:[%s3 + $0xd0] sm:$0xf] %v918
    %1047 = vst [vmem:[%s3 + $0xd4] sm:$0xf] %v919
    %1048 = vst [vmem:[%s3 + $0xd8] sm:$0xf] %v920
    %1049 = vst [vmem:[%s3 + $0xdc] sm:$0xf] %v921
    %1050 = vst [vmem:[%s3 + $0xe0] sm:$0xf] %v922
    %1051 = vst [vmem:[%s3 + $0xe4] sm:$0xf] %v923
    %1052 = vst [vmem:[%s3 + $0xe8] sm:$0xf] %v924
    %1053 = vst [vmem:[%s3 + $0xec] sm:$0xf] %v925
    %1054 = vst [vmem:[%s3 + $0xf0] sm:$0xf] %v926
    %1055 = vst [vmem:[%s3 + $0xf4] sm:$0xf] %v927
    %1056 = vst [vmem:[%s3 + $0xf8] sm:$0xf] %v928
    %1057 = vst [vmem:[%s3 + $0xfc] sm:$0xf] %v929
    // Predicated region
    $region22: #{autoencoder_forward.6} parent=1 // pred_check
      _
    $region23: #{autoencoder_forward.6} parent=1 // pred_check_branch
      %1059 = sbr.rel (0) target = $region25
    $region24: #{autoencoder_forward.6} parent=1 // pred_region
      _
    $region25: #{autoencoder_forward.6} parent=1 // pred_fallthru
      _
    // Predicated region
    $region26: #{autoencoder_forward.6} parent=1 // pred_check
      _
    $region27: #{autoencoder_forward.6} parent=1 // pred_check_branch
      %1061 = sbr.rel (0) target = $region29
    $region28: #{autoencoder_forward.6} parent=1 // pred_region
      _
    $region29: #{autoencoder_forward.6} parent=1 // pred_fallthru
      _
    %1062 = vsyncpa [#allocation3], 1
    %1063 = vsyncpa [#allocation5], 1

// kernel: autoencoder_forward.7
$region0: #{autoencoder_forward.7}
  #allocation0 [shape = 'u32[]', space=smem, size = 0x4, offset = 0x4, fixed_abs, tag = 'smem constant byte address 0x4 - core index']
  #allocation1 [shape = 'u32[144,128]{1,0:T(1,128)}', space=vmem, size = 0x12000, scoped, tag = 'internal scratch']
  %s0 = inlined_call_operand.vmem [shape: bf16[128,144], index: 0, kind: input, shape index: {}]
  %s1 = inlined_call_operand.hbm [shape: bf16[144,128], index: 1, kind: input, shape index: {}]
  %s2 = inlined_call_operand.hbm [shape: f32[1,128], index: 2, kind: input, shape index: {}]
  %s3 = inlined_call_operand.vmem [shape: bf16[128,128], index: 3, kind: output, shape index: {}]
  %s4 = sld [smem:[#allocation0]]
  $region30: #{autoencoder_forward.7} parent=0
    _
  %s6 = ssub.s32 1, %s4
  %s7 = scalar_select 0, %s6, %s4
  $region1: #{autoencoder_forward.7} parent=0
    #allocation2 [shape = 'u8[36864]{0}', space=vmem, size = 0x9000, scoped, tag = 'input window, operand 1, single buffered']
    #allocation3 [shape = 's32[1]{0}', space=sflag, size = 0x4, scoped, tag = 'scoped memory for autoencoder_forward.7']
    #allocation4 [shape = 'u8[512]{0}', space=vmem, size = 0x400, scoped, tag = 'input window, operand 2, single buffered']
    #allocation5 [shape = 's32[1]{0}', space=sflag, size = 0x4, scoped, tag = 'scoped memory for autoencoder_forward.7']
    %8 = vsyncpa [#allocation3], 0
    %9 = vsyncpa [#allocation5], 0
    // Predicated region
    $region2: #{autoencoder_forward.7} parent=1 // pred_check
      _
    $region3: #{autoencoder_forward.7} parent=1 // pred_check_branch
      %11 = sbr.rel (0) target = $region5
    $region4: #{autoencoder_forward.7} parent=1 // pred_region
      _
    $region5: #{autoencoder_forward.7} parent=1 // pred_fallthru
      _
    // Predicated region
    $region6: #{autoencoder_forward.7} parent=1 // pred_check
      _
    $region7: #{autoencoder_forward.7} parent=1 // pred_check_branch
      %13 = sbr.rel (0) target = $region9
    $region8: #{autoencoder_forward.7} parent=1 // pred_region
      %s15 = ssub.s32 1152, 1152
      %16 = vsyncadd [#allocation3], %s15
      %s17 = sshll.u32 [#allocation2], 4
      %s18 = int_to_ptr.vmem [resolvable:$true] %s17
      %23 = dma.hbm_to_vmem [thread:$0]  %s1, 1152, %s18, [#allocation3], 64, 64, 4
    $region9: #{autoencoder_forward.7} parent=1 // pred_fallthru
      _
    // Predicated region
    $region10: #{autoencoder_forward.7} parent=1 // pred_check
      _
    $region11: #{autoencoder_forward.7} parent=1 // pred_check_branch
      %25 = sbr.rel (0) target = $region13
    $region12: #{autoencoder_forward.7} parent=1 // pred_region
      %s27 = ssub.s32 16, 16
      %28 = vsyncadd [#allocation5], %s27
      %s30 = sshll.u32 [#allocation4], 4
      %s31 = int_to_ptr.vmem [resolvable:$true] %s30
      %33 = dma.hbm_to_vmem [thread:$0]  %s2, 16, %s31, [#allocation5]
    $region13: #{autoencoder_forward.7} parent=1 // pred_fallthru
      _
    // Predicated region
    $region14: #{autoencoder_forward.7} parent=1 // pred_check
      _
    $region15: #{autoencoder_forward.7} parent=1 // pred_check_branch
      %35 = sbr.rel (0) target = $region17
    $region16: #{autoencoder_forward.7} parent=1 // pred_region
      %36 = dma.done [#allocation3], 1152
    $region17: #{autoencoder_forward.7} parent=1 // pred_fallthru
      _
    // Predicated region
    $region18: #{autoencoder_forward.7} parent=1 // pred_check
      _
    $region19: #{autoencoder_forward.7} parent=1 // pred_check_branch
      %38 = sbr.rel (0) target = $region21
    $region20: #{autoencoder_forward.7} parent=1 // pred_region
      %39 = dma.done [#allocation5], 16
    $region21: #{autoencoder_forward.7} parent=1 // pred_fallthru
      _
    %v41 = vld [vmem:[%s0] sm:$0xff]
    %v42 = vld [vmem:[%s0 + $0x8] sm:$0xff]
    %v43 = vld [vmem:[%s0 + $0x10] sm:$0xff]
    %v44 = vld [vmem:[%s0 + $0x18] sm:$0xff]
    %v45 = vld [vmem:[%s0 + $0x20] sm:$0xff]
    %v46 = vld [vmem:[%s0 + $0x28] sm:$0xff]
    %v47 = vld [vmem:[%s0 + $0x30] sm:$0xff]
    %v48 = vld [vmem:[%s0 + $0x38] sm:$0xff]
    %v49 = vld [vmem:[%s0 + $0x40] sm:$0xff]
    %v50 = vld [vmem:[%s0 + $0x48] sm:$0xff]
    %v51 = vld [vmem:[%s0 + $0x50] sm:$0xff]
    %v52 = vld [vmem:[%s0 + $0x58] sm:$0xff]
    %v53 = vld [vmem:[%s0 + $0x60] sm:$0xff]
    %v54 = vld [vmem:[%s0 + $0x68] sm:$0xff]
    %v55 = vld [vmem:[%s0 + $0x70] sm:$0xff]
    %v56 = vld [vmem:[%s0 + $0x78] sm:$0xff]
    %v57 = vld [vmem:[#allocation2] sm:$0xf]
    %v58 = vld [vmem:[#allocation2 + $0x4] sm:$0xf]
    %v59 = vld [vmem:[#allocation2 + $0x8] sm:$0xf]
    %v60 = vld [vmem:[#allocation2 + $0xc] sm:$0xf]
    %v61 = vld [vmem:[#allocation2 + $0x10] sm:$0xf]
    %v62 = vld [vmem:[#allocation2 + $0x14] sm:$0xf]
    %v63 = vld [vmem:[#allocation2 + $0x18] sm:$0xf]
    %v64 = vld [vmem:[#allocation2 + $0x1c] sm:$0xf]
    %v65 = vld [vmem:[#allocation2 + $0x20] sm:$0xf]
    %v66 = vld [vmem:[#allocation2 + $0x24] sm:$0xf]
    %v67 = vld [vmem:[#allocation2 + $0x28] sm:$0xf]
    %v68 = vld [vmem:[#allocation2 + $0x2c] sm:$0xf]
    %v69 = vld [vmem:[#allocation2 + $0x30] sm:$0xf]
    %v70 = vld [vmem:[#allocation2 + $0x34] sm:$0xf]
    %v71 = vld [vmem:[#allocation2 + $0x38] sm:$0xf]
    %v72 = vld [vmem:[#allocation2 + $0x3c] sm:$0xf]
    %v73 = vld [vmem:[#allocation2 + $0x40] sm:$0xf]
    %v74 = vld [vmem:[#allocation2 + $0x44] sm:$0xf]
    %v75 = vld [vmem:[#allocation4] sm:$0x1]
    %v77 = vlaneseq
    %v78 = vshrl.u32 %v77, 7
    %v79 = vsub.s32 0, %v78
    %v80 = vrot.slane %v75, %v79
    %v98 = vunpack.c.l.b16 %v41
    %v99 = vunpack.c.h.b16 %v41
    %v100 = vunpack.c.l.b16 %v42
    %v101 = vunpack.c.h.b16 %v42
    %v102 = vunpack.c.l.b16 %v43
    %v103 = vunpack.c.h.b16 %v43
    %v104 = vunpack.c.l.b16 %v44
    %v105 = vunpack.c.h.b16 %v44
    %v106 = vunpack.c.l.b16 %v45
    %v107 = vunpack.c.h.b16 %v45
    %v108 = vunpack.c.l.b16 %v46
    %v109 = vunpack.c.h.b16 %v46
    %v110 = vunpack.c.l.b16 %v47
    %v111 = vunpack.c.h.b16 %v47
    %v112 = vunpack.c.l.b16 %v48
    %v113 = vunpack.c.h.b16 %v48
    %v114 = vunpack.c.l.b16 %v49
    %v115 = vunpack.c.h.b16 %v49
    %v116 = vunpack.c.l.b16 %v50
    %v117 = vunpack.c.h.b16 %v50
    %v118 = vunpack.c.l.b16 %v51
    %v119 = vunpack.c.h.b16 %v51
    %v120 = vunpack.c.l.b16 %v52
    %v121 = vunpack.c.h.b16 %v52
    %v122 = vunpack.c.l.b16 %v53
    %v123 = vunpack.c.h.b16 %v53
    %v124 = vunpack.c.l.b16 %v54
    %v125 = vunpack.c.h.b16 %v54
    %v126 = vunpack.c.l.b16 %v55
    %v127 = vunpack.c.h.b16 %v55
    %v128 = vunpack.c.l.b16 %v56
    %v129 = vunpack.c.h.b16 %v56
    %v130 = vpack.c.b16 %v100, %v98
    %v131 = vpack.c.b16 %v101, %v99
    %v132 = vpack.c.b16 %v104, %v102
    %v133 = vpack.c.b16 %v105, %v103
    %v134 = vpack.c.b16 %v108, %v106
    %v135 = vpack.c.b16 %v109, %v107
    %v136 = vpack.c.b16 %v112, %v110
    %v137 = vpack.c.b16 %v113, %v111
    %v138 = vpack.c.b16 %v116, %v114
    %v139 = vpack.c.b16 %v117, %v115
    %v140 = vpack.c.b16 %v120, %v118
    %v141 = vpack.c.b16 %v121, %v119
    %v142 = vpack.c.b16 %v124, %v122
    %v143 = vpack.c.b16 %v125, %v123
    %v144 = vpack.c.b16 %v128, %v126
    %v145 = vpack.c.b16 %v129, %v127
    %v172 = vunpack.c.l.b16 %v57
    %v173 = vunpack.c.l.b16 %v58
    %v174 = vunpack.c.l.b16 %v59
    %v175 = vunpack.c.l.b16 %v60
    %v176 = vunpack.c.l.b16 %v61
    %v177 = vunpack.c.l.b16 %v62
    %v178 = vunpack.c.l.b16 %v63
    %v179 = vunpack.c.l.b16 %v64
    %v180 = vunpack.c.l.b16 %v65
    %v181 = vunpack.c.l.b16 %v66
    %v182 = vunpack.c.l.b16 %v67
    %v183 = vunpack.c.l.b16 %v68
    %v184 = vunpack.c.l.b16 %v69
    %v185 = vunpack.c.l.b16 %v70
    %v186 = vunpack.c.l.b16 %v71
    %v187 = vunpack.c.l.b16 %v72
    %v188 = vunpack.c.l.b16 %v73
    %v189 = vunpack.c.l.b16 %v74
    %v190 = vpack.c.b16 %v173, %v172
    %v191 = vpack.c.b16 %v175, %v174
    %v192 = vpack.c.b16 %v177, %v176
    %v193 = vpack.c.b16 %v179, %v178
    %v194 = vpack.c.b16 %v181, %v180
    %v195 = vpack.c.b16 %v183, %v182
    %v196 = vpack.c.b16 %v185, %v184
    %v197 = vpack.c.b16 %v187, %v186
    %v198 = vpack.c.b16 %v189, %v188
    %vm208 = vcmask 130048
    %v210 = vsel %vm208, %v131, 0
    %v213 = vsel %vm208, %v133, 0
    %v216 = vsel %vm208, %v135, 0
    %v219 = vsel %vm208, %v137, 0
    %v222 = vsel %vm208, %v139, 0
    %v225 = vsel %vm208, %v141, 0
    %v228 = vsel %vm208, %v143, 0
    %v231 = vsel %vm208, %v145, 0
    %233 = vmatprep.subr.bf16.mxu0 0
    %234 = vmatpush1.bf16.msra.mxu0 %v197
    %235 = vmatprep.subr.bf16.mxu0 0
    %236 = vmatpush1.bf16.msra.mxu0 %v196
    %237 = vmatprep.subr.bf16.mxu0 0
    %238 = vmatpush1.bf16.msra.mxu0 %v195
    %239 = vmatprep.subr.bf16.mxu0 0
    %240 = vmatpush1.bf16.msra.mxu0 %v194
    %241 = vmatprep.subr.bf16.mxu0 0
    %242 = vmatpush1.bf16.msra.mxu0 %v193
    %243 = vmatprep.subr.bf16.mxu0 0
    %244 = vmatpush1.bf16.msra.mxu0 %v192
    %245 = vmatprep.subr.bf16.mxu0 0
    %246 = vmatpush1.bf16.msra.mxu0 %v191
    %247 = vmatprep.subr.bf16.mxu0 0
    %248 = vmatpush1.bf16.msra.mxu0 %v190
    %249 = vmatprep.subr.bf16.mxu0 0
    %250 = vmatpush2.bf16.msra.mxu0 0
    %251 = vmatprep.subr.bf16.mxu0 0
    %252 = vmatpush2.bf16.msra.mxu0 0
    %253 = vmatprep.subr.bf16.mxu0 0
    %254 = vmatpush2.bf16.msra.mxu0 0
    %255 = vmatprep.subr.bf16.mxu0 0
    %256 = vmatpush2.bf16.msra.mxu0 0
    %257 = vmatprep.subr.bf16.mxu0 0
    %258 = vmatpush2.bf16.msra.mxu0 0
    %259 = vmatprep.subr.bf16.mxu0 0
    %260 = vmatpush2.bf16.msra.mxu0 0
    %261 = vmatprep.subr.bf16.mxu0 0
    %262 = vmatpush2.bf16.msra.mxu0 0
    %263 = vmatprep.subr.bf16.mxu0 0
    %264 = vmatpush2.bf16.msra.mxu0 %v198
    %265 = vmatprep.mubr.bf16.mxu0 %v210
    %266 = vmatmul.mubr.bf16.gmra.mxu0 %v130
    %v267 = vpop.f32.mrf.mxu0
    %v268 = vadd.f32 %v80, %v267
    %v269 = vpop.f32.mrf.mxu0
    %v270 = vpop.f32.mrf.mxu0
    %v271 = vadd.f32 %v80, %v270
    %v272 = vpop.f32.mrf.mxu0
    %273 = vmatprep.mubr.bf16.mxu0 %v213
    %274 = vmatmul.mubr.bf16.gmra.mxu0 %v132
    %v275 = vpop.f32.mrf.mxu0
    %v276 = vadd.f32 %v80, %v275
    %v277 = vpop.f32.mrf.mxu0
    %v278 = vpop.f32.mrf.mxu0
    %v279 = vadd.f32 %v80, %v278
    %v280 = vpop.f32.mrf.mxu0
    %281 = vmatprep.mubr.bf16.mxu0 %v216
    %282 = vmatmul.mubr.bf16.gmra.mxu0 %v134
    %v283 = vpop.f32.mrf.mxu0
    %v284 = vadd.f32 %v80, %v283
    %v285 = vpop.f32.mrf.mxu0
    %v286 = vpop.f32.mrf.mxu0
    %v287 = vadd.f32 %v80, %v286
    %v288 = vpop.f32.mrf.mxu0
    %289 = vmatprep.mubr.bf16.mxu0 %v219
    %290 = vmatmul.mubr.bf16.gmra.mxu0 %v136
    %v291 = vpop.f32.mrf.mxu0
    %v292 = vadd.f32 %v80, %v291
    %v293 = vpop.f32.mrf.mxu0
    %v294 = vpop.f32.mrf.mxu0
    %v295 = vadd.f32 %v80, %v294
    %v296 = vpop.f32.mrf.mxu0
    %297 = vmatprep.mubr.bf16.mxu0 %v222
    %298 = vmatmul.mubr.bf16.gmra.mxu0 %v138
    %v299 = vpop.f32.mrf.mxu0
    %v300 = vadd.f32 %v80, %v299
    %v301 = vpop.f32.mrf.mxu0
    %v302 = vpop.f32.mrf.mxu0
    %v303 = vadd.f32 %v80, %v302
    %v304 = vpop.f32.mrf.mxu0
    %305 = vmatprep.mubr.bf16.mxu0 %v225
    %306 = vmatmul.mubr.bf16.gmra.mxu0 %v140
    %v307 = vpop.f32.mrf.mxu0
    %v308 = vadd.f32 %v80, %v307
    %v309 = vpop.f32.mrf.mxu0
    %v310 = vpop.f32.mrf.mxu0
    %v311 = vadd.f32 %v80, %v310
    %v312 = vpop.f32.mrf.mxu0
    %313 = vmatprep.mubr.bf16.mxu0 %v228
    %314 = vmatmul.mubr.bf16.gmra.mxu0 %v142
    %v315 = vpop.f32.mrf.mxu0
    %v316 = vadd.f32 %v80, %v315
    %v317 = vpop.f32.mrf.mxu0
    %v318 = vpop.f32.mrf.mxu0
    %v319 = vadd.f32 %v80, %v318
    %v320 = vpop.f32.mrf.mxu0
    %321 = vmatprep.mubr.bf16.mxu0 %v231
    %322 = vmatmul.mubr.bf16.gmra.mxu0 %v144
    %v323 = vpop.f32.mrf.mxu0
    %v324 = vadd.f32 %v80, %v323
    %v325 = vpop.f32.mrf.mxu0
    %v326 = vpop.f32.mrf.mxu0
    %v327 = vadd.f32 %v80, %v326
    %v328 = vpop.f32.mrf.mxu0
    %329 = vdwg.mxu0
    %v330 = vmax.f32 %v268, 0.0
    %v331 = vmax.f32 %v271, 0.0
    %v332 = vmax.f32 %v276, 0.0
    %v333 = vmax.f32 %v279, 0.0
    %v334 = vmax.f32 %v284, 0.0
    %v335 = vmax.f32 %v287, 0.0
    %v336 = vmax.f32 %v292, 0.0
    %v337 = vmax.f32 %v295, 0.0
    %v338 = vmax.f32 %v300, 0.0
    %v339 = vmax.f32 %v303, 0.0
    %v340 = vmax.f32 %v308, 0.0
    %v341 = vmax.f32 %v311, 0.0
    %v342 = vmax.f32 %v316, 0.0
    %v343 = vmax.f32 %v319, 0.0
    %v344 = vmax.f32 %v324, 0.0
    %v345 = vmax.f32 %v327, 0.0
    %v346 = vpack.c.bf16 %v331, %v330
    %v347 = vpack.c.bf16 %v333, %v332
    %v348 = vpack.c.bf16 %v335, %v334
    %v349 = vpack.c.bf16 %v337, %v336
    %v350 = vpack.c.bf16 %v339, %v338
    %v351 = vpack.c.bf16 %v341, %v340
    %v352 = vpack.c.bf16 %v343, %v342
    %v353 = vpack.c.bf16 %v345, %v344
    %v362 = vunpack.c.l.b16 %v346
    %v363 = vunpack.c.h.b16 %v346
    %v364 = vunpack.c.l.b16 %v347
    %v365 = vunpack.c.h.b16 %v347
    %v366 = vunpack.c.l.b16 %v348
    %v367 = vunpack.c.h.b16 %v348
    %v368 = vunpack.c.l.b16 %v349
    %v369 = vunpack.c.h.b16 %v349
    %v370 = vunpack.c.l.b16 %v350
    %v371 = vunpack.c.h.b16 %v350
    %v372 = vunpack.c.l.b16 %v351
    %v373 = vunpack.c.h.b16 %v351
    %v374 = vunpack.c.l.b16 %v352
    %v375 = vunpack.c.h.b16 %v352
    %v376 = vunpack.c.l.b16 %v353
    %v377 = vunpack.c.h.b16 %v353
    %v378 = vpack.c.b16 %v362, %v362
    %v379 = vpack.c.b16 %v363, %v363
    %v380 = vpack.c.b16 %v364, %v364
    %v381 = vpack.c.b16 %v365, %v365
    %v382 = vpack.c.b16 %v366, %v366
    %v383 = vpack.c.b16 %v367, %v367
    %v384 = vpack.c.b16 %v368, %v368
    %v385 = vpack.c.b16 %v369, %v369
    %v386 = vpack.c.b16 %v370, %v370
    %v387 = vpack.c.b16 %v371, %v371
    %v388 = vpack.c.b16 %v372, %v372
    %v389 = vpack.c.b16 %v373, %v373
    %v390 = vpack.c.b16 %v374, %v374
    %v391 = vpack.c.b16 %v375, %v375
    %v392 = vpack.c.b16 %v376, %v376
    %v393 = vpack.c.b16 %v377, %v377
    %410 = vst [vmem:[%s3] sm:$0xf] %v378
    %411 = vst [vmem:[%s3 + $0x4] sm:$0xf] %v379
    %412 = vst [vmem:[%s3 + $0x8] sm:$0xf] %v380
    %413 = vst [vmem:[%s3 + $0xc] sm:$0xf] %v381
    %414 = vst [vmem:[%s3 + $0x10] sm:$0xf] %v382
    %415 = vst [vmem:[%s3 + $0x14] sm:$0xf] %v383
    %416 = vst [vmem:[%s3 + $0x18] sm:$0xf] %v384
    %417 = vst [vmem:[%s3 + $0x1c] sm:$0xf] %v385
    %418 = vst [vmem:[%s3 + $0x20] sm:$0xf] %v386
    %419 = vst [vmem:[%s3 + $0x24] sm:$0xf] %v387
    %420 = vst [vmem:[%s3 + $0x28] sm:$0xf] %v388
    %421 = vst [vmem:[%s3 + $0x2c] sm:$0xf] %v389
    %422 = vst [vmem:[%s3 + $0x30] sm:$0xf] %v390
    %423 = vst [vmem:[%s3 + $0x34] sm:$0xf] %v391
    %424 = vst [vmem:[%s3 + $0x38] sm:$0xf] %v392
    %425 = vst [vmem:[%s3 + $0x3c] sm:$0xf] %v393
    // Predicated region
    $region22: #{autoencoder_forward.7} parent=1 // pred_check
      _
    $region23: #{autoencoder_forward.7} parent=1 // pred_check_branch
      %427 = sbr.rel (0) target = $region25
    $region24: #{autoencoder_forward.7} parent=1 // pred_region
      _
    $region25: #{autoencoder_forward.7} parent=1 // pred_fallthru
      _
    // Predicated region
    $region26: #{autoencoder_forward.7} parent=1 // pred_check
      _
    $region27: #{autoencoder_forward.7} parent=1 // pred_check_branch
      %429 = sbr.rel (0) target = $region29
    $region28: #{autoencoder_forward.7} parent=1 // pred_region
      _
    $region29: #{autoencoder_forward.7} parent=1 // pred_fallthru
      _
    %430 = vsyncpa [#allocation3], 1
    %431 = vsyncpa [#allocation5], 1

// kernel: autoencoder_forward.8
$region0: #{autoencoder_forward.8}
  #allocation0 [shape = 'u32[]', space=smem, size = 0x4, offset = 0x4, fixed_abs, tag = 'smem constant byte address 0x4 - core index']
  #allocation1 [shape = 'u32[144,128]{1,0:T(1,128)}', space=vmem, size = 0x12000, scoped, tag = 'internal scratch']
  %s0 = inlined_call_operand.vmem [shape: bf16[8,1568], index: 0, kind: input, shape index: {}]
  %s1 = inlined_call_operand.hbm [shape: bf16[1568,128], index: 1, kind: input, shape index: {}]
  %s2 = inlined_call_operand.hbm [shape: f32[1,128], index: 2, kind: input, shape index: {}]
  %s3 = inlined_call_operand.vmem [shape: bf16[8,128], index: 3, kind: output, shape index: {}]
  %s4 = sld [smem:[#allocation0]]
  $region30: #{autoencoder_forward.8} parent=0
    _
  %s6 = ssub.s32 1, %s4
  %s7 = scalar_select 0, %s6, %s4
  $region1: #{autoencoder_forward.8} parent=0
    #allocation2 [shape = 'u8[401408]{0}', space=vmem, size = 0x62000, scoped, tag = 'input window, operand 1, single buffered']
    #allocation3 [shape = 's32[1]{0}', space=sflag, size = 0x4, scoped, tag = 'scoped memory for autoencoder_forward.8']
    #allocation4 [shape = 'u8[512]{0}', space=vmem, size = 0x400, scoped, tag = 'input window, operand 2, single buffered']
    #allocation5 [shape = 's32[1]{0}', space=sflag, size = 0x4, scoped, tag = 'scoped memory for autoencoder_forward.8']
    %8 = vsyncpa [#allocation3], 0
    %9 = vsyncpa [#allocation5], 0
    // Predicated region
    $region2: #{autoencoder_forward.8} parent=1 // pred_check
      _
    $region3: #{autoencoder_forward.8} parent=1 // pred_check_branch
      %11 = sbr.rel (0) target = $region5
    $region4: #{autoencoder_forward.8} parent=1 // pred_region
      _
    $region5: #{autoencoder_forward.8} parent=1 // pred_fallthru
      _
    // Predicated region
    $region6: #{autoencoder_forward.8} parent=1 // pred_check
      _
    $region7: #{autoencoder_forward.8} parent=1 // pred_check_branch
      %13 = sbr.rel (0) target = $region9
    $region8: #{autoencoder_forward.8} parent=1 // pred_region
      %s15 = ssub.s32 12544, 12544
      %16 = vsyncadd [#allocation3], %s15
      %s17 = sshll.u32 [#allocation2], 4
      %s18 = int_to_ptr.vmem [resolvable:$true] %s17
      %23 = dma.hbm_to_vmem [thread:$0]  %s1, 12544, %s18, [#allocation3], 64, 64, 4
    $region9: #{autoencoder_forward.8} parent=1 // pred_fallthru
      _
    // Predicated region
    $region10: #{autoencoder_forward.8} parent=1 // pred_check
      _
    $region11: #{autoencoder_forward.8} parent=1 // pred_check_branch
      %25 = sbr.rel (0) target = $region13
    $region12: #{autoencoder_forward.8} parent=1 // pred_region
      %s27 = ssub.s32 16, 16
      %28 = vsyncadd [#allocation5], %s27
      %s30 = sshll.u32 [#allocation4], 4
      %s31 = int_to_ptr.vmem [resolvable:$true] %s30
      %33 = dma.hbm_to_vmem [thread:$0]  %s2, 16, %s31, [#allocation5]
    $region13: #{autoencoder_forward.8} parent=1 // pred_fallthru
      _
    // Predicated region
    $region14: #{autoencoder_forward.8} parent=1 // pred_check
      _
    $region15: #{autoencoder_forward.8} parent=1 // pred_check_branch
      %35 = sbr.rel (0) target = $region17
    $region16: #{autoencoder_forward.8} parent=1 // pred_region
      %36 = dma.done [#allocation3], 12544
    $region17: #{autoencoder_forward.8} parent=1 // pred_fallthru
      _
    // Predicated region
    $region18: #{autoencoder_forward.8} parent=1 // pred_check
      _
    $region19: #{autoencoder_forward.8} parent=1 // pred_check_branch
      %38 = sbr.rel (0) target = $region21
    $region20: #{autoencoder_forward.8} parent=1 // pred_region
      %39 = dma.done [#allocation5], 16
    $region21: #{autoencoder_forward.8} parent=1 // pred_fallthru
      _
    %v41 = vld [vmem:[%s0] sm:$0xff]
    %v42 = vld [vmem:[%s0 + $0x8] sm:$0xff]
    %v43 = vld [vmem:[%s0 + $0x10] sm:$0xff]
    %v44 = vld [vmem:[%s0 + $0x18] sm:$0xff]
    %v45 = vld [vmem:[%s0 + $0x20] sm:$0xff]
    %v46 = vld [vmem:[%s0 + $0x28] sm:$0xff]
    %v47 = vld [vmem:[%s0 + $0x30] sm:$0xf]
    %v48 = vld [vmem:[#allocation2] sm:$0xf]
    %v49 = vld [vmem:[#allocation2 + $0x4] sm:$0xf]
    %v50 = vld [vmem:[#allocation2 + $0x8] sm:$0xf]
    %v51 = vld [vmem:[#allocation2 + $0xc] sm:$0xf]
    %v52 = vld [vmem:[#allocation2 + $0x10] sm:$0xf]
    %v53 = vld [vmem:[#allocation2 + $0x14] sm:$0xf]
    %v54 = vld [vmem:[#allocation2 + $0x18] sm:$0xf]
    %v55 = vld [vmem:[#allocation2 + $0x1c] sm:$0xf]
    %v56 = vld [vmem:[#allocation2 + $0x20] sm:$0xf]
    %v57 = vld [vmem:[#allocation2 + $0x24] sm:$0xf]
    %v58 = vld [vmem:[#allocation2 + $0x28] sm:$0xf]
    %v59 = vld [vmem:[#allocation2 + $0x2c] sm:$0xf]
    %v60 = vld [vmem:[#allocation2 + $0x30] sm:$0xf]
    %v61 = vld [vmem:[#allocation2 + $0x34] sm:$0xf]
    %v62 = vld [vmem:[#allocation2 + $0x38] sm:$0xf]
    %v63 = vld [vmem:[#allocation2 + $0x3c] sm:$0xf]
    %v64 = vld [vmem:[#allocation2 + $0x40] sm:$0xf]
    %v65 = vld [vmem:[#allocation2 + $0x44] sm:$0xf]
    %v66 = vld [vmem:[#allocation2 + $0x48] sm:$0xf]
    %v67 = vld [vmem:[#allocation2 + $0x4c] sm:$0xf]
    %v68 = vld [vmem:[#allocation2 + $0x50] sm:$0xf]
    %v69 = vld [vmem:[#allocation2 + $0x54] sm:$0xf]
    %v70 = vld [vmem:[#allocation2 + $0x58] sm:$0xf]
    %v71 = vld [vmem:[#allocation2 + $0x5c] sm:$0xf]
    %v72 = vld [vmem:[#allocation2 + $0x60] sm:$0xf]
    %v73 = vld [vmem:[#allocation2 + $0x64] sm:$0xf]
    %v74 = vld [vmem:[#allocation2 + $0x68] sm:$0xf]
    %v75 = vld [vmem:[#allocation2 + $0x6c] sm:$0xf]
    %v76 = vld [vmem:[#allocation2 + $0x70] sm:$0xf]
    %v77 = vld [vmem:[#allocation2 + $0x74] sm:$0xf]
    %v78 = vld [vmem:[#allocation2 + $0x78] sm:$0xf]
    %v79 = vld [vmem:[#allocation2 + $0x7c] sm:$0xf]
    %v80 = vld [vmem:[#allocation2 + $0x80] sm:$0xf]
    %v81 = vld [vmem:[#allocation2 + $0x84] sm:$0xf]
    %v82 = vld [vmem:[#allocation2 + $0x88] sm:$0xf]
    %v83 = vld [vmem:[#allocation2 + $0x8c] sm:$0xf]
    %v84 = vld [vmem:[#allocation2 + $0x90] sm:$0xf]
    %v85 = vld [vmem:[#allocation2 + $0x94] sm:$0xf]
    %v86 = vld [vmem:[#allocation2 + $0x98] sm:$0xf]
    %v87 = vld [vmem:[#allocation2 + $0x9c] sm:$0xf]
    %v88 = vld [vmem:[#allocation2 + $0xa0] sm:$0xf]
    %v89 = vld [vmem:[#allocation2 + $0xa4] sm:$0xf]
    %v90 = vld [vmem:[#allocation2 + $0xa8] sm:$0xf]
    %v91 = vld [vmem:[#allocation2 + $0xac] sm:$0xf]
    %v92 = vld [vmem:[#allocation2 + $0xb0] sm:$0xf]
    %v93 = vld [vmem:[#allocation2 + $0xb4] sm:$0xf]
    %v94 = vld [vmem:[#allocation2 + $0xb8] sm:$0xf]
    %v95 = vld [vmem:[#allocation2 + $0xbc] sm:$0xf]
    %v96 = vld [vmem:[#allocation2 + $0xc0] sm:$0xf]
    %v97 = vld [vmem:[#allocation2 + $0xc4] sm:$0xf]
    %v98 = vld [vmem:[#allocation2 + $0xc8] sm:$0xf]
    %v99 = vld [vmem:[#allocation2 + $0xcc] sm:$0xf]
    %v100 = vld [vmem:[#allocation2 + $0xd0] sm:$0xf]
    %v101 = vld [vmem:[#allocation2 + $0xd4] sm:$0xf]
    %v102 = vld [vmem:[#allocation2 + $0xd8] sm:$0xf]
    %v103 = vld [vmem:[#allocation2 + $0xdc] sm:$0xf]
    %v104 = vld [vmem:[#allocation2 + $0xe0] sm:$0xf]
    %v105 = vld [vmem:[#allocation2 + $0xe4] sm:$0xf]
    %v106 = vld [vmem:[#allocation2 + $0xe8] sm:$0xf]
    %v107 = vld [vmem:[#allocation2 + $0xec] sm:$0xf]
    %v108 = vld [vmem:[#allocation2 + $0xf0] sm:$0xf]
    %v109 = vld [vmem:[#allocation2 + $0xf4] sm:$0xf]
    %v110 = vld [vmem:[#allocation2 + $0xf8] sm:$0xf]
    %v111 = vld [vmem:[#allocation2 + $0xfc] sm:$0xf]
    %v112 = vld [vmem:[#allocation2 + $0x100] sm:$0xf]
    %v113 = vld [vmem:[#allocation2 + $0x104] sm:$0xf]
    %v114 = vld [vmem:[#allocation2 + $0x108] sm:$0xf]
    %v115 = vld [vmem:[#allocation2 + $0x10c] sm:$0xf]
    %v116 = vld [vmem:[#allocation2 + $0x110] sm:$0xf]
    %v117 = vld [vmem:[#allocation2 + $0x114] sm:$0xf]
    %v118 = vld [vmem:[#allocation2 + $0x118] sm:$0xf]
    %v119 = vld [vmem:[#allocation2 + $0x11c] sm:$0xf]
    %v120 = vld [vmem:[#allocation2 + $0x120] sm:$0xf]
    %v121 = vld [vmem:[#allocation2 + $0x124] sm:$0xf]
    %v122 = vld [vmem:[#allocation2 + $0x128] sm:$0xf]
    %v123 = vld [vmem:[#allocation2 + $0x12c] sm:$0xf]
    %v124 = vld [vmem:[#allocation2 + $0x130] sm:$0xf]
    %v125 = vld [vmem:[#allocation2 + $0x134] sm:$0xf]
    %v126 = vld [vmem:[#allocation2 + $0x138] sm:$0xf]
    %v127 = vld [vmem:[#allocation2 + $0x13c] sm:$0xf]
    %v128 = vld [vmem:[#allocation2 + $0x140] sm:$0xf]
    %v129 = vld [vmem:[#allocation2 + $0x144] sm:$0xf]
    %v130 = vld [vmem:[#allocation2 + $0x148] sm:$0xf]
    %v131 = vld [vmem:[#allocation2 + $0x14c] sm:$0xf]
    %v132 = vld [vmem:[#allocation2 + $0x150] sm:$0xf]
    %v133 = vld [vmem:[#allocation2 + $0x154] sm:$0xf]
    %v134 = vld [vmem:[#allocation2 + $0x158] sm:$0xf]
    %v135 = vld [vmem:[#allocation2 + $0x15c] sm:$0xf]
    %v136 = vld [vmem:[#allocation2 + $0x160] sm:$0xf]
    %v137 = vld [vmem:[#allocation2 + $0x164] sm:$0xf]
    %v138 = vld [vmem:[#allocation2 + $0x168] sm:$0xf]
    %v139 = vld [vmem:[#allocation2 + $0x16c] sm:$0xf]
    %v140 = vld [vmem:[#allocation2 + $0x170] sm:$0xf]
    %v141 = vld [vmem:[#allocation2 + $0x174] sm:$0xf]
    %v142 = vld [vmem:[#allocation2 + $0x178] sm:$0xf]
    %v143 = vld [vmem:[#allocation2 + $0x17c] sm:$0xf]
    %v144 = vld [vmem:[#allocation2 + $0x180] sm:$0xf]
    %v145 = vld [vmem:[#allocation2 + $0x184] sm:$0xf]
    %v146 = vld [vmem:[#allocation2 + $0x188] sm:$0xf]
    %v147 = vld [vmem:[#allocation2 + $0x18c] sm:$0xf]
    %v148 = vld [vmem:[#allocation2 + $0x190] sm:$0xf]
    %v149 = vld [vmem:[#allocation2 + $0x194] sm:$0xf]
    %v150 = vld [vmem:[#allocation2 + $0x198] sm:$0xf]
    %v151 = vld [vmem:[#allocation2 + $0x19c] sm:$0xf]
    %v152 = vld [vmem:[#allocation2 + $0x1a0] sm:$0xf]
    %v153 = vld [vmem:[#allocation2 + $0x1a4] sm:$0xf]
    %v154 = vld [vmem:[#allocation2 + $0x1a8] sm:$0xf]
    %v155 = vld [vmem:[#allocation2 + $0x1ac] sm:$0xf]
    %v156 = vld [vmem:[#allocation2 + $0x1b0] sm:$0xf]
    %v157 = vld [vmem:[#allocation2 + $0x1b4] sm:$0xf]
    %v158 = vld [vmem:[#allocation2 + $0x1b8] sm:$0xf]
    %v159 = vld [vmem:[#allocation2 + $0x1bc] sm:$0xf]
    %v160 = vld [vmem:[#allocation2 + $0x1c0] sm:$0xf]
    %v161 = vld [vmem:[#allocation2 + $0x1c4] sm:$0xf]
    %v162 = vld [vmem:[#allocation2 + $0x1c8] sm:$0xf]
    %v163 = vld [vmem:[#allocation2 + $0x1cc] sm:$0xf]
    %v164 = vld [vmem:[#allocation2 + $0x1d0] sm:$0xf]
    %v165 = vld [vmem:[#allocation2 + $0x1d4] sm:$0xf]
    %v166 = vld [vmem:[#allocation2 + $0x1d8] sm:$0xf]
    %v167 = vld [vmem:[#allocation2 + $0x1dc] sm:$0xf]
    %v168 = vld [vmem:[#allocation2 + $0x1e0] sm:$0xf]
    %v169 = vld [vmem:[#allocation2 + $0x1e4] sm:$0xf]
    %v170 = vld [vmem:[#allocation2 + $0x1e8] sm:$0xf]
    %v171 = vld [vmem:[#allocation2 + $0x1ec] sm:$0xf]
    %v172 = vld [vmem:[#allocation2 + $0x1f0] sm:$0xf]
    %v173 = vld [vmem:[#allocation2 + $0x1f4] sm:$0xf]
    %v174 = vld [vmem:[#allocation2 + $0x1f8] sm:$0xf]
    %v175 = vld [vmem:[#allocation2 + $0x1fc] sm:$0xf]
    %v176 = vld [vmem:[#allocation2 + $0x200] sm:$0xf]
    %v177 = vld [vmem:[#allocation2 + $0x204] sm:$0xf]
    %v178 = vld [vmem:[#allocation2 + $0x208] sm:$0xf]
    %v179 = vld [vmem:[#allocation2 + $0x20c] sm:$0xf]
    %v180 = vld [vmem:[#allocation2 + $0x210] sm:$0xf]
    %v181 = vld [vmem:[#allocation2 + $0x214] sm:$0xf]
    %v182 = vld [vmem:[#allocation2 + $0x218] sm:$0xf]
    %v183 = vld [vmem:[#allocation2 + $0x21c] sm:$0xf]
    %v184 = vld [vmem:[#allocation2 + $0x220] sm:$0xf]
    %v185 = vld [vmem:[#allocation2 + $0x224] sm:$0xf]
    %v186 = vld [vmem:[#allocation2 + $0x228] sm:$0xf]
    %v187 = vld [vmem:[#allocation2 + $0x22c] sm:$0xf]
    %v188 = vld [vmem:[#allocation2 + $0x230] sm:$0xf]
    %v189 = vld [vmem:[#allocation2 + $0x234] sm:$0xf]
    %v190 = vld [vmem:[#allocation2 + $0x238] sm:$0xf]
    %v191 = vld [vmem:[#allocation2 + $0x23c] sm:$0xf]
    %v192 = vld [vmem:[#allocation2 + $0x240] sm:$0xf]
    %v193 = vld [vmem:[#allocation2 + $0x244] sm:$0xf]
    %v194 = vld [vmem:[#allocation2 + $0x248] sm:$0xf]
    %v195 = vld [vmem:[#allocation2 + $0x24c] sm:$0xf]
    %v196 = vld [vmem:[#allocation2 + $0x250] sm:$0xf]
    %v197 = vld [vmem:[#allocation2 + $0x254] sm:$0xf]
    %v198 = vld [vmem:[#allocation2 + $0x258] sm:$0xf]
    %v199 = vld [vmem:[#allocation2 + $0x25c] sm:$0xf]
    %v200 = vld [vmem:[#allocation2 + $0x260] sm:$0xf]
    %v201 = vld [vmem:[#allocation2 + $0x264] sm:$0xf]
    %v202 = vld [vmem:[#allocation2 + $0x268] sm:$0xf]
    %v203 = vld [vmem:[#allocation2 + $0x26c] sm:$0xf]
    %v204 = vld [vmem:[#allocation2 + $0x270] sm:$0xf]
    %v205 = vld [vmem:[#allocation2 + $0x274] sm:$0xf]
    %v206 = vld [vmem:[#allocation2 + $0x278] sm:$0xf]
    %v207 = vld [vmem:[#allocation2 + $0x27c] sm:$0xf]
    %v208 = vld [vmem:[#allocation2 + $0x280] sm:$0xf]
    %v209 = vld [vmem:[#allocation2 + $0x284] sm:$0xf]
    %v210 = vld [vmem:[#allocation2 + $0x288] sm:$0xf]
    %v211 = vld [vmem:[#allocation2 + $0x28c] sm:$0xf]
    %v212 = vld [vmem:[#allocation2 + $0x290] sm:$0xf]
    %v213 = vld [vmem:[#allocation2 + $0x294] sm:$0xf]
    %v214 = vld [vmem:[#allocation2 + $0x298] sm:$0xf]
    %v215 = vld [vmem:[#allocation2 + $0x29c] sm:$0xf]
    %v216 = vld [vmem:[#allocation2 + $0x2a0] sm:$0xf]
    %v217 = vld [vmem:[#allocation2 + $0x2a4] sm:$0xf]
    %v218 = vld [vmem:[#allocation2 + $0x2a8] sm:$0xf]
    %v219 = vld [vmem:[#allocation2 + $0x2ac] sm:$0xf]
    %v220 = vld [vmem:[#allocation2 + $0x2b0] sm:$0xf]
    %v221 = vld [vmem:[#allocation2 + $0x2b4] sm:$0xf]
    %v222 = vld [vmem:[#allocation2 + $0x2b8] sm:$0xf]
    %v223 = vld [vmem:[#allocation2 + $0x2bc] sm:$0xf]
    %v224 = vld [vmem:[#allocation2 + $0x2c0] sm:$0xf]
    %v225 = vld [vmem:[#allocation2 + $0x2c4] sm:$0xf]
    %v226 = vld [vmem:[#allocation2 + $0x2c8] sm:$0xf]
    %v227 = vld [vmem:[#allocation2 + $0x2cc] sm:$0xf]
    %v228 = vld [vmem:[#allocation2 + $0x2d0] sm:$0xf]
    %v229 = vld [vmem:[#allocation2 + $0x2d4] sm:$0xf]
    %v230 = vld [vmem:[#allocation2 + $0x2d8] sm:$0xf]
    %v231 = vld [vmem:[#allocation2 + $0x2dc] sm:$0xf]
    %v232 = vld [vmem:[#allocation2 + $0x2e0] sm:$0xf]
    %v233 = vld [vmem:[#allocation2 + $0x2e4] sm:$0xf]
    %v234 = vld [vmem:[#allocation2 + $0x2e8] sm:$0xf]
    %v235 = vld [vmem:[#allocation2 + $0x2ec] sm:$0xf]
    %v236 = vld [vmem:[#allocation2 + $0x2f0] sm:$0xf]
    %v237 = vld [vmem:[#allocation2 + $0x2f4] sm:$0xf]
    %v238 = vld [vmem:[#allocation2 + $0x2f8] sm:$0xf]
    %v239 = vld [vmem:[#allocation2 + $0x2fc] sm:$0xf]
    %v240 = vld [vmem:[#allocation2 + $0x300] sm:$0xf]
    %v241 = vld [vmem:[#allocation2 + $0x304] sm:$0xf]
    %v242 = vld [vmem:[#allocation2 + $0x308] sm:$0xf]
    %v243 = vld [vmem:[#allocation2 + $0x30c] sm:$0xf]
    %v244 = vld [vmem:[#allocation4] sm:$0x1]
    %v246 = vlaneseq
    %v247 = vshrl.u32 %v246, 7
    %v248 = vsub.s32 0, %v247
    %v249 = vrot.slane %v244, %v248
    %v258 = vunpack.c.l.b16 %v41
    %v259 = vunpack.c.h.b16 %v41
    %v260 = vunpack.c.l.b16 %v42
    %v261 = vunpack.c.h.b16 %v42
    %v262 = vunpack.c.l.b16 %v43
    %v263 = vunpack.c.h.b16 %v43
    %v264 = vunpack.c.l.b16 %v44
    %v265 = vunpack.c.h.b16 %v44
    %v266 = vunpack.c.l.b16 %v45
    %v267 = vunpack.c.h.b16 %v45
    %v268 = vunpack.c.l.b16 %v46
    %v269 = vunpack.c.h.b16 %v46
    %v270 = vunpack.c.l.b16 %v47
    %v271 = vpack.c.b16 %v258, %v258
    %v272 = vpack.c.b16 %v259, %v259
    %v273 = vpack.c.b16 %v260, %v260
    %v274 = vpack.c.b16 %v261, %v261
    %v275 = vpack.c.b16 %v262, %v262
    %v276 = vpack.c.b16 %v263, %v263
    %v277 = vpack.c.b16 %v264, %v264
    %v278 = vpack.c.b16 %v265, %v265
    %v279 = vpack.c.b16 %v266, %v266
    %v280 = vpack.c.b16 %v267, %v267
    %v281 = vpack.c.b16 %v268, %v268
    %v282 = vpack.c.b16 %v269, %v269
    %v283 = vpack.c.b16 %v270, %v270
    %v492 = vunpack.c.l.b16 %v48
    %v493 = vunpack.c.l.b16 %v49
    %v494 = vunpack.c.l.b16 %v50
    %v495 = vunpack.c.l.b16 %v51
    %v496 = vunpack.c.l.b16 %v52
    %v497 = vunpack.c.l.b16 %v53
    %v498 = vunpack.c.l.b16 %v54
    %v499 = vunpack.c.l.b16 %v55
    %v500 = vunpack.c.l.b16 %v56
    %v501 = vunpack.c.l.b16 %v57
    %v502 = vunpack.c.l.b16 %v58
    %v503 = vunpack.c.l.b16 %v59
    %v504 = vunpack.c.l.b16 %v60
    %v505 = vunpack.c.l.b16 %v61
    %v506 = vunpack.c.l.b16 %v62
    %v507 = vunpack.c.l.b16 %v63
    %v508 = vunpack.c.l.b16 %v64
    %v509 = vunpack.c.l.b16 %v65
    %v510 = vunpack.c.l.b16 %v66
    %v511 = vunpack.c.l.b16 %v67
    %v512 = vunpack.c.l.b16 %v68
    %v513 = vunpack.c.l.b16 %v69
    %v514 = vunpack.c.l.b16 %v70
    %v515 = vunpack.c.l.b16 %v71
    %v516 = vunpack.c.l.b16 %v72
    %v517 = vunpack.c.l.b16 %v73
    %v518 = vunpack.c.l.b16 %v74
    %v519 = vunpack.c.l.b16 %v75
    %v520 = vunpack.c.l.b16 %v76
    %v521 = vunpack.c.l.b16 %v77
    %v522 = vunpack.c.l.b16 %v78
    %v523 = vunpack.c.l.b16 %v79
    %v524 = vunpack.c.l.b16 %v80
    %v525 = vunpack.c.l.b16 %v81
    %v526 = vunpack.c.l.b16 %v82
    %v527 = vunpack.c.l.b16 %v83
    %v528 = vunpack.c.l.b16 %v84
    %v529 = vunpack.c.l.b16 %v85
    %v530 = vunpack.c.l.b16 %v86
    %v531 = vunpack.c.l.b16 %v87
    %v532 = vunpack.c.l.b16 %v88
    %v533 = vunpack.c.l.b16 %v89
    %v534 = vunpack.c.l.b16 %v90
    %v535 = vunpack.c.l.b16 %v91
    %v536 = vunpack.c.l.b16 %v92
    %v537 = vunpack.c.l.b16 %v93
    %v538 = vunpack.c.l.b16 %v94
    %v539 = vunpack.c.l.b16 %v95
    %v540 = vunpack.c.l.b16 %v96
    %v541 = vunpack.c.l.b16 %v97
    %v542 = vunpack.c.l.b16 %v98
    %v543 = vunpack.c.l.b16 %v99
    %v544 = vunpack.c.l.b16 %v100
    %v545 = vunpack.c.l.b16 %v101
    %v546 = vunpack.c.l.b16 %v102
    %v547 = vunpack.c.l.b16 %v103
    %v548 = vunpack.c.l.b16 %v104
    %v549 = vunpack.c.l.b16 %v105
    %v550 = vunpack.c.l.b16 %v106
    %v551 = vunpack.c.l.b16 %v107
    %v552 = vunpack.c.l.b16 %v108
    %v553 = vunpack.c.l.b16 %v109
    %v554 = vunpack.c.l.b16 %v110
    %v555 = vunpack.c.l.b16 %v111
    %v556 = vunpack.c.l.b16 %v112
    %v557 = vunpack.c.l.b16 %v113
    %v558 = vunpack.c.l.b16 %v114
    %v559 = vunpack.c.l.b16 %v115
    %v560 = vunpack.c.l.b16 %v116
    %v561 = vunpack.c.l.b16 %v117
    %v562 = vunpack.c.l.b16 %v118
    %v563 = vunpack.c.l.b16 %v119
    %v564 = vunpack.c.l.b16 %v120
    %v565 = vunpack.c.l.b16 %v121
    %v566 = vunpack.c.l.b16 %v122
    %v567 = vunpack.c.l.b16 %v123
    %v568 = vunpack.c.l.b16 %v124
    %v569 = vunpack.c.l.b16 %v125
    %v570 = vunpack.c.l.b16 %v126
    %v571 = vunpack.c.l.b16 %v127
    %v572 = vunpack.c.l.b16 %v128
    %v573 = vunpack.c.l.b16 %v129
    %v574 = vunpack.c.l.b16 %v130
    %v575 = vunpack.c.l.b16 %v131
    %v576 = vunpack.c.l.b16 %v132
    %v577 = vunpack.c.l.b16 %v133
    %v578 = vunpack.c.l.b16 %v134
    %v579 = vunpack.c.l.b16 %v135
    %v580 = vunpack.c.l.b16 %v136
    %v581 = vunpack.c.l.b16 %v137
    %v582 = vunpack.c.l.b16 %v138
    %v583 = vunpack.c.l.b16 %v139
    %v584 = vunpack.c.l.b16 %v140
    %v585 = vunpack.c.l.b16 %v141
    %v586 = vunpack.c.l.b16 %v142
    %v587 = vunpack.c.l.b16 %v143
    %v588 = vunpack.c.l.b16 %v144
    %v589 = vunpack.c.l.b16 %v145
    %v590 = vunpack.c.l.b16 %v146
    %v591 = vunpack.c.l.b16 %v147
    %v592 = vunpack.c.l.b16 %v148
    %v593 = vunpack.c.l.b16 %v149
    %v594 = vunpack.c.l.b16 %v150
    %v595 = vunpack.c.l.b16 %v151
    %v596 = vunpack.c.l.b16 %v152
    %v597 = vunpack.c.l.b16 %v153
    %v598 = vunpack.c.l.b16 %v154
    %v599 = vunpack.c.l.b16 %v155
    %v600 = vunpack.c.l.b16 %v156
    %v601 = vunpack.c.l.b16 %v157
    %v602 = vunpack.c.l.b16 %v158
    %v603 = vunpack.c.l.b16 %v159
    %v604 = vunpack.c.l.b16 %v160
    %v605 = vunpack.c.l.b16 %v161
    %v606 = vunpack.c.l.b16 %v162
    %v607 = vunpack.c.l.b16 %v163
    %v608 = vunpack.c.l.b16 %v164
    %v609 = vunpack.c.l.b16 %v165
    %v610 = vunpack.c.l.b16 %v166
    %v611 = vunpack.c.l.b16 %v167
    %v612 = vunpack.c.l.b16 %v168
    %v613 = vunpack.c.l.b16 %v169
    %v614 = vunpack.c.l.b16 %v170
    %v615 = vunpack.c.l.b16 %v171
    %v616 = vunpack.c.l.b16 %v172
    %v617 = vunpack.c.l.b16 %v173
    %v618 = vunpack.c.l.b16 %v174
    %v619 = vunpack.c.l.b16 %v175
    %v620 = vunpack.c.l.b16 %v176
    %v621 = vunpack.c.l.b16 %v177
    %v622 = vunpack.c.l.b16 %v178
    %v623 = vunpack.c.l.b16 %v179
    %v624 = vunpack.c.l.b16 %v180
    %v625 = vunpack.c.l.b16 %v181
    %v626 = vunpack.c.l.b16 %v182
    %v627 = vunpack.c.l.b16 %v183
    %v628 = vunpack.c.l.b16 %v184
    %v629 = vunpack.c.l.b16 %v185
    %v630 = vunpack.c.l.b16 %v186
    %v631 = vunpack.c.l.b16 %v187
    %v632 = vunpack.c.l.b16 %v188
    %v633 = vunpack.c.l.b16 %v189
    %v634 = vunpack.c.l.b16 %v190
    %v635 = vunpack.c.l.b16 %v191
    %v636 = vunpack.c.l.b16 %v192
    %v637 = vunpack.c.l.b16 %v193
    %v638 = vunpack.c.l.b16 %v194
    %v639 = vunpack.c.l.b16 %v195
    %v640 = vunpack.c.l.b16 %v196
    %v641 = vunpack.c.l.b16 %v197
    %v642 = vunpack.c.l.b16 %v198
    %v643 = vunpack.c.l.b16 %v199
    %v644 = vunpack.c.l.b16 %v200
    %v645 = vunpack.c.l.b16 %v201
    %v646 = vunpack.c.l.b16 %v202
    %v647 = vunpack.c.l.b16 %v203
    %v648 = vunpack.c.l.b16 %v204
    %v649 = vunpack.c.l.b16 %v205
    %v650 = vunpack.c.l.b16 %v206
    %v651 = vunpack.c.l.b16 %v207
    %v652 = vunpack.c.l.b16 %v208
    %v653 = vunpack.c.l.b16 %v209
    %v654 = vunpack.c.l.b16 %v210
    %v655 = vunpack.c.l.b16 %v211
    %v656 = vunpack.c.l.b16 %v212
    %v657 = vunpack.c.l.b16 %v213
    %v658 = vunpack.c.l.b16 %v214
    %v659 = vunpack.c.l.b16 %v215
    %v660 = vunpack.c.l.b16 %v216
    %v661 = vunpack.c.l.b16 %v217
    %v662 = vunpack.c.l.b16 %v218
    %v663 = vunpack.c.l.b16 %v219
    %v664 = vunpack.c.l.b16 %v220
    %v665 = vunpack.c.l.b16 %v221
    %v666 = vunpack.c.l.b16 %v222
    %v667 = vunpack.c.l.b16 %v223
    %v668 = vunpack.c.l.b16 %v224
    %v669 = vunpack.c.l.b16 %v225
    %v670 = vunpack.c.l.b16 %v226
    %v671 = vunpack.c.l.b16 %v227
    %v672 = vunpack.c.l.b16 %v228
    %v673 = vunpack.c.l.b16 %v229
    %v674 = vunpack.c.l.b16 %v230
    %v675 = vunpack.c.l.b16 %v231
    %v676 = vunpack.c.l.b16 %v232
    %v677 = vunpack.c.l.b16 %v233
    %v678 = vunpack.c.l.b16 %v234
    %v679 = vunpack.c.l.b16 %v235
    %v680 = vunpack.c.l.b16 %v236
    %v681 = vunpack.c.l.b16 %v237
    %v682 = vunpack.c.l.b16 %v238
    %v683 = vunpack.c.l.b16 %v239
    %v684 = vunpack.c.l.b16 %v240
    %v685 = vunpack.c.l.b16 %v241
    %v686 = vunpack.c.l.b16 %v242
    %v687 = vunpack.c.l.b16 %v243
    %v688 = vpack.c.b16 %v493, %v492
    %v689 = vpack.c.b16 %v495, %v494
    %v690 = vpack.c.b16 %v497, %v496
    %v691 = vpack.c.b16 %v499, %v498
    %v692 = vpack.c.b16 %v501, %v500
    %v693 = vpack.c.b16 %v503, %v502
    %v694 = vpack.c.b16 %v505, %v504
    %v695 = vpack.c.b16 %v507, %v506
    %v696 = vpack.c.b16 %v509, %v508
    %v697 = vpack.c.b16 %v511, %v510
    %v698 = vpack.c.b16 %v513, %v512
    %v699 = vpack.c.b16 %v515, %v514
    %v700 = vpack.c.b16 %v517, %v516
    %v701 = vpack.c.b16 %v519, %v518
    %v702 = vpack.c.b16 %v521, %v520
    %v703 = vpack.c.b16 %v523, %v522
    %v704 = vpack.c.b16 %v525, %v524
    %v705 = vpack.c.b16 %v527, %v526
    %v706 = vpack.c.b16 %v529, %v528
    %v707 = vpack.c.b16 %v531, %v530
    %v708 = vpack.c.b16 %v533, %v532
    %v709 = vpack.c.b16 %v535, %v534
    %v710 = vpack.c.b16 %v537, %v536
    %v711 = vpack.c.b16 %v539, %v538
    %v712 = vpack.c.b16 %v541, %v540
    %v713 = vpack.c.b16 %v543, %v542
    %v714 = vpack.c.b16 %v545, %v544
    %v715 = vpack.c.b16 %v547, %v546
    %v716 = vpack.c.b16 %v549, %v548
    %v717 = vpack.c.b16 %v551, %v550
    %v718 = vpack.c.b16 %v553, %v552
    %v719 = vpack.c.b16 %v555, %v554
    %v720 = vpack.c.b16 %v557, %v556
    %v721 = vpack.c.b16 %v559, %v558
    %v722 = vpack.c.b16 %v561, %v560
    %v723 = vpack.c.b16 %v563, %v562
    %v724 = vpack.c.b16 %v565, %v564
    %v725 = vpack.c.b16 %v567, %v566
    %v726 = vpack.c.b16 %v569, %v568
    %v727 = vpack.c.b16 %v571, %v570
    %v728 = vpack.c.b16 %v573, %v572
    %v729 = vpack.c.b16 %v575, %v574
    %v730 = vpack.c.b16 %v577, %v576
    %v731 = vpack.c.b16 %v579, %v578
    %v732 = vpack.c.b16 %v581, %v580
    %v733 = vpack.c.b16 %v583, %v582
    %v734 = vpack.c.b16 %v585, %v584
    %v735 = vpack.c.b16 %v587, %v586
    %v736 = vpack.c.b16 %v589, %v588
    %v737 = vpack.c.b16 %v591, %v590
    %v738 = vpack.c.b16 %v593, %v592
    %v739 = vpack.c.b16 %v595, %v594
    %v740 = vpack.c.b16 %v597, %v596
    %v741 = vpack.c.b16 %v599, %v598
    %v742 = vpack.c.b16 %v601, %v600
    %v743 = vpack.c.b16 %v603, %v602
    %v744 = vpack.c.b16 %v605, %v604
    %v745 = vpack.c.b16 %v607, %v606
    %v746 = vpack.c.b16 %v609, %v608
    %v747 = vpack.c.b16 %v611, %v610
    %v748 = vpack.c.b16 %v613, %v612
    %v749 = vpack.c.b16 %v615, %v614
    %v750 = vpack.c.b16 %v617, %v616
    %v751 = vpack.c.b16 %v619, %v618
    %v752 = vpack.c.b16 %v621, %v620
    %v753 = vpack.c.b16 %v623, %v622
    %v754 = vpack.c.b16 %v625, %v624
    %v755 = vpack.c.b16 %v627, %v626
    %v756 = vpack.c.b16 %v629, %v628
    %v757 = vpack.c.b16 %v631, %v630
    %v758 = vpack.c.b16 %v633, %v632
    %v759 = vpack.c.b16 %v635, %v634
    %v760 = vpack.c.b16 %v637, %v636
    %v761 = vpack.c.b16 %v639, %v638
    %v762 = vpack.c.b16 %v641, %v640
    %v763 = vpack.c.b16 %v643, %v642
    %v764 = vpack.c.b16 %v645, %v644
    %v765 = vpack.c.b16 %v647, %v646
    %v766 = vpack.c.b16 %v649, %v648
    %v767 = vpack.c.b16 %v651, %v650
    %v768 = vpack.c.b16 %v653, %v652
    %v769 = vpack.c.b16 %v655, %v654
    %v770 = vpack.c.b16 %v657, %v656
    %v771 = vpack.c.b16 %v659, %v658
    %v772 = vpack.c.b16 %v661, %v660
    %v773 = vpack.c.b16 %v663, %v662
    %v774 = vpack.c.b16 %v665, %v664
    %v775 = vpack.c.b16 %v667, %v666
    %v776 = vpack.c.b16 %v669, %v668
    %v777 = vpack.c.b16 %v671, %v670
    %v778 = vpack.c.b16 %v673, %v672
    %v779 = vpack.c.b16 %v675, %v674
    %v780 = vpack.c.b16 %v677, %v676
    %v781 = vpack.c.b16 %v679, %v678
    %v782 = vpack.c.b16 %v681, %v680
    %v783 = vpack.c.b16 %v683, %v682
    %v784 = vpack.c.b16 %v685, %v684
    %v785 = vpack.c.b16 %v687, %v686
    %vm884 = vcmask 261120
    %v886 = vsel %vm884, %v283, 0
    %888 = vmatprep.subr.bf16.mxu0 0
    %889 = vmatpush1.bf16.msra.mxu0 %v695
    %890 = vmatprep.subr.bf16.mxu0 0
    %891 = vmatpush1.bf16.msra.mxu0 %v694
    %892 = vmatprep.subr.bf16.mxu0 0
    %893 = vmatpush1.bf16.msra.mxu0 %v693
    %894 = vmatprep.subr.bf16.mxu0 0
    %895 = vmatpush1.bf16.msra.mxu0 %v692
    %896 = vmatprep.subr.bf16.mxu0 0
    %897 = vmatpush1.bf16.msra.mxu0 %v691
    %898 = vmatprep.subr.bf16.mxu0 0
    %899 = vmatpush1.bf16.msra.mxu0 %v690
    %900 = vmatprep.subr.bf16.mxu0 0
    %901 = vmatpush1.bf16.msra.mxu0 %v689
    %902 = vmatprep.subr.bf16.mxu0 0
    %903 = vmatpush1.bf16.msra.mxu0 %v688
    %904 = vmatprep.subr.bf16.mxu0 0
    %905 = vmatpush2.bf16.msra.mxu0 %v703
    %906 = vmatprep.subr.bf16.mxu0 0
    %907 = vmatpush2.bf16.msra.mxu0 %v702
    %908 = vmatprep.subr.bf16.mxu0 0
    %909 = vmatpush2.bf16.msra.mxu0 %v701
    %910 = vmatprep.subr.bf16.mxu0 0
    %911 = vmatpush2.bf16.msra.mxu0 %v700
    %912 = vmatprep.subr.bf16.mxu0 0
    %913 = vmatpush2.bf16.msra.mxu0 %v699
    %914 = vmatprep.subr.bf16.mxu0 0
    %915 = vmatpush2.bf16.msra.mxu0 %v698
    %916 = vmatprep.subr.bf16.mxu0 0
    %917 = vmatpush2.bf16.msra.mxu0 %v697
    %918 = vmatprep.subr.bf16.mxu0 0
    %919 = vmatpush2.bf16.msra.mxu0 %v696
    %920 = vmatprep.mubr.bf16.mxu0 %v272
    %921 = vmatmul.mubr.bf16.gmra.mxu0 %v271
    %v922 = vpop.f32.mrf.mxu0
    %v923 = vadd.f32 %v249, %v922
    %v924 = vpop.f32.mrf.mxu0
    %v925 = vpop.f32.mrf.mxu0
    %v926 = vpop.f32.mrf.mxu0
    %927 = vdwg.mxu0
    %928 = vmatprep.subr.bf16.mxu0 0
    %929 = vmatpush1.bf16.msra.mxu0 %v711
    %930 = vmatprep.subr.bf16.mxu0 0
    %931 = vmatpush1.bf16.msra.mxu0 %v710
    %932 = vmatprep.subr.bf16.mxu0 0
    %933 = vmatpush1.bf16.msra.mxu0 %v709
    %934 = vmatprep.subr.bf16.mxu0 0
    %935 = vmatpush1.bf16.msra.mxu0 %v708
    %936 = vmatprep.subr.bf16.mxu0 0
    %937 = vmatpush1.bf16.msra.mxu0 %v707
    %938 = vmatprep.subr.bf16.mxu0 0
    %939 = vmatpush1.bf16.msra.mxu0 %v706
    %940 = vmatprep.subr.bf16.mxu0 0
    %941 = vmatpush1.bf16.msra.mxu0 %v705
    %942 = vmatprep.subr.bf16.mxu0 0
    %943 = vmatpush1.bf16.msra.mxu0 %v704
    %944 = vmatprep.subr.bf16.mxu0 0
    %945 = vmatpush2.bf16.msra.mxu0 %v719
    %946 = vmatprep.subr.bf16.mxu0 0
    %947 = vmatpush2.bf16.msra.mxu0 %v718
    %948 = vmatprep.subr.bf16.mxu0 0
    %949 = vmatpush2.bf16.msra.mxu0 %v717
    %950 = vmatprep.subr.bf16.mxu0 0
    %951 = vmatpush2.bf16.msra.mxu0 %v716
    %952 = vmatprep.subr.bf16.mxu0 0
    %953 = vmatpush2.bf16.msra.mxu0 %v715
    %954 = vmatprep.subr.bf16.mxu0 0
    %955 = vmatpush2.bf16.msra.mxu0 %v714
    %956 = vmatprep.subr.bf16.mxu0 0
    %957 = vmatpush2.bf16.msra.mxu0 %v713
    %958 = vmatprep.subr.bf16.mxu0 0
    %959 = vmatpush2.bf16.msra.mxu0 %v712
    %960 = vmatprep.mubr.bf16.mxu0 %v274
    %961 = vmatmul.mubr.bf16.gmra.mxu0 %v273
    %v962 = vpop.f32.mrf.mxu0
    %v963 = vadd.f32 %v923, %v962
    %v964 = vpop.f32.mrf.mxu0
    %v965 = vpop.f32.mrf.mxu0
    %v966 = vpop.f32.mrf.mxu0
    %967 = vdwg.mxu0
    %968 = vmatprep.subr.bf16.mxu0 0
    %969 = vmatpush1.bf16.msra.mxu0 %v727
    %970 = vmatprep.subr.bf16.mxu0 0
    %971 = vmatpush1.bf16.msra.mxu0 %v726
    %972 = vmatprep.subr.bf16.mxu0 0
    %973 = vmatpush1.bf16.msra.mxu0 %v725
    %974 = vmatprep.subr.bf16.mxu0 0
    %975 = vmatpush1.bf16.msra.mxu0 %v724
    %976 = vmatprep.subr.bf16.mxu0 0
    %977 = vmatpush1.bf16.msra.mxu0 %v723
    %978 = vmatprep.subr.bf16.mxu0 0
    %979 = vmatpush1.bf16.msra.mxu0 %v722
    %980 = vmatprep.subr.bf16.mxu0 0
    %981 = vmatpush1.bf16.msra.mxu0 %v721
    %982 = vmatprep.subr.bf16.mxu0 0
    %983 = vmatpush1.bf16.msra.mxu0 %v720
    %984 = vmatprep.subr.bf16.mxu0 0
    %985 = vmatpush2.bf16.msra.mxu0 %v735
    %986 = vmatprep.subr.bf16.mxu0 0
    %987 = vmatpush2.bf16.msra.mxu0 %v734
    %988 = vmatprep.subr.bf16.mxu0 0
    %989 = vmatpush2.bf16.msra.mxu0 %v733
    %990 = vmatprep.subr.bf16.mxu0 0
    %991 = vmatpush2.bf16.msra.mxu0 %v732
    %992 = vmatprep.subr.bf16.mxu0 0
    %993 = vmatpush2.bf16.msra.mxu0 %v731
    %994 = vmatprep.subr.bf16.mxu0 0
    %995 = vmatpush2.bf16.msra.mxu0 %v730
    %996 = vmatprep.subr.bf16.mxu0 0
    %997 = vmatpush2.bf16.msra.mxu0 %v729
    %998 = vmatprep.subr.bf16.mxu0 0
    %999 = vmatpush2.bf16.msra.mxu0 %v728
    %1000 = vmatprep.mubr.bf16.mxu0 %v276
    %1001 = vmatmul.mubr.bf16.gmra.mxu0 %v275
    %v1002 = vpop.f32.mrf.mxu0
    %v1003 = vadd.f32 %v963, %v1002
    %v1004 = vpop.f32.mrf.mxu0
    %v1005 = vpop.f32.mrf.mxu0
    %v1006 = vpop.f32.mrf.mxu0
    %1007 = vdwg.mxu0
    %1008 = vmatprep.subr.bf16.mxu0 0
    %1009 = vmatpush1.bf16.msra.mxu0 %v743
    %1010 = vmatprep.subr.bf16.mxu0 0
    %1011 = vmatpush1.bf16.msra.mxu0 %v742
    %1012 = vmatprep.subr.bf16.mxu0 0
    %1013 = vmatpush1.bf16.msra.mxu0 %v741
    %1014 = vmatprep.subr.bf16.mxu0 0
    %1015 = vmatpush1.bf16.msra.mxu0 %v740
    %1016 = vmatprep.subr.bf16.mxu0 0
    %1017 = vmatpush1.bf16.msra.mxu0 %v739
    %1018 = vmatprep.subr.bf16.mxu0 0
    %1019 = vmatpush1.bf16.msra.mxu0 %v738
    %1020 = vmatprep.subr.bf16.mxu0 0
    %1021 = vmatpush1.bf16.msra.mxu0 %v737
    %1022 = vmatprep.subr.bf16.mxu0 0
    %1023 = vmatpush1.bf16.msra.mxu0 %v736
    %1024 = vmatprep.subr.bf16.mxu0 0
    %1025 = vmatpush2.bf16.msra.mxu0 %v751
    %1026 = vmatprep.subr.bf16.mxu0 0
    %1027 = vmatpush2.bf16.msra.mxu0 %v750
    %1028 = vmatprep.subr.bf16.mxu0 0
    %1029 = vmatpush2.bf16.msra.mxu0 %v749
    %1030 = vmatprep.subr.bf16.mxu0 0
    %1031 = vmatpush2.bf16.msra.mxu0 %v748
    %1032 = vmatprep.subr.bf16.mxu0 0
    %1033 = vmatpush2.bf16.msra.mxu0 %v747
    %1034 = vmatprep.subr.bf16.mxu0 0
    %1035 = vmatpush2.bf16.msra.mxu0 %v746
    %1036 = vmatprep.subr.bf16.mxu0 0
    %1037 = vmatpush2.bf16.msra.mxu0 %v745
    %1038 = vmatprep.subr.bf16.mxu0 0
    %1039 = vmatpush2.bf16.msra.mxu0 %v744
    %1040 = vmatprep.mubr.bf16.mxu0 %v278
    %1041 = vmatmul.mubr.bf16.gmra.mxu0 %v277
    %v1042 = vpop.f32.mrf.mxu0
    %v1043 = vadd.f32 %v1003, %v1042
    %v1044 = vpop.f32.mrf.mxu0
    %v1045 = vpop.f32.mrf.mxu0
    %v1046 = vpop.f32.mrf.mxu0
    %1047 = vdwg.mxu0
    %1048 = vmatprep.subr.bf16.mxu0 0
    %1049 = vmatpush1.bf16.msra.mxu0 %v759
    %1050 = vmatprep.subr.bf16.mxu0 0
    %1051 = vmatpush1.bf16.msra.mxu0 %v758
    %1052 = vmatprep.subr.bf16.mxu0 0
    %1053 = vmatpush1.bf16.msra.mxu0 %v757
    %1054 = vmatprep.subr.bf16.mxu0 0
    %1055 = vmatpush1.bf16.msra.mxu0 %v756
    %1056 = vmatprep.subr.bf16.mxu0 0
    %1057 = vmatpush1.bf16.msra.mxu0 %v755
    %1058 = vmatprep.subr.bf16.mxu0 0
    %1059 = vmatpush1.bf16.msra.mxu0 %v754
    %1060 = vmatprep.subr.bf16.mxu0 0
    %1061 = vmatpush1.bf16.msra.mxu0 %v753
    %1062 = vmatprep.subr.bf16.mxu0 0
    %1063 = vmatpush1.bf16.msra.mxu0 %v752
    %1064 = vmatprep.subr.bf16.mxu0 0
    %1065 = vmatpush2.bf16.msra.mxu0 %v767
    %1066 = vmatprep.subr.bf16.mxu0 0
    %1067 = vmatpush2.bf16.msra.mxu0 %v766
    %1068 = vmatprep.subr.bf16.mxu0 0
    %1069 = vmatpush2.bf16.msra.mxu0 %v765
    %1070 = vmatprep.subr.bf16.mxu0 0
    %1071 = vmatpush2.bf16.msra.mxu0 %v764
    %1072 = vmatprep.subr.bf16.mxu0 0
    %1073 = vmatpush2.bf16.msra.mxu0 %v763
    %1074 = vmatprep.subr.bf16.mxu0 0
    %1075 = vmatpush2.bf16.msra.mxu0 %v762
    %1076 = vmatprep.subr.bf16.mxu0 0
    %1077 = vmatpush2.bf16.msra.mxu0 %v761
    %1078 = vmatprep.subr.bf16.mxu0 0
    %1079 = vmatpush2.bf16.msra.mxu0 %v760
    %1080 = vmatprep.mubr.bf16.mxu0 %v280
    %1081 = vmatmul.mubr.bf16.gmra.mxu0 %v279
    %v1082 = vpop.f32.mrf.mxu0
    %v1083 = vadd.f32 %v1043, %v1082
    %v1084 = vpop.f32.mrf.mxu0
    %v1085 = vpop.f32.mrf.mxu0
    %v1086 = vpop.f32.mrf.mxu0
    %1087 = vdwg.mxu0
    %1088 = vmatprep.subr.bf16.mxu0 0
    %1089 = vmatpush1.bf16.msra.mxu0 %v775
    %1090 = vmatprep.subr.bf16.mxu0 0
    %1091 = vmatpush1.bf16.msra.mxu0 %v774
    %1092 = vmatprep.subr.bf16.mxu0 0
    %1093 = vmatpush1.bf16.msra.mxu0 %v773
    %1094 = vmatprep.subr.bf16.mxu0 0
    %1095 = vmatpush1.bf16.msra.mxu0 %v772
    %1096 = vmatprep.subr.bf16.mxu0 0
    %1097 = vmatpush1.bf16.msra.mxu0 %v771
    %1098 = vmatprep.subr.bf16.mxu0 0
    %1099 = vmatpush1.bf16.msra.mxu0 %v770
    %1100 = vmatprep.subr.bf16.mxu0 0
    %1101 = vmatpush1.bf16.msra.mxu0 %v769
    %1102 = vmatprep.subr.bf16.mxu0 0
    %1103 = vmatpush1.bf16.msra.mxu0 %v768
    %1104 = vmatprep.subr.bf16.mxu0 0
    %1105 = vmatpush2.bf16.msra.mxu0 %v783
    %1106 = vmatprep.subr.bf16.mxu0 0
    %1107 = vmatpush2.bf16.msra.mxu0 %v782
    %1108 = vmatprep.subr.bf16.mxu0 0
    %1109 = vmatpush2.bf16.msra.mxu0 %v781
    %1110 = vmatprep.subr.bf16.mxu0 0
    %1111 = vmatpush2.bf16.msra.mxu0 %v780
    %1112 = vmatprep.subr.bf16.mxu0 0
    %1113 = vmatpush2.bf16.msra.mxu0 %v779
    %1114 = vmatprep.subr.bf16.mxu0 0
    %1115 = vmatpush2.bf16.msra.mxu0 %v778
    %1116 = vmatprep.subr.bf16.mxu0 0
    %1117 = vmatpush2.bf16.msra.mxu0 %v777
    %1118 = vmatprep.subr.bf16.mxu0 0
    %1119 = vmatpush2.bf16.msra.mxu0 %v776
    %1120 = vmatprep.mubr.bf16.mxu0 %v282
    %1121 = vmatmul.mubr.bf16.gmra.mxu0 %v281
    %v1122 = vpop.f32.mrf.mxu0
    %v1123 = vadd.f32 %v1083, %v1122
    %v1124 = vpop.f32.mrf.mxu0
    %v1125 = vpop.f32.mrf.mxu0
    %v1126 = vpop.f32.mrf.mxu0
    %1127 = vdwg.mxu0
    %1128 = vmatprep.subr.bf16.mxu0 0
    %1129 = vmatpush1.bf16.msra.mxu0 0
    %1130 = vmatprep.subr.bf16.mxu0 0
    %1131 = vmatpush1.bf16.msra.mxu0 0
    %1132 = vmatprep.subr.bf16.mxu0 0
    %1133 = vmatpush1.bf16.msra.mxu0 0
    %1134 = vmatprep.subr.bf16.mxu0 0
    %1135 = vmatpush1.bf16.msra.mxu0 0
    %1136 = vmatprep.subr.bf16.mxu0 0
    %1137 = vmatpush1.bf16.msra.mxu0 0
    %1138 = vmatprep.subr.bf16.mxu0 0
    %1139 = vmatpush1.bf16.msra.mxu0 0
    %1140 = vmatprep.subr.bf16.mxu0 0
    %1141 = vmatpush1.bf16.msra.mxu0 %v785
    %1142 = vmatprep.subr.bf16.mxu0 0
    %1143 = vmatpush1.bf16.msra.mxu0 %v784
    %1144 = vmatprep.subr.bf16.mxu0 0
    %1145 = vmatpush2.bf16.msra.mxu0 0
    %1146 = vmatprep.subr.bf16.mxu0 0
    %1147 = vmatpush2.bf16.msra.mxu0 0
    %1148 = vmatprep.subr.bf16.mxu0 0
    %1149 = vmatpush2.bf16.msra.mxu0 0
    %1150 = vmatprep.subr.bf16.mxu0 0
    %1151 = vmatpush2.bf16.msra.mxu0 0
    %1152 = vmatprep.subr.bf16.mxu0 0
    %1153 = vmatpush2.bf16.msra.mxu0 0
    %1154 = vmatprep.subr.bf16.mxu0 0
    %1155 = vmatpush2.bf16.msra.mxu0 0
    %1156 = vmatprep.subr.bf16.mxu0 0
    %1157 = vmatpush2.bf16.msra.mxu0 0
    %1158 = vmatprep.subr.bf16.mxu0 0
    %1159 = vmatpush2.bf16.msra.mxu0 0
    %1160 = vmatprep.mubr.bf16.mxu0 0
    %1161 = vmatmul.mubr.bf16.gmra.mxu0 %v886
    %v1162 = vpop.f32.mrf.mxu0
    %v1163 = vadd.f32 %v1123, %v1162
    %v1164 = vpop.f32.mrf.mxu0
    %v1165 = vpop.f32.mrf.mxu0
    %v1166 = vpop.f32.mrf.mxu0
    %1167 = vdwg.mxu0
    %v1168 = vpack.c.bf16 %v1163, %v1163
    %1169 = vst [vmem:[%s3] sm:$0xf] %v1168
    // Predicated region
    $region22: #{autoencoder_forward.8} parent=1 // pred_check
      _
    $region23: #{autoencoder_forward.8} parent=1 // pred_check_branch
      %1171 = sbr.rel (0) target = $region25
    $region24: #{autoencoder_forward.8} parent=1 // pred_region
      _
    $region25: #{autoencoder_forward.8} parent=1 // pred_fallthru
      _
    // Predicated region
    $region26: #{autoencoder_forward.8} parent=1 // pred_check
      _
    $region27: #{autoencoder_forward.8} parent=1 // pred_check_branch
      %1173 = sbr.rel (0) target = $region29
    $region28: #{autoencoder_forward.8} parent=1 // pred_region
      _
    $region29: #{autoencoder_forward.8} parent=1 // pred_fallthru
      _
    %1174 = vsyncpa [#allocation3], 1
    %1175 = vsyncpa [#allocation5], 1

// kernel: reverse
$region0: #{reverse}
  #allocation0 [shape = 's32[1]{0}', space=sflag, size = 0x4, scoped, tag = 'scoped memory for reverse']
  %s0 = inlined_call_operand.vmem [shape: bf16[7,7,64,3136], index: 0, kind: input, shape index: {}]
  %s1 = inlined_call_operand.vmem [shape: bf16[7,7,64,3136], index: 1, kind: output, shape index: {}]
  loop: start=0, step=1, limit=80
  $region2: #{reverse} parent=0 // loop_pre_header
    _
  $region3: #{reverse} parent=0 // loop_header
    %s3 = sphi 0, %s7
    %p4 = scmp.ge.s32.totalorder %s3, 80
    %s18 = sphi 0, %s76
    %s19 = sphi 0, %s72
    %s20 = sphi 0, %s68
    %s21 = sphi 0, %s64
    %s22 = sphi 0, %s18
    %s23 = sphi 0, %s19
    %s24 = sphi 0, %s20
    %s25 = sphi 0, %s21
    %s26 = sphi 0, %s22
    %s27 = sphi 0, %s23
    %s28 = sphi 0, %s24
    %s29 = sphi 0, %s25
    %s30 = sphi 0, %s26
    %s31 = sphi 0, %s27
    %s32 = sphi 0, %s28
    %s33 = sphi 0, %s29
    %s34 = sphi 0, %s30
    %s35 = sphi 0, %s31
    %s36 = sphi 0, %s32
    %s37 = sphi 0, %s33
    %s38 = sphi 0, %s34
    %s39 = sphi 0, %s35
    %s40 = sphi 0, %s36
    %s41 = sphi 0, %s37
    %s42 = sphi 0, %s38
    %s43 = sphi 0, %s39
    %s44 = sphi 0, %s40
    %s45 = sphi 0, %s41
    %s46 = sphi 0, %s42
    %s47 = sphi 0, %s43
    %s48 = sphi 0, %s44
    %s49 = sphi 0, %s45
    %s50 = sphi 0, %s46
    %s51 = sphi 0, %s47
    %s52 = sphi 0, %s48
    %s53 = sphi 0, %s49
    %s54 = sphi 0, %s50
    %s55 = sphi 0, %s51
    %s56 = sphi 0, %s52
    %s57 = sphi 0, %s53
    %s58 = sphi 0, %s54
    %s59 = sphi 0, %s55
    %s60 = sphi 0, %s56
    %s61 = sphi 0, %s57
  $region4: #{reverse} parent=0 // loop_header_branch
    %6 = sbr.rel (%p4) target = $region8
  $region5: #{reverse} parent=0 // loop_body
    %s8 = ssub.s32 %s3, 1
    %s9 = ssub.s32 %s3, 2
    %s10 = ssub.s32 %s3, 3
    %s11 = ssub.s32 %s3, 4
    %s12 = ssub.s32 %s3, 5
    %s13 = ssub.s32 %s3, 6
    %s14 = ssub.s32 %s3, 7
    %s15 = ssub.s32 %s3, 8
    %s16 = ssub.s32 %s3, 9
    %s17 = ssub.s32 %s3, 10
    %s62 = sadd.s32 1, %s21
    %p63 = scmp.ge.s32.totalorder %s62, 5
    %s64 = scalar_select %p63, 0, %s62
    %s65 = sadd.s32 1, %s20
    %s66 = scalar_select %p63, %s65, %s20
    %p67 = scmp.ge.s32.totalorder %s66, 2
    %s68 = scalar_select %p67, 0, %s66
    %s69 = sadd.s32 1, %s19
    %s70 = scalar_select %p67, %s69, %s19
    %p71 = scmp.ge.s32.totalorder %s70, 1
    %s72 = scalar_select %p71, 0, %s70
    %s73 = sadd.s32 1, %s18
    %s74 = scalar_select %p71, %s73, %s18
    %p75 = scmp.ge.s32.totalorder %s74, 7
    %s76 = scalar_select %p75, 0, %s74
    %p77 = scmp.le.s32.totalorder 5, %s3
    %p78 = scmp.lt.s32.totalorder %s3, 75
    %p79 = pnand %p77, %p78
    %p80 = pneg %p79
    // Predicated region
    $region9: #{reverse} parent=5 // pred_check
      _
    $region10: #{reverse} parent=5 // pred_check_branch
      %82 = sbr.rel (%p79) target = $region12
    $region11: #{reverse} parent=5 // pred_region
      %s83 = ssub.s32 %s3, 5
    $region12: #{reverse} parent=5 // pred_fallthru
      _
    %p84 = scmp.lt.s32.totalorder %s3, 70
    // Predicated region
    $region13: #{reverse} parent=5 // pred_check
      %p85 = pneg %p84
    $region14: #{reverse} parent=5 // pred_check_branch
      %87 = sbr.rel (%p85) target = $region16
    $region15: #{reverse} parent=5 // pred_region
      %s88 = ssub.s32 6, %s18
      %s89 = ssub.s32 0, %s19
      %s90 = smul.u32 7, %s89
      %s91 = smul.u32 4, %s20
      %s92 = smul.u32 5, %s21
      %p93 = scmp.lt.s32.totalorder %s88, 6
      %s94 = scalar_select %p93, %s88, 6
      %p95 = scmp.lt.s32.totalorder %s90, 6
      %s96 = scalar_select %p95, %s90, 6
      %p97 = scmp.lt.s32.totalorder %s91, 7
      %s98 = scalar_select %p97, %s91, 7
      %p99 = scmp.lt.s32.totalorder %s92, 24
      %s100 = scalar_select %p99, %s92, 24
      %s101 = smul.addr %s98, 25
      %s102 = sadd.s32 %s100, %s101
      %s103 = smul.addr %s96, 200
      %s104 = sadd.s32 %s102, %s103
      %s105 = smul.addr %s94, 1400
      %s106 = sadd.s32 %s104, %s105
      %s107 = smul.addr %s106, 4
      %s108 = scalar_lea.vmem %s0, %s107
      %s109 = ssub.s32 6, %s18
      %s110 = ssub.s32 0, %s19
      %s111 = smul.u32 7, %s110
      %s112 = smul.u32 4, %s20
      %s113 = smul.u32 5, %s21
    $region16: #{reverse} parent=5 // pred_fallthru
      _
    %p114 = scmp.le.s32.totalorder 5, %s3
    %p115 = scmp.lt.s32.totalorder %s3, 75
    %p116 = pnand %p114, %p115
    %p117 = pneg %p116
    // Predicated region
    $region17: #{reverse} parent=5 // pred_check
      _
    $region18: #{reverse} parent=5 // pred_check_branch
      %119 = sbr.rel (%p116) target = $region20
    $region19: #{reverse} parent=5 // pred_region
      %s120 = ssub.s32 %s3, 5
      %s121 = ssub.s32 6, %s38
      %s122 = ssub.s32 0, %s39
      %s123 = smul.u32 7, %s122
      %s124 = smul.u32 4, %s40
      %s125 = smul.u32 5, %s41
      %p126 = scmp.lt.s32.totalorder %s121, 6
      %s127 = scalar_select %p126, %s121, 6
      %p128 = scmp.lt.s32.totalorder %s123, 6
      %s129 = scalar_select %p128, %s123, 6
      %p130 = scmp.lt.s32.totalorder %s124, 7
      %s131 = scalar_select %p130, %s124, 7
      %p132 = scmp.lt.s32.totalorder %s125, 24
      %s133 = scalar_select %p132, %s125, 24
      %s134 = smul.addr %s131, 25
      %s135 = sadd.s32 %s133, %s134
      %s136 = smul.addr %s129, 200
      %s137 = sadd.s32 %s135, %s136
      %s138 = smul.addr %s127, 1400
      %s139 = sadd.s32 %s137, %s138
      %s140 = smul.addr %s139, 4
      %s141 = scalar_lea.vmem %s0, %s140
      %s142 = smul.u32 7, %s39
      %s143 = smul.u32 4, %s40
      %s144 = smul.u32 5, %s41
      %p145 = scmp.lt.s32.totalorder %s38, 6
      %s146 = scalar_select %p145, %s38, 6
      %p147 = scmp.lt.s32.totalorder %s142, 6
      %s148 = scalar_select %p147, %s142, 6
      %p149 = scmp.lt.s32.totalorder %s143, 7
      %s150 = scalar_select %p149, %s143, 7
      %p151 = scmp.lt.s32.totalorder %s144, 24
      %s152 = scalar_select %p151, %s144, 24
      %s153 = smul.addr %s150, 25
      %s154 = sadd.s32 %s152, %s153
      %s155 = smul.addr %s148, 200
      %s156 = sadd.s32 %s154, %s155
      %s157 = smul.addr %s146, 1400
      %s158 = sadd.s32 %s156, %s157
      %s159 = smul.addr %s158, 4
      %s160 = scalar_lea.vmem %s1, %s159
      %s161 = smul.u32 7, %s39
      %s162 = smul.u32 4, %s40
      %s163 = smul.u32 5, %s41
      %s164 = ssub.s32 6, %s38
      %s165 = ssub.s32 0, %s39
      %s166 = smul.u32 7, %s165
      %s167 = smul.u32 4, %s40
      %s168 = smul.u32 5, %s41
      %p169 = scmp.lt.s32.totalorder %s164, 6
      %s170 = scalar_select %p169, %s164, 6
      %p171 = scmp.lt.s32.totalorder %s166, 6
      %s172 = scalar_select %p171, %s166, 6
      %p173 = scmp.lt.s32.totalorder %s167, 7
      %s174 = scalar_select %p173, %s167, 7
      %p175 = scmp.lt.s32.totalorder %s168, 24
      %s176 = scalar_select %p175, %s168, 24
      %s177 = smul.addr %s174, 25
      %s178 = sadd.s32 %s176, %s177
      %s179 = smul.addr %s172, 200
      %s180 = sadd.s32 %s178, %s179
      %s181 = smul.addr %s170, 1400
      %s182 = sadd.s32 %s180, %s181
      %s183 = smul.addr %s182, 4
      %s184 = scalar_lea.vmem %s0, %s183
      %s185 = ssub.s32 6, %s38
      %s186 = ssub.s32 0, %s39
      %s187 = smul.u32 7, %s186
      %s188 = smul.u32 4, %s40
      %s189 = smul.u32 5, %s41
      %s190 = smul.u32 7, %s39
      %s191 = smul.u32 4, %s40
      %s192 = smul.u32 5, %s41
      %p193 = scmp.lt.s32.totalorder %s38, 6
      %s194 = scalar_select %p193, %s38, 6
      %p195 = scmp.lt.s32.totalorder %s190, 6
      %s196 = scalar_select %p195, %s190, 6
      %p197 = scmp.lt.s32.totalorder %s191, 7
      %s198 = scalar_select %p197, %s191, 7
      %p199 = scmp.lt.s32.totalorder %s192, 24
      %s200 = scalar_select %p199, %s192, 24
      %s201 = smul.addr %s198, 25
      %s202 = sadd.s32 %s200, %s201
      %s203 = smul.addr %s196, 200
      %s204 = sadd.s32 %s202, %s203
      %s205 = smul.addr %s194, 1400
      %s206 = sadd.s32 %s204, %s205
      %s207 = smul.addr %s206, 4
      %s208 = scalar_lea.vmem %s1, %s207
      %s209 = smul.u32 7, %s39
      %s210 = smul.u32 4, %s40
      %s211 = smul.u32 5, %s41
      %s212 = scalar_lea.vmem %s184, 4800
      %v213 = vld [vmem:[%s212] sm:$0xf]
      %v214 = vunpack.c.l.bf16 %v213
      %v215 = vunpack.c.h.bf16 %v213
      %s216 = scalar_lea.vmem %s184, 4000
      %v217 = vld [vmem:[%s216] sm:$0xf]
      %v218 = vunpack.c.l.bf16 %v217
      %v219 = vunpack.c.h.bf16 %v217
      %s220 = scalar_lea.vmem %s208, 800
      %s221 = scalar_lea.vmem %s184, 3200
      %v222 = vld [vmem:[%s221] sm:$0xf]
      %v223 = vunpack.c.l.bf16 %v222
      %v224 = vunpack.c.h.bf16 %v222
      %s225 = scalar_lea.vmem %s208, 1600
      %s226 = scalar_lea.vmem %s184, 2400
      %v227 = vld [vmem:[%s226] sm:$0xf]
      %v228 = vunpack.c.l.bf16 %v227
      %v229 = vunpack.c.h.bf16 %v227
      %s230 = scalar_lea.vmem %s208, 2400
      %s231 = scalar_lea.vmem %s184, 1600
      %v232 = vld [vmem:[%s231] sm:$0xf]
      %v233 = vunpack.c.l.bf16 %v232
      %v234 = vunpack.c.h.bf16 %v232
      %s235 = scalar_lea.vmem %s208, 3200
      %s236 = scalar_lea.vmem %s184, 800
      %v237 = vld [vmem:[%s236] sm:$0xf]
      %v238 = vunpack.c.l.bf16 %v237
      %v239 = vunpack.c.h.bf16 %v237
      %s240 = scalar_lea.vmem %s208, 4000
      %v241 = vld [vmem:[%s184] sm:$0xf]
      %v242 = vunpack.c.l.bf16 %v241
      %v243 = vunpack.c.h.bf16 %v241
      %s244 = scalar_lea.vmem %s208, 4800
      %s245 = scalar_lea.vmem %s184, 4900
      %v246 = vld [vmem:[%s245] sm:$0xf]
      %v247 = vunpack.c.l.bf16 %v246
      %v248 = vunpack.c.h.bf16 %v246
      %s249 = scalar_lea.vmem %s208, 100
      %s250 = scalar_lea.vmem %s184, 4100
      %v251 = vld [vmem:[%s250] sm:$0xf]
      %v252 = vunpack.c.l.bf16 %v251
      %v253 = vunpack.c.h.bf16 %v251
      %s254 = scalar_lea.vmem %s208, 900
      %s255 = scalar_lea.vmem %s184, 3300
      %v256 = vld [vmem:[%s255] sm:$0xf]
      %v257 = vunpack.c.l.bf16 %v256
      %v258 = vunpack.c.h.bf16 %v256
      %s259 = scalar_lea.vmem %s208, 1700
      %s260 = scalar_lea.vmem %s184, 2500
      %v261 = vld [vmem:[%s260] sm:$0xf]
      %v262 = vunpack.c.l.bf16 %v261
      %v263 = vunpack.c.h.bf16 %v261
      %s264 = scalar_lea.vmem %s208, 2500
      %s265 = scalar_lea.vmem %s184, 1700
      %v266 = vld [vmem:[%s265] sm:$0xf]
      %v267 = vunpack.c.l.bf16 %v266
      %v268 = vunpack.c.h.bf16 %v266
      %s269 = scalar_lea.vmem %s208, 3300
      %s270 = scalar_lea.vmem %s184, 900
      %v271 = vld [vmem:[%s270] sm:$0xf]
      %v272 = vunpack.c.l.bf16 %v271
      %v273 = vunpack.c.h.bf16 %v271
      %s274 = scalar_lea.vmem %s208, 4100
      %s275 = scalar_lea.vmem %s184, 100
      %v276 = vld [vmem:[%s275] sm:$0xf]
      %v277 = vunpack.c.l.bf16 %v276
      %v278 = vunpack.c.h.bf16 %v276
      %s279 = scalar_lea.vmem %s208, 4900
      %s280 = scalar_lea.vmem %s184, 5000
      %v281 = vld [vmem:[%s280] sm:$0xf]
      %v282 = vunpack.c.l.bf16 %v281
      %v283 = vunpack.c.h.bf16 %v281
      %s284 = scalar_lea.vmem %s208, 200
      %s285 = scalar_lea.vmem %s184, 4200
      %v286 = vld [vmem:[%s285] sm:$0xf]
      %v287 = vunpack.c.l.bf16 %v286
      %v288 = vunpack.c.h.bf16 %v286
      %s289 = scalar_lea.vmem %s208, 1000
      %s290 = scalar_lea.vmem %s184, 3400
      %v291 = vld [vmem:[%s290] sm:$0xf]
      %v292 = vunpack.c.l.bf16 %v291
      %v293 = vunpack.c.h.bf16 %v291
      %s294 = scalar_lea.vmem %s208, 1800
      %s295 = scalar_lea.vmem %s184, 2600
      %v296 = vld [vmem:[%s295] sm:$0xf]
      %v297 = vunpack.c.l.bf16 %v296
      %v298 = vunpack.c.h.bf16 %v296
      %s299 = scalar_lea.vmem %s208, 2600
      %s300 = scalar_lea.vmem %s184, 1800
      %v301 = vld [vmem:[%s300] sm:$0xf]
      %v302 = vunpack.c.l.bf16 %v301
      %v303 = vunpack.c.h.bf16 %v301
      %s304 = scalar_lea.vmem %s208, 3400
      %s305 = scalar_lea.vmem %s184, 1000
      %v306 = vld [vmem:[%s305] sm:$0xf]
      %v307 = vunpack.c.l.bf16 %v306
      %v308 = vunpack.c.h.bf16 %v306
      %s309 = scalar_lea.vmem %s208, 4200
      %s310 = scalar_lea.vmem %s184, 200
      %v311 = vld [vmem:[%s310] sm:$0xf]
      %v312 = vunpack.c.l.bf16 %v311
      %v313 = vunpack.c.h.bf16 %v311
      %s314 = scalar_lea.vmem %s208, 5000
      %s315 = scalar_lea.vmem %s184, 5100
      %v316 = vld [vmem:[%s315] sm:$0xf]
      %v317 = vunpack.c.l.bf16 %v316
      %v318 = vunpack.c.h.bf16 %v316
      %s319 = scalar_lea.vmem %s208, 300
      %s320 = scalar_lea.vmem %s184, 4300
      %v321 = vld [vmem:[%s320] sm:$0xf]
      %v322 = vunpack.c.l.bf16 %v321
      %v323 = vunpack.c.h.bf16 %v321
      %s324 = scalar_lea.vmem %s208, 1100
      %s325 = scalar_lea.vmem %s184, 3500
      %v326 = vld [vmem:[%s325] sm:$0xf]
      %v327 = vunpack.c.l.bf16 %v326
      %v328 = vunpack.c.h.bf16 %v326
      %s329 = scalar_lea.vmem %s208, 1900
      %s330 = scalar_lea.vmem %s184, 2700
      %v331 = vld [vmem:[%s330] sm:$0xf]
      %v332 = vunpack.c.l.bf16 %v331
      %v333 = vunpack.c.h.bf16 %v331
      %s334 = scalar_lea.vmem %s208, 2700
      %s335 = scalar_lea.vmem %s184, 1900
      %v336 = vld [vmem:[%s335] sm:$0xf]
      %v337 = vunpack.c.l.bf16 %v336
      %v338 = vunpack.c.h.bf16 %v336
      %s339 = scalar_lea.vmem %s208, 3500
      %s340 = scalar_lea.vmem %s184, 1100
      %v341 = vld [vmem:[%s340] sm:$0xf]
      %v342 = vunpack.c.l.bf16 %v341
      %v343 = vunpack.c.h.bf16 %v341
      %s344 = scalar_lea.vmem %s208, 4300
      %s345 = scalar_lea.vmem %s184, 300
      %v346 = vld [vmem:[%s345] sm:$0xf]
      %v347 = vunpack.c.l.bf16 %v346
      %v348 = vunpack.c.h.bf16 %v346
      %s349 = scalar_lea.vmem %s208, 5100
      %s350 = scalar_lea.vmem %s184, 4804
      %v351 = vld [vmem:[%s350] sm:$0xf]
      %v352 = vunpack.c.l.bf16 %v351
      %v353 = vunpack.c.h.bf16 %v351
      %s354 = scalar_lea.vmem %s208, 4
      %s356 = ssub.s32 0, 4
      %s357 = scalar_lea.vmem %s354, %s356
      %v358 = vpack.c.bf16 %v352, %v214
      %359 = vst [vmem:[%s357] sm:$0xff] %v358
      %s360 = scalar_lea.vmem %s184, 4004
      %v361 = vld [vmem:[%s360] sm:$0xf]
      %v362 = vunpack.c.l.bf16 %v361
      %v363 = vunpack.c.h.bf16 %v361
      %s364 = scalar_lea.vmem %s208, 804
      %s366 = ssub.s32 0, 4
      %s367 = scalar_lea.vmem %s364, %s366
      %v368 = vpack.c.bf16 %v362, %v218
      %369 = vst [vmem:[%s367] sm:$0xff] %v368
      %s370 = scalar_lea.vmem %s184, 3204
      %v371 = vld [vmem:[%s370] sm:$0xf]
      %v372 = vunpack.c.l.bf16 %v371
      %v373 = vunpack.c.h.bf16 %v371
      %s374 = scalar_lea.vmem %s208, 1604
      %s376 = ssub.s32 0, 4
      %s377 = scalar_lea.vmem %s374, %s376
      %v378 = vpack.c.bf16 %v372, %v223
      %379 = vst [vmem:[%s377] sm:$0xff] %v378
      %s380 = scalar_lea.vmem %s184, 2404
      %v381 = vld [vmem:[%s380] sm:$0xf]
      %v382 = vunpack.c.l.bf16 %v381
      %v383 = vunpack.c.h.bf16 %v381
      %s384 = scalar_lea.vmem %s208, 2404
      %s386 = ssub.s32 0, 4
      %s387 = scalar_lea.vmem %s384, %s386
      %v388 = vpack.c.bf16 %v382, %v228
      %389 = vst [vmem:[%s387] sm:$0xff] %v388
      %s390 = scalar_lea.vmem %s184, 1604
      %v391 = vld [vmem:[%s390] sm:$0xf]
      %v392 = vunpack.c.l.bf16 %v391
      %v393 = vunpack.c.h.bf16 %v391
      %s394 = scalar_lea.vmem %s208, 3204
      %s396 = ssub.s32 0, 4
      %s397 = scalar_lea.vmem %s394, %s396
      %v398 = vpack.c.bf16 %v392, %v233
      %399 = vst [vmem:[%s397] sm:$0xff] %v398
      %s400 = scalar_lea.vmem %s184, 804
      %v401 = vld [vmem:[%s400] sm:$0xf]
      %v402 = vunpack.c.l.bf16 %v401
      %v403 = vunpack.c.h.bf16 %v401
      %s404 = scalar_lea.vmem %s208, 4004
      %s406 = ssub.s32 0, 4
      %s407 = scalar_lea.vmem %s404, %s406
      %v408 = vpack.c.bf16 %v402, %v238
      %409 = vst [vmem:[%s407] sm:$0xff] %v408
      %s410 = scalar_lea.vmem %s184, 4
      %v411 = vld [vmem:[%s410] sm:$0xf]
      %v412 = vunpack.c.l.bf16 %v411
      %v413 = vunpack.c.h.bf16 %v411
      %s414 = scalar_lea.vmem %s208, 4804
      %s416 = ssub.s32 0, 4
      %s417 = scalar_lea.vmem %s414, %s416
      %v418 = vpack.c.bf16 %v412, %v242
      %419 = vst [vmem:[%s417] sm:$0xff] %v418
      %s420 = scalar_lea.vmem %s184, 4904
      %v421 = vld [vmem:[%s420] sm:$0xf]
      %v422 = vunpack.c.l.bf16 %v421
      %v423 = vunpack.c.h.bf16 %v421
      %s424 = scalar_lea.vmem %s208, 104
      %s426 = ssub.s32 0, 4
      %s427 = scalar_lea.vmem %s424, %s426
      %v428 = vpack.c.bf16 %v422, %v247
      %429 = vst [vmem:[%s427] sm:$0xff] %v428
      %s430 = scalar_lea.vmem %s184, 4104
      %v431 = vld [vmem:[%s430] sm:$0xf]
      %v432 = vunpack.c.l.bf16 %v431
      %v433 = vunpack.c.h.bf16 %v431
      %s434 = scalar_lea.vmem %s208, 904
      %s436 = ssub.s32 0, 4
      %s437 = scalar_lea.vmem %s434, %s436
      %v438 = vpack.c.bf16 %v432, %v252
      %439 = vst [vmem:[%s437] sm:$0xff] %v438
      %s440 = scalar_lea.vmem %s184, 3304
      %v441 = vld [vmem:[%s440] sm:$0xf]
      %v442 = vunpack.c.l.bf16 %v441
      %v443 = vunpack.c.h.bf16 %v441
      %s444 = scalar_lea.vmem %s208, 1704
      %s446 = ssub.s32 0, 4
      %s447 = scalar_lea.vmem %s444, %s446
      %v448 = vpack.c.bf16 %v442, %v257
      %449 = vst [vmem:[%s447] sm:$0xff] %v448
      %s450 = scalar_lea.vmem %s184, 2504
      %v451 = vld [vmem:[%s450] sm:$0xf]
      %v452 = vunpack.c.l.bf16 %v451
      %v453 = vunpack.c.h.bf16 %v451
      %s454 = scalar_lea.vmem %s208, 2504
      %s456 = ssub.s32 0, 4
      %s457 = scalar_lea.vmem %s454, %s456
      %v458 = vpack.c.bf16 %v452, %v262
      %459 = vst [vmem:[%s457] sm:$0xff] %v458
      %s460 = scalar_lea.vmem %s184, 1704
      %v461 = vld [vmem:[%s460] sm:$0xf]
      %v462 = vunpack.c.l.bf16 %v461
      %v463 = vunpack.c.h.bf16 %v461
      %s464 = scalar_lea.vmem %s208, 3304
      %s466 = ssub.s32 0, 4
      %s467 = scalar_lea.vmem %s464, %s466
      %v468 = vpack.c.bf16 %v462, %v267
      %469 = vst [vmem:[%s467] sm:$0xff] %v468
      %s470 = scalar_lea.vmem %s184, 904
      %v471 = vld [vmem:[%s470] sm:$0xf]
      %v472 = vunpack.c.l.bf16 %v471
      %v473 = vunpack.c.h.bf16 %v471
      %s474 = scalar_lea.vmem %s208, 4104
      %s476 = ssub.s32 0, 4
      %s477 = scalar_lea.vmem %s474, %s476
      %v478 = vpack.c.bf16 %v472, %v272
      %479 = vst [vmem:[%s477] sm:$0xff] %v478
      %s480 = scalar_lea.vmem %s184, 104
      %v481 = vld [vmem:[%s480] sm:$0xf]
      %v482 = vunpack.c.l.bf16 %v481
      %v483 = vunpack.c.h.bf16 %v481
      %s484 = scalar_lea.vmem %s208, 4904
      %s486 = ssub.s32 0, 4
      %s487 = scalar_lea.vmem %s484, %s486
      %v488 = vpack.c.bf16 %v482, %v277
      %489 = vst [vmem:[%s487] sm:$0xff] %v488
      %s490 = scalar_lea.vmem %s184, 5004
      %v491 = vld [vmem:[%s490] sm:$0xf]
      %v492 = vunpack.c.l.bf16 %v491
      %v493 = vunpack.c.h.bf16 %v491
      %s494 = scalar_lea.vmem %s208, 204
      %s496 = ssub.s32 0, 4
      %s497 = scalar_lea.vmem %s494, %s496
      %v498 = vpack.c.bf16 %v492, %v282
      %499 = vst [vmem:[%s497] sm:$0xff] %v498
      %s500 = scalar_lea.vmem %s184, 4204
      %v501 = vld [vmem:[%s500] sm:$0xf]
      %v502 = vunpack.c.l.bf16 %v501
      %v503 = vunpack.c.h.bf16 %v501
      %s504 = scalar_lea.vmem %s208, 1004
      %s506 = ssub.s32 0, 4
      %s507 = scalar_lea.vmem %s504, %s506
      %v508 = vpack.c.bf16 %v502, %v287
      %509 = vst [vmem:[%s507] sm:$0xff] %v508
      %s510 = scalar_lea.vmem %s184, 3404
      %v511 = vld [vmem:[%s510] sm:$0xf]
      %v512 = vunpack.c.l.bf16 %v511
      %v513 = vunpack.c.h.bf16 %v511
      %s514 = scalar_lea.vmem %s208, 1804
      %s516 = ssub.s32 0, 4
      %s517 = scalar_lea.vmem %s514, %s516
      %v518 = vpack.c.bf16 %v512, %v292
      %519 = vst [vmem:[%s517] sm:$0xff] %v518
      %s520 = scalar_lea.vmem %s184, 2604
      %v521 = vld [vmem:[%s520] sm:$0xf]
      %v522 = vunpack.c.l.bf16 %v521
      %v523 = vunpack.c.h.bf16 %v521
      %s524 = scalar_lea.vmem %s208, 2604
      %s526 = ssub.s32 0, 4
      %s527 = scalar_lea.vmem %s524, %s526
      %v528 = vpack.c.bf16 %v522, %v297
      %529 = vst [vmem:[%s527] sm:$0xff] %v528
      %s530 = scalar_lea.vmem %s184, 1804
      %v531 = vld [vmem:[%s530] sm:$0xf]
      %v532 = vunpack.c.l.bf16 %v531
      %v533 = vunpack.c.h.bf16 %v531
      %s534 = scalar_lea.vmem %s208, 3404
      %s536 = ssub.s32 0, 4
      %s537 = scalar_lea.vmem %s534, %s536
      %v538 = vpack.c.bf16 %v532, %v302
      %539 = vst [vmem:[%s537] sm:$0xff] %v538
      %s540 = scalar_lea.vmem %s184, 1004
      %v541 = vld [vmem:[%s540] sm:$0xf]
      %v542 = vunpack.c.l.bf16 %v541
      %v543 = vunpack.c.h.bf16 %v541
      %s544 = scalar_lea.vmem %s208, 4204
      %s546 = ssub.s32 0, 4
      %s547 = scalar_lea.vmem %s544, %s546
      %v548 = vpack.c.bf16 %v542, %v307
      %549 = vst [vmem:[%s547] sm:$0xff] %v548
      %s550 = scalar_lea.vmem %s184, 204
      %v551 = vld [vmem:[%s550] sm:$0xf]
      %v552 = vunpack.c.l.bf16 %v551
      %v553 = vunpack.c.h.bf16 %v551
      %s554 = scalar_lea.vmem %s208, 5004
      %s556 = ssub.s32 0, 4
      %s557 = scalar_lea.vmem %s554, %s556
      %v558 = vpack.c.bf16 %v552, %v312
      %559 = vst [vmem:[%s557] sm:$0xff] %v558
      %s560 = scalar_lea.vmem %s184, 5104
      %v561 = vld [vmem:[%s560] sm:$0xf]
      %v562 = vunpack.c.l.bf16 %v561
      %v563 = vunpack.c.h.bf16 %v561
      %s564 = scalar_lea.vmem %s208, 304
      %s566 = ssub.s32 0, 4
      %s567 = scalar_lea.vmem %s564, %s566
      %v568 = vpack.c.bf16 %v562, %v317
      %569 = vst [vmem:[%s567] sm:$0xff] %v568
      %s570 = scalar_lea.vmem %s184, 4304
      %v571 = vld [vmem:[%s570] sm:$0xf]
      %v572 = vunpack.c.l.bf16 %v571
      %v573 = vunpack.c.h.bf16 %v571
      %s574 = scalar_lea.vmem %s208, 1104
      %s576 = ssub.s32 0, 4
      %s577 = scalar_lea.vmem %s574, %s576
      %v578 = vpack.c.bf16 %v572, %v322
      %579 = vst [vmem:[%s577] sm:$0xff] %v578
      %s580 = scalar_lea.vmem %s184, 3504
      %v581 = vld [vmem:[%s580] sm:$0xf]
      %v582 = vunpack.c.l.bf16 %v581
      %v583 = vunpack.c.h.bf16 %v581
      %s584 = scalar_lea.vmem %s208, 1904
      %s586 = ssub.s32 0, 4
      %s587 = scalar_lea.vmem %s584, %s586
      %v588 = vpack.c.bf16 %v582, %v327
      %589 = vst [vmem:[%s587] sm:$0xff] %v588
      %s590 = scalar_lea.vmem %s184, 2704
      %v591 = vld [vmem:[%s590] sm:$0xf]
      %v592 = vunpack.c.l.bf16 %v591
      %v593 = vunpack.c.h.bf16 %v591
      %s594 = scalar_lea.vmem %s208, 2704
      %s596 = ssub.s32 0, 4
      %s597 = scalar_lea.vmem %s594, %s596
      %v598 = vpack.c.bf16 %v592, %v332
      %599 = vst [vmem:[%s597] sm:$0xff] %v598
      %s600 = scalar_lea.vmem %s184, 1904
      %v601 = vld [vmem:[%s600] sm:$0xf]
      %v602 = vunpack.c.l.bf16 %v601
      %v603 = vunpack.c.h.bf16 %v601
      %s604 = scalar_lea.vmem %s208, 3504
      %s606 = ssub.s32 0, 4
      %s607 = scalar_lea.vmem %s604, %s606
      %v608 = vpack.c.bf16 %v602, %v337
      %609 = vst [vmem:[%s607] sm:$0xff] %v608
      %s610 = scalar_lea.vmem %s184, 1104
      %v611 = vld [vmem:[%s610] sm:$0xf]
      %v612 = vunpack.c.l.bf16 %v611
      %v613 = vunpack.c.h.bf16 %v611
      %s614 = scalar_lea.vmem %s208, 4304
      %s616 = ssub.s32 0, 4
      %s617 = scalar_lea.vmem %s614, %s616
      %v618 = vpack.c.bf16 %v612, %v342
      %619 = vst [vmem:[%s617] sm:$0xff] %v618
      %s620 = scalar_lea.vmem %s184, 304
      %v621 = vld [vmem:[%s620] sm:$0xf]
      %v622 = vunpack.c.l.bf16 %v621
      %v623 = vunpack.c.h.bf16 %v621
      %s624 = scalar_lea.vmem %s208, 5104
      %s626 = ssub.s32 0, 4
      %s627 = scalar_lea.vmem %s624, %s626
      %v628 = vpack.c.bf16 %v622, %v347
      %629 = vst [vmem:[%s627] sm:$0xff] %v628
      %s630 = scalar_lea.vmem %s184, 4808
      %v631 = vld [vmem:[%s630] sm:$0xf]
      %v632 = vunpack.c.l.bf16 %v631
      %v633 = vunpack.c.h.bf16 %v631
      %s634 = scalar_lea.vmem %s208, 8
      %s635 = scalar_lea.vmem %s184, 4008
      %v636 = vld [vmem:[%s635] sm:$0xf]
      %v637 = vunpack.c.l.bf16 %v636
      %v638 = vunpack.c.h.bf16 %v636
      %s639 = scalar_lea.vmem %s208, 808
      %s640 = scalar_lea.vmem %s184, 3208
      %v641 = vld [vmem:[%s640] sm:$0xf]
      %v642 = vunpack.c.l.bf16 %v641
      %v643 = vunpack.c.h.bf16 %v641
      %s644 = scalar_lea.vmem %s208, 1608
      %s645 = scalar_lea.vmem %s184, 2408
      %v646 = vld [vmem:[%s645] sm:$0xf]
      %v647 = vunpack.c.l.bf16 %v646
      %v648 = vunpack.c.h.bf16 %v646
      %s649 = scalar_lea.vmem %s208, 2408
      %s650 = scalar_lea.vmem %s184, 1608
      %v651 = vld [vmem:[%s650] sm:$0xf]
      %v652 = vunpack.c.l.bf16 %v651
      %v653 = vunpack.c.h.bf16 %v651
      %s654 = scalar_lea.vmem %s208, 3208
      %s655 = scalar_lea.vmem %s184, 808
      %v656 = vld [vmem:[%s655] sm:$0xf]
      %v657 = vunpack.c.l.bf16 %v656
      %v658 = vunpack.c.h.bf16 %v656
      %s659 = scalar_lea.vmem %s208, 4008
      %s660 = scalar_lea.vmem %s184, 8
      %v661 = vld [vmem:[%s660] sm:$0xf]
      %v662 = vunpack.c.l.bf16 %v661
      %v663 = vunpack.c.h.bf16 %v661
      %s664 = scalar_lea.vmem %s208, 4808
      %s665 = scalar_lea.vmem %s184, 4908
      %v666 = vld [vmem:[%s665] sm:$0xf]
      %v667 = vunpack.c.l.bf16 %v666
      %v668 = vunpack.c.h.bf16 %v666
      %s669 = scalar_lea.vmem %s208, 108
      %s670 = scalar_lea.vmem %s184, 4108
      %v671 = vld [vmem:[%s670] sm:$0xf]
      %v672 = vunpack.c.l.bf16 %v671
      %v673 = vunpack.c.h.bf16 %v671
      %s674 = scalar_lea.vmem %s208, 908
      %s675 = scalar_lea.vmem %s184, 3308
      %v676 = vld [vmem:[%s675] sm:$0xf]
      %v677 = vunpack.c.l.bf16 %v676
      %v678 = vunpack.c.h.bf16 %v676
      %s679 = scalar_lea.vmem %s208, 1708
      %s680 = scalar_lea.vmem %s184, 2508
      %v681 = vld [vmem:[%s680] sm:$0xf]
      %v682 = vunpack.c.l.bf16 %v681
      %v683 = vunpack.c.h.bf16 %v681
      %s684 = scalar_lea.vmem %s208, 2508
      %s685 = scalar_lea.vmem %s184, 1708
      %v686 = vld [vmem:[%s685] sm:$0xf]
      %v687 = vunpack.c.l.bf16 %v686
      %v688 = vunpack.c.h.bf16 %v686
      %s689 = scalar_lea.vmem %s208, 3308
      %s690 = scalar_lea.vmem %s184, 908
      %v691 = vld [vmem:[%s690] sm:$0xf]
      %v692 = vunpack.c.l.bf16 %v691
      %v693 = vunpack.c.h.bf16 %v691
      %s694 = scalar_lea.vmem %s208, 4108
      %s695 = scalar_lea.vmem %s184, 108
      %v696 = vld [vmem:[%s695] sm:$0xf]
      %v697 = vunpack.c.l.bf16 %v696
      %v698 = vunpack.c.h.bf16 %v696
      %s699 = scalar_lea.vmem %s208, 4908
      %s700 = scalar_lea.vmem %s184, 5008
      %v701 = vld [vmem:[%s700] sm:$0xf]
      %v702 = vunpack.c.l.bf16 %v701
      %v703 = vunpack.c.h.bf16 %v701
      %s704 = scalar_lea.vmem %s208, 208
      %s705 = scalar_lea.vmem %s184, 4208
      %v706 = vld [vmem:[%s705] sm:$0xf]
      %v707 = vunpack.c.l.bf16 %v706
      %v708 = vunpack.c.h.bf16 %v706
      %s709 = scalar_lea.vmem %s208, 1008
      %s710 = scalar_lea.vmem %s184, 3408
      %v711 = vld [vmem:[%s710] sm:$0xf]
      %v712 = vunpack.c.l.bf16 %v711
      %v713 = vunpack.c.h.bf16 %v711
      %s714 = scalar_lea.vmem %s208, 1808
      %s715 = scalar_lea.vmem %s184, 2608
      %v716 = vld [vmem:[%s715] sm:$0xf]
      %v717 = vunpack.c.l.bf16 %v716
      %v718 = vunpack.c.h.bf16 %v716
      %s719 = scalar_lea.vmem %s208, 2608
      %s720 = scalar_lea.vmem %s184, 1808
      %v721 = vld [vmem:[%s720] sm:$0xf]
      %v722 = vunpack.c.l.bf16 %v721
      %v723 = vunpack.c.h.bf16 %v721
      %s724 = scalar_lea.vmem %s208, 3408
      %s725 = scalar_lea.vmem %s184, 1008
      %v726 = vld [vmem:[%s725] sm:$0xf]
      %v727 = vunpack.c.l.bf16 %v726
      %v728 = vunpack.c.h.bf16 %v726
      %s729 = scalar_lea.vmem %s208, 4208
      %s730 = scalar_lea.vmem %s184, 208
      %v731 = vld [vmem:[%s730] sm:$0xf]
      %v732 = vunpack.c.l.bf16 %v731
      %v733 = vunpack.c.h.bf16 %v731
      %s734 = scalar_lea.vmem %s208, 5008
      %s735 = scalar_lea.vmem %s184, 5108
      %v736 = vld [vmem:[%s735] sm:$0xf]
      %v737 = vunpack.c.l.bf16 %v736
      %v738 = vunpack.c.h.bf16 %v736
      %s739 = scalar_lea.vmem %s208, 308
      %s740 = scalar_lea.vmem %s184, 4308
      %v741 = vld [vmem:[%s740] sm:$0xf]
      %v742 = vunpack.c.l.bf16 %v741
      %v743 = vunpack.c.h.bf16 %v741
      %s744 = scalar_lea.vmem %s208, 1108
      %s745 = scalar_lea.vmem %s184, 3508
      %v746 = vld [vmem:[%s745] sm:$0xf]
      %v747 = vunpack.c.l.bf16 %v746
      %v748 = vunpack.c.h.bf16 %v746
      %s749 = scalar_lea.vmem %s208, 1908
      %s750 = scalar_lea.vmem %s184, 2708
      %v751 = vld [vmem:[%s750] sm:$0xf]
      %v752 = vunpack.c.l.bf16 %v751
      %v753 = vunpack.c.h.bf16 %v751
      %s754 = scalar_lea.vmem %s208, 2708
      %s755 = scalar_lea.vmem %s184, 1908
      %v756 = vld [vmem:[%s755] sm:$0xf]
      %v757 = vunpack.c.l.bf16 %v756
      %v758 = vunpack.c.h.bf16 %v756
      %s759 = scalar_lea.vmem %s208, 3508
      %s760 = scalar_lea.vmem %s184, 1108
      %v761 = vld [vmem:[%s760] sm:$0xf]
      %v762 = vunpack.c.l.bf16 %v761
      %v763 = vunpack.c.h.bf16 %v761
      %s764 = scalar_lea.vmem %s208, 4308
      %s765 = scalar_lea.vmem %s184, 308
      %v766 = vld [vmem:[%s765] sm:$0xf]
      %v767 = vunpack.c.l.bf16 %v766
      %v768 = vunpack.c.h.bf16 %v766
      %s769 = scalar_lea.vmem %s208, 5108
      %s770 = scalar_lea.vmem %s184, 4812
      %v771 = vld [vmem:[%s770] sm:$0xf]
      %v772 = vunpack.c.l.bf16 %v771
      %v773 = vunpack.c.h.bf16 %v771
      %s774 = scalar_lea.vmem %s208, 12
      %s776 = ssub.s32 0, 4
      %s777 = scalar_lea.vmem %s774, %s776
      %v778 = vpack.c.bf16 %v772, %v632
      %779 = vst [vmem:[%s777] sm:$0xff] %v778
      %s780 = scalar_lea.vmem %s184, 4012
      %v781 = vld [vmem:[%s780] sm:$0xf]
      %v782 = vunpack.c.l.bf16 %v781
      %v783 = vunpack.c.h.bf16 %v781
      %s784 = scalar_lea.vmem %s208, 812
      %s786 = ssub.s32 0, 4
      %s787 = scalar_lea.vmem %s784, %s786
      %v788 = vpack.c.bf16 %v782, %v637
      %789 = vst [vmem:[%s787] sm:$0xff] %v788
      %s790 = scalar_lea.vmem %s184, 3212
      %v791 = vld [vmem:[%s790] sm:$0xf]
      %v792 = vunpack.c.l.bf16 %v791
      %v793 = vunpack.c.h.bf16 %v791
      %s794 = scalar_lea.vmem %s208, 1612
      %s796 = ssub.s32 0, 4
      %s797 = scalar_lea.vmem %s794, %s796
      %v798 = vpack.c.bf16 %v792, %v642
      %799 = vst [vmem:[%s797] sm:$0xff] %v798
      %s800 = scalar_lea.vmem %s184, 2412
      %v801 = vld [vmem:[%s800] sm:$0xf]
      %v802 = vunpack.c.l.bf16 %v801
      %v803 = vunpack.c.h.bf16 %v801
      %s804 = scalar_lea.vmem %s208, 2412
      %s806 = ssub.s32 0, 4
      %s807 = scalar_lea.vmem %s804, %s806
      %v808 = vpack.c.bf16 %v802, %v647
      %809 = vst [vmem:[%s807] sm:$0xff] %v808
      %s810 = scalar_lea.vmem %s184, 1612
      %v811 = vld [vmem:[%s810] sm:$0xf]
      %v812 = vunpack.c.l.bf16 %v811
      %v813 = vunpack.c.h.bf16 %v811
      %s814 = scalar_lea.vmem %s208, 3212
      %s816 = ssub.s32 0, 4
      %s817 = scalar_lea.vmem %s814, %s816
      %v818 = vpack.c.bf16 %v812, %v652
      %819 = vst [vmem:[%s817] sm:$0xff] %v818
      %s820 = scalar_lea.vmem %s184, 812
      %v821 = vld [vmem:[%s820] sm:$0xf]
      %v822 = vunpack.c.l.bf16 %v821
      %v823 = vunpack.c.h.bf16 %v821
      %s824 = scalar_lea.vmem %s208, 4012
      %s826 = ssub.s32 0, 4
      %s827 = scalar_lea.vmem %s824, %s826
      %v828 = vpack.c.bf16 %v822, %v657
      %829 = vst [vmem:[%s827] sm:$0xff] %v828
      %s830 = scalar_lea.vmem %s184, 12
      %v831 = vld [vmem:[%s830] sm:$0xf]
      %v832 = vunpack.c.l.bf16 %v831
      %v833 = vunpack.c.h.bf16 %v831
      %s834 = scalar_lea.vmem %s208, 4812
      %s836 = ssub.s32 0, 4
      %s837 = scalar_lea.vmem %s834, %s836
      %v838 = vpack.c.bf16 %v832, %v662
      %839 = vst [vmem:[%s837] sm:$0xff] %v838
      %s840 = scalar_lea.vmem %s184, 4912
      %v841 = vld [vmem:[%s840] sm:$0xf]
      %v842 = vunpack.c.l.bf16 %v841
      %v843 = vunpack.c.h.bf16 %v841
      %s844 = scalar_lea.vmem %s208, 112
      %s846 = ssub.s32 0, 4
      %s847 = scalar_lea.vmem %s844, %s846
      %v848 = vpack.c.bf16 %v842, %v667
      %849 = vst [vmem:[%s847] sm:$0xff] %v848
      %s850 = scalar_lea.vmem %s184, 4112
      %v851 = vld [vmem:[%s850] sm:$0xf]
      %v852 = vunpack.c.l.bf16 %v851
      %v853 = vunpack.c.h.bf16 %v851
      %s854 = scalar_lea.vmem %s208, 912
      %s856 = ssub.s32 0, 4
      %s857 = scalar_lea.vmem %s854, %s856
      %v858 = vpack.c.bf16 %v852, %v672
      %859 = vst [vmem:[%s857] sm:$0xff] %v858
      %s860 = scalar_lea.vmem %s184, 3312
      %v861 = vld [vmem:[%s860] sm:$0xf]
      %v862 = vunpack.c.l.bf16 %v861
      %v863 = vunpack.c.h.bf16 %v861
      %s864 = scalar_lea.vmem %s208, 1712
      %s866 = ssub.s32 0, 4
      %s867 = scalar_lea.vmem %s864, %s866
      %v868 = vpack.c.bf16 %v862, %v677
      %869 = vst [vmem:[%s867] sm:$0xff] %v868
      %s870 = scalar_lea.vmem %s184, 2512
      %v871 = vld [vmem:[%s870] sm:$0xf]
      %v872 = vunpack.c.l.bf16 %v871
      %v873 = vunpack.c.h.bf16 %v871
      %s874 = scalar_lea.vmem %s208, 2512
      %s876 = ssub.s32 0, 4
      %s877 = scalar_lea.vmem %s874, %s876
      %v878 = vpack.c.bf16 %v872, %v682
      %879 = vst [vmem:[%s877] sm:$0xff] %v878
      %s880 = scalar_lea.vmem %s184, 1712
      %v881 = vld [vmem:[%s880] sm:$0xf]
      %v882 = vunpack.c.l.bf16 %v881
      %v883 = vunpack.c.h.bf16 %v881
      %s884 = scalar_lea.vmem %s208, 3312
      %s886 = ssub.s32 0, 4
      %s887 = scalar_lea.vmem %s884, %s886
      %v888 = vpack.c.bf16 %v882, %v687
      %889 = vst [vmem:[%s887] sm:$0xff] %v888
      %s890 = scalar_lea.vmem %s184, 912
      %v891 = vld [vmem:[%s890] sm:$0xf]
      %v892 = vunpack.c.l.bf16 %v891
      %v893 = vunpack.c.h.bf16 %v891
      %s894 = scalar_lea.vmem %s208, 4112
      %s896 = ssub.s32 0, 4
      %s897 = scalar_lea.vmem %s894, %s896
      %v898 = vpack.c.bf16 %v892, %v692
      %899 = vst [vmem:[%s897] sm:$0xff] %v898
      %s900 = scalar_lea.vmem %s184, 112
      %v901 = vld [vmem:[%s900] sm:$0xf]
      %v902 = vunpack.c.l.bf16 %v901
      %v903 = vunpack.c.h.bf16 %v901
      %s904 = scalar_lea.vmem %s208, 4912
      %s906 = ssub.s32 0, 4
      %s907 = scalar_lea.vmem %s904, %s906
      %v908 = vpack.c.bf16 %v902, %v697
      %909 = vst [vmem:[%s907] sm:$0xff] %v908
      %s910 = scalar_lea.vmem %s184, 5012
      %v911 = vld [vmem:[%s910] sm:$0xf]
      %v912 = vunpack.c.l.bf16 %v911
      %v913 = vunpack.c.h.bf16 %v911
      %s914 = scalar_lea.vmem %s208, 212
      %s916 = ssub.s32 0, 4
      %s917 = scalar_lea.vmem %s914, %s916
      %v918 = vpack.c.bf16 %v912, %v702
      %919 = vst [vmem:[%s917] sm:$0xff] %v918
      %s920 = scalar_lea.vmem %s184, 4212
      %v921 = vld [vmem:[%s920] sm:$0xf]
      %v922 = vunpack.c.l.bf16 %v921
      %v923 = vunpack.c.h.bf16 %v921
      %s924 = scalar_lea.vmem %s208, 1012
      %s926 = ssub.s32 0, 4
      %s927 = scalar_lea.vmem %s924, %s926
      %v928 = vpack.c.bf16 %v922, %v707
      %929 = vst [vmem:[%s927] sm:$0xff] %v928
      %s930 = scalar_lea.vmem %s184, 3412
      %v931 = vld [vmem:[%s930] sm:$0xf]
      %v932 = vunpack.c.l.bf16 %v931
      %v933 = vunpack.c.h.bf16 %v931
      %s934 = scalar_lea.vmem %s208, 1812
      %s936 = ssub.s32 0, 4
      %s937 = scalar_lea.vmem %s934, %s936
      %v938 = vpack.c.bf16 %v932, %v712
      %939 = vst [vmem:[%s937] sm:$0xff] %v938
      %s940 = scalar_lea.vmem %s184, 2612
      %v941 = vld [vmem:[%s940] sm:$0xf]
      %v942 = vunpack.c.l.bf16 %v941
      %v943 = vunpack.c.h.bf16 %v941
      %s944 = scalar_lea.vmem %s208, 2612
      %s946 = ssub.s32 0, 4
      %s947 = scalar_lea.vmem %s944, %s946
      %v948 = vpack.c.bf16 %v942, %v717
      %949 = vst [vmem:[%s947] sm:$0xff] %v948
      %s950 = scalar_lea.vmem %s184, 1812
      %v951 = vld [vmem:[%s950] sm:$0xf]
      %v952 = vunpack.c.l.bf16 %v951
      %v953 = vunpack.c.h.bf16 %v951
      %s954 = scalar_lea.vmem %s208, 3412
      %s956 = ssub.s32 0, 4
      %s957 = scalar_lea.vmem %s954, %s956
      %v958 = vpack.c.bf16 %v952, %v722
      %959 = vst [vmem:[%s957] sm:$0xff] %v958
      %s960 = scalar_lea.vmem %s184, 1012
      %v961 = vld [vmem:[%s960] sm:$0xf]
      %v962 = vunpack.c.l.bf16 %v961
      %v963 = vunpack.c.h.bf16 %v961
      %s964 = scalar_lea.vmem %s208, 4212
      %s966 = ssub.s32 0, 4
      %s967 = scalar_lea.vmem %s964, %s966
      %v968 = vpack.c.bf16 %v962, %v727
      %969 = vst [vmem:[%s967] sm:$0xff] %v968
      %s970 = scalar_lea.vmem %s184, 212
      %v971 = vld [vmem:[%s970] sm:$0xf]
      %v972 = vunpack.c.l.bf16 %v971
      %v973 = vunpack.c.h.bf16 %v971
      %s974 = scalar_lea.vmem %s208, 5012
      %s976 = ssub.s32 0, 4
      %s977 = scalar_lea.vmem %s974, %s976
      %v978 = vpack.c.bf16 %v972, %v732
      %979 = vst [vmem:[%s977] sm:$0xff] %v978
      %s980 = scalar_lea.vmem %s184, 5112
      %v981 = vld [vmem:[%s980] sm:$0xf]
      %v982 = vunpack.c.l.bf16 %v981
      %v983 = vunpack.c.h.bf16 %v981
      %s984 = scalar_lea.vmem %s208, 312
      %s986 = ssub.s32 0, 4
      %s987 = scalar_lea.vmem %s984, %s986
      %v988 = vpack.c.bf16 %v982, %v737
      %989 = vst [vmem:[%s987] sm:$0xff] %v988
      %s990 = scalar_lea.vmem %s184, 4312
      %v991 = vld [vmem:[%s990] sm:$0xf]
      %v992 = vunpack.c.l.bf16 %v991
      %v993 = vunpack.c.h.bf16 %v991
      %s994 = scalar_lea.vmem %s208, 1112
      %s996 = ssub.s32 0, 4
      %s997 = scalar_lea.vmem %s994, %s996
      %v998 = vpack.c.bf16 %v992, %v742
      %999 = vst [vmem:[%s997] sm:$0xff] %v998
      %s1000 = scalar_lea.vmem %s184, 3512
      %v1001 = vld [vmem:[%s1000] sm:$0xf]
      %v1002 = vunpack.c.l.bf16 %v1001
      %v1003 = vunpack.c.h.bf16 %v1001
      %s1004 = scalar_lea.vmem %s208, 1912
      %s1006 = ssub.s32 0, 4
      %s1007 = scalar_lea.vmem %s1004, %s1006
      %v1008 = vpack.c.bf16 %v1002, %v747
      %1009 = vst [vmem:[%s1007] sm:$0xff] %v1008
      %s1010 = scalar_lea.vmem %s184, 2712
      %v1011 = vld [vmem:[%s1010] sm:$0xf]
      %v1012 = vunpack.c.l.bf16 %v1011
      %v1013 = vunpack.c.h.bf16 %v1011
      %s1014 = scalar_lea.vmem %s208, 2712
      %s1016 = ssub.s32 0, 4
      %s1017 = scalar_lea.vmem %s1014, %s1016
      %v1018 = vpack.c.bf16 %v1012, %v752
      %1019 = vst [vmem:[%s1017] sm:$0xff] %v1018
      %s1020 = scalar_lea.vmem %s184, 1912
      %v1021 = vld [vmem:[%s1020] sm:$0xf]
      %v1022 = vunpack.c.l.bf16 %v1021
      %v1023 = vunpack.c.h.bf16 %v1021
      %s1024 = scalar_lea.vmem %s208, 3512
      %s1026 = ssub.s32 0, 4
      %s1027 = scalar_lea.vmem %s1024, %s1026
      %v1028 = vpack.c.bf16 %v1022, %v757
      %1029 = vst [vmem:[%s1027] sm:$0xff] %v1028
      %s1030 = scalar_lea.vmem %s184, 1112
      %v1031 = vld [vmem:[%s1030] sm:$0xf]
      %v1032 = vunpack.c.l.bf16 %v1031
      %v1033 = vunpack.c.h.bf16 %v1031
      %s1034 = scalar_lea.vmem %s208, 4312
      %s1036 = ssub.s32 0, 4
      %s1037 = scalar_lea.vmem %s1034, %s1036
      %v1038 = vpack.c.bf16 %v1032, %v762
      %1039 = vst [vmem:[%s1037] sm:$0xff] %v1038
      %s1040 = scalar_lea.vmem %s184, 312
      %v1041 = vld [vmem:[%s1040] sm:$0xf]
      %v1042 = vunpack.c.l.bf16 %v1041
      %v1043 = vunpack.c.h.bf16 %v1041
      %s1044 = scalar_lea.vmem %s208, 5112
      %s1046 = ssub.s32 0, 4
      %s1047 = scalar_lea.vmem %s1044, %s1046
      %v1048 = vpack.c.bf16 %v1042, %v767
      %1049 = vst [vmem:[%s1047] sm:$0xff] %v1048
      %s1050 = scalar_lea.vmem %s184, 4816
      %v1051 = vld [vmem:[%s1050] sm:$0xf]
      %v1052 = vunpack.c.l.bf16 %v1051
      %v1053 = vunpack.c.h.bf16 %v1051
      %s1054 = scalar_lea.vmem %s208, 16
      %v1055 = vpack.c.bf16 0.0, %v1052
      %1056 = vst [vmem:[%s1054] sm:$0xf] %v1055
      %s1057 = scalar_lea.vmem %s184, 4016
      %v1058 = vld [vmem:[%s1057] sm:$0xf]
      %v1059 = vunpack.c.l.bf16 %v1058
      %v1060 = vunpack.c.h.bf16 %v1058
      %s1061 = scalar_lea.vmem %s208, 816
      %v1062 = vpack.c.bf16 0.0, %v1059
      %1063 = vst [vmem:[%s1061] sm:$0xf] %v1062
      %s1064 = scalar_lea.vmem %s184, 3216
      %v1065 = vld [vmem:[%s1064] sm:$0xf]
      %v1066 = vunpack.c.l.bf16 %v1065
      %v1067 = vunpack.c.h.bf16 %v1065
      %s1068 = scalar_lea.vmem %s208, 1616
      %v1069 = vpack.c.bf16 0.0, %v1066
      %1070 = vst [vmem:[%s1068] sm:$0xf] %v1069
      %s1071 = scalar_lea.vmem %s184, 2416
      %v1072 = vld [vmem:[%s1071] sm:$0xf]
      %v1073 = vunpack.c.l.bf16 %v1072
      %v1074 = vunpack.c.h.bf16 %v1072
      %s1075 = scalar_lea.vmem %s208, 2416
      %v1076 = vpack.c.bf16 0.0, %v1073
      %1077 = vst [vmem:[%s1075] sm:$0xf] %v1076
      %s1078 = scalar_lea.vmem %s184, 1616
      %v1079 = vld [vmem:[%s1078] sm:$0xf]
      %v1080 = vunpack.c.l.bf16 %v1079
      %v1081 = vunpack.c.h.bf16 %v1079
      %s1082 = scalar_lea.vmem %s208, 3216
      %v1083 = vpack.c.bf16 0.0, %v1080
      %1084 = vst [vmem:[%s1082] sm:$0xf] %v1083
      %s1085 = scalar_lea.vmem %s184, 816
      %v1086 = vld [vmem:[%s1085] sm:$0xf]
      %v1087 = vunpack.c.l.bf16 %v1086
      %v1088 = vunpack.c.h.bf16 %v1086
      %s1089 = scalar_lea.vmem %s208, 4016
      %v1090 = vpack.c.bf16 0.0, %v1087
      %1091 = vst [vmem:[%s1089] sm:$0xf] %v1090
      %s1092 = scalar_lea.vmem %s184, 16
      %v1093 = vld [vmem:[%s1092] sm:$0xf]
      %v1094 = vunpack.c.l.bf16 %v1093
      %v1095 = vunpack.c.h.bf16 %v1093
      %s1096 = scalar_lea.vmem %s208, 4816
      %v1097 = vpack.c.bf16 0.0, %v1094
      %1098 = vst [vmem:[%s1096] sm:$0xf] %v1097
      %s1099 = scalar_lea.vmem %s184, 4916
      %v1100 = vld [vmem:[%s1099] sm:$0xf]
      %v1101 = vunpack.c.l.bf16 %v1100
      %v1102 = vunpack.c.h.bf16 %v1100
      %s1103 = scalar_lea.vmem %s208, 116
      %v1104 = vpack.c.bf16 0.0, %v1101
      %1105 = vst [vmem:[%s1103] sm:$0xf] %v1104
      %s1106 = scalar_lea.vmem %s184, 4116
      %v1107 = vld [vmem:[%s1106] sm:$0xf]
      %v1108 = vunpack.c.l.bf16 %v1107
      %v1109 = vunpack.c.h.bf16 %v1107
      %s1110 = scalar_lea.vmem %s208, 916
      %v1111 = vpack.c.bf16 0.0, %v1108
      %1112 = vst [vmem:[%s1110] sm:$0xf] %v1111
      %s1113 = scalar_lea.vmem %s184, 3316
      %v1114 = vld [vmem:[%s1113] sm:$0xf]
      %v1115 = vunpack.c.l.bf16 %v1114
      %v1116 = vunpack.c.h.bf16 %v1114
      %s1117 = scalar_lea.vmem %s208, 1716
      %v1118 = vpack.c.bf16 0.0, %v1115
      %1119 = vst [vmem:[%s1117] sm:$0xf] %v1118
      %s1120 = scalar_lea.vmem %s184, 2516
      %v1121 = vld [vmem:[%s1120] sm:$0xf]
      %v1122 = vunpack.c.l.bf16 %v1121
      %v1123 = vunpack.c.h.bf16 %v1121
      %s1124 = scalar_lea.vmem %s208, 2516
      %v1125 = vpack.c.bf16 0.0, %v1122
      %1126 = vst [vmem:[%s1124] sm:$0xf] %v1125
      %s1127 = scalar_lea.vmem %s184, 1716
      %v1128 = vld [vmem:[%s1127] sm:$0xf]
      %v1129 = vunpack.c.l.bf16 %v1128
      %v1130 = vunpack.c.h.bf16 %v1128
      %s1131 = scalar_lea.vmem %s208, 3316
      %v1132 = vpack.c.bf16 0.0, %v1129
      %1133 = vst [vmem:[%s1131] sm:$0xf] %v1132
      %s1134 = scalar_lea.vmem %s184, 916
      %v1135 = vld [vmem:[%s1134] sm:$0xf]
      %v1136 = vunpack.c.l.bf16 %v1135
      %v1137 = vunpack.c.h.bf16 %v1135
      %s1138 = scalar_lea.vmem %s208, 4116
      %v1139 = vpack.c.bf16 0.0, %v1136
      %1140 = vst [vmem:[%s1138] sm:$0xf] %v1139
      %s1141 = scalar_lea.vmem %s184, 116
      %v1142 = vld [vmem:[%s1141] sm:$0xf]
      %v1143 = vunpack.c.l.bf16 %v1142
      %v1144 = vunpack.c.h.bf16 %v1142
      %s1145 = scalar_lea.vmem %s208, 4916
      %v1146 = vpack.c.bf16 0.0, %v1143
      %1147 = vst [vmem:[%s1145] sm:$0xf] %v1146
      %s1148 = scalar_lea.vmem %s184, 5016
      %v1149 = vld [vmem:[%s1148] sm:$0xf]
      %v1150 = vunpack.c.l.bf16 %v1149
      %v1151 = vunpack.c.h.bf16 %v1149
      %s1152 = scalar_lea.vmem %s208, 216
      %v1153 = vpack.c.bf16 0.0, %v1150
      %1154 = vst [vmem:[%s1152] sm:$0xf] %v1153
      %s1155 = scalar_lea.vmem %s184, 4216
      %v1156 = vld [vmem:[%s1155] sm:$0xf]
      %v1157 = vunpack.c.l.bf16 %v1156
      %v1158 = vunpack.c.h.bf16 %v1156
      %s1159 = scalar_lea.vmem %s208, 1016
      %v1160 = vpack.c.bf16 0.0, %v1157
      %1161 = vst [vmem:[%s1159] sm:$0xf] %v1160
      %s1162 = scalar_lea.vmem %s184, 3416
      %v1163 = vld [vmem:[%s1162] sm:$0xf]
      %v1164 = vunpack.c.l.bf16 %v1163
      %v1165 = vunpack.c.h.bf16 %v1163
      %s1166 = scalar_lea.vmem %s208, 1816
      %v1167 = vpack.c.bf16 0.0, %v1164
      %1168 = vst [vmem:[%s1166] sm:$0xf] %v1167
      %s1169 = scalar_lea.vmem %s184, 2616
      %v1170 = vld [vmem:[%s1169] sm:$0xf]
      %v1171 = vunpack.c.l.bf16 %v1170
      %v1172 = vunpack.c.h.bf16 %v1170
      %s1173 = scalar_lea.vmem %s208, 2616
      %v1174 = vpack.c.bf16 0.0, %v1171
      %1175 = vst [vmem:[%s1173] sm:$0xf] %v1174
      %s1176 = scalar_lea.vmem %s184, 1816
      %v1177 = vld [vmem:[%s1176] sm:$0xf]
      %v1178 = vunpack.c.l.bf16 %v1177
      %v1179 = vunpack.c.h.bf16 %v1177
      %s1180 = scalar_lea.vmem %s208, 3416
      %v1181 = vpack.c.bf16 0.0, %v1178
      %1182 = vst [vmem:[%s1180] sm:$0xf] %v1181
      %s1183 = scalar_lea.vmem %s184, 1016
      %v1184 = vld [vmem:[%s1183] sm:$0xf]
      %v1185 = vunpack.c.l.bf16 %v1184
      %v1186 = vunpack.c.h.bf16 %v1184
      %s1187 = scalar_lea.vmem %s208, 4216
      %v1188 = vpack.c.bf16 0.0, %v1185
      %1189 = vst [vmem:[%s1187] sm:$0xf] %v1188
      %s1190 = scalar_lea.vmem %s184, 216
      %v1191 = vld [vmem:[%s1190] sm:$0xf]
      %v1192 = vunpack.c.l.bf16 %v1191
      %v1193 = vunpack.c.h.bf16 %v1191
      %s1194 = scalar_lea.vmem %s208, 5016
      %v1195 = vpack.c.bf16 0.0, %v1192
      %1196 = vst [vmem:[%s1194] sm:$0xf] %v1195
      %s1197 = scalar_lea.vmem %s184, 5116
      %v1198 = vld [vmem:[%s1197] sm:$0xf]
      %v1199 = vunpack.c.l.bf16 %v1198
      %v1200 = vunpack.c.h.bf16 %v1198
      %s1201 = scalar_lea.vmem %s208, 316
      %v1202 = vpack.c.bf16 0.0, %v1199
      %1203 = vst [vmem:[%s1201] sm:$0xf] %v1202
      %s1204 = scalar_lea.vmem %s184, 4316
      %v1205 = vld [vmem:[%s1204] sm:$0xf]
      %v1206 = vunpack.c.l.bf16 %v1205
      %v1207 = vunpack.c.h.bf16 %v1205
      %s1208 = scalar_lea.vmem %s208, 1116
      %v1209 = vpack.c.bf16 0.0, %v1206
      %1210 = vst [vmem:[%s1208] sm:$0xf] %v1209
      %s1211 = scalar_lea.vmem %s184, 3516
      %v1212 = vld [vmem:[%s1211] sm:$0xf]
      %v1213 = vunpack.c.l.bf16 %v1212
      %v1214 = vunpack.c.h.bf16 %v1212
      %s1215 = scalar_lea.vmem %s208, 1916
      %v1216 = vpack.c.bf16 0.0, %v1213
      %1217 = vst [vmem:[%s1215] sm:$0xf] %v1216
      %s1218 = scalar_lea.vmem %s184, 2716
      %v1219 = vld [vmem:[%s1218] sm:$0xf]
      %v1220 = vunpack.c.l.bf16 %v1219
      %v1221 = vunpack.c.h.bf16 %v1219
      %s1222 = scalar_lea.vmem %s208, 2716
      %v1223 = vpack.c.bf16 0.0, %v1220
      %1224 = vst [vmem:[%s1222] sm:$0xf] %v1223
      %s1225 = scalar_lea.vmem %s184, 1916
      %v1226 = vld [vmem:[%s1225] sm:$0xf]
      %v1227 = vunpack.c.l.bf16 %v1226
      %v1228 = vunpack.c.h.bf16 %v1226
      %s1229 = scalar_lea.vmem %s208, 3516
      %v1230 = vpack.c.bf16 0.0, %v1227
      %1231 = vst [vmem:[%s1229] sm:$0xf] %v1230
      %s1232 = scalar_lea.vmem %s184, 1116
      %v1233 = vld [vmem:[%s1232] sm:$0xf]
      %v1234 = vunpack.c.l.bf16 %v1233
      %v1235 = vunpack.c.h.bf16 %v1233
      %s1236 = scalar_lea.vmem %s208, 4316
      %v1237 = vpack.c.bf16 0.0, %v1234
      %1238 = vst [vmem:[%s1236] sm:$0xf] %v1237
      %s1239 = scalar_lea.vmem %s184, 316
      %v1240 = vld [vmem:[%s1239] sm:$0xf]
      %v1241 = vunpack.c.l.bf16 %v1240
      %v1242 = vunpack.c.h.bf16 %v1240
      %s1243 = scalar_lea.vmem %s208, 5116
      %v1244 = vpack.c.bf16 0.0, %v1241
      %1245 = vst [vmem:[%s1243] sm:$0xf] %v1244
      %s1246 = smul.u32 7, %s39
      %s1247 = smul.u32 4, %s40
      %s1248 = smul.u32 5, %s41
      %p1249 = scmp.lt.s32.totalorder %s38, 6
      %s1250 = scalar_select %p1249, %s38, 6
      %p1251 = scmp.lt.s32.totalorder %s1246, 6
      %s1252 = scalar_select %p1251, %s1246, 6
      %p1253 = scmp.lt.s32.totalorder %s1247, 7
      %s1254 = scalar_select %p1253, %s1247, 7
      %p1255 = scmp.lt.s32.totalorder %s1248, 24
      %s1256 = scalar_select %p1255, %s1248, 24
      %s1257 = smul.addr %s1254, 25
      %s1258 = sadd.s32 %s1256, %s1257
      %s1259 = smul.addr %s1252, 200
      %s1260 = sadd.s32 %s1258, %s1259
      %s1261 = smul.addr %s1250, 1400
      %s1262 = sadd.s32 %s1260, %s1261
      %s1263 = smul.addr %s1262, 4
      %s1264 = scalar_lea.vmem %s1, %s1263
      %s1265 = smul.u32 7, %s39
      %s1266 = smul.u32 4, %s40
      %s1267 = smul.u32 5, %s41
    $region20: #{reverse} parent=5 // pred_fallthru
      _
    %p1268 = scmp.le.s32.totalorder 10, %s3
    // Predicated region
    $region21: #{reverse} parent=5 // pred_check
      %p1269 = pneg %p1268
    $region22: #{reverse} parent=5 // pred_check_branch
      %1271 = sbr.rel (%p1269) target = $region24
    $region23: #{reverse} parent=5 // pred_region
      %s1272 = ssub.s32 %s3, 10
      %s1273 = smul.u32 7, %s59
      %s1274 = smul.u32 4, %s60
      %s1275 = smul.u32 5, %s61
      %p1276 = scmp.lt.s32.totalorder %s58, 6
      %s1277 = scalar_select %p1276, %s58, 6
      %p1278 = scmp.lt.s32.totalorder %s1273, 6
      %s1279 = scalar_select %p1278, %s1273, 6
      %p1280 = scmp.lt.s32.totalorder %s1274, 7
      %s1281 = scalar_select %p1280, %s1274, 7
      %p1282 = scmp.lt.s32.totalorder %s1275, 24
      %s1283 = scalar_select %p1282, %s1275, 24
      %s1284 = smul.addr %s1281, 25
      %s1285 = sadd.s32 %s1283, %s1284
      %s1286 = smul.addr %s1279, 200
      %s1287 = sadd.s32 %s1285, %s1286
      %s1288 = smul.addr %s1277, 1400
      %s1289 = sadd.s32 %s1287, %s1288
      %s1290 = smul.addr %s1289, 4
      %s1291 = scalar_lea.vmem %s1, %s1290
    $region24: #{reverse} parent=5 // pred_fallthru
      _
  $region6: #{reverse} parent=0 // loop_footer
    %s7 = sadd.s32 1, %s3
  $region7: #{reverse} parent=0 // loop_footer_branch
    %2 = sbr.rel target = $region3
  $region8: #{reverse} parent=0 // loop_exit
    _

// kernel: autoencoder_forward.9
$region0: #{autoencoder_forward.9}
  #allocation0 [shape = 'u32[]', space=smem, size = 0x4, offset = 0x4, fixed_abs, tag = 'smem constant byte address 0x4 - core index']
  #allocation1 [shape = 'u32[144,128]{1,0:T(1,128)}', space=vmem, size = 0x12000, scoped, tag = 'internal scratch']
  %s0 = inlined_call_operand.vmem [shape: bf16[128,3136], index: 0, kind: input, shape index: {}]
  %s1 = inlined_call_operand.vmem [shape: bf16[3136,128], index: 1, kind: input, shape index: {}]
  %s2 = inlined_call_operand.vmem [shape: f32[1,128], index: 2, kind: input, shape index: {}]
  %s3 = inlined_call_operand.vmem [shape: bf16[128,128], index: 3, kind: output, shape index: {}]
  %s4 = sld [smem:[#allocation0]]
  $region22: #{autoencoder_forward.9} parent=0
    _
  %s6 = ssub.s32 1, %s4
  %s7 = scalar_select 0, %s6, %s4
  // Predicated region
  $region2: #{autoencoder_forward.9} parent=0 // pred_check
    _
  $region3: #{autoencoder_forward.9} parent=0 // pred_check_branch
    %9 = sbr.rel (0) target = $region5
  $region4: #{autoencoder_forward.9} parent=0 // pred_region
    _
  $region5: #{autoencoder_forward.9} parent=0 // pred_fallthru
    _
  // Predicated region
  $region6: #{autoencoder_forward.9} parent=0 // pred_check
    _
  $region7: #{autoencoder_forward.9} parent=0 // pred_check_branch
    %11 = sbr.rel (0) target = $region9
  $region8: #{autoencoder_forward.9} parent=0 // pred_region
    _
  $region9: #{autoencoder_forward.9} parent=0 // pred_fallthru
    _
  // Predicated region
  $region10: #{autoencoder_forward.9} parent=0 // pred_check
    _
  $region11: #{autoencoder_forward.9} parent=0 // pred_check_branch
    %13 = sbr.rel (0) target = $region13
  $region12: #{autoencoder_forward.9} parent=0 // pred_region
    _
  $region13: #{autoencoder_forward.9} parent=0 // pred_fallthru
    _
  %v15 = vld [vmem:[%s0] sm:$0xff]
  %v16 = vld [vmem:[%s0 + $0x8] sm:$0xff]
  %v17 = vld [vmem:[%s0 + $0x10] sm:$0xff]
  %v18 = vld [vmem:[%s0 + $0x18] sm:$0xff]
  %v19 = vld [vmem:[%s0 + $0x20] sm:$0xff]
  %v20 = vld [vmem:[%s0 + $0x28] sm:$0xff]
  %v21 = vld [vmem:[%s0 + $0x30] sm:$0xff]
  %v22 = vld [vmem:[%s0 + $0x38] sm:$0xff]
  %v23 = vld [vmem:[%s0 + $0x40] sm:$0xff]
  %v24 = vld [vmem:[%s0 + $0x48] sm:$0xff]
  %v25 = vld [vmem:[%s0 + $0x50] sm:$0xff]
  %v26 = vld [vmem:[%s0 + $0x58] sm:$0xff]
  %v27 = vld [vmem:[%s0 + $0x60] sm:$0xf]
  %v28 = vld [vmem:[%s0 + $0x64] sm:$0xff]
  %v29 = vld [vmem:[%s0 + $0x6c] sm:$0xff]
  %v30 = vld [vmem:[%s0 + $0x74] sm:$0xff]
  %v31 = vld [vmem:[%s0 + $0x7c] sm:$0xff]
  %v32 = vld [vmem:[%s0 + $0x84] sm:$0xff]
  %v33 = vld [vmem:[%s0 + $0x8c] sm:$0xff]
  %v34 = vld [vmem:[%s0 + $0x94] sm:$0xff]
  %v35 = vld [vmem:[%s0 + $0x9c] sm:$0xff]
  %v36 = vld [vmem:[%s0 + $0xa4] sm:$0xff]
  %v37 = vld [vmem:[%s0 + $0xac] sm:$0xff]
  %v38 = vld [vmem:[%s0 + $0xb4] sm:$0xff]
  %v39 = vld [vmem:[%s0 + $0xbc] sm:$0xff]
  %v40 = vld [vmem:[%s0 + $0xc4] sm:$0xf]
  %v41 = vld [vmem:[%s0 + $0xc8] sm:$0xff]
  %v42 = vld [vmem:[%s0 + $0xd0] sm:$0xff]
  %v43 = vld [vmem:[%s0 + $0xd8] sm:$0xff]
  %v44 = vld [vmem:[%s0 + $0xe0] sm:$0xff]
  %v45 = vld [vmem:[%s0 + $0xe8] sm:$0xff]
  %v46 = vld [vmem:[%s0 + $0xf0] sm:$0xff]
  %v47 = vld [vmem:[%s0 + $0xf8] sm:$0xff]
  %v48 = vld [vmem:[%s0 + $0x100] sm:$0xff]
  %v49 = vld [vmem:[%s0 + $0x108] sm:$0xff]
  %v50 = vld [vmem:[%s0 + $0x110] sm:$0xff]
  %v51 = vld [vmem:[%s0 + $0x118] sm:$0xff]
  %v52 = vld [vmem:[%s0 + $0x120] sm:$0xff]
  %v53 = vld [vmem:[%s0 + $0x128] sm:$0xf]
  %v54 = vld [vmem:[%s0 + $0x12c] sm:$0xff]
  %v55 = vld [vmem:[%s0 + $0x134] sm:$0xff]
  %v56 = vld [vmem:[%s0 + $0x13c] sm:$0xff]
  %v57 = vld [vmem:[%s0 + $0x144] sm:$0xff]
  %v58 = vld [vmem:[%s0 + $0x14c] sm:$0xff]
  %v59 = vld [vmem:[%s0 + $0x154] sm:$0xff]
  %v60 = vld [vmem:[%s0 + $0x15c] sm:$0xff]
  %v61 = vld [vmem:[%s0 + $0x164] sm:$0xff]
  %v62 = vld [vmem:[%s0 + $0x16c] sm:$0xff]
  %v63 = vld [vmem:[%s0 + $0x174] sm:$0xff]
  %v64 = vld [vmem:[%s0 + $0x17c] sm:$0xff]
  %v65 = vld [vmem:[%s0 + $0x184] sm:$0xff]
  %v66 = vld [vmem:[%s0 + $0x18c] sm:$0xf]
  %v67 = vld [vmem:[%s0 + $0x190] sm:$0xff]
  %v68 = vld [vmem:[%s0 + $0x198] sm:$0xff]
  %v69 = vld [vmem:[%s0 + $0x1a0] sm:$0xff]
  %v70 = vld [vmem:[%s0 + $0x1a8] sm:$0xff]
  %v71 = vld [vmem:[%s0 + $0x1b0] sm:$0xff]
  %v72 = vld [vmem:[%s0 + $0x1b8] sm:$0xff]
  %v73 = vld [vmem:[%s0 + $0x1c0] sm:$0xff]
  %v74 = vld [vmem:[%s0 + $0x1c8] sm:$0xff]
  %v75 = vld [vmem:[%s0 + $0x1d0] sm:$0xff]
  %v76 = vld [vmem:[%s0 + $0x1d8] sm:$0xff]
  %v77 = vld [vmem:[%s0 + $0x1e0] sm:$0xff]
  %v78 = vld [vmem:[%s0 + $0x1e8] sm:$0xff]
  %v79 = vld [vmem:[%s0 + $0x1f0] sm:$0xf]
  %v80 = vld [vmem:[%s0 + $0x1f4] sm:$0xff]
  %v81 = vld [vmem:[%s0 + $0x1fc] sm:$0xff]
  %v82 = vld [vmem:[%s0 + $0x204] sm:$0xff]
  %v83 = vld [vmem:[%s0 + $0x20c] sm:$0xff]
  %v84 = vld [vmem:[%s0 + $0x214] sm:$0xff]
  %v85 = vld [vmem:[%s0 + $0x21c] sm:$0xff]
  %v86 = vld [vmem:[%s0 + $0x224] sm:$0xff]
  %v87 = vld [vmem:[%s0 + $0x22c] sm:$0xff]
  %v88 = vld [vmem:[%s0 + $0x234] sm:$0xff]
  %v89 = vld [vmem:[%s0 + $0x23c] sm:$0xff]
  %v90 = vld [vmem:[%s0 + $0x244] sm:$0xff]
  %v91 = vld [vmem:[%s0 + $0x24c] sm:$0xff]
  %v92 = vld [vmem:[%s0 + $0x254] sm:$0xf]
  %v93 = vld [vmem:[%s0 + $0x258] sm:$0xff]
  %v94 = vld [vmem:[%s0 + $0x260] sm:$0xff]
  %v95 = vld [vmem:[%s0 + $0x268] sm:$0xff]
  %v96 = vld [vmem:[%s0 + $0x270] sm:$0xff]
  %v97 = vld [vmem:[%s0 + $0x278] sm:$0xff]
  %v98 = vld [vmem:[%s0 + $0x280] sm:$0xff]
  %v99 = vld [vmem:[%s0 + $0x288] sm:$0xff]
  %v100 = vld [vmem:[%s0 + $0x290] sm:$0xff]
  %v101 = vld [vmem:[%s0 + $0x298] sm:$0xff]
  %v102 = vld [vmem:[%s0 + $0x2a0] sm:$0xff]
  %v103 = vld [vmem:[%s0 + $0x2a8] sm:$0xff]
  %v104 = vld [vmem:[%s0 + $0x2b0] sm:$0xff]
  %v105 = vld [vmem:[%s0 + $0x2b8] sm:$0xf]
  %v106 = vld [vmem:[%s0 + $0x2bc] sm:$0xff]
  %v107 = vld [vmem:[%s0 + $0x2c4] sm:$0xff]
  %v108 = vld [vmem:[%s0 + $0x2cc] sm:$0xff]
  %v109 = vld [vmem:[%s0 + $0x2d4] sm:$0xff]
  %v110 = vld [vmem:[%s0 + $0x2dc] sm:$0xff]
  %v111 = vld [vmem:[%s0 + $0x2e4] sm:$0xff]
  %v112 = vld [vmem:[%s0 + $0x2ec] sm:$0xff]
  %v113 = vld [vmem:[%s0 + $0x2f4] sm:$0xff]
  %v114 = vld [vmem:[%s0 + $0x2fc] sm:$0xff]
  %v115 = vld [vmem:[%s0 + $0x304] sm:$0xff]
  %v116 = vld [vmem:[%s0 + $0x30c] sm:$0xff]
  %v117 = vld [vmem:[%s0 + $0x314] sm:$0xff]
  %v118 = vld [vmem:[%s0 + $0x31c] sm:$0xf]
  %v119 = vld [vmem:[%s0 + $0x320] sm:$0xff]
  %v120 = vld [vmem:[%s0 + $0x328] sm:$0xff]
  %v121 = vld [vmem:[%s0 + $0x330] sm:$0xff]
  %v122 = vld [vmem:[%s0 + $0x338] sm:$0xff]
  %v123 = vld [vmem:[%s0 + $0x340] sm:$0xff]
  %v124 = vld [vmem:[%s0 + $0x348] sm:$0xff]
  %v125 = vld [vmem:[%s0 + $0x350] sm:$0xff]
  %v126 = vld [vmem:[%s0 + $0x358] sm:$0xff]
  %v127 = vld [vmem:[%s0 + $0x360] sm:$0xff]
  %v128 = vld [vmem:[%s0 + $0x368] sm:$0xff]
  %v129 = vld [vmem:[%s0 + $0x370] sm:$0xff]
  %v130 = vld [vmem:[%s0 + $0x378] sm:$0xff]
  %v131 = vld [vmem:[%s0 + $0x380] sm:$0xf]
  %v132 = vld [vmem:[%s0 + $0x384] sm:$0xff]
  %v133 = vld [vmem:[%s0 + $0x38c] sm:$0xff]
  %v134 = vld [vmem:[%s0 + $0x394] sm:$0xff]
  %v135 = vld [vmem:[%s0 + $0x39c] sm:$0xff]
  %v136 = vld [vmem:[%s0 + $0x3a4] sm:$0xff]
  %v137 = vld [vmem:[%s0 + $0x3ac] sm:$0xff]
  %v138 = vld [vmem:[%s0 + $0x3b4] sm:$0xff]
  %v139 = vld [vmem:[%s0 + $0x3bc] sm:$0xff]
  %v140 = vld [vmem:[%s0 + $0x3c4] sm:$0xff]
  %v141 = vld [vmem:[%s0 + $0x3cc] sm:$0xff]
  %v142 = vld [vmem:[%s0 + $0x3d4] sm:$0xff]
  %v143 = vld [vmem:[%s0 + $0x3dc] sm:$0xff]
  %v144 = vld [vmem:[%s0 + $0x3e4] sm:$0xf]
  %v145 = vld [vmem:[%s0 + $0x3e8] sm:$0xff]
  %v146 = vld [vmem:[%s0 + $0x3f0] sm:$0xff]
  %v147 = vld [vmem:[%s0 + $0x3f8] sm:$0xff]
  %v148 = vld [vmem:[%s0 + $0x400] sm:$0xff]
  %v149 = vld [vmem:[%s0 + $0x408] sm:$0xff]
  %v150 = vld [vmem:[%s0 + $0x410] sm:$0xff]
  %v151 = vld [vmem:[%s0 + $0x418] sm:$0xff]
  %v152 = vld [vmem:[%s0 + $0x420] sm:$0xff]
  %v153 = vld [vmem:[%s0 + $0x428] sm:$0xff]
  %v154 = vld [vmem:[%s0 + $0x430] sm:$0xff]
  %v155 = vld [vmem:[%s0 + $0x438] sm:$0xff]
  %v156 = vld [vmem:[%s0 + $0x440] sm:$0xff]
  %v157 = vld [vmem:[%s0 + $0x448] sm:$0xf]
  %v158 = vld [vmem:[%s0 + $0x44c] sm:$0xff]
  %v159 = vld [vmem:[%s0 + $0x454] sm:$0xff]
  %v160 = vld [vmem:[%s0 + $0x45c] sm:$0xff]
  %v161 = vld [vmem:[%s0 + $0x464] sm:$0xff]
  %v162 = vld [vmem:[%s0 + $0x46c] sm:$0xff]
  %v163 = vld [vmem:[%s0 + $0x474] sm:$0xff]
  %v164 = vld [vmem:[%s0 + $0x47c] sm:$0xff]
  %v165 = vld [vmem:[%s0 + $0x484] sm:$0xff]
  %v166 = vld [vmem:[%s0 + $0x48c] sm:$0xff]
  %v167 = vld [vmem:[%s0 + $0x494] sm:$0xff]
  %v168 = vld [vmem:[%s0 + $0x49c] sm:$0xff]
  %v169 = vld [vmem:[%s0 + $0x4a4] sm:$0xff]
  %v170 = vld [vmem:[%s0 + $0x4ac] sm:$0xf]
  %v171 = vld [vmem:[%s0 + $0x4b0] sm:$0xff]
  %v172 = vld [vmem:[%s0 + $0x4b8] sm:$0xff]
  %v173 = vld [vmem:[%s0 + $0x4c0] sm:$0xff]
  %v174 = vld [vmem:[%s0 + $0x4c8] sm:$0xff]
  %v175 = vld [vmem:[%s0 + $0x4d0] sm:$0xff]
  %v176 = vld [vmem:[%s0 + $0x4d8] sm:$0xff]
  %v177 = vld [vmem:[%s0 + $0x4e0] sm:$0xff]
  %v178 = vld [vmem:[%s0 + $0x4e8] sm:$0xff]
  %v179 = vld [vmem:[%s0 + $0x4f0] sm:$0xff]
  %v180 = vld [vmem:[%s0 + $0x4f8] sm:$0xff]
  %v181 = vld [vmem:[%s0 + $0x500] sm:$0xff]
  %v182 = vld [vmem:[%s0 + $0x508] sm:$0xff]
  %v183 = vld [vmem:[%s0 + $0x510] sm:$0xf]
  %v184 = vld [vmem:[%s0 + $0x514] sm:$0xff]
  %v185 = vld [vmem:[%s0 + $0x51c] sm:$0xff]
  %v186 = vld [vmem:[%s0 + $0x524] sm:$0xff]
  %v187 = vld [vmem:[%s0 + $0x52c] sm:$0xff]
  %v188 = vld [vmem:[%s0 + $0x534] sm:$0xff]
  %v189 = vld [vmem:[%s0 + $0x53c] sm:$0xff]
  %v190 = vld [vmem:[%s0 + $0x544] sm:$0xff]
  %v191 = vld [vmem:[%s0 + $0x54c] sm:$0xff]
  %v192 = vld [vmem:[%s0 + $0x554] sm:$0xff]
  %v193 = vld [vmem:[%s0 + $0x55c] sm:$0xff]
  %v194 = vld [vmem:[%s0 + $0x564] sm:$0xff]
  %v195 = vld [vmem:[%s0 + $0x56c] sm:$0xff]
  %v196 = vld [vmem:[%s0 + $0x574] sm:$0xf]
  %v197 = vld [vmem:[%s0 + $0x578] sm:$0xff]
  %v198 = vld [vmem:[%s0 + $0x580] sm:$0xff]
  %v199 = vld [vmem:[%s0 + $0x588] sm:$0xff]
  %v200 = vld [vmem:[%s0 + $0x590] sm:$0xff]
  %v201 = vld [vmem:[%s0 + $0x598] sm:$0xff]
  %v202 = vld [vmem:[%s0 + $0x5a0] sm:$0xff]
  %v203 = vld [vmem:[%s0 + $0x5a8] sm:$0xff]
  %v204 = vld [vmem:[%s0 + $0x5b0] sm:$0xff]
  %v205 = vld [vmem:[%s0 + $0x5b8] sm:$0xff]
  %v206 = vld [vmem:[%s0 + $0x5c0] sm:$0xff]
  %v207 = vld [vmem:[%s0 + $0x5c8] sm:$0xff]
  %v208 = vld [vmem:[%s0 + $0x5d0] sm:$0xff]
  %v209 = vld [vmem:[%s0 + $0x5d8] sm:$0xf]
  %v210 = vld [vmem:[%s0 + $0x5dc] sm:$0xff]
  %v211 = vld [vmem:[%s0 + $0x5e4] sm:$0xff]
  %v212 = vld [vmem:[%s0 + $0x5ec] sm:$0xff]
  %v213 = vld [vmem:[%s0 + $0x5f4] sm:$0xff]
  %v214 = vld [vmem:[%s0 + $0x5fc] sm:$0xff]
  %v215 = vld [vmem:[%s0 + $0x604] sm:$0xff]
  %v216 = vld [vmem:[%s0 + $0x60c] sm:$0xff]
  %v217 = vld [vmem:[%s0 + $0x614] sm:$0xff]
  %v218 = vld [vmem:[%s0 + $0x61c] sm:$0xff]
  %v219 = vld [vmem:[%s0 + $0x624] sm:$0xff]
  %v220 = vld [vmem:[%s0 + $0x62c] sm:$0xff]
  %v221 = vld [vmem:[%s0 + $0x634] sm:$0xff]
  %v222 = vld [vmem:[%s0 + $0x63c] sm:$0xf]
  %v223 = vld [vmem:[%s1] sm:$0xf]
  %v224 = vld [vmem:[%s1 + $0x4] sm:$0xf]
  %v225 = vld [vmem:[%s1 + $0x8] sm:$0xf]
  %v226 = vld [vmem:[%s1 + $0xc] sm:$0xf]
  %v227 = vld [vmem:[%s1 + $0x10] sm:$0xf]
  %v228 = vld [vmem:[%s1 + $0x14] sm:$0xf]
  %v229 = vld [vmem:[%s1 + $0x18] sm:$0xf]
  %v230 = vld [vmem:[%s1 + $0x1c] sm:$0xf]
  %v231 = vld [vmem:[%s1 + $0x20] sm:$0xf]
  %v232 = vld [vmem:[%s1 + $0x24] sm:$0xf]
  %v233 = vld [vmem:[%s1 + $0x28] sm:$0xf]
  %v234 = vld [vmem:[%s1 + $0x2c] sm:$0xf]
  %v235 = vld [vmem:[%s1 + $0x30] sm:$0xf]
  %v236 = vld [vmem:[%s1 + $0x34] sm:$0xf]
  %v237 = vld [vmem:[%s1 + $0x38] sm:$0xf]
  %v238 = vld [vmem:[%s1 + $0x3c] sm:$0xf]
  %v239 = vld [vmem:[%s1 + $0x40] sm:$0xf]
  %v240 = vld [vmem:[%s1 + $0x44] sm:$0xf]
  %v241 = vld [vmem:[%s1 + $0x48] sm:$0xf]
  %v242 = vld [vmem:[%s1 + $0x4c] sm:$0xf]
  %v243 = vld [vmem:[%s1 + $0x50] sm:$0xf]
  %v244 = vld [vmem:[%s1 + $0x54] sm:$0xf]
  %v245 = vld [vmem:[%s1 + $0x58] sm:$0xf]
  %v246 = vld [vmem:[%s1 + $0x5c] sm:$0xf]
  %v247 = vld [vmem:[%s1 + $0x60] sm:$0xf]
  %v248 = vld [vmem:[%s1 + $0x64] sm:$0xf]
  %v249 = vld [vmem:[%s1 + $0x68] sm:$0xf]
  %v250 = vld [vmem:[%s1 + $0x6c] sm:$0xf]
  %v251 = vld [vmem:[%s1 + $0x70] sm:$0xf]
  %v252 = vld [vmem:[%s1 + $0x74] sm:$0xf]
  %v253 = vld [vmem:[%s1 + $0x78] sm:$0xf]
  %v254 = vld [vmem:[%s1 + $0x7c] sm:$0xf]
  %v255 = vld [vmem:[%s1 + $0x80] sm:$0xf]
  %v256 = vld [vmem:[%s1 + $0x84] sm:$0xf]
  %v257 = vld [vmem:[%s1 + $0x88] sm:$0xf]
  %v258 = vld [vmem:[%s1 + $0x8c] sm:$0xf]
  %v259 = vld [vmem:[%s1 + $0x90] sm:$0xf]
  %v260 = vld [vmem:[%s1 + $0x94] sm:$0xf]
  %v261 = vld [vmem:[%s1 + $0x98] sm:$0xf]
  %v262 = vld [vmem:[%s1 + $0x9c] sm:$0xf]
  %v263 = vld [vmem:[%s1 + $0xa0] sm:$0xf]
  %v264 = vld [vmem:[%s1 + $0xa4] sm:$0xf]
  %v265 = vld [vmem:[%s1 + $0xa8] sm:$0xf]
  %v266 = vld [vmem:[%s1 + $0xac] sm:$0xf]
  %v267 = vld [vmem:[%s1 + $0xb0] sm:$0xf]
  %v268 = vld [vmem:[%s1 + $0xb4] sm:$0xf]
  %v269 = vld [vmem:[%s1 + $0xb8] sm:$0xf]
  %v270 = vld [vmem:[%s1 + $0xbc] sm:$0xf]
  %v271 = vld [vmem:[%s1 + $0xc0] sm:$0xf]
  %v272 = vld [vmem:[%s1 + $0xc4] sm:$0xf]
  %v273 = vld [vmem:[%s1 + $0xc8] sm:$0xf]
  %v274 = vld [vmem:[%s1 + $0xcc] sm:$0xf]
  %v275 = vld [vmem:[%s1 + $0xd0] sm:$0xf]
  %v276 = vld [vmem:[%s1 + $0xd4] sm:$0xf]
  %v277 = vld [vmem:[%s1 + $0xd8] sm:$0xf]
  %v278 = vld [vmem:[%s1 + $0xdc] sm:$0xf]
  %v279 = vld [vmem:[%s1 + $0xe0] sm:$0xf]
  %v280 = vld [vmem:[%s1 + $0xe4] sm:$0xf]
  %v281 = vld [vmem:[%s1 + $0xe8] sm:$0xf]
  %v282 = vld [vmem:[%s1 + $0xec] sm:$0xf]
  %v283 = vld [vmem:[%s1 + $0xf0] sm:$0xf]
  %v284 = vld [vmem:[%s1 + $0xf4] sm:$0xf]
  %v285 = vld [vmem:[%s1 + $0xf8] sm:$0xf]
  %v286 = vld [vmem:[%s1 + $0xfc] sm:$0xf]
  %v287 = vld [vmem:[%s1 + $0x100] sm:$0xf]
  %v288 = vld [vmem:[%s1 + $0x104] sm:$0xf]
  %v289 = vld [vmem:[%s1 + $0x108] sm:$0xf]
  %v290 = vld [vmem:[%s1 + $0x10c] sm:$0xf]
  %v291 = vld [vmem:[%s1 + $0x110] sm:$0xf]
  %v292 = vld [vmem:[%s1 + $0x114] sm:$0xf]
  %v293 = vld [vmem:[%s1 + $0x118] sm:$0xf]
  %v294 = vld [vmem:[%s1 + $0x11c] sm:$0xf]
  %v295 = vld [vmem:[%s1 + $0x120] sm:$0xf]
  %v296 = vld [vmem:[%s1 + $0x124] sm:$0xf]
  %v297 = vld [vmem:[%s1 + $0x128] sm:$0xf]
  %v298 = vld [vmem:[%s1 + $0x12c] sm:$0xf]
  %v299 = vld [vmem:[%s1 + $0x130] sm:$0xf]
  %v300 = vld [vmem:[%s1 + $0x134] sm:$0xf]
  %v301 = vld [vmem:[%s1 + $0x138] sm:$0xf]
  %v302 = vld [vmem:[%s1 + $0x13c] sm:$0xf]
  %v303 = vld [vmem:[%s1 + $0x140] sm:$0xf]
  %v304 = vld [vmem:[%s1 + $0x144] sm:$0xf]
  %v305 = vld [vmem:[%s1 + $0x148] sm:$0xf]
  %v306 = vld [vmem:[%s1 + $0x14c] sm:$0xf]
  %v307 = vld [vmem:[%s1 + $0x150] sm:$0xf]
  %v308 = vld [vmem:[%s1 + $0x154] sm:$0xf]
  %v309 = vld [vmem:[%s1 + $0x158] sm:$0xf]
  %v310 = vld [vmem:[%s1 + $0x15c] sm:$0xf]
  %v311 = vld [vmem:[%s1 + $0x160] sm:$0xf]
  %v312 = vld [vmem:[%s1 + $0x164] sm:$0xf]
  %v313 = vld [vmem:[%s1 + $0x168] sm:$0xf]
  %v314 = vld [vmem:[%s1 + $0x16c] sm:$0xf]
  %v315 = vld [vmem:[%s1 + $0x170] sm:$0xf]
  %v316 = vld [vmem:[%s1 + $0x174] sm:$0xf]
  %v317 = vld [vmem:[%s1 + $0x178] sm:$0xf]
  %v318 = vld [vmem:[%s1 + $0x17c] sm:$0xf]
  %v319 = vld [vmem:[%s1 + $0x180] sm:$0xf]
  %v320 = vld [vmem:[%s1 + $0x184] sm:$0xf]
  %v321 = vld [vmem:[%s1 + $0x188] sm:$0xf]
  %v322 = vld [vmem:[%s1 + $0x18c] sm:$0xf]
  %v323 = vld [vmem:[%s1 + $0x190] sm:$0xf]
  %v324 = vld [vmem:[%s1 + $0x194] sm:$0xf]
  %v325 = vld [vmem:[%s1 + $0x198] sm:$0xf]
  %v326 = vld [vmem:[%s1 + $0x19c] sm:$0xf]
  %v327 = vld [vmem:[%s1 + $0x1a0] sm:$0xf]
  %v328 = vld [vmem:[%s1 + $0x1a4] sm:$0xf]
  %v329 = vld [vmem:[%s1 + $0x1a8] sm:$0xf]
  %v330 = vld [vmem:[%s1 + $0x1ac] sm:$0xf]
  %v331 = vld [vmem:[%s1 + $0x1b0] sm:$0xf]
  %v332 = vld [vmem:[%s1 + $0x1b4] sm:$0xf]
  %v333 = vld [vmem:[%s1 + $0x1b8] sm:$0xf]
  %v334 = vld [vmem:[%s1 + $0x1bc] sm:$0xf]
  %v335 = vld [vmem:[%s1 + $0x1c0] sm:$0xf]
  %v336 = vld [vmem:[%s1 + $0x1c4] sm:$0xf]
  %v337 = vld [vmem:[%s1 + $0x1c8] sm:$0xf]
  %v338 = vld [vmem:[%s1 + $0x1cc] sm:$0xf]
  %v339 = vld [vmem:[%s1 + $0x1d0] sm:$0xf]
  %v340 = vld [vmem:[%s1 + $0x1d4] sm:$0xf]
  %v341 = vld [vmem:[%s1 + $0x1d8] sm:$0xf]
  %v342 = vld [vmem:[%s1 + $0x1dc] sm:$0xf]
  %v343 = vld [vmem:[%s1 + $0x1e0] sm:$0xf]
  %v344 = vld [vmem:[%s1 + $0x1e4] sm:$0xf]
  %v345 = vld [vmem:[%s1 + $0x1e8] sm:$0xf]
  %v346 = vld [vmem:[%s1 + $0x1ec] sm:$0xf]
  %v347 = vld [vmem:[%s1 + $0x1f0] sm:$0xf]
  %v348 = vld [vmem:[%s1 + $0x1f4] sm:$0xf]
  %v349 = vld [vmem:[%s1 + $0x1f8] sm:$0xf]
  %v350 = vld [vmem:[%s1 + $0x1fc] sm:$0xf]
  %v351 = vld [vmem:[%s1 + $0x200] sm:$0xf]
  %v352 = vld [vmem:[%s1 + $0x204] sm:$0xf]
  %v353 = vld [vmem:[%s1 + $0x208] sm:$0xf]
  %v354 = vld [vmem:[%s1 + $0x20c] sm:$0xf]
  %v355 = vld [vmem:[%s1 + $0x210] sm:$0xf]
  %v356 = vld [vmem:[%s1 + $0x214] sm:$0xf]
  %v357 = vld [vmem:[%s1 + $0x218] sm:$0xf]
  %v358 = vld [vmem:[%s1 + $0x21c] sm:$0xf]
  %v359 = vld [vmem:[%s1 + $0x220] sm:$0xf]
  %v360 = vld [vmem:[%s1 + $0x224] sm:$0xf]
  %v361 = vld [vmem:[%s1 + $0x228] sm:$0xf]
  %v362 = vld [vmem:[%s1 + $0x22c] sm:$0xf]
  %v363 = vld [vmem:[%s1 + $0x230] sm:$0xf]
  %v364 = vld [vmem:[%s1 + $0x234] sm:$0xf]
  %v365 = vld [vmem:[%s1 + $0x238] sm:$0xf]
  %v366 = vld [vmem:[%s1 + $0x23c] sm:$0xf]
  %v367 = vld [vmem:[%s1 + $0x240] sm:$0xf]
  %v368 = vld [vmem:[%s1 + $0x244] sm:$0xf]
  %v369 = vld [vmem:[%s1 + $0x248] sm:$0xf]
  %v370 = vld [vmem:[%s1 + $0x24c] sm:$0xf]
  %v371 = vld [vmem:[%s1 + $0x250] sm:$0xf]
  %v372 = vld [vmem:[%s1 + $0x254] sm:$0xf]
  %v373 = vld [vmem:[%s1 + $0x258] sm:$0xf]
  %v374 = vld [vmem:[%s1 + $0x25c] sm:$0xf]
  %v375 = vld [vmem:[%s1 + $0x260] sm:$0xf]
  %v376 = vld [vmem:[%s1 + $0x264] sm:$0xf]
  %v377 = vld [vmem:[%s1 + $0x268] sm:$0xf]
  %v378 = vld [vmem:[%s1 + $0x26c] sm:$0xf]
  %v379 = vld [vmem:[%s1 + $0x270] sm:$0xf]
  %v380 = vld [vmem:[%s1 + $0x274] sm:$0xf]
  %v381 = vld [vmem:[%s1 + $0x278] sm:$0xf]
  %v382 = vld [vmem:[%s1 + $0x27c] sm:$0xf]
  %v383 = vld [vmem:[%s1 + $0x280] sm:$0xf]
  %v384 = vld [vmem:[%s1 + $0x284] sm:$0xf]
  %v385 = vld [vmem:[%s1 + $0x288] sm:$0xf]
  %v386 = vld [vmem:[%s1 + $0x28c] sm:$0xf]
  %v387 = vld [vmem:[%s1 + $0x290] sm:$0xf]
  %v388 = vld [vmem:[%s1 + $0x294] sm:$0xf]
  %v389 = vld [vmem:[%s1 + $0x298] sm:$0xf]
  %v390 = vld [vmem:[%s1 + $0x29c] sm:$0xf]
  %v391 = vld [vmem:[%s1 + $0x2a0] sm:$0xf]
  %v392 = vld [vmem:[%s1 + $0x2a4] sm:$0xf]
  %v393 = vld [vmem:[%s1 + $0x2a8] sm:$0xf]
  %v394 = vld [vmem:[%s1 + $0x2ac] sm:$0xf]
  %v395 = vld [vmem:[%s1 + $0x2b0] sm:$0xf]
  %v396 = vld [vmem:[%s1 + $0x2b4] sm:$0xf]
  %v397 = vld [vmem:[%s1 + $0x2b8] sm:$0xf]
  %v398 = vld [vmem:[%s1 + $0x2bc] sm:$0xf]
  %v399 = vld [vmem:[%s1 + $0x2c0] sm:$0xf]
  %v400 = vld [vmem:[%s1 + $0x2c4] sm:$0xf]
  %v401 = vld [vmem:[%s1 + $0x2c8] sm:$0xf]
  %v402 = vld [vmem:[%s1 + $0x2cc] sm:$0xf]
  %v403 = vld [vmem:[%s1 + $0x2d0] sm:$0xf]
  %v404 = vld [vmem:[%s1 + $0x2d4] sm:$0xf]
  %v405 = vld [vmem:[%s1 + $0x2d8] sm:$0xf]
  %v406 = vld [vmem:[%s1 + $0x2dc] sm:$0xf]
  %v407 = vld [vmem:[%s1 + $0x2e0] sm:$0xf]
  %v408 = vld [vmem:[%s1 + $0x2e4] sm:$0xf]
  %v409 = vld [vmem:[%s1 + $0x2e8] sm:$0xf]
  %v410 = vld [vmem:[%s1 + $0x2ec] sm:$0xf]
  %v411 = vld [vmem:[%s1 + $0x2f0] sm:$0xf]
  %v412 = vld [vmem:[%s1 + $0x2f4] sm:$0xf]
  %v413 = vld [vmem:[%s1 + $0x2f8] sm:$0xf]
  %v414 = vld [vmem:[%s1 + $0x2fc] sm:$0xf]
  %v415 = vld [vmem:[%s1 + $0x300] sm:$0xf]
  %v416 = vld [vmem:[%s1 + $0x304] sm:$0xf]
  %v417 = vld [vmem:[%s1 + $0x308] sm:$0xf]
  %v418 = vld [vmem:[%s1 + $0x30c] sm:$0xf]
  %v419 = vld [vmem:[%s1 + $0x310] sm:$0xf]
  %v420 = vld [vmem:[%s1 + $0x314] sm:$0xf]
  %v421 = vld [vmem:[%s1 + $0x318] sm:$0xf]
  %v422 = vld [vmem:[%s1 + $0x31c] sm:$0xf]
  %v423 = vld [vmem:[%s1 + $0x320] sm:$0xf]
  %v424 = vld [vmem:[%s1 + $0x324] sm:$0xf]
  %v425 = vld [vmem:[%s1 + $0x328] sm:$0xf]
  %v426 = vld [vmem:[%s1 + $0x32c] sm:$0xf]
  %v427 = vld [vmem:[%s1 + $0x330] sm:$0xf]
  %v428 = vld [vmem:[%s1 + $0x334] sm:$0xf]
  %v429 = vld [vmem:[%s1 + $0x338] sm:$0xf]
  %v430 = vld [vmem:[%s1 + $0x33c] sm:$0xf]
  %v431 = vld [vmem:[%s1 + $0x340] sm:$0xf]
  %v432 = vld [vmem:[%s1 + $0x344] sm:$0xf]
  %v433 = vld [vmem:[%s1 + $0x348] sm:$0xf]
  %v434 = vld [vmem:[%s1 + $0x34c] sm:$0xf]
  %v435 = vld [vmem:[%s1 + $0x350] sm:$0xf]
  %v436 = vld [vmem:[%s1 + $0x354] sm:$0xf]
  %v437 = vld [vmem:[%s1 + $0x358] sm:$0xf]
  %v438 = vld [vmem:[%s1 + $0x35c] sm:$0xf]
  %v439 = vld [vmem:[%s1 + $0x360] sm:$0xf]
  %v440 = vld [vmem:[%s1 + $0x364] sm:$0xf]
  %v441 = vld [vmem:[%s1 + $0x368] sm:$0xf]
  %v442 = vld [vmem:[%s1 + $0x36c] sm:$0xf]
  %v443 = vld [vmem:[%s1 + $0x370] sm:$0xf]
  %v444 = vld [vmem:[%s1 + $0x374] sm:$0xf]
  %v445 = vld [vmem:[%s1 + $0x378] sm:$0xf]
  %v446 = vld [vmem:[%s1 + $0x37c] sm:$0xf]
  %v447 = vld [vmem:[%s1 + $0x380] sm:$0xf]
  %v448 = vld [vmem:[%s1 + $0x384] sm:$0xf]
  %v449 = vld [vmem:[%s1 + $0x388] sm:$0xf]
  %v450 = vld [vmem:[%s1 + $0x38c] sm:$0xf]
  %v451 = vld [vmem:[%s1 + $0x390] sm:$0xf]
  %v452 = vld [vmem:[%s1 + $0x394] sm:$0xf]
  %v453 = vld [vmem:[%s1 + $0x398] sm:$0xf]
  %v454 = vld [vmem:[%s1 + $0x39c] sm:$0xf]
  %v455 = vld [vmem:[%s1 + $0x3a0] sm:$0xf]
  %v456 = vld [vmem:[%s1 + $0x3a4] sm:$0xf]
  %v457 = vld [vmem:[%s1 + $0x3a8] sm:$0xf]
  %v458 = vld [vmem:[%s1 + $0x3ac] sm:$0xf]
  %v459 = vld [vmem:[%s1 + $0x3b0] sm:$0xf]
  %v460 = vld [vmem:[%s1 + $0x3b4] sm:$0xf]
  %v461 = vld [vmem:[%s1 + $0x3b8] sm:$0xf]
  %v462 = vld [vmem:[%s1 + $0x3bc] sm:$0xf]
  %v463 = vld [vmem:[%s1 + $0x3c0] sm:$0xf]
  %v464 = vld [vmem:[%s1 + $0x3c4] sm:$0xf]
  %v465 = vld [vmem:[%s1 + $0x3c8] sm:$0xf]
  %v466 = vld [vmem:[%s1 + $0x3cc] sm:$0xf]
  %v467 = vld [vmem:[%s1 + $0x3d0] sm:$0xf]
  %v468 = vld [vmem:[%s1 + $0x3d4] sm:$0xf]
  %v469 = vld [vmem:[%s1 + $0x3d8] sm:$0xf]
  %v470 = vld [vmem:[%s1 + $0x3dc] sm:$0xf]
  %v471 = vld [vmem:[%s1 + $0x3e0] sm:$0xf]
  %v472 = vld [vmem:[%s1 + $0x3e4] sm:$0xf]
  %v473 = vld [vmem:[%s1 + $0x3e8] sm:$0xf]
  %v474 = vld [vmem:[%s1 + $0x3ec] sm:$0xf]
  %v475 = vld [vmem:[%s1 + $0x3f0] sm:$0xf]
  %v476 = vld [vmem:[%s1 + $0x3f4] sm:$0xf]
  %v477 = vld [vmem:[%s1 + $0x3f8] sm:$0xf]
  %v478 = vld [vmem:[%s1 + $0x3fc] sm:$0xf]
  %v479 = vld [vmem:[%s1 + $0x400] sm:$0xf]
  %v480 = vld [vmem:[%s1 + $0x404] sm:$0xf]
  %v481 = vld [vmem:[%s1 + $0x408] sm:$0xf]
  %v482 = vld [vmem:[%s1 + $0x40c] sm:$0xf]
  %v483 = vld [vmem:[%s1 + $0x410] sm:$0xf]
  %v484 = vld [vmem:[%s1 + $0x414] sm:$0xf]
  %v485 = vld [vmem:[%s1 + $0x418] sm:$0xf]
  %v486 = vld [vmem:[%s1 + $0x41c] sm:$0xf]
  %v487 = vld [vmem:[%s1 + $0x420] sm:$0xf]
  %v488 = vld [vmem:[%s1 + $0x424] sm:$0xf]
  %v489 = vld [vmem:[%s1 + $0x428] sm:$0xf]
  %v490 = vld [vmem:[%s1 + $0x42c] sm:$0xf]
  %v491 = vld [vmem:[%s1 + $0x430] sm:$0xf]
  %v492 = vld [vmem:[%s1 + $0x434] sm:$0xf]
  %v493 = vld [vmem:[%s1 + $0x438] sm:$0xf]
  %v494 = vld [vmem:[%s1 + $0x43c] sm:$0xf]
  %v495 = vld [vmem:[%s1 + $0x440] sm:$0xf]
  %v496 = vld [vmem:[%s1 + $0x444] sm:$0xf]
  %v497 = vld [vmem:[%s1 + $0x448] sm:$0xf]
  %v498 = vld [vmem:[%s1 + $0x44c] sm:$0xf]
  %v499 = vld [vmem:[%s1 + $0x450] sm:$0xf]
  %v500 = vld [vmem:[%s1 + $0x454] sm:$0xf]
  %v501 = vld [vmem:[%s1 + $0x458] sm:$0xf]
  %v502 = vld [vmem:[%s1 + $0x45c] sm:$0xf]
  %v503 = vld [vmem:[%s1 + $0x460] sm:$0xf]
  %v504 = vld [vmem:[%s1 + $0x464] sm:$0xf]
  %v505 = vld [vmem:[%s1 + $0x468] sm:$0xf]
  %v506 = vld [vmem:[%s1 + $0x46c] sm:$0xf]
  %v507 = vld [vmem:[%s1 + $0x470] sm:$0xf]
  %v508 = vld [vmem:[%s1 + $0x474] sm:$0xf]
  %v509 = vld [vmem:[%s1 + $0x478] sm:$0xf]
  %v510 = vld [vmem:[%s1 + $0x47c] sm:$0xf]
  %v511 = vld [vmem:[%s1 + $0x480] sm:$0xf]
  %v512 = vld [vmem:[%s1 + $0x484] sm:$0xf]
  %v513 = vld [vmem:[%s1 + $0x488] sm:$0xf]
  %v514 = vld [vmem:[%s1 + $0x48c] sm:$0xf]
  %v515 = vld [vmem:[%s1 + $0x490] sm:$0xf]
  %v516 = vld [vmem:[%s1 + $0x494] sm:$0xf]
  %v517 = vld [vmem:[%s1 + $0x498] sm:$0xf]
  %v518 = vld [vmem:[%s1 + $0x49c] sm:$0xf]
  %v519 = vld [vmem:[%s1 + $0x4a0] sm:$0xf]
  %v520 = vld [vmem:[%s1 + $0x4a4] sm:$0xf]
  %v521 = vld [vmem:[%s1 + $0x4a8] sm:$0xf]
  %v522 = vld [vmem:[%s1 + $0x4ac] sm:$0xf]
  %v523 = vld [vmem:[%s1 + $0x4b0] sm:$0xf]
  %v524 = vld [vmem:[%s1 + $0x4b4] sm:$0xf]
  %v525 = vld [vmem:[%s1 + $0x4b8] sm:$0xf]
  %v526 = vld [vmem:[%s1 + $0x4bc] sm:$0xf]
  %v527 = vld [vmem:[%s1 + $0x4c0] sm:$0xf]
  %v528 = vld [vmem:[%s1 + $0x4c4] sm:$0xf]
  %v529 = vld [vmem:[%s1 + $0x4c8] sm:$0xf]
  %v530 = vld [vmem:[%s1 + $0x4cc] sm:$0xf]
  %v531 = vld [vmem:[%s1 + $0x4d0] sm:$0xf]
  %v532 = vld [vmem:[%s1 + $0x4d4] sm:$0xf]
  %v533 = vld [vmem:[%s1 + $0x4d8] sm:$0xf]
  %v534 = vld [vmem:[%s1 + $0x4dc] sm:$0xf]
  %v535 = vld [vmem:[%s1 + $0x4e0] sm:$0xf]
  %v536 = vld [vmem:[%s1 + $0x4e4] sm:$0xf]
  %v537 = vld [vmem:[%s1 + $0x4e8] sm:$0xf]
  %v538 = vld [vmem:[%s1 + $0x4ec] sm:$0xf]
  %v539 = vld [vmem:[%s1 + $0x4f0] sm:$0xf]
  %v540 = vld [vmem:[%s1 + $0x4f4] sm:$0xf]
  %v541 = vld [vmem:[%s1 + $0x4f8] sm:$0xf]
  %v542 = vld [vmem:[%s1 + $0x4fc] sm:$0xf]
  %v543 = vld [vmem:[%s1 + $0x500] sm:$0xf]
  %v544 = vld [vmem:[%s1 + $0x504] sm:$0xf]
  %v545 = vld [vmem:[%s1 + $0x508] sm:$0xf]
  %v546 = vld [vmem:[%s1 + $0x50c] sm:$0xf]
  %v547 = vld [vmem:[%s1 + $0x510] sm:$0xf]
  %v548 = vld [vmem:[%s1 + $0x514] sm:$0xf]
  %v549 = vld [vmem:[%s1 + $0x518] sm:$0xf]
  %v550 = vld [vmem:[%s1 + $0x51c] sm:$0xf]
  %v551 = vld [vmem:[%s1 + $0x520] sm:$0xf]
  %v552 = vld [vmem:[%s1 + $0x524] sm:$0xf]
  %v553 = vld [vmem:[%s1 + $0x528] sm:$0xf]
  %v554 = vld [vmem:[%s1 + $0x52c] sm:$0xf]
  %v555 = vld [vmem:[%s1 + $0x530] sm:$0xf]
  %v556 = vld [vmem:[%s1 + $0x534] sm:$0xf]
  %v557 = vld [vmem:[%s1 + $0x538] sm:$0xf]
  %v558 = vld [vmem:[%s1 + $0x53c] sm:$0xf]
  %v559 = vld [vmem:[%s1 + $0x540] sm:$0xf]
  %v560 = vld [vmem:[%s1 + $0x544] sm:$0xf]
  %v561 = vld [vmem:[%s1 + $0x548] sm:$0xf]
  %v562 = vld [vmem:[%s1 + $0x54c] sm:$0xf]
  %v563 = vld [vmem:[%s1 + $0x550] sm:$0xf]
  %v564 = vld [vmem:[%s1 + $0x554] sm:$0xf]
  %v565 = vld [vmem:[%s1 + $0x558] sm:$0xf]
  %v566 = vld [vmem:[%s1 + $0x55c] sm:$0xf]
  %v567 = vld [vmem:[%s1 + $0x560] sm:$0xf]
  %v568 = vld [vmem:[%s1 + $0x564] sm:$0xf]
  %v569 = vld [vmem:[%s1 + $0x568] sm:$0xf]
  %v570 = vld [vmem:[%s1 + $0x56c] sm:$0xf]
  %v571 = vld [vmem:[%s1 + $0x570] sm:$0xf]
  %v572 = vld [vmem:[%s1 + $0x574] sm:$0xf]
  %v573 = vld [vmem:[%s1 + $0x578] sm:$0xf]
  %v574 = vld [vmem:[%s1 + $0x57c] sm:$0xf]
  %v575 = vld [vmem:[%s1 + $0x580] sm:$0xf]
  %v576 = vld [vmem:[%s1 + $0x584] sm:$0xf]
  %v577 = vld [vmem:[%s1 + $0x588] sm:$0xf]
  %v578 = vld [vmem:[%s1 + $0x58c] sm:$0xf]
  %v579 = vld [vmem:[%s1 + $0x590] sm:$0xf]
  %v580 = vld [vmem:[%s1 + $0x594] sm:$0xf]
  %v581 = vld [vmem:[%s1 + $0x598] sm:$0xf]
  %v582 = vld [vmem:[%s1 + $0x59c] sm:$0xf]
  %v583 = vld [vmem:[%s1 + $0x5a0] sm:$0xf]
  %v584 = vld [vmem:[%s1 + $0x5a4] sm:$0xf]
  %v585 = vld [vmem:[%s1 + $0x5a8] sm:$0xf]
  %v586 = vld [vmem:[%s1 + $0x5ac] sm:$0xf]
  %v587 = vld [vmem:[%s1 + $0x5b0] sm:$0xf]
  %v588 = vld [vmem:[%s1 + $0x5b4] sm:$0xf]
  %v589 = vld [vmem:[%s1 + $0x5b8] sm:$0xf]
  %v590 = vld [vmem:[%s1 + $0x5bc] sm:$0xf]
  %v591 = vld [vmem:[%s1 + $0x5c0] sm:$0xf]
  %v592 = vld [vmem:[%s1 + $0x5c4] sm:$0xf]
  %v593 = vld [vmem:[%s1 + $0x5c8] sm:$0xf]
  %v594 = vld [vmem:[%s1 + $0x5cc] sm:$0xf]
  %v595 = vld [vmem:[%s1 + $0x5d0] sm:$0xf]
  %v596 = vld [vmem:[%s1 + $0x5d4] sm:$0xf]
  %v597 = vld [vmem:[%s1 + $0x5d8] sm:$0xf]
  %v598 = vld [vmem:[%s1 + $0x5dc] sm:$0xf]
  %v599 = vld [vmem:[%s1 + $0x5e0] sm:$0xf]
  %v600 = vld [vmem:[%s1 + $0x5e4] sm:$0xf]
  %v601 = vld [vmem:[%s1 + $0x5e8] sm:$0xf]
  %v602 = vld [vmem:[%s1 + $0x5ec] sm:$0xf]
  %v603 = vld [vmem:[%s1 + $0x5f0] sm:$0xf]
  %v604 = vld [vmem:[%s1 + $0x5f4] sm:$0xf]
  %v605 = vld [vmem:[%s1 + $0x5f8] sm:$0xf]
  %v606 = vld [vmem:[%s1 + $0x5fc] sm:$0xf]
  %v607 = vld [vmem:[%s1 + $0x600] sm:$0xf]
  %v608 = vld [vmem:[%s1 + $0x604] sm:$0xf]
  %v609 = vld [vmem:[%s1 + $0x608] sm:$0xf]
  %v610 = vld [vmem:[%s1 + $0x60c] sm:$0xf]
  %v611 = vld [vmem:[%s1 + $0x610] sm:$0xf]
  %v612 = vld [vmem:[%s1 + $0x614] sm:$0xf]
  %v613 = vld [vmem:[%s1 + $0x618] sm:$0xf]
  %v614 = vld [vmem:[%s1 + $0x61c] sm:$0xf]
  %v615 = vld [vmem:[%s2] sm:$0x1]
  %v617 = vlaneseq
  %v618 = vshrl.u32 %v617, 7
  %v619 = vsub.s32 0, %v618
  %v620 = vrot.slane %v615, %v619
  %v830 = vunpack.c.l.b16 %v15
  %v831 = vunpack.c.h.b16 %v15
  %v832 = vunpack.c.l.b16 %v16
  %v833 = vunpack.c.h.b16 %v16
  %v834 = vunpack.c.l.b16 %v17
  %v835 = vunpack.c.h.b16 %v17
  %v836 = vunpack.c.l.b16 %v18
  %v837 = vunpack.c.h.b16 %v18
  %v838 = vunpack.c.l.b16 %v19
  %v839 = vunpack.c.h.b16 %v19
  %v840 = vunpack.c.l.b16 %v20
  %v841 = vunpack.c.h.b16 %v20
  %v842 = vunpack.c.l.b16 %v21
  %v843 = vunpack.c.h.b16 %v21
  %v844 = vunpack.c.l.b16 %v22
  %v845 = vunpack.c.h.b16 %v22
  %v846 = vunpack.c.l.b16 %v23
  %v847 = vunpack.c.h.b16 %v23
  %v848 = vunpack.c.l.b16 %v24
  %v849 = vunpack.c.h.b16 %v24
  %v850 = vunpack.c.l.b16 %v25
  %v851 = vunpack.c.h.b16 %v25
  %v852 = vunpack.c.l.b16 %v26
  %v853 = vunpack.c.h.b16 %v26
  %v854 = vunpack.c.l.b16 %v27
  %v855 = vunpack.c.l.b16 %v28
  %v856 = vunpack.c.h.b16 %v28
  %v857 = vunpack.c.l.b16 %v29
  %v858 = vunpack.c.h.b16 %v29
  %v859 = vunpack.c.l.b16 %v30
  %v860 = vunpack.c.h.b16 %v30
  %v861 = vunpack.c.l.b16 %v31
  %v862 = vunpack.c.h.b16 %v31
  %v863 = vunpack.c.l.b16 %v32
  %v864 = vunpack.c.h.b16 %v32
  %v865 = vunpack.c.l.b16 %v33
  %v866 = vunpack.c.h.b16 %v33
  %v867 = vunpack.c.l.b16 %v34
  %v868 = vunpack.c.h.b16 %v34
  %v869 = vunpack.c.l.b16 %v35
  %v870 = vunpack.c.h.b16 %v35
  %v871 = vunpack.c.l.b16 %v36
  %v872 = vunpack.c.h.b16 %v36
  %v873 = vunpack.c.l.b16 %v37
  %v874 = vunpack.c.h.b16 %v37
  %v875 = vunpack.c.l.b16 %v38
  %v876 = vunpack.c.h.b16 %v38
  %v877 = vunpack.c.l.b16 %v39
  %v878 = vunpack.c.h.b16 %v39
  %v879 = vunpack.c.l.b16 %v40
  %v880 = vunpack.c.l.b16 %v41
  %v881 = vunpack.c.h.b16 %v41
  %v882 = vunpack.c.l.b16 %v42
  %v883 = vunpack.c.h.b16 %v42
  %v884 = vunpack.c.l.b16 %v43
  %v885 = vunpack.c.h.b16 %v43
  %v886 = vunpack.c.l.b16 %v44
  %v887 = vunpack.c.h.b16 %v44
  %v888 = vunpack.c.l.b16 %v45
  %v889 = vunpack.c.h.b16 %v45
  %v890 = vunpack.c.l.b16 %v46
  %v891 = vunpack.c.h.b16 %v46
  %v892 = vunpack.c.l.b16 %v47
  %v893 = vunpack.c.h.b16 %v47
  %v894 = vunpack.c.l.b16 %v48
  %v895 = vunpack.c.h.b16 %v48
  %v896 = vunpack.c.l.b16 %v49
  %v897 = vunpack.c.h.b16 %v49
  %v898 = vunpack.c.l.b16 %v50
  %v899 = vunpack.c.h.b16 %v50
  %v900 = vunpack.c.l.b16 %v51
  %v901 = vunpack.c.h.b16 %v51
  %v902 = vunpack.c.l.b16 %v52
  %v903 = vunpack.c.h.b16 %v52
  %v904 = vunpack.c.l.b16 %v53
  %v905 = vunpack.c.l.b16 %v54
  %v906 = vunpack.c.h.b16 %v54
  %v907 = vunpack.c.l.b16 %v55
  %v908 = vunpack.c.h.b16 %v55
  %v909 = vunpack.c.l.b16 %v56
  %v910 = vunpack.c.h.b16 %v56
  %v911 = vunpack.c.l.b16 %v57
  %v912 = vunpack.c.h.b16 %v57
  %v913 = vunpack.c.l.b16 %v58
  %v914 = vunpack.c.h.b16 %v58
  %v915 = vunpack.c.l.b16 %v59
  %v916 = vunpack.c.h.b16 %v59
  %v917 = vunpack.c.l.b16 %v60
  %v918 = vunpack.c.h.b16 %v60
  %v919 = vunpack.c.l.b16 %v61
  %v920 = vunpack.c.h.b16 %v61
  %v921 = vunpack.c.l.b16 %v62
  %v922 = vunpack.c.h.b16 %v62
  %v923 = vunpack.c.l.b16 %v63
  %v924 = vunpack.c.h.b16 %v63
  %v925 = vunpack.c.l.b16 %v64
  %v926 = vunpack.c.h.b16 %v64
  %v927 = vunpack.c.l.b16 %v65
  %v928 = vunpack.c.h.b16 %v65
  %v929 = vunpack.c.l.b16 %v66
  %v930 = vunpack.c.l.b16 %v67
  %v931 = vunpack.c.h.b16 %v67
  %v932 = vunpack.c.l.b16 %v68
  %v933 = vunpack.c.h.b16 %v68
  %v934 = vunpack.c.l.b16 %v69
  %v935 = vunpack.c.h.b16 %v69
  %v936 = vunpack.c.l.b16 %v70
  %v937 = vunpack.c.h.b16 %v70
  %v938 = vunpack.c.l.b16 %v71
  %v939 = vunpack.c.h.b16 %v71
  %v940 = vunpack.c.l.b16 %v72
  %v941 = vunpack.c.h.b16 %v72
  %v942 = vunpack.c.l.b16 %v73
  %v943 = vunpack.c.h.b16 %v73
  %v944 = vunpack.c.l.b16 %v74
  %v945 = vunpack.c.h.b16 %v74
  %v946 = vunpack.c.l.b16 %v75
  %v947 = vunpack.c.h.b16 %v75
  %v948 = vunpack.c.l.b16 %v76
  %v949 = vunpack.c.h.b16 %v76
  %v950 = vunpack.c.l.b16 %v77
  %v951 = vunpack.c.h.b16 %v77
  %v952 = vunpack.c.l.b16 %v78
  %v953 = vunpack.c.h.b16 %v78
  %v954 = vunpack.c.l.b16 %v79
  %v955 = vunpack.c.l.b16 %v80
  %v956 = vunpack.c.h.b16 %v80
  %v957 = vunpack.c.l.b16 %v81
  %v958 = vunpack.c.h.b16 %v81
  %v959 = vunpack.c.l.b16 %v82
  %v960 = vunpack.c.h.b16 %v82
  %v961 = vunpack.c.l.b16 %v83
  %v962 = vunpack.c.h.b16 %v83
  %v963 = vunpack.c.l.b16 %v84
  %v964 = vunpack.c.h.b16 %v84
  %v965 = vunpack.c.l.b16 %v85
  %v966 = vunpack.c.h.b16 %v85
  %v967 = vunpack.c.l.b16 %v86
  %v968 = vunpack.c.h.b16 %v86
  %v969 = vunpack.c.l.b16 %v87
  %v970 = vunpack.c.h.b16 %v87
  %v971 = vunpack.c.l.b16 %v88
  %v972 = vunpack.c.h.b16 %v88
  %v973 = vunpack.c.l.b16 %v89
  %v974 = vunpack.c.h.b16 %v89
  %v975 = vunpack.c.l.b16 %v90
  %v976 = vunpack.c.h.b16 %v90
  %v977 = vunpack.c.l.b16 %v91
  %v978 = vunpack.c.h.b16 %v91
  %v979 = vunpack.c.l.b16 %v92
  %v980 = vunpack.c.l.b16 %v93
  %v981 = vunpack.c.h.b16 %v93
  %v982 = vunpack.c.l.b16 %v94
  %v983 = vunpack.c.h.b16 %v94
  %v984 = vunpack.c.l.b16 %v95
  %v985 = vunpack.c.h.b16 %v95
  %v986 = vunpack.c.l.b16 %v96
  %v987 = vunpack.c.h.b16 %v96
  %v988 = vunpack.c.l.b16 %v97
  %v989 = vunpack.c.h.b16 %v97
  %v990 = vunpack.c.l.b16 %v98
  %v991 = vunpack.c.h.b16 %v98
  %v992 = vunpack.c.l.b16 %v99
  %v993 = vunpack.c.h.b16 %v99
  %v994 = vunpack.c.l.b16 %v100
  %v995 = vunpack.c.h.b16 %v100
  %v996 = vunpack.c.l.b16 %v101
  %v997 = vunpack.c.h.b16 %v101
  %v998 = vunpack.c.l.b16 %v102
  %v999 = vunpack.c.h.b16 %v102
  %v1000 = vunpack.c.l.b16 %v103
  %v1001 = vunpack.c.h.b16 %v103
  %v1002 = vunpack.c.l.b16 %v104
  %v1003 = vunpack.c.h.b16 %v104
  %v1004 = vunpack.c.l.b16 %v105
  %v1005 = vunpack.c.l.b16 %v106
  %v1006 = vunpack.c.h.b16 %v106
  %v1007 = vunpack.c.l.b16 %v107
  %v1008 = vunpack.c.h.b16 %v107
  %v1009 = vunpack.c.l.b16 %v108
  %v1010 = vunpack.c.h.b16 %v108
  %v1011 = vunpack.c.l.b16 %v109
  %v1012 = vunpack.c.h.b16 %v109
  %v1013 = vunpack.c.l.b16 %v110
  %v1014 = vunpack.c.h.b16 %v110
  %v1015 = vunpack.c.l.b16 %v111
  %v1016 = vunpack.c.h.b16 %v111
  %v1017 = vunpack.c.l.b16 %v112
  %v1018 = vunpack.c.h.b16 %v112
  %v1019 = vunpack.c.l.b16 %v113
  %v1020 = vunpack.c.h.b16 %v113
  %v1021 = vunpack.c.l.b16 %v114
  %v1022 = vunpack.c.h.b16 %v114
  %v1023 = vunpack.c.l.b16 %v115
  %v1024 = vunpack.c.h.b16 %v115
  %v1025 = vunpack.c.l.b16 %v116
  %v1026 = vunpack.c.h.b16 %v116
  %v1027 = vunpack.c.l.b16 %v117
  %v1028 = vunpack.c.h.b16 %v117
  %v1029 = vunpack.c.l.b16 %v118
  %v1030 = vunpack.c.l.b16 %v119
  %v1031 = vunpack.c.h.b16 %v119
  %v1032 = vunpack.c.l.b16 %v120
  %v1033 = vunpack.c.h.b16 %v120
  %v1034 = vunpack.c.l.b16 %v121
  %v1035 = vunpack.c.h.b16 %v121
  %v1036 = vunpack.c.l.b16 %v122
  %v1037 = vunpack.c.h.b16 %v122
  %v1038 = vunpack.c.l.b16 %v123
  %v1039 = vunpack.c.h.b16 %v123
  %v1040 = vunpack.c.l.b16 %v124
  %v1041 = vunpack.c.h.b16 %v124
  %v1042 = vunpack.c.l.b16 %v125
  %v1043 = vunpack.c.h.b16 %v125
  %v1044 = vunpack.c.l.b16 %v126
  %v1045 = vunpack.c.h.b16 %v126
  %v1046 = vunpack.c.l.b16 %v127
  %v1047 = vunpack.c.h.b16 %v127
  %v1048 = vunpack.c.l.b16 %v128
  %v1049 = vunpack.c.h.b16 %v128
  %v1050 = vunpack.c.l.b16 %v129
  %v1051 = vunpack.c.h.b16 %v129
  %v1052 = vunpack.c.l.b16 %v130
  %v1053 = vunpack.c.h.b16 %v130
  %v1054 = vunpack.c.l.b16 %v131
  %v1055 = vunpack.c.l.b16 %v132
  %v1056 = vunpack.c.h.b16 %v132
  %v1057 = vunpack.c.l.b16 %v133
  %v1058 = vunpack.c.h.b16 %v133
  %v1059 = vunpack.c.l.b16 %v134
  %v1060 = vunpack.c.h.b16 %v134
  %v1061 = vunpack.c.l.b16 %v135
  %v1062 = vunpack.c.h.b16 %v135
  %v1063 = vunpack.c.l.b16 %v136
  %v1064 = vunpack.c.h.b16 %v136
  %v1065 = vunpack.c.l.b16 %v137
  %v1066 = vunpack.c.h.b16 %v137
  %v1067 = vunpack.c.l.b16 %v138
  %v1068 = vunpack.c.h.b16 %v138
  %v1069 = vunpack.c.l.b16 %v139
  %v1070 = vunpack.c.h.b16 %v139
  %v1071 = vunpack.c.l.b16 %v140
  %v1072 = vunpack.c.h.b16 %v140
  %v1073 = vunpack.c.l.b16 %v141
  %v1074 = vunpack.c.h.b16 %v141
  %v1075 = vunpack.c.l.b16 %v142
  %v1076 = vunpack.c.h.b16 %v142
  %v1077 = vunpack.c.l.b16 %v143
  %v1078 = vunpack.c.h.b16 %v143
  %v1079 = vunpack.c.l.b16 %v144
  %v1080 = vunpack.c.l.b16 %v145
  %v1081 = vunpack.c.h.b16 %v145
  %v1082 = vunpack.c.l.b16 %v146
  %v1083 = vunpack.c.h.b16 %v146
  %v1084 = vunpack.c.l.b16 %v147
  %v1085 = vunpack.c.h.b16 %v147
  %v1086 = vunpack.c.l.b16 %v148
  %v1087 = vunpack.c.h.b16 %v148
  %v1088 = vunpack.c.l.b16 %v149
  %v1089 = vunpack.c.h.b16 %v149
  %v1090 = vunpack.c.l.b16 %v150
  %v1091 = vunpack.c.h.b16 %v150
  %v1092 = vunpack.c.l.b16 %v151
  %v1093 = vunpack.c.h.b16 %v151
  %v1094 = vunpack.c.l.b16 %v152
  %v1095 = vunpack.c.h.b16 %v152
  %v1096 = vunpack.c.l.b16 %v153
  %v1097 = vunpack.c.h.b16 %v153
  %v1098 = vunpack.c.l.b16 %v154
  %v1099 = vunpack.c.h.b16 %v154
  %v1100 = vunpack.c.l.b16 %v155
  %v1101 = vunpack.c.h.b16 %v155
  %v1102 = vunpack.c.l.b16 %v156
  %v1103 = vunpack.c.h.b16 %v156
  %v1104 = vunpack.c.l.b16 %v157
  %v1105 = vunpack.c.l.b16 %v158
  %v1106 = vunpack.c.h.b16 %v158
  %v1107 = vunpack.c.l.b16 %v159
  %v1108 = vunpack.c.h.b16 %v159
  %v1109 = vunpack.c.l.b16 %v160
  %v1110 = vunpack.c.h.b16 %v160
  %v1111 = vunpack.c.l.b16 %v161
  %v1112 = vunpack.c.h.b16 %v161
  %v1113 = vunpack.c.l.b16 %v162
  %v1114 = vunpack.c.h.b16 %v162
  %v1115 = vunpack.c.l.b16 %v163
  %v1116 = vunpack.c.h.b16 %v163
  %v1117 = vunpack.c.l.b16 %v164
  %v1118 = vunpack.c.h.b16 %v164
  %v1119 = vunpack.c.l.b16 %v165
  %v1120 = vunpack.c.h.b16 %v165
  %v1121 = vunpack.c.l.b16 %v166
  %v1122 = vunpack.c.h.b16 %v166
  %v1123 = vunpack.c.l.b16 %v167
  %v1124 = vunpack.c.h.b16 %v167
  %v1125 = vunpack.c.l.b16 %v168
  %v1126 = vunpack.c.h.b16 %v168
  %v1127 = vunpack.c.l.b16 %v169
  %v1128 = vunpack.c.h.b16 %v169
  %v1129 = vunpack.c.l.b16 %v170
  %v1130 = vunpack.c.l.b16 %v171
  %v1131 = vunpack.c.h.b16 %v171
  %v1132 = vunpack.c.l.b16 %v172
  %v1133 = vunpack.c.h.b16 %v172
  %v1134 = vunpack.c.l.b16 %v173
  %v1135 = vunpack.c.h.b16 %v173
  %v1136 = vunpack.c.l.b16 %v174
  %v1137 = vunpack.c.h.b16 %v174
  %v1138 = vunpack.c.l.b16 %v175
  %v1139 = vunpack.c.h.b16 %v175
  %v1140 = vunpack.c.l.b16 %v176
  %v1141 = vunpack.c.h.b16 %v176
  %v1142 = vunpack.c.l.b16 %v177
  %v1143 = vunpack.c.h.b16 %v177
  %v1144 = vunpack.c.l.b16 %v178
  %v1145 = vunpack.c.h.b16 %v178
  %v1146 = vunpack.c.l.b16 %v179
  %v1147 = vunpack.c.h.b16 %v179
  %v1148 = vunpack.c.l.b16 %v180
  %v1149 = vunpack.c.h.b16 %v180
  %v1150 = vunpack.c.l.b16 %v181
  %v1151 = vunpack.c.h.b16 %v181
  %v1152 = vunpack.c.l.b16 %v182
  %v1153 = vunpack.c.h.b16 %v182
  %v1154 = vunpack.c.l.b16 %v183
  %v1155 = vunpack.c.l.b16 %v184
  %v1156 = vunpack.c.h.b16 %v184
  %v1157 = vunpack.c.l.b16 %v185
  %v1158 = vunpack.c.h.b16 %v185
  %v1159 = vunpack.c.l.b16 %v186
  %v1160 = vunpack.c.h.b16 %v186
  %v1161 = vunpack.c.l.b16 %v187
  %v1162 = vunpack.c.h.b16 %v187
  %v1163 = vunpack.c.l.b16 %v188
  %v1164 = vunpack.c.h.b16 %v188
  %v1165 = vunpack.c.l.b16 %v189
  %v1166 = vunpack.c.h.b16 %v189
  %v1167 = vunpack.c.l.b16 %v190
  %v1168 = vunpack.c.h.b16 %v190
  %v1169 = vunpack.c.l.b16 %v191
  %v1170 = vunpack.c.h.b16 %v191
  %v1171 = vunpack.c.l.b16 %v192
  %v1172 = vunpack.c.h.b16 %v192
  %v1173 = vunpack.c.l.b16 %v193
  %v1174 = vunpack.c.h.b16 %v193
  %v1175 = vunpack.c.l.b16 %v194
  %v1176 = vunpack.c.h.b16 %v194
  %v1177 = vunpack.c.l.b16 %v195
  %v1178 = vunpack.c.h.b16 %v195
  %v1179 = vunpack.c.l.b16 %v196
  %v1180 = vunpack.c.l.b16 %v197
  %v1181 = vunpack.c.h.b16 %v197
  %v1182 = vunpack.c.l.b16 %v198
  %v1183 = vunpack.c.h.b16 %v198
  %v1184 = vunpack.c.l.b16 %v199
  %v1185 = vunpack.c.h.b16 %v199
  %v1186 = vunpack.c.l.b16 %v200
  %v1187 = vunpack.c.h.b16 %v200
  %v1188 = vunpack.c.l.b16 %v201
  %v1189 = vunpack.c.h.b16 %v201
  %v1190 = vunpack.c.l.b16 %v202
  %v1191 = vunpack.c.h.b16 %v202
  %v1192 = vunpack.c.l.b16 %v203
  %v1193 = vunpack.c.h.b16 %v203
  %v1194 = vunpack.c.l.b16 %v204
  %v1195 = vunpack.c.h.b16 %v204
  %v1196 = vunpack.c.l.b16 %v205
  %v1197 = vunpack.c.h.b16 %v205
  %v1198 = vunpack.c.l.b16 %v206
  %v1199 = vunpack.c.h.b16 %v206
  %v1200 = vunpack.c.l.b16 %v207
  %v1201 = vunpack.c.h.b16 %v207
  %v1202 = vunpack.c.l.b16 %v208
  %v1203 = vunpack.c.h.b16 %v208
  %v1204 = vunpack.c.l.b16 %v209
  %v1205 = vunpack.c.l.b16 %v210
  %v1206 = vunpack.c.h.b16 %v210
  %v1207 = vunpack.c.l.b16 %v211
  %v1208 = vunpack.c.h.b16 %v211
  %v1209 = vunpack.c.l.b16 %v212
  %v1210 = vunpack.c.h.b16 %v212
  %v1211 = vunpack.c.l.b16 %v213
  %v1212 = vunpack.c.h.b16 %v213
  %v1213 = vunpack.c.l.b16 %v214
  %v1214 = vunpack.c.h.b16 %v214
  %v1215 = vunpack.c.l.b16 %v215
  %v1216 = vunpack.c.h.b16 %v215
  %v1217 = vunpack.c.l.b16 %v216
  %v1218 = vunpack.c.h.b16 %v216
  %v1219 = vunpack.c.l.b16 %v217
  %v1220 = vunpack.c.h.b16 %v217
  %v1221 = vunpack.c.l.b16 %v218
  %v1222 = vunpack.c.h.b16 %v218
  %v1223 = vunpack.c.l.b16 %v219
  %v1224 = vunpack.c.h.b16 %v219
  %v1225 = vunpack.c.l.b16 %v220
  %v1226 = vunpack.c.h.b16 %v220
  %v1227 = vunpack.c.l.b16 %v221
  %v1228 = vunpack.c.h.b16 %v221
  %v1229 = vunpack.c.l.b16 %v222
  %v1230 = vpack.c.b16 %v855, %v830
  %v1231 = vpack.c.b16 %v856, %v831
  %v1232 = vpack.c.b16 %v857, %v832
  %v1233 = vpack.c.b16 %v858, %v833
  %v1234 = vpack.c.b16 %v859, %v834
  %v1235 = vpack.c.b16 %v860, %v835
  %v1236 = vpack.c.b16 %v861, %v836
  %v1237 = vpack.c.b16 %v862, %v837
  %v1238 = vpack.c.b16 %v863, %v838
  %v1239 = vpack.c.b16 %v864, %v839
  %v1240 = vpack.c.b16 %v865, %v840
  %v1241 = vpack.c.b16 %v866, %v841
  %v1242 = vpack.c.b16 %v867, %v842
  %v1243 = vpack.c.b16 %v868, %v843
  %v1244 = vpack.c.b16 %v869, %v844
  %v1245 = vpack.c.b16 %v870, %v845
  %v1246 = vpack.c.b16 %v871, %v846
  %v1247 = vpack.c.b16 %v872, %v847
  %v1248 = vpack.c.b16 %v873, %v848
  %v1249 = vpack.c.b16 %v874, %v849
  %v1250 = vpack.c.b16 %v875, %v850
  %v1251 = vpack.c.b16 %v876, %v851
  %v1252 = vpack.c.b16 %v877, %v852
  %v1253 = vpack.c.b16 %v878, %v853
  %v1254 = vpack.c.b16 %v879, %v854
  %v1255 = vpack.c.b16 %v905, %v880
  %v1256 = vpack.c.b16 %v906, %v881
  %v1257 = vpack.c.b16 %v907, %v882
  %v1258 = vpack.c.b16 %v908, %v883
  %v1259 = vpack.c.b16 %v909, %v884
  %v1260 = vpack.c.b16 %v910, %v885
  %v1261 = vpack.c.b16 %v911, %v886
  %v1262 = vpack.c.b16 %v912, %v887
  %v1263 = vpack.c.b16 %v913, %v888
  %v1264 = vpack.c.b16 %v914, %v889
  %v1265 = vpack.c.b16 %v915, %v890
  %v1266 = vpack.c.b16 %v916, %v891
  %v1267 = vpack.c.b16 %v917, %v892
  %v1268 = vpack.c.b16 %v918, %v893
  %v1269 = vpack.c.b16 %v919, %v894
  %v1270 = vpack.c.b16 %v920, %v895
  %v1271 = vpack.c.b16 %v921, %v896
  %v1272 = vpack.c.b16 %v922, %v897
  %v1273 = vpack.c.b16 %v923, %v898
  %v1274 = vpack.c.b16 %v924, %v899
  %v1275 = vpack.c.b16 %v925, %v900
  %v1276 = vpack.c.b16 %v926, %v901
  %v1277 = vpack.c.b16 %v927, %v902
  %v1278 = vpack.c.b16 %v928, %v903
  %v1279 = vpack.c.b16 %v929, %v904
  %v1280 = vpack.c.b16 %v955, %v930
  %v1281 = vpack.c.b16 %v956, %v931
  %v1282 = vpack.c.b16 %v957, %v932
  %v1283 = vpack.c.b16 %v958, %v933
  %v1284 = vpack.c.b16 %v959, %v934
  %v1285 = vpack.c.b16 %v960, %v935
  %v1286 = vpack.c.b16 %v961, %v936
  %v1287 = vpack.c.b16 %v962, %v937
  %v1288 = vpack.c.b16 %v963, %v938
  %v1289 = vpack.c.b16 %v964, %v939
  %v1290 = vpack.c.b16 %v965, %v940
  %v1291 = vpack.c.b16 %v966, %v941
  %v1292 = vpack.c.b16 %v967, %v942
  %v1293 = vpack.c.b16 %v968, %v943
  %v1294 = vpack.c.b16 %v969, %v944
  %v1295 = vpack.c.b16 %v970, %v945
  %v1296 = vpack.c.b16 %v971, %v946
  %v1297 = vpack.c.b16 %v972, %v947
  %v1298 = vpack.c.b16 %v973, %v948
  %v1299 = vpack.c.b16 %v974, %v949
  %v1300 = vpack.c.b16 %v975, %v950
  %v1301 = vpack.c.b16 %v976, %v951
  %v1302 = vpack.c.b16 %v977, %v952
  %v1303 = vpack.c.b16 %v978, %v953
  %v1304 = vpack.c.b16 %v979, %v954
  %v1305 = vpack.c.b16 %v1005, %v980
  %v1306 = vpack.c.b16 %v1006, %v981
  %v1307 = vpack.c.b16 %v1007, %v982
  %v1308 = vpack.c.b16 %v1008, %v983
  %v1309 = vpack.c.b16 %v1009, %v984
  %v1310 = vpack.c.b16 %v1010, %v985
  %v1311 = vpack.c.b16 %v1011, %v986
  %v1312 = vpack.c.b16 %v1012, %v987
  %v1313 = vpack.c.b16 %v1013, %v988
  %v1314 = vpack.c.b16 %v1014, %v989
  %v1315 = vpack.c.b16 %v1015, %v990
  %v1316 = vpack.c.b16 %v1016, %v991
  %v1317 = vpack.c.b16 %v1017, %v992
  %v1318 = vpack.c.b16 %v1018, %v993
  %v1319 = vpack.c.b16 %v1019, %v994
  %v1320 = vpack.c.b16 %v1020, %v995
  %v1321 = vpack.c.b16 %v1021, %v996
  %v1322 = vpack.c.b16 %v1022, %v997
  %v1323 = vpack.c.b16 %v1023, %v998
  %v1324 = vpack.c.b16 %v1024, %v999
  %v1325 = vpack.c.b16 %v1025, %v1000
  %v1326 = vpack.c.b16 %v1026, %v1001
  %v1327 = vpack.c.b16 %v1027, %v1002
  %v1328 = vpack.c.b16 %v1028, %v1003
  %v1329 = vpack.c.b16 %v1029, %v1004
  %v1330 = vpack.c.b16 %v1055, %v1030
  %v1331 = vpack.c.b16 %v1056, %v1031
  %v1332 = vpack.c.b16 %v1057, %v1032
  %v1333 = vpack.c.b16 %v1058, %v1033
  %v1334 = vpack.c.b16 %v1059, %v1034
  %v1335 = vpack.c.b16 %v1060, %v1035
  %v1336 = vpack.c.b16 %v1061, %v1036
  %v1337 = vpack.c.b16 %v1062, %v1037
  %v1338 = vpack.c.b16 %v1063, %v1038
  %v1339 = vpack.c.b16 %v1064, %v1039
  %v1340 = vpack.c.b16 %v1065, %v1040
  %v1341 = vpack.c.b16 %v1066, %v1041
  %v1342 = vpack.c.b16 %v1067, %v1042
  %v1343 = vpack.c.b16 %v1068, %v1043
  %v1344 = vpack.c.b16 %v1069, %v1044
  %v1345 = vpack.c.b16 %v1070, %v1045
  %v1346 = vpack.c.b16 %v1071, %v1046
  %v1347 = vpack.c.b16 %v1072, %v1047
  %v1348 = vpack.c.b16 %v1073, %v1048
  %v1349 = vpack.c.b16 %v1074, %v1049
  %v1350 = vpack.c.b16 %v1075, %v1050
  %v1351 = vpack.c.b16 %v1076, %v1051
  %v1352 = vpack.c.b16 %v1077, %v1052
  %v1353 = vpack.c.b16 %v1078, %v1053
  %v1354 = vpack.c.b16 %v1079, %v1054
  %v1355 = vpack.c.b16 %v1105, %v1080
  %v1356 = vpack.c.b16 %v1106, %v1081
  %v1357 = vpack.c.b16 %v1107, %v1082
  %v1358 = vpack.c.b16 %v1108, %v1083
  %v1359 = vpack.c.b16 %v1109, %v1084
  %v1360 = vpack.c.b16 %v1110, %v1085
  %v1361 = vpack.c.b16 %v1111, %v1086
  %v1362 = vpack.c.b16 %v1112, %v1087
  %v1363 = vpack.c.b16 %v1113, %v1088
  %v1364 = vpack.c.b16 %v1114, %v1089
  %v1365 = vpack.c.b16 %v1115, %v1090
  %v1366 = vpack.c.b16 %v1116, %v1091
  %v1367 = vpack.c.b16 %v1117, %v1092
  %v1368 = vpack.c.b16 %v1118, %v1093
  %v1369 = vpack.c.b16 %v1119, %v1094
  %v1370 = vpack.c.b16 %v1120, %v1095
  %v1371 = vpack.c.b16 %v1121, %v1096
  %v1372 = vpack.c.b16 %v1122, %v1097
  %v1373 = vpack.c.b16 %v1123, %v1098
  %v1374 = vpack.c.b16 %v1124, %v1099
  %v1375 = vpack.c.b16 %v1125, %v1100
  %v1376 = vpack.c.b16 %v1126, %v1101
  %v1377 = vpack.c.b16 %v1127, %v1102
  %v1378 = vpack.c.b16 %v1128, %v1103
  %v1379 = vpack.c.b16 %v1129, %v1104
  %v1380 = vpack.c.b16 %v1155, %v1130
  %v1381 = vpack.c.b16 %v1156, %v1131
  %v1382 = vpack.c.b16 %v1157, %v1132
  %v1383 = vpack.c.b16 %v1158, %v1133
  %v1384 = vpack.c.b16 %v1159, %v1134
  %v1385 = vpack.c.b16 %v1160, %v1135
  %v1386 = vpack.c.b16 %v1161, %v1136
  %v1387 = vpack.c.b16 %v1162, %v1137
  %v1388 = vpack.c.b16 %v1163, %v1138
  %v1389 = vpack.c.b16 %v1164, %v1139
  %v1390 = vpack.c.b16 %v1165, %v1140
  %v1391 = vpack.c.b16 %v1166, %v1141
  %v1392 = vpack.c.b16 %v1167, %v1142
  %v1393 = vpack.c.b16 %v1168, %v1143
  %v1394 = vpack.c.b16 %v1169, %v1144
  %v1395 = vpack.c.b16 %v1170, %v1145
  %v1396 = vpack.c.b16 %v1171, %v1146
  %v1397 = vpack.c.b16 %v1172, %v1147
  %v1398 = vpack.c.b16 %v1173, %v1148
  %v1399 = vpack.c.b16 %v1174, %v1149
  %v1400 = vpack.c.b16 %v1175, %v1150
  %v1401 = vpack.c.b16 %v1176, %v1151
  %v1402 = vpack.c.b16 %v1177, %v1152
  %v1403 = vpack.c.b16 %v1178, %v1153
  %v1404 = vpack.c.b16 %v1179, %v1154
  %v1405 = vpack.c.b16 %v1205, %v1180
  %v1406 = vpack.c.b16 %v1206, %v1181
  %v1407 = vpack.c.b16 %v1207, %v1182
  %v1408 = vpack.c.b16 %v1208, %v1183
  %v1409 = vpack.c.b16 %v1209, %v1184
  %v1410 = vpack.c.b16 %v1210, %v1185
  %v1411 = vpack.c.b16 %v1211, %v1186
  %v1412 = vpack.c.b16 %v1212, %v1187
  %v1413 = vpack.c.b16 %v1213, %v1188
  %v1414 = vpack.c.b16 %v1214, %v1189
  %v1415 = vpack.c.b16 %v1215, %v1190
  %v1416 = vpack.c.b16 %v1216, %v1191
  %v1417 = vpack.c.b16 %v1217, %v1192
  %v1418 = vpack.c.b16 %v1218, %v1193
  %v1419 = vpack.c.b16 %v1219, %v1194
  %v1420 = vpack.c.b16 %v1220, %v1195
  %v1421 = vpack.c.b16 %v1221, %v1196
  %v1422 = vpack.c.b16 %v1222, %v1197
  %v1423 = vpack.c.b16 %v1223, %v1198
  %v1424 = vpack.c.b16 %v1224, %v1199
  %v1425 = vpack.c.b16 %v1225, %v1200
  %v1426 = vpack.c.b16 %v1226, %v1201
  %v1427 = vpack.c.b16 %v1227, %v1202
  %v1428 = vpack.c.b16 %v1228, %v1203
  %v1429 = vpack.c.b16 %v1229, %v1204
  %v2014 = vunpack.c.l.b16 %v223
  %v2015 = vunpack.c.l.b16 %v224
  %v2016 = vunpack.c.l.b16 %v225
  %v2017 = vunpack.c.l.b16 %v226
  %v2018 = vunpack.c.l.b16 %v227
  %v2019 = vunpack.c.l.b16 %v228
  %v2020 = vunpack.c.l.b16 %v229
  %v2021 = vunpack.c.l.b16 %v230
  %v2022 = vunpack.c.l.b16 %v231
  %v2023 = vunpack.c.l.b16 %v232
  %v2024 = vunpack.c.l.b16 %v233
  %v2025 = vunpack.c.l.b16 %v234
  %v2026 = vunpack.c.l.b16 %v235
  %v2027 = vunpack.c.l.b16 %v236
  %v2028 = vunpack.c.l.b16 %v237
  %v2029 = vunpack.c.l.b16 %v238
  %v2030 = vunpack.c.l.b16 %v239
  %v2031 = vunpack.c.l.b16 %v240
  %v2032 = vunpack.c.l.b16 %v241
  %v2033 = vunpack.c.l.b16 %v242
  %v2034 = vunpack.c.l.b16 %v243
  %v2035 = vunpack.c.l.b16 %v244
  %v2036 = vunpack.c.l.b16 %v245
  %v2037 = vunpack.c.l.b16 %v246
  %v2038 = vunpack.c.l.b16 %v247
  %v2039 = vunpack.c.l.b16 %v248
  %v2040 = vunpack.c.l.b16 %v249
  %v2041 = vunpack.c.l.b16 %v250
  %v2042 = vunpack.c.l.b16 %v251
  %v2043 = vunpack.c.l.b16 %v252
  %v2044 = vunpack.c.l.b16 %v253
  %v2045 = vunpack.c.l.b16 %v254
  %v2046 = vunpack.c.l.b16 %v255
  %v2047 = vunpack.c.l.b16 %v256
  %v2048 = vunpack.c.l.b16 %v257
  %v2049 = vunpack.c.l.b16 %v258
  %v2050 = vunpack.c.l.b16 %v259
  %v2051 = vunpack.c.l.b16 %v260
  %v2052 = vunpack.c.l.b16 %v261
  %v2053 = vunpack.c.l.b16 %v262
  %v2054 = vunpack.c.l.b16 %v263
  %v2055 = vunpack.c.l.b16 %v264
  %v2056 = vunpack.c.l.b16 %v265
  %v2057 = vunpack.c.l.b16 %v266
  %v2058 = vunpack.c.l.b16 %v267
  %v2059 = vunpack.c.l.b16 %v268
  %v2060 = vunpack.c.l.b16 %v269
  %v2061 = vunpack.c.l.b16 %v270
  %v2062 = vunpack.c.l.b16 %v271
  %v2063 = vunpack.c.l.b16 %v272
  %v2064 = vunpack.c.l.b16 %v273
  %v2065 = vunpack.c.l.b16 %v274
  %v2066 = vunpack.c.l.b16 %v275
  %v2067 = vunpack.c.l.b16 %v276
  %v2068 = vunpack.c.l.b16 %v277
  %v2069 = vunpack.c.l.b16 %v278
  %v2070 = vunpack.c.l.b16 %v279
  %v2071 = vunpack.c.l.b16 %v280
  %v2072 = vunpack.c.l.b16 %v281
  %v2073 = vunpack.c.l.b16 %v282
  %v2074 = vunpack.c.l.b16 %v283
  %v2075 = vunpack.c.l.b16 %v284
  %v2076 = vunpack.c.l.b16 %v285
  %v2077 = vunpack.c.l.b16 %v286
  %v2078 = vunpack.c.l.b16 %v287
  %v2079 = vunpack.c.l.b16 %v288
  %v2080 = vunpack.c.l.b16 %v289
  %v2081 = vunpack.c.l.b16 %v290
  %v2082 = vunpack.c.l.b16 %v291
  %v2083 = vunpack.c.l.b16 %v292
  %v2084 = vunpack.c.l.b16 %v293
  %v2085 = vunpack.c.l.b16 %v294
  %v2086 = vunpack.c.l.b16 %v295
  %v2087 = vunpack.c.l.b16 %v296
  %v2088 = vunpack.c.l.b16 %v297
  %v2089 = vunpack.c.l.b16 %v298
  %v2090 = vunpack.c.l.b16 %v299
  %v2091 = vunpack.c.l.b16 %v300
  %v2092 = vunpack.c.l.b16 %v301
  %v2093 = vunpack.c.l.b16 %v302
  %v2094 = vunpack.c.l.b16 %v303
  %v2095 = vunpack.c.l.b16 %v304
  %v2096 = vunpack.c.l.b16 %v305
  %v2097 = vunpack.c.l.b16 %v306
  %v2098 = vunpack.c.l.b16 %v307
  %v2099 = vunpack.c.l.b16 %v308
  %v2100 = vunpack.c.l.b16 %v309
  %v2101 = vunpack.c.l.b16 %v310
  %v2102 = vunpack.c.l.b16 %v311
  %v2103 = vunpack.c.l.b16 %v312
  %v2104 = vunpack.c.l.b16 %v313
  %v2105 = vunpack.c.l.b16 %v314
  %v2106 = vunpack.c.l.b16 %v315
  %v2107 = vunpack.c.l.b16 %v316
  %v2108 = vunpack.c.l.b16 %v317
  %v2109 = vunpack.c.l.b16 %v318
  %v2110 = vunpack.c.l.b16 %v319
  %v2111 = vunpack.c.l.b16 %v320
  %v2112 = vunpack.c.l.b16 %v321
  %v2113 = vunpack.c.l.b16 %v322
  %v2114 = vunpack.c.l.b16 %v323
  %v2115 = vunpack.c.l.b16 %v324
  %v2116 = vunpack.c.l.b16 %v325
  %v2117 = vunpack.c.l.b16 %v326
  %v2118 = vunpack.c.l.b16 %v327
  %v2119 = vunpack.c.l.b16 %v328
  %v2120 = vunpack.c.l.b16 %v329
  %v2121 = vunpack.c.l.b16 %v330
  %v2122 = vunpack.c.l.b16 %v331
  %v2123 = vunpack.c.l.b16 %v332
  %v2124 = vunpack.c.l.b16 %v333
  %v2125 = vunpack.c.l.b16 %v334
  %v2126 = vunpack.c.l.b16 %v335
  %v2127 = vunpack.c.l.b16 %v336
  %v2128 = vunpack.c.l.b16 %v337
  %v2129 = vunpack.c.l.b16 %v338
  %v2130 = vunpack.c.l.b16 %v339
  %v2131 = vunpack.c.l.b16 %v340
  %v2132 = vunpack.c.l.b16 %v341
  %v2133 = vunpack.c.l.b16 %v342
  %v2134 = vunpack.c.l.b16 %v343
  %v2135 = vunpack.c.l.b16 %v344
  %v2136 = vunpack.c.l.b16 %v345
  %v2137 = vunpack.c.l.b16 %v346
  %v2138 = vunpack.c.l.b16 %v347
  %v2139 = vunpack.c.l.b16 %v348
  %v2140 = vunpack.c.l.b16 %v349
  %v2141 = vunpack.c.l.b16 %v350
  %v2142 = vunpack.c.l.b16 %v351
  %v2143 = vunpack.c.l.b16 %v352
  %v2144 = vunpack.c.l.b16 %v353
  %v2145 = vunpack.c.l.b16 %v354
  %v2146 = vunpack.c.l.b16 %v355
  %v2147 = vunpack.c.l.b16 %v356
  %v2148 = vunpack.c.l.b16 %v357
  %v2149 = vunpack.c.l.b16 %v358
  %v2150 = vunpack.c.l.b16 %v359
  %v2151 = vunpack.c.l.b16 %v360
  %v2152 = vunpack.c.l.b16 %v361
  %v2153 = vunpack.c.l.b16 %v362
  %v2154 = vunpack.c.l.b16 %v363
  %v2155 = vunpack.c.l.b16 %v364
  %v2156 = vunpack.c.l.b16 %v365
  %v2157 = vunpack.c.l.b16 %v366
  %v2158 = vunpack.c.l.b16 %v367
  %v2159 = vunpack.c.l.b16 %v368
  %v2160 = vunpack.c.l.b16 %v369
  %v2161 = vunpack.c.l.b16 %v370
  %v2162 = vunpack.c.l.b16 %v371
  %v2163 = vunpack.c.l.b16 %v372
  %v2164 = vunpack.c.l.b16 %v373
  %v2165 = vunpack.c.l.b16 %v374
  %v2166 = vunpack.c.l.b16 %v375
  %v2167 = vunpack.c.l.b16 %v376
  %v2168 = vunpack.c.l.b16 %v377
  %v2169 = vunpack.c.l.b16 %v378
  %v2170 = vunpack.c.l.b16 %v379
  %v2171 = vunpack.c.l.b16 %v380
  %v2172 = vunpack.c.l.b16 %v381
  %v2173 = vunpack.c.l.b16 %v382
  %v2174 = vunpack.c.l.b16 %v383
  %v2175 = vunpack.c.l.b16 %v384
  %v2176 = vunpack.c.l.b16 %v385
  %v2177 = vunpack.c.l.b16 %v386
  %v2178 = vunpack.c.l.b16 %v387
  %v2179 = vunpack.c.l.b16 %v388
  %v2180 = vunpack.c.l.b16 %v389
  %v2181 = vunpack.c.l.b16 %v390
  %v2182 = vunpack.c.l.b16 %v391
  %v2183 = vunpack.c.l.b16 %v392
  %v2184 = vunpack.c.l.b16 %v393
  %v2185 = vunpack.c.l.b16 %v394
  %v2186 = vunpack.c.l.b16 %v395
  %v2187 = vunpack.c.l.b16 %v396
  %v2188 = vunpack.c.l.b16 %v397
  %v2189 = vunpack.c.l.b16 %v398
  %v2190 = vunpack.c.l.b16 %v399
  %v2191 = vunpack.c.l.b16 %v400
  %v2192 = vunpack.c.l.b16 %v401
  %v2193 = vunpack.c.l.b16 %v402
  %v2194 = vunpack.c.l.b16 %v403
  %v2195 = vunpack.c.l.b16 %v404
  %v2196 = vunpack.c.l.b16 %v405
  %v2197 = vunpack.c.l.b16 %v406
  %v2198 = vunpack.c.l.b16 %v407
  %v2199 = vunpack.c.l.b16 %v408
  %v2200 = vunpack.c.l.b16 %v409
  %v2201 = vunpack.c.l.b16 %v410
  %v2202 = vunpack.c.l.b16 %v411
  %v2203 = vunpack.c.l.b16 %v412
  %v2204 = vunpack.c.l.b16 %v413
  %v2205 = vunpack.c.l.b16 %v414
  %v2206 = vunpack.c.l.b16 %v415
  %v2207 = vunpack.c.l.b16 %v416
  %v2208 = vunpack.c.l.b16 %v417
  %v2209 = vunpack.c.l.b16 %v418
  %v2210 = vunpack.c.l.b16 %v419
  %v2211 = vunpack.c.l.b16 %v420
  %v2212 = vunpack.c.l.b16 %v421
  %v2213 = vunpack.c.l.b16 %v422
  %v2214 = vunpack.c.l.b16 %v423
  %v2215 = vunpack.c.l.b16 %v424
  %v2216 = vunpack.c.l.b16 %v425
  %v2217 = vunpack.c.l.b16 %v426
  %v2218 = vunpack.c.l.b16 %v427
  %v2219 = vunpack.c.l.b16 %v428
  %v2220 = vunpack.c.l.b16 %v429
  %v2221 = vunpack.c.l.b16 %v430
  %v2222 = vunpack.c.l.b16 %v431
  %v2223 = vunpack.c.l.b16 %v432
  %v2224 = vunpack.c.l.b16 %v433
  %v2225 = vunpack.c.l.b16 %v434
  %v2226 = vunpack.c.l.b16 %v435
  %v2227 = vunpack.c.l.b16 %v436
  %v2228 = vunpack.c.l.b16 %v437
  %v2229 = vunpack.c.l.b16 %v438
  %v2230 = vunpack.c.l.b16 %v439
  %v2231 = vunpack.c.l.b16 %v440
  %v2232 = vunpack.c.l.b16 %v441
  %v2233 = vunpack.c.l.b16 %v442
  %v2234 = vunpack.c.l.b16 %v443
  %v2235 = vunpack.c.l.b16 %v444
  %v2236 = vunpack.c.l.b16 %v445
  %v2237 = vunpack.c.l.b16 %v446
  %v2238 = vunpack.c.l.b16 %v447
  %v2239 = vunpack.c.l.b16 %v448
  %v2240 = vunpack.c.l.b16 %v449
  %v2241 = vunpack.c.l.b16 %v450
  %v2242 = vunpack.c.l.b16 %v451
  %v2243 = vunpack.c.l.b16 %v452
  %v2244 = vunpack.c.l.b16 %v453
  %v2245 = vunpack.c.l.b16 %v454
  %v2246 = vunpack.c.l.b16 %v455
  %v2247 = vunpack.c.l.b16 %v456
  %v2248 = vunpack.c.l.b16 %v457
  %v2249 = vunpack.c.l.b16 %v458
  %v2250 = vunpack.c.l.b16 %v459
  %v2251 = vunpack.c.l.b16 %v460
  %v2252 = vunpack.c.l.b16 %v461
  %v2253 = vunpack.c.l.b16 %v462
  %v2254 = vunpack.c.l.b16 %v463
  %v2255 = vunpack.c.l.b16 %v464
  %v2256 = vunpack.c.l.b16 %v465
  %v2257 = vunpack.c.l.b16 %v466
  %v2258 = vunpack.c.l.b16 %v467
  %v2259 = vunpack.c.l.b16 %v468
  %v2260 = vunpack.c.l.b16 %v469
  %v2261 = vunpack.c.l.b16 %v470
  %v2262 = vunpack.c.l.b16 %v471
  %v2263 = vunpack.c.l.b16 %v472
  %v2264 = vunpack.c.l.b16 %v473
  %v2265 = vunpack.c.l.b16 %v474
  %v2266 = vunpack.c.l.b16 %v475
  %v2267 = vunpack.c.l.b16 %v476
  %v2268 = vunpack.c.l.b16 %v477
  %v2269 = vunpack.c.l.b16 %v478
  %v2270 = vunpack.c.l.b16 %v479
  %v2271 = vunpack.c.l.b16 %v480
  %v2272 = vunpack.c.l.b16 %v481
  %v2273 = vunpack.c.l.b16 %v482
  %v2274 = vunpack.c.l.b16 %v483
  %v2275 = vunpack.c.l.b16 %v484
  %v2276 = vunpack.c.l.b16 %v485
  %v2277 = vunpack.c.l.b16 %v486
  %v2278 = vunpack.c.l.b16 %v487
  %v2279 = vunpack.c.l.b16 %v488
  %v2280 = vunpack.c.l.b16 %v489
  %v2281 = vunpack.c.l.b16 %v490
  %v2282 = vunpack.c.l.b16 %v491
  %v2283 = vunpack.c.l.b16 %v492
  %v2284 = vunpack.c.l.b16 %v493
  %v2285 = vunpack.c.l.b16 %v494
  %v2286 = vunpack.c.l.b16 %v495
  %v2287 = vunpack.c.l.b16 %v496
  %v2288 = vunpack.c.l.b16 %v497
  %v2289 = vunpack.c.l.b16 %v498
  %v2290 = vunpack.c.l.b16 %v499
  %v2291 = vunpack.c.l.b16 %v500
  %v2292 = vunpack.c.l.b16 %v501
  %v2293 = vunpack.c.l.b16 %v502
  %v2294 = vunpack.c.l.b16 %v503
  %v2295 = vunpack.c.l.b16 %v504
  %v2296 = vunpack.c.l.b16 %v505
  %v2297 = vunpack.c.l.b16 %v506
  %v2298 = vunpack.c.l.b16 %v507
  %v2299 = vunpack.c.l.b16 %v508
  %v2300 = vunpack.c.l.b16 %v509
  %v2301 = vunpack.c.l.b16 %v510
  %v2302 = vunpack.c.l.b16 %v511
  %v2303 = vunpack.c.l.b16 %v512
  %v2304 = vunpack.c.l.b16 %v513
  %v2305 = vunpack.c.l.b16 %v514
  %v2306 = vunpack.c.l.b16 %v515
  %v2307 = vunpack.c.l.b16 %v516
  %v2308 = vunpack.c.l.b16 %v517
  %v2309 = vunpack.c.l.b16 %v518
  %v2310 = vunpack.c.l.b16 %v519
  %v2311 = vunpack.c.l.b16 %v520
  %v2312 = vunpack.c.l.b16 %v521
  %v2313 = vunpack.c.l.b16 %v522
  %v2314 = vunpack.c.l.b16 %v523
  %v2315 = vunpack.c.l.b16 %v524
  %v2316 = vunpack.c.l.b16 %v525
  %v2317 = vunpack.c.l.b16 %v526
  %v2318 = vunpack.c.l.b16 %v527
  %v2319 = vunpack.c.l.b16 %v528
  %v2320 = vunpack.c.l.b16 %v529
  %v2321 = vunpack.c.l.b16 %v530
  %v2322 = vunpack.c.l.b16 %v531
  %v2323 = vunpack.c.l.b16 %v532
  %v2324 = vunpack.c.l.b16 %v533
  %v2325 = vunpack.c.l.b16 %v534
  %v2326 = vunpack.c.l.b16 %v535
  %v2327 = vunpack.c.l.b16 %v536
  %v2328 = vunpack.c.l.b16 %v537
  %v2329 = vunpack.c.l.b16 %v538
  %v2330 = vunpack.c.l.b16 %v539
  %v2331 = vunpack.c.l.b16 %v540
  %v2332 = vunpack.c.l.b16 %v541
  %v2333 = vunpack.c.l.b16 %v542
  %v2334 = vunpack.c.l.b16 %v543
  %v2335 = vunpack.c.l.b16 %v544
  %v2336 = vunpack.c.l.b16 %v545
  %v2337 = vunpack.c.l.b16 %v546
  %v2338 = vunpack.c.l.b16 %v547
  %v2339 = vunpack.c.l.b16 %v548
  %v2340 = vunpack.c.l.b16 %v549
  %v2341 = vunpack.c.l.b16 %v550
  %v2342 = vunpack.c.l.b16 %v551
  %v2343 = vunpack.c.l.b16 %v552
  %v2344 = vunpack.c.l.b16 %v553
  %v2345 = vunpack.c.l.b16 %v554
  %v2346 = vunpack.c.l.b16 %v555
  %v2347 = vunpack.c.l.b16 %v556
  %v2348 = vunpack.c.l.b16 %v557
  %v2349 = vunpack.c.l.b16 %v558
  %v2350 = vunpack.c.l.b16 %v559
  %v2351 = vunpack.c.l.b16 %v560
  %v2352 = vunpack.c.l.b16 %v561
  %v2353 = vunpack.c.l.b16 %v562
  %v2354 = vunpack.c.l.b16 %v563
  %v2355 = vunpack.c.l.b16 %v564
  %v2356 = vunpack.c.l.b16 %v565
  %v2357 = vunpack.c.l.b16 %v566
  %v2358 = vunpack.c.l.b16 %v567
  %v2359 = vunpack.c.l.b16 %v568
  %v2360 = vunpack.c.l.b16 %v569
  %v2361 = vunpack.c.l.b16 %v570
  %v2362 = vunpack.c.l.b16 %v571
  %v2363 = vunpack.c.l.b16 %v572
  %v2364 = vunpack.c.l.b16 %v573
  %v2365 = vunpack.c.l.b16 %v574
  %v2366 = vunpack.c.l.b16 %v575
  %v2367 = vunpack.c.l.b16 %v576
  %v2368 = vunpack.c.l.b16 %v577
  %v2369 = vunpack.c.l.b16 %v578
  %v2370 = vunpack.c.l.b16 %v579
  %v2371 = vunpack.c.l.b16 %v580
  %v2372 = vunpack.c.l.b16 %v581
  %v2373 = vunpack.c.l.b16 %v582
  %v2374 = vunpack.c.l.b16 %v583
  %v2375 = vunpack.c.l.b16 %v584
  %v2376 = vunpack.c.l.b16 %v585
  %v2377 = vunpack.c.l.b16 %v586
  %v2378 = vunpack.c.l.b16 %v587
  %v2379 = vunpack.c.l.b16 %v588
  %v2380 = vunpack.c.l.b16 %v589
  %v2381 = vunpack.c.l.b16 %v590
  %v2382 = vunpack.c.l.b16 %v591
  %v2383 = vunpack.c.l.b16 %v592
  %v2384 = vunpack.c.l.b16 %v593
  %v2385 = vunpack.c.l.b16 %v594
  %v2386 = vunpack.c.l.b16 %v595
  %v2387 = vunpack.c.l.b16 %v596
  %v2388 = vunpack.c.l.b16 %v597
  %v2389 = vunpack.c.l.b16 %v598
  %v2390 = vunpack.c.l.b16 %v599
  %v2391 = vunpack.c.l.b16 %v600
  %v2392 = vunpack.c.l.b16 %v601
  %v2393 = vunpack.c.l.b16 %v602
  %v2394 = vunpack.c.l.b16 %v603
  %v2395 = vunpack.c.l.b16 %v604
  %v2396 = vunpack.c.l.b16 %v605
  %v2397 = vunpack.c.l.b16 %v606
  %v2398 = vunpack.c.l.b16 %v607
  %v2399 = vunpack.c.l.b16 %v608
  %v2400 = vunpack.c.l.b16 %v609
  %v2401 = vunpack.c.l.b16 %v610
  %v2402 = vunpack.c.l.b16 %v611
  %v2403 = vunpack.c.l.b16 %v612
  %v2404 = vunpack.c.l.b16 %v613
  %v2405 = vunpack.c.l.b16 %v614
  %v2406 = vpack.c.b16 %v2015, %v2014
  %v2407 = vpack.c.b16 %v2017, %v2016
  %v2408 = vpack.c.b16 %v2019, %v2018
  %v2409 = vpack.c.b16 %v2021, %v2020
  %v2410 = vpack.c.b16 %v2023, %v2022
  %v2411 = vpack.c.b16 %v2025, %v2024
  %v2412 = vpack.c.b16 %v2027, %v2026
  %v2413 = vpack.c.b16 %v2029, %v2028
  %v2414 = vpack.c.b16 %v2031, %v2030
  %v2415 = vpack.c.b16 %v2033, %v2032
  %v2416 = vpack.c.b16 %v2035, %v2034
  %v2417 = vpack.c.b16 %v2037, %v2036
  %v2418 = vpack.c.b16 %v2039, %v2038
  %v2419 = vpack.c.b16 %v2041, %v2040
  %v2420 = vpack.c.b16 %v2043, %v2042
  %v2421 = vpack.c.b16 %v2045, %v2044
  %v2422 = vpack.c.b16 %v2047, %v2046
  %v2423 = vpack.c.b16 %v2049, %v2048
  %v2424 = vpack.c.b16 %v2051, %v2050
  %v2425 = vpack.c.b16 %v2053, %v2052
  %v2426 = vpack.c.b16 %v2055, %v2054
  %v2427 = vpack.c.b16 %v2057, %v2056
  %v2428 = vpack.c.b16 %v2059, %v2058
  %v2429 = vpack.c.b16 %v2061, %v2060
  %v2430 = vpack.c.b16 %v2063, %v2062
  %v2431 = vpack.c.b16 %v2065, %v2064
  %v2432 = vpack.c.b16 %v2067, %v2066
  %v2433 = vpack.c.b16 %v2069, %v2068
  %v2434 = vpack.c.b16 %v2071, %v2070
  %v2435 = vpack.c.b16 %v2073, %v2072
  %v2436 = vpack.c.b16 %v2075, %v2074
  %v2437 = vpack.c.b16 %v2077, %v2076
  %v2438 = vpack.c.b16 %v2079, %v2078
  %v2439 = vpack.c.b16 %v2081, %v2080
  %v2440 = vpack.c.b16 %v2083, %v2082
  %v2441 = vpack.c.b16 %v2085, %v2084
  %v2442 = vpack.c.b16 %v2087, %v2086
  %v2443 = vpack.c.b16 %v2089, %v2088
  %v2444 = vpack.c.b16 %v2091, %v2090
  %v2445 = vpack.c.b16 %v2093, %v2092
  %v2446 = vpack.c.b16 %v2095, %v2094
  %v2447 = vpack.c.b16 %v2097, %v2096
  %v2448 = vpack.c.b16 %v2099, %v2098
  %v2449 = vpack.c.b16 %v2101, %v2100
  %v2450 = vpack.c.b16 %v2103, %v2102
  %v2451 = vpack.c.b16 %v2105, %v2104
  %v2452 = vpack.c.b16 %v2107, %v2106
  %v2453 = vpack.c.b16 %v2109, %v2108
  %v2454 = vpack.c.b16 %v2111, %v2110
  %v2455 = vpack.c.b16 %v2113, %v2112
  %v2456 = vpack.c.b16 %v2115, %v2114
  %v2457 = vpack.c.b16 %v2117, %v2116
  %v2458 = vpack.c.b16 %v2119, %v2118
  %v2459 = vpack.c.b16 %v2121, %v2120
  %v2460 = vpack.c.b16 %v2123, %v2122
  %v2461 = vpack.c.b16 %v2125, %v2124
  %v2462 = vpack.c.b16 %v2127, %v2126
  %v2463 = vpack.c.b16 %v2129, %v2128
  %v2464 = vpack.c.b16 %v2131, %v2130
  %v2465 = vpack.c.b16 %v2133, %v2132
  %v2466 = vpack.c.b16 %v2135, %v2134
  %v2467 = vpack.c.b16 %v2137, %v2136
  %v2468 = vpack.c.b16 %v2139, %v2138
  %v2469 = vpack.c.b16 %v2141, %v2140
  %v2470 = vpack.c.b16 %v2143, %v2142
  %v2471 = vpack.c.b16 %v2145, %v2144
  %v2472 = vpack.c.b16 %v2147, %v2146
  %v2473 = vpack.c.b16 %v2149, %v2148
  %v2474 = vpack.c.b16 %v2151, %v2150
  %v2475 = vpack.c.b16 %v2153, %v2152
  %v2476 = vpack.c.b16 %v2155, %v2154
  %v2477 = vpack.c.b16 %v2157, %v2156
  %v2478 = vpack.c.b16 %v2159, %v2158
  %v2479 = vpack.c.b16 %v2161, %v2160
  %v2480 = vpack.c.b16 %v2163, %v2162
  %v2481 = vpack.c.b16 %v2165, %v2164
  %v2482 = vpack.c.b16 %v2167, %v2166
  %v2483 = vpack.c.b16 %v2169, %v2168
  %v2484 = vpack.c.b16 %v2171, %v2170
  %v2485 = vpack.c.b16 %v2173, %v2172
  %v2486 = vpack.c.b16 %v2175, %v2174
  %v2487 = vpack.c.b16 %v2177, %v2176
  %v2488 = vpack.c.b16 %v2179, %v2178
  %v2489 = vpack.c.b16 %v2181, %v2180
  %v2490 = vpack.c.b16 %v2183, %v2182
  %v2491 = vpack.c.b16 %v2185, %v2184
  %v2492 = vpack.c.b16 %v2187, %v2186
  %v2493 = vpack.c.b16 %v2189, %v2188
  %v2494 = vpack.c.b16 %v2191, %v2190
  %v2495 = vpack.c.b16 %v2193, %v2192
  %v2496 = vpack.c.b16 %v2195, %v2194
  %v2497 = vpack.c.b16 %v2197, %v2196
  %v2498 = vpack.c.b16 %v2199, %v2198
  %v2499 = vpack.c.b16 %v2201, %v2200
  %v2500 = vpack.c.b16 %v2203, %v2202
  %v2501 = vpack.c.b16 %v2205, %v2204
  %v2502 = vpack.c.b16 %v2207, %v2206
  %v2503 = vpack.c.b16 %v2209, %v2208
  %v2504 = vpack.c.b16 %v2211, %v2210
  %v2505 = vpack.c.b16 %v2213, %v2212
  %v2506 = vpack.c.b16 %v2215, %v2214
  %v2507 = vpack.c.b16 %v2217, %v2216
  %v2508 = vpack.c.b16 %v2219, %v2218
  %v2509 = vpack.c.b16 %v2221, %v2220
  %v2510 = vpack.c.b16 %v2223, %v2222
  %v2511 = vpack.c.b16 %v2225, %v2224
  %v2512 = vpack.c.b16 %v2227, %v2226
  %v2513 = vpack.c.b16 %v2229, %v2228
  %v2514 = vpack.c.b16 %v2231, %v2230
  %v2515 = vpack.c.b16 %v2233, %v2232
  %v2516 = vpack.c.b16 %v2235, %v2234
  %v2517 = vpack.c.b16 %v2237, %v2236
  %v2518 = vpack.c.b16 %v2239, %v2238
  %v2519 = vpack.c.b16 %v2241, %v2240
  %v2520 = vpack.c.b16 %v2243, %v2242
  %v2521 = vpack.c.b16 %v2245, %v2244
  %v2522 = vpack.c.b16 %v2247, %v2246
  %v2523 = vpack.c.b16 %v2249, %v2248
  %v2524 = vpack.c.b16 %v2251, %v2250
  %v2525 = vpack.c.b16 %v2253, %v2252
  %v2526 = vpack.c.b16 %v2255, %v2254
  %v2527 = vpack.c.b16 %v2257, %v2256
  %v2528 = vpack.c.b16 %v2259, %v2258
  %v2529 = vpack.c.b16 %v2261, %v2260
  %v2530 = vpack.c.b16 %v2263, %v2262
  %v2531 = vpack.c.b16 %v2265, %v2264
  %v2532 = vpack.c.b16 %v2267, %v2266
  %v2533 = vpack.c.b16 %v2269, %v2268
  %v2534 = vpack.c.b16 %v2271, %v2270
  %v2535 = vpack.c.b16 %v2273, %v2272
  %v2536 = vpack.c.b16 %v2275, %v2274
  %v2537 = vpack.c.b16 %v2277, %v2276
  %v2538 = vpack.c.b16 %v2279, %v2278
  %v2539 = vpack.c.b16 %v2281, %v2280
  %v2540 = vpack.c.b16 %v2283, %v2282
  %v2541 = vpack.c.b16 %v2285, %v2284
  %v2542 = vpack.c.b16 %v2287, %v2286
  %v2543 = vpack.c.b16 %v2289, %v2288
  %v2544 = vpack.c.b16 %v2291, %v2290
  %v2545 = vpack.c.b16 %v2293, %v2292
  %v2546 = vpack.c.b16 %v2295, %v2294
  %v2547 = vpack.c.b16 %v2297, %v2296
  %v2548 = vpack.c.b16 %v2299, %v2298
  %v2549 = vpack.c.b16 %v2301, %v2300
  %v2550 = vpack.c.b16 %v2303, %v2302
  %v2551 = vpack.c.b16 %v2305, %v2304
  %v2552 = vpack.c.b16 %v2307, %v2306
  %v2553 = vpack.c.b16 %v2309, %v2308
  %v2554 = vpack.c.b16 %v2311, %v2310
  %v2555 = vpack.c.b16 %v2313, %v2312
  %v2556 = vpack.c.b16 %v2315, %v2314
  %v2557 = vpack.c.b16 %v2317, %v2316
  %v2558 = vpack.c.b16 %v2319, %v2318
  %v2559 = vpack.c.b16 %v2321, %v2320
  %v2560 = vpack.c.b16 %v2323, %v2322
  %v2561 = vpack.c.b16 %v2325, %v2324
  %v2562 = vpack.c.b16 %v2327, %v2326
  %v2563 = vpack.c.b16 %v2329, %v2328
  %v2564 = vpack.c.b16 %v2331, %v2330
  %v2565 = vpack.c.b16 %v2333, %v2332
  %v2566 = vpack.c.b16 %v2335, %v2334
  %v2567 = vpack.c.b16 %v2337, %v2336
  %v2568 = vpack.c.b16 %v2339, %v2338
  %v2569 = vpack.c.b16 %v2341, %v2340
  %v2570 = vpack.c.b16 %v2343, %v2342
  %v2571 = vpack.c.b16 %v2345, %v2344
  %v2572 = vpack.c.b16 %v2347, %v2346
  %v2573 = vpack.c.b16 %v2349, %v2348
  %v2574 = vpack.c.b16 %v2351, %v2350
  %v2575 = vpack.c.b16 %v2353, %v2352
  %v2576 = vpack.c.b16 %v2355, %v2354
  %v2577 = vpack.c.b16 %v2357, %v2356
  %v2578 = vpack.c.b16 %v2359, %v2358
  %v2579 = vpack.c.b16 %v2361, %v2360
  %v2580 = vpack.c.b16 %v2363, %v2362
  %v2581 = vpack.c.b16 %v2365, %v2364
  %v2582 = vpack.c.b16 %v2367, %v2366
  %v2583 = vpack.c.b16 %v2369, %v2368
  %v2584 = vpack.c.b16 %v2371, %v2370
  %v2585 = vpack.c.b16 %v2373, %v2372
  %v2586 = vpack.c.b16 %v2375, %v2374
  %v2587 = vpack.c.b16 %v2377, %v2376
  %v2588 = vpack.c.b16 %v2379, %v2378
  %v2589 = vpack.c.b16 %v2381, %v2380
  %v2590 = vpack.c.b16 %v2383, %v2382
  %v2591 = vpack.c.b16 %v2385, %v2384
  %v2592 = vpack.c.b16 %v2387, %v2386
  %v2593 = vpack.c.b16 %v2389, %v2388
  %v2594 = vpack.c.b16 %v2391, %v2390
  %v2595 = vpack.c.b16 %v2393, %v2392
  %v2596 = vpack.c.b16 %v2395, %v2394
  %v2597 = vpack.c.b16 %v2397, %v2396
  %v2598 = vpack.c.b16 %v2399, %v2398
  %v2599 = vpack.c.b16 %v2401, %v2400
  %v2600 = vpack.c.b16 %v2403, %v2402
  %v2601 = vpack.c.b16 %v2405, %v2404
  %vm2798 = vcmask 523264
  %v2800 = vsel %vm2798, %v1254, 0
  %v2803 = vsel %vm2798, %v1279, 0
  %v2806 = vsel %vm2798, %v1304, 0
  %v2809 = vsel %vm2798, %v1329, 0
  %v2812 = vsel %vm2798, %v1354, 0
  %v2815 = vsel %vm2798, %v1379, 0
  %v2818 = vsel %vm2798, %v1404, 0
  %v2821 = vsel %vm2798, %v1429, 0
  %2823 = vmatprep.subr.bf16.mxu0 0
  %2824 = vmatpush1.bf16.msra.mxu0 %v2413
  %2825 = vmatprep.subr.bf16.mxu0 0
  %2826 = vmatpush1.bf16.msra.mxu0 %v2412
  %2827 = vmatprep.subr.bf16.mxu0 0
  %2828 = vmatpush1.bf16.msra.mxu0 %v2411
  %2829 = vmatprep.subr.bf16.mxu0 0
  %2830 = vmatpush1.bf16.msra.mxu0 %v2410
  %2831 = vmatprep.subr.bf16.mxu0 0
  %2832 = vmatpush1.bf16.msra.mxu0 %v2409
  %2833 = vmatprep.subr.bf16.mxu0 0
  %2834 = vmatpush1.bf16.msra.mxu0 %v2408
  %2835 = vmatprep.subr.bf16.mxu0 0
  %2836 = vmatpush1.bf16.msra.mxu0 %v2407
  %2837 = vmatprep.subr.bf16.mxu0 0
  %2838 = vmatpush1.bf16.msra.mxu0 %v2406
  %2839 = vmatprep.subr.bf16.mxu0 0
  %2840 = vmatpush2.bf16.msra.mxu0 %v2421
  %2841 = vmatprep.subr.bf16.mxu0 0
  %2842 = vmatpush2.bf16.msra.mxu0 %v2420
  %2843 = vmatprep.subr.bf16.mxu0 0
  %2844 = vmatpush2.bf16.msra.mxu0 %v2419
  %2845 = vmatprep.subr.bf16.mxu0 0
  %2846 = vmatpush2.bf16.msra.mxu0 %v2418
  %2847 = vmatprep.subr.bf16.mxu0 0
  %2848 = vmatpush2.bf16.msra.mxu0 %v2417
  %2849 = vmatprep.subr.bf16.mxu0 0
  %2850 = vmatpush2.bf16.msra.mxu0 %v2416
  %2851 = vmatprep.subr.bf16.mxu0 0
  %2852 = vmatpush2.bf16.msra.mxu0 %v2415
  %2853 = vmatprep.subr.bf16.mxu0 0
  %2854 = vmatpush2.bf16.msra.mxu0 %v2414
  %2855 = vmatprep.mubr.bf16.mxu0 %v1231
  %2856 = vmatmul.mubr.bf16.gmra.mxu0 %v1230
  %v2857 = vpop.f32.mrf.mxu0
  %v2858 = vadd.f32 %v620, %v2857
  %v2859 = vpop.f32.mrf.mxu0
  %v2860 = vpop.f32.mrf.mxu0
  %v2861 = vadd.f32 %v620, %v2860
  %v2862 = vpop.f32.mrf.mxu0
  %2863 = vmatprep.mubr.bf16.mxu0 %v1256
  %2864 = vmatmul.mubr.bf16.gmra.mxu0 %v1255
  %v2865 = vpop.f32.mrf.mxu0
  %v2866 = vadd.f32 %v620, %v2865
  %v2867 = vpop.f32.mrf.mxu0
  %v2868 = vpop.f32.mrf.mxu0
  %v2869 = vadd.f32 %v620, %v2868
  %v2870 = vpop.f32.mrf.mxu0
  %2871 = vmatprep.mubr.bf16.mxu0 %v1281
  %2872 = vmatmul.mubr.bf16.gmra.mxu0 %v1280
  %v2873 = vpop.f32.mrf.mxu0
  %v2874 = vadd.f32 %v620, %v2873
  %v2875 = vpop.f32.mrf.mxu0
  %v2876 = vpop.f32.mrf.mxu0
  %v2877 = vadd.f32 %v620, %v2876
  %v2878 = vpop.f32.mrf.mxu0
  %2879 = vmatprep.mubr.bf16.mxu0 %v1306
  %2880 = vmatmul.mubr.bf16.gmra.mxu0 %v1305
  %v2881 = vpop.f32.mrf.mxu0
  %v2882 = vadd.f32 %v620, %v2881
  %v2883 = vpop.f32.mrf.mxu0
  %v2884 = vpop.f32.mrf.mxu0
  %v2885 = vadd.f32 %v620, %v2884
  %v2886 = vpop.f32.mrf.mxu0
  %2887 = vmatprep.mubr.bf16.mxu0 %v1331
  %2888 = vmatmul.mubr.bf16.gmra.mxu0 %v1330
  %v2889 = vpop.f32.mrf.mxu0
  %v2890 = vadd.f32 %v620, %v2889
  %v2891 = vpop.f32.mrf.mxu0
  %v2892 = vpop.f32.mrf.mxu0
  %v2893 = vadd.f32 %v620, %v2892
  %v2894 = vpop.f32.mrf.mxu0
  %2895 = vmatprep.mubr.bf16.mxu0 %v1356
  %2896 = vmatmul.mubr.bf16.gmra.mxu0 %v1355
  %v2897 = vpop.f32.mrf.mxu0
  %v2898 = vadd.f32 %v620, %v2897
  %v2899 = vpop.f32.mrf.mxu0
  %v2900 = vpop.f32.mrf.mxu0
  %v2901 = vadd.f32 %v620, %v2900
  %v2902 = vpop.f32.mrf.mxu0
  %2903 = vmatprep.mubr.bf16.mxu0 %v1381
  %2904 = vmatmul.mubr.bf16.gmra.mxu0 %v1380
  %v2905 = vpop.f32.mrf.mxu0
  %v2906 = vadd.f32 %v620, %v2905
  %v2907 = vpop.f32.mrf.mxu0
  %v2908 = vpop.f32.mrf.mxu0
  %v2909 = vadd.f32 %v620, %v2908
  %v2910 = vpop.f32.mrf.mxu0
  %2911 = vmatprep.mubr.bf16.mxu0 %v1406
  %2912 = vmatmul.mubr.bf16.gmra.mxu0 %v1405
  %v2913 = vpop.f32.mrf.mxu0
  %v2914 = vadd.f32 %v620, %v2913
  %v2915 = vpop.f32.mrf.mxu0
  %v2916 = vpop.f32.mrf.mxu0
  %v2917 = vadd.f32 %v620, %v2916
  %v2918 = vpop.f32.mrf.mxu0
  %2919 = vdwg.mxu0
  %2920 = vmatprep.subr.bf16.mxu0 0
  %2921 = vmatpush1.bf16.msra.mxu0 %v2429
  %2922 = vmatprep.subr.bf16.mxu0 0
  %2923 = vmatpush1.bf16.msra.mxu0 %v2428
  %2924 = vmatprep.subr.bf16.mxu0 0
  %2925 = vmatpush1.bf16.msra.mxu0 %v2427
  %2926 = vmatprep.subr.bf16.mxu0 0
  %2927 = vmatpush1.bf16.msra.mxu0 %v2426
  %2928 = vmatprep.subr.bf16.mxu0 0
  %2929 = vmatpush1.bf16.msra.mxu0 %v2425
  %2930 = vmatprep.subr.bf16.mxu0 0
  %2931 = vmatpush1.bf16.msra.mxu0 %v2424
  %2932 = vmatprep.subr.bf16.mxu0 0
  %2933 = vmatpush1.bf16.msra.mxu0 %v2423
  %2934 = vmatprep.subr.bf16.mxu0 0
  %2935 = vmatpush1.bf16.msra.mxu0 %v2422
  %2936 = vmatprep.subr.bf16.mxu0 0
  %2937 = vmatpush2.bf16.msra.mxu0 %v2437
  %2938 = vmatprep.subr.bf16.mxu0 0
  %2939 = vmatpush2.bf16.msra.mxu0 %v2436
  %2940 = vmatprep.subr.bf16.mxu0 0
  %2941 = vmatpush2.bf16.msra.mxu0 %v2435
  %2942 = vmatprep.subr.bf16.mxu0 0
  %2943 = vmatpush2.bf16.msra.mxu0 %v2434
  %2944 = vmatprep.subr.bf16.mxu0 0
  %2945 = vmatpush2.bf16.msra.mxu0 %v2433
  %2946 = vmatprep.subr.bf16.mxu0 0
  %2947 = vmatpush2.bf16.msra.mxu0 %v2432
  %2948 = vmatprep.subr.bf16.mxu0 0
  %2949 = vmatpush2.bf16.msra.mxu0 %v2431
  %2950 = vmatprep.subr.bf16.mxu0 0
  %2951 = vmatpush2.bf16.msra.mxu0 %v2430
  %2952 = vmatprep.mubr.bf16.mxu0 %v1233
  %2953 = vmatmul.mubr.bf16.gmra.mxu0 %v1232
  %v2954 = vpop.f32.mrf.mxu0
  %v2955 = vadd.f32 %v2858, %v2954
  %v2956 = vpop.f32.mrf.mxu0
  %v2957 = vpop.f32.mrf.mxu0
  %v2958 = vadd.f32 %v2861, %v2957
  %v2959 = vpop.f32.mrf.mxu0
  %2960 = vmatprep.mubr.bf16.mxu0 %v1258
  %2961 = vmatmul.mubr.bf16.gmra.mxu0 %v1257
  %v2962 = vpop.f32.mrf.mxu0
  %v2963 = vadd.f32 %v2866, %v2962
  %v2964 = vpop.f32.mrf.mxu0
  %v2965 = vpop.f32.mrf.mxu0
  %v2966 = vadd.f32 %v2869, %v2965
  %v2967 = vpop.f32.mrf.mxu0
  %2968 = vmatprep.mubr.bf16.mxu0 %v1283
  %2969 = vmatmul.mubr.bf16.gmra.mxu0 %v1282
  %v2970 = vpop.f32.mrf.mxu0
  %v2971 = vadd.f32 %v2874, %v2970
  %v2972 = vpop.f32.mrf.mxu0
  %v2973 = vpop.f32.mrf.mxu0
  %v2974 = vadd.f32 %v2877, %v2973
  %v2975 = vpop.f32.mrf.mxu0
  %2976 = vmatprep.mubr.bf16.mxu0 %v1308
  %2977 = vmatmul.mubr.bf16.gmra.mxu0 %v1307
  %v2978 = vpop.f32.mrf.mxu0
  %v2979 = vadd.f32 %v2882, %v2978
  %v2980 = vpop.f32.mrf.mxu0
  %v2981 = vpop.f32.mrf.mxu0
  %v2982 = vadd.f32 %v2885, %v2981
  %v2983 = vpop.f32.mrf.mxu0
  %2984 = vmatprep.mubr.bf16.mxu0 %v1333
  %2985 = vmatmul.mubr.bf16.gmra.mxu0 %v1332
  %v2986 = vpop.f32.mrf.mxu0
  %v2987 = vadd.f32 %v2890, %v2986
  %v2988 = vpop.f32.mrf.mxu0
  %v2989 = vpop.f32.mrf.mxu0
  %v2990 = vadd.f32 %v2893, %v2989
  %v2991 = vpop.f32.mrf.mxu0
  %2992 = vmatprep.mubr.bf16.mxu0 %v1358
  %2993 = vmatmul.mubr.bf16.gmra.mxu0 %v1357
  %v2994 = vpop.f32.mrf.mxu0
  %v2995 = vadd.f32 %v2898, %v2994
  %v2996 = vpop.f32.mrf.mxu0
  %v2997 = vpop.f32.mrf.mxu0
  %v2998 = vadd.f32 %v2901, %v2997
  %v2999 = vpop.f32.mrf.mxu0
  %3000 = vmatprep.mubr.bf16.mxu0 %v1383
  %3001 = vmatmul.mubr.bf16.gmra.mxu0 %v1382
  %v3002 = vpop.f32.mrf.mxu0
  %v3003 = vadd.f32 %v2906, %v3002
  %v3004 = vpop.f32.mrf.mxu0
  %v3005 = vpop.f32.mrf.mxu0
  %v3006 = vadd.f32 %v2909, %v3005
  %v3007 = vpop.f32.mrf.mxu0
  %3008 = vmatprep.mubr.bf16.mxu0 %v1408
  %3009 = vmatmul.mubr.bf16.gmra.mxu0 %v1407
  %v3010 = vpop.f32.mrf.mxu0
  %v3011 = vadd.f32 %v2914, %v3010
  %v3012 = vpop.f32.mrf.mxu0
  %v3013 = vpop.f32.mrf.mxu0
  %v3014 = vadd.f32 %v2917, %v3013
  %v3015 = vpop.f32.mrf.mxu0
  %3016 = vdwg.mxu0
  %3017 = vmatprep.subr.bf16.mxu0 0
  %3018 = vmatpush1.bf16.msra.mxu0 %v2445
  %3019 = vmatprep.subr.bf16.mxu0 0
  %3020 = vmatpush1.bf16.msra.mxu0 %v2444
  %3021 = vmatprep.subr.bf16.mxu0 0
  %3022 = vmatpush1.bf16.msra.mxu0 %v2443
  %3023 = vmatprep.subr.bf16.mxu0 0
  %3024 = vmatpush1.bf16.msra.mxu0 %v2442
  %3025 = vmatprep.subr.bf16.mxu0 0
  %3026 = vmatpush1.bf16.msra.mxu0 %v2441
  %3027 = vmatprep.subr.bf16.mxu0 0
  %3028 = vmatpush1.bf16.msra.mxu0 %v2440
  %3029 = vmatprep.subr.bf16.mxu0 0
  %3030 = vmatpush1.bf16.msra.mxu0 %v2439
  %3031 = vmatprep.subr.bf16.mxu0 0
  %3032 = vmatpush1.bf16.msra.mxu0 %v2438
  %3033 = vmatprep.subr.bf16.mxu0 0
  %3034 = vmatpush2.bf16.msra.mxu0 %v2453
  %3035 = vmatprep.subr.bf16.mxu0 0
  %3036 = vmatpush2.bf16.msra.mxu0 %v2452
  %3037 = vmatprep.subr.bf16.mxu0 0
  %3038 = vmatpush2.bf16.msra.mxu0 %v2451
  %3039 = vmatprep.subr.bf16.mxu0 0
  %3040 = vmatpush2.bf16.msra.mxu0 %v2450
  %3041 = vmatprep.subr.bf16.mxu0 0
  %3042 = vmatpush2.bf16.msra.mxu0 %v2449
  %3043 = vmatprep.subr.bf16.mxu0 0
  %3044 = vmatpush2.bf16.msra.mxu0 %v2448
  %3045 = vmatprep.subr.bf16.mxu0 0
  %3046 = vmatpush2.bf16.msra.mxu0 %v2447
  %3047 = vmatprep.subr.bf16.mxu0 0
  %3048 = vmatpush2.bf16.msra.mxu0 %v2446
  %3049 = vmatprep.mubr.bf16.mxu0 %v1235
  %3050 = vmatmul.mubr.bf16.gmra.mxu0 %v1234
  %v3051 = vpop.f32.mrf.mxu0
  %v3052 = vadd.f32 %v2955, %v3051
  %v3053 = vpop.f32.mrf.mxu0
  %v3054 = vpop.f32.mrf.mxu0
  %v3055 = vadd.f32 %v2958, %v3054
  %v3056 = vpop.f32.mrf.mxu0
  %3057 = vmatprep.mubr.bf16.mxu0 %v1260
  %3058 = vmatmul.mubr.bf16.gmra.mxu0 %v1259
  %v3059 = vpop.f32.mrf.mxu0
  %v3060 = vadd.f32 %v2963, %v3059
  %v3061 = vpop.f32.mrf.mxu0
  %v3062 = vpop.f32.mrf.mxu0
  %v3063 = vadd.f32 %v2966, %v3062
  %v3064 = vpop.f32.mrf.mxu0
  %3065 = vmatprep.mubr.bf16.mxu0 %v1285
  %3066 = vmatmul.mubr.bf16.gmra.mxu0 %v1284
  %v3067 = vpop.f32.mrf.mxu0
  %v3068 = vadd.f32 %v2971, %v3067
  %v3069 = vpop.f32.mrf.mxu0
  %v3070 = vpop.f32.mrf.mxu0
  %v3071 = vadd.f32 %v2974, %v3070
  %v3072 = vpop.f32.mrf.mxu0
  %3073 = vmatprep.mubr.bf16.mxu0 %v1310
  %3074 = vmatmul.mubr.bf16.gmra.mxu0 %v1309
  %v3075 = vpop.f32.mrf.mxu0
  %v3076 = vadd.f32 %v2979, %v3075
  %v3077 = vpop.f32.mrf.mxu0
  %v3078 = vpop.f32.mrf.mxu0
  %v3079 = vadd.f32 %v2982, %v3078
  %v3080 = vpop.f32.mrf.mxu0
  %3081 = vmatprep.mubr.bf16.mxu0 %v1335
  %3082 = vmatmul.mubr.bf16.gmra.mxu0 %v1334
  %v3083 = vpop.f32.mrf.mxu0
  %v3084 = vadd.f32 %v2987, %v3083
  %v3085 = vpop.f32.mrf.mxu0
  %v3086 = vpop.f32.mrf.mxu0
  %v3087 = vadd.f32 %v2990, %v3086
  %v3088 = vpop.f32.mrf.mxu0
  %3089 = vmatprep.mubr.bf16.mxu0 %v1360
  %3090 = vmatmul.mubr.bf16.gmra.mxu0 %v1359
  %v3091 = vpop.f32.mrf.mxu0
  %v3092 = vadd.f32 %v2995, %v3091
  %v3093 = vpop.f32.mrf.mxu0
  %v3094 = vpop.f32.mrf.mxu0
  %v3095 = vadd.f32 %v2998, %v3094
  %v3096 = vpop.f32.mrf.mxu0
  %3097 = vmatprep.mubr.bf16.mxu0 %v1385
  %3098 = vmatmul.mubr.bf16.gmra.mxu0 %v1384
  %v3099 = vpop.f32.mrf.mxu0
  %v3100 = vadd.f32 %v3003, %v3099
  %v3101 = vpop.f32.mrf.mxu0
  %v3102 = vpop.f32.mrf.mxu0
  %v3103 = vadd.f32 %v3006, %v3102
  %v3104 = vpop.f32.mrf.mxu0
  %3105 = vmatprep.mubr.bf16.mxu0 %v1410
  %3106 = vmatmul.mubr.bf16.gmra.mxu0 %v1409
  %v3107 = vpop.f32.mrf.mxu0
  %v3108 = vadd.f32 %v3011, %v3107
  %v3109 = vpop.f32.mrf.mxu0
  %v3110 = vpop.f32.mrf.mxu0
  %v3111 = vadd.f32 %v3014, %v3110
  %v3112 = vpop.f32.mrf.mxu0
  %3113 = vdwg.mxu0
  %3114 = vmatprep.subr.bf16.mxu0 0
  %3115 = vmatpush1.bf16.msra.mxu0 %v2461
  %3116 = vmatprep.subr.bf16.mxu0 0
  %3117 = vmatpush1.bf16.msra.mxu0 %v2460
  %3118 = vmatprep.subr.bf16.mxu0 0
  %3119 = vmatpush1.bf16.msra.mxu0 %v2459
  %3120 = vmatprep.subr.bf16.mxu0 0
  %3121 = vmatpush1.bf16.msra.mxu0 %v2458
  %3122 = vmatprep.subr.bf16.mxu0 0
  %3123 = vmatpush1.bf16.msra.mxu0 %v2457
  %3124 = vmatprep.subr.bf16.mxu0 0
  %3125 = vmatpush1.bf16.msra.mxu0 %v2456
  %3126 = vmatprep.subr.bf16.mxu0 0
  %3127 = vmatpush1.bf16.msra.mxu0 %v2455
  %3128 = vmatprep.subr.bf16.mxu0 0
  %3129 = vmatpush1.bf16.msra.mxu0 %v2454
  %3130 = vmatprep.subr.bf16.mxu0 0
  %3131 = vmatpush2.bf16.msra.mxu0 %v2469
  %3132 = vmatprep.subr.bf16.mxu0 0
  %3133 = vmatpush2.bf16.msra.mxu0 %v2468
  %3134 = vmatprep.subr.bf16.mxu0 0
  %3135 = vmatpush2.bf16.msra.mxu0 %v2467
  %3136 = vmatprep.subr.bf16.mxu0 0
  %3137 = vmatpush2.bf16.msra.mxu0 %v2466
  %3138 = vmatprep.subr.bf16.mxu0 0
  %3139 = vmatpush2.bf16.msra.mxu0 %v2465
  %3140 = vmatprep.subr.bf16.mxu0 0
  %3141 = vmatpush2.bf16.msra.mxu0 %v2464
  %3142 = vmatprep.subr.bf16.mxu0 0
  %3143 = vmatpush2.bf16.msra.mxu0 %v2463
  %3144 = vmatprep.subr.bf16.mxu0 0
  %3145 = vmatpush2.bf16.msra.mxu0 %v2462
  %3146 = vmatprep.mubr.bf16.mxu0 %v1237
  %3147 = vmatmul.mubr.bf16.gmra.mxu0 %v1236
  %v3148 = vpop.f32.mrf.mxu0
  %v3149 = vadd.f32 %v3052, %v3148
  %v3150 = vpop.f32.mrf.mxu0
  %v3151 = vpop.f32.mrf.mxu0
  %v3152 = vadd.f32 %v3055, %v3151
  %v3153 = vpop.f32.mrf.mxu0
  %3154 = vmatprep.mubr.bf16.mxu0 %v1262
  %3155 = vmatmul.mubr.bf16.gmra.mxu0 %v1261
  %v3156 = vpop.f32.mrf.mxu0
  %v3157 = vadd.f32 %v3060, %v3156
  %v3158 = vpop.f32.mrf.mxu0
  %v3159 = vpop.f32.mrf.mxu0
  %v3160 = vadd.f32 %v3063, %v3159
  %v3161 = vpop.f32.mrf.mxu0
  %3162 = vmatprep.mubr.bf16.mxu0 %v1287
  %3163 = vmatmul.mubr.bf16.gmra.mxu0 %v1286
  %v3164 = vpop.f32.mrf.mxu0
  %v3165 = vadd.f32 %v3068, %v3164
  %v3166 = vpop.f32.mrf.mxu0
  %v3167 = vpop.f32.mrf.mxu0
  %v3168 = vadd.f32 %v3071, %v3167
  %v3169 = vpop.f32.mrf.mxu0
  %3170 = vmatprep.mubr.bf16.mxu0 %v1312
  %3171 = vmatmul.mubr.bf16.gmra.mxu0 %v1311
  %v3172 = vpop.f32.mrf.mxu0
  %v3173 = vadd.f32 %v3076, %v3172
  %v3174 = vpop.f32.mrf.mxu0
  %v3175 = vpop.f32.mrf.mxu0
  %v3176 = vadd.f32 %v3079, %v3175
  %v3177 = vpop.f32.mrf.mxu0
  %3178 = vmatprep.mubr.bf16.mxu0 %v1337
  %3179 = vmatmul.mubr.bf16.gmra.mxu0 %v1336
  %v3180 = vpop.f32.mrf.mxu0
  %v3181 = vadd.f32 %v3084, %v3180
  %v3182 = vpop.f32.mrf.mxu0
  %v3183 = vpop.f32.mrf.mxu0
  %v3184 = vadd.f32 %v3087, %v3183
  %v3185 = vpop.f32.mrf.mxu0
  %3186 = vmatprep.mubr.bf16.mxu0 %v1362
  %3187 = vmatmul.mubr.bf16.gmra.mxu0 %v1361
  %v3188 = vpop.f32.mrf.mxu0
  %v3189 = vadd.f32 %v3092, %v3188
  %v3190 = vpop.f32.mrf.mxu0
  %v3191 = vpop.f32.mrf.mxu0
  %v3192 = vadd.f32 %v3095, %v3191
  %v3193 = vpop.f32.mrf.mxu0
  %3194 = vmatprep.mubr.bf16.mxu0 %v1387
  %3195 = vmatmul.mubr.bf16.gmra.mxu0 %v1386
  %v3196 = vpop.f32.mrf.mxu0
  %v3197 = vadd.f32 %v3100, %v3196
  %v3198 = vpop.f32.mrf.mxu0
  %v3199 = vpop.f32.mrf.mxu0
  %v3200 = vadd.f32 %v3103, %v3199
  %v3201 = vpop.f32.mrf.mxu0
  %3202 = vmatprep.mubr.bf16.mxu0 %v1412
  %3203 = vmatmul.mubr.bf16.gmra.mxu0 %v1411
  %v3204 = vpop.f32.mrf.mxu0
  %v3205 = vadd.f32 %v3108, %v3204
  %v3206 = vpop.f32.mrf.mxu0
  %v3207 = vpop.f32.mrf.mxu0
  %v3208 = vadd.f32 %v3111, %v3207
  %v3209 = vpop.f32.mrf.mxu0
  %3210 = vdwg.mxu0
  %3211 = vmatprep.subr.bf16.mxu0 0
  %3212 = vmatpush1.bf16.msra.mxu0 %v2477
  %3213 = vmatprep.subr.bf16.mxu0 0
  %3214 = vmatpush1.bf16.msra.mxu0 %v2476
  %3215 = vmatprep.subr.bf16.mxu0 0
  %3216 = vmatpush1.bf16.msra.mxu0 %v2475
  %3217 = vmatprep.subr.bf16.mxu0 0
  %3218 = vmatpush1.bf16.msra.mxu0 %v2474
  %3219 = vmatprep.subr.bf16.mxu0 0
  %3220 = vmatpush1.bf16.msra.mxu0 %v2473
  %3221 = vmatprep.subr.bf16.mxu0 0
  %3222 = vmatpush1.bf16.msra.mxu0 %v2472
  %3223 = vmatprep.subr.bf16.mxu0 0
  %3224 = vmatpush1.bf16.msra.mxu0 %v2471
  %3225 = vmatprep.subr.bf16.mxu0 0
  %3226 = vmatpush1.bf16.msra.mxu0 %v2470
  %3227 = vmatprep.subr.bf16.mxu0 0
  %3228 = vmatpush2.bf16.msra.mxu0 %v2485
  %3229 = vmatprep.subr.bf16.mxu0 0
  %3230 = vmatpush2.bf16.msra.mxu0 %v2484
  %3231 = vmatprep.subr.bf16.mxu0 0
  %3232 = vmatpush2.bf16.msra.mxu0 %v2483
  %3233 = vmatprep.subr.bf16.mxu0 0
  %3234 = vmatpush2.bf16.msra.mxu0 %v2482
  %3235 = vmatprep.subr.bf16.mxu0 0
  %3236 = vmatpush2.bf16.msra.mxu0 %v2481
  %3237 = vmatprep.subr.bf16.mxu0 0
  %3238 = vmatpush2.bf16.msra.mxu0 %v2480
  %3239 = vmatprep.subr.bf16.mxu0 0
  %3240 = vmatpush2.bf16.msra.mxu0 %v2479
  %3241 = vmatprep.subr.bf16.mxu0 0
  %3242 = vmatpush2.bf16.msra.mxu0 %v2478
  %3243 = vmatprep.mubr.bf16.mxu0 %v1239
  %3244 = vmatmul.mubr.bf16.gmra.mxu0 %v1238
  %v3245 = vpop.f32.mrf.mxu0
  %v3246 = vadd.f32 %v3149, %v3245
  %v3247 = vpop.f32.mrf.mxu0
  %v3248 = vpop.f32.mrf.mxu0
  %v3249 = vadd.f32 %v3152, %v3248
  %v3250 = vpop.f32.mrf.mxu0
  %3251 = vmatprep.mubr.bf16.mxu0 %v1264
  %3252 = vmatmul.mubr.bf16.gmra.mxu0 %v1263
  %v3253 = vpop.f32.mrf.mxu0
  %v3254 = vadd.f32 %v3157, %v3253
  %v3255 = vpop.f32.mrf.mxu0
  %v3256 = vpop.f32.mrf.mxu0
  %v3257 = vadd.f32 %v3160, %v3256
  %v3258 = vpop.f32.mrf.mxu0
  %3259 = vmatprep.mubr.bf16.mxu0 %v1289
  %3260 = vmatmul.mubr.bf16.gmra.mxu0 %v1288
  %v3261 = vpop.f32.mrf.mxu0
  %v3262 = vadd.f32 %v3165, %v3261
  %v3263 = vpop.f32.mrf.mxu0
  %v3264 = vpop.f32.mrf.mxu0
  %v3265 = vadd.f32 %v3168, %v3264
  %v3266 = vpop.f32.mrf.mxu0
  %3267 = vmatprep.mubr.bf16.mxu0 %v1314
  %3268 = vmatmul.mubr.bf16.gmra.mxu0 %v1313
  %v3269 = vpop.f32.mrf.mxu0
  %v3270 = vadd.f32 %v3173, %v3269
  %v3271 = vpop.f32.mrf.mxu0
  %v3272 = vpop.f32.mrf.mxu0
  %v3273 = vadd.f32 %v3176, %v3272
  %v3274 = vpop.f32.mrf.mxu0
  %3275 = vmatprep.mubr.bf16.mxu0 %v1339
  %3276 = vmatmul.mubr.bf16.gmra.mxu0 %v1338
  %v3277 = vpop.f32.mrf.mxu0
  %v3278 = vadd.f32 %v3181, %v3277
  %v3279 = vpop.f32.mrf.mxu0
  %v3280 = vpop.f32.mrf.mxu0
  %v3281 = vadd.f32 %v3184, %v3280
  %v3282 = vpop.f32.mrf.mxu0
  %3283 = vmatprep.mubr.bf16.mxu0 %v1364
  %3284 = vmatmul.mubr.bf16.gmra.mxu0 %v1363
  %v3285 = vpop.f32.mrf.mxu0
  %v3286 = vadd.f32 %v3189, %v3285
  %v3287 = vpop.f32.mrf.mxu0
  %v3288 = vpop.f32.mrf.mxu0
  %v3289 = vadd.f32 %v3192, %v3288
  %v3290 = vpop.f32.mrf.mxu0
  %3291 = vmatprep.mubr.bf16.mxu0 %v1389
  %3292 = vmatmul.mubr.bf16.gmra.mxu0 %v1388
  %v3293 = vpop.f32.mrf.mxu0
  %v3294 = vadd.f32 %v3197, %v3293
  %v3295 = vpop.f32.mrf.mxu0
  %v3296 = vpop.f32.mrf.mxu0
  %v3297 = vadd.f32 %v3200, %v3296
  %v3298 = vpop.f32.mrf.mxu0
  %3299 = vmatprep.mubr.bf16.mxu0 %v1414
  %3300 = vmatmul.mubr.bf16.gmra.mxu0 %v1413
  %v3301 = vpop.f32.mrf.mxu0
  %v3302 = vadd.f32 %v3205, %v3301
  %v3303 = vpop.f32.mrf.mxu0
  %v3304 = vpop.f32.mrf.mxu0
  %v3305 = vadd.f32 %v3208, %v3304
  %v3306 = vpop.f32.mrf.mxu0
  %3307 = vdwg.mxu0
  %3308 = vmatprep.subr.bf16.mxu0 0
  %3309 = vmatpush1.bf16.msra.mxu0 %v2493
  %3310 = vmatprep.subr.bf16.mxu0 0
  %3311 = vmatpush1.bf16.msra.mxu0 %v2492
  %3312 = vmatprep.subr.bf16.mxu0 0
  %3313 = vmatpush1.bf16.msra.mxu0 %v2491
  %3314 = vmatprep.subr.bf16.mxu0 0
  %3315 = vmatpush1.bf16.msra.mxu0 %v2490
  %3316 = vmatprep.subr.bf16.mxu0 0
  %3317 = vmatpush1.bf16.msra.mxu0 %v2489
  %3318 = vmatprep.subr.bf16.mxu0 0
  %3319 = vmatpush1.bf16.msra.mxu0 %v2488
  %3320 = vmatprep.subr.bf16.mxu0 0
  %3321 = vmatpush1.bf16.msra.mxu0 %v2487
  %3322 = vmatprep.subr.bf16.mxu0 0
  %3323 = vmatpush1.bf16.msra.mxu0 %v2486
  %3324 = vmatprep.subr.bf16.mxu0 0
  %3325 = vmatpush2.bf16.msra.mxu0 %v2501
  %3326 = vmatprep.subr.bf16.mxu0 0
  %3327 = vmatpush2.bf16.msra.mxu0 %v2500
  %3328 = vmatprep.subr.bf16.mxu0 0
  %3329 = vmatpush2.bf16.msra.mxu0 %v2499
  %3330 = vmatprep.subr.bf16.mxu0 0
  %3331 = vmatpush2.bf16.msra.mxu0 %v2498
  %3332 = vmatprep.subr.bf16.mxu0 0
  %3333 = vmatpush2.bf16.msra.mxu0 %v2497
  %3334 = vmatprep.subr.bf16.mxu0 0
  %3335 = vmatpush2.bf16.msra.mxu0 %v2496
  %3336 = vmatprep.subr.bf16.mxu0 0
  %3337 = vmatpush2.bf16.msra.mxu0 %v2495
  %3338 = vmatprep.subr.bf16.mxu0 0
  %3339 = vmatpush2.bf16.msra.mxu0 %v2494
  %3340 = vmatprep.mubr.bf16.mxu0 %v1241
  %3341 = vmatmul.mubr.bf16.gmra.mxu0 %v1240
  %v3342 = vpop.f32.mrf.mxu0
  %v3343 = vadd.f32 %v3246, %v3342
  %v3344 = vpop.f32.mrf.mxu0
  %v3345 = vpop.f32.mrf.mxu0
  %v3346 = vadd.f32 %v3249, %v3345
  %v3347 = vpop.f32.mrf.mxu0
  %3348 = vmatprep.mubr.bf16.mxu0 %v1266
  %3349 = vmatmul.mubr.bf16.gmra.mxu0 %v1265
  %v3350 = vpop.f32.mrf.mxu0
  %v3351 = vadd.f32 %v3254, %v3350
  %v3352 = vpop.f32.mrf.mxu0
  %v3353 = vpop.f32.mrf.mxu0
  %v3354 = vadd.f32 %v3257, %v3353
  %v3355 = vpop.f32.mrf.mxu0
  %3356 = vmatprep.mubr.bf16.mxu0 %v1291
  %3357 = vmatmul.mubr.bf16.gmra.mxu0 %v1290
  %v3358 = vpop.f32.mrf.mxu0
  %v3359 = vadd.f32 %v3262, %v3358
  %v3360 = vpop.f32.mrf.mxu0
  %v3361 = vpop.f32.mrf.mxu0
  %v3362 = vadd.f32 %v3265, %v3361
  %v3363 = vpop.f32.mrf.mxu0
  %3364 = vmatprep.mubr.bf16.mxu0 %v1316
  %3365 = vmatmul.mubr.bf16.gmra.mxu0 %v1315
  %v3366 = vpop.f32.mrf.mxu0
  %v3367 = vadd.f32 %v3270, %v3366
  %v3368 = vpop.f32.mrf.mxu0
  %v3369 = vpop.f32.mrf.mxu0
  %v3370 = vadd.f32 %v3273, %v3369
  %v3371 = vpop.f32.mrf.mxu0
  %3372 = vmatprep.mubr.bf16.mxu0 %v1341
  %3373 = vmatmul.mubr.bf16.gmra.mxu0 %v1340
  %v3374 = vpop.f32.mrf.mxu0
  %v3375 = vadd.f32 %v3278, %v3374
  %v3376 = vpop.f32.mrf.mxu0
  %v3377 = vpop.f32.mrf.mxu0
  %v3378 = vadd.f32 %v3281, %v3377
  %v3379 = vpop.f32.mrf.mxu0
  %3380 = vmatprep.mubr.bf16.mxu0 %v1366
  %3381 = vmatmul.mubr.bf16.gmra.mxu0 %v1365
  %v3382 = vpop.f32.mrf.mxu0
  %v3383 = vadd.f32 %v3286, %v3382
  %v3384 = vpop.f32.mrf.mxu0
  %v3385 = vpop.f32.mrf.mxu0
  %v3386 = vadd.f32 %v3289, %v3385
  %v3387 = vpop.f32.mrf.mxu0
  %3388 = vmatprep.mubr.bf16.mxu0 %v1391
  %3389 = vmatmul.mubr.bf16.gmra.mxu0 %v1390
  %v3390 = vpop.f32.mrf.mxu0
  %v3391 = vadd.f32 %v3294, %v3390
  %v3392 = vpop.f32.mrf.mxu0
  %v3393 = vpop.f32.mrf.mxu0
  %v3394 = vadd.f32 %v3297, %v3393
  %v3395 = vpop.f32.mrf.mxu0
  %3396 = vmatprep.mubr.bf16.mxu0 %v1416
  %3397 = vmatmul.mubr.bf16.gmra.mxu0 %v1415
  %v3398 = vpop.f32.mrf.mxu0
  %v3399 = vadd.f32 %v3302, %v3398
  %v3400 = vpop.f32.mrf.mxu0
  %v3401 = vpop.f32.mrf.mxu0
  %v3402 = vadd.f32 %v3305, %v3401
  %v3403 = vpop.f32.mrf.mxu0
  %3404 = vdwg.mxu0
  %3405 = vmatprep.subr.bf16.mxu0 0
  %3406 = vmatpush1.bf16.msra.mxu0 %v2509
  %3407 = vmatprep.subr.bf16.mxu0 0
  %3408 = vmatpush1.bf16.msra.mxu0 %v2508
  %3409 = vmatprep.subr.bf16.mxu0 0
  %3410 = vmatpush1.bf16.msra.mxu0 %v2507
  %3411 = vmatprep.subr.bf16.mxu0 0
  %3412 = vmatpush1.bf16.msra.mxu0 %v2506
  %3413 = vmatprep.subr.bf16.mxu0 0
  %3414 = vmatpush1.bf16.msra.mxu0 %v2505
  %3415 = vmatprep.subr.bf16.mxu0 0
  %3416 = vmatpush1.bf16.msra.mxu0 %v2504
  %3417 = vmatprep.subr.bf16.mxu0 0
  %3418 = vmatpush1.bf16.msra.mxu0 %v2503
  %3419 = vmatprep.subr.bf16.mxu0 0
  %3420 = vmatpush1.bf16.msra.mxu0 %v2502
  %3421 = vmatprep.subr.bf16.mxu0 0
  %3422 = vmatpush2.bf16.msra.mxu0 %v2517
  %3423 = vmatprep.subr.bf16.mxu0 0
  %3424 = vmatpush2.bf16.msra.mxu0 %v2516
  %3425 = vmatprep.subr.bf16.mxu0 0
  %3426 = vmatpush2.bf16.msra.mxu0 %v2515
  %3427 = vmatprep.subr.bf16.mxu0 0
  %3428 = vmatpush2.bf16.msra.mxu0 %v2514
  %3429 = vmatprep.subr.bf16.mxu0 0
  %3430 = vmatpush2.bf16.msra.mxu0 %v2513
  %3431 = vmatprep.subr.bf16.mxu0 0
  %3432 = vmatpush2.bf16.msra.mxu0 %v2512
  %3433 = vmatprep.subr.bf16.mxu0 0
  %3434 = vmatpush2.bf16.msra.mxu0 %v2511
  %3435 = vmatprep.subr.bf16.mxu0 0
  %3436 = vmatpush2.bf16.msra.mxu0 %v2510
  %3437 = vmatprep.mubr.bf16.mxu0 %v1243
  %3438 = vmatmul.mubr.bf16.gmra.mxu0 %v1242
  %v3439 = vpop.f32.mrf.mxu0
  %v3440 = vadd.f32 %v3343, %v3439
  %v3441 = vpop.f32.mrf.mxu0
  %v3442 = vpop.f32.mrf.mxu0
  %v3443 = vadd.f32 %v3346, %v3442
  %v3444 = vpop.f32.mrf.mxu0
  %3445 = vmatprep.mubr.bf16.mxu0 %v1268
  %3446 = vmatmul.mubr.bf16.gmra.mxu0 %v1267
  %v3447 = vpop.f32.mrf.mxu0
  %v3448 = vadd.f32 %v3351, %v3447
  %v3449 = vpop.f32.mrf.mxu0
  %v3450 = vpop.f32.mrf.mxu0
  %v3451 = vadd.f32 %v3354, %v3450
  %v3452 = vpop.f32.mrf.mxu0
  %3453 = vmatprep.mubr.bf16.mxu0 %v1293
  %3454 = vmatmul.mubr.bf16.gmra.mxu0 %v1292
  %v3455 = vpop.f32.mrf.mxu0
  %v3456 = vadd.f32 %v3359, %v3455
  %v3457 = vpop.f32.mrf.mxu0
  %v3458 = vpop.f32.mrf.mxu0
  %v3459 = vadd.f32 %v3362, %v3458
  %v3460 = vpop.f32.mrf.mxu0
  %3461 = vmatprep.mubr.bf16.mxu0 %v1318
  %3462 = vmatmul.mubr.bf16.gmra.mxu0 %v1317
  %v3463 = vpop.f32.mrf.mxu0
  %v3464 = vadd.f32 %v3367, %v3463
  %v3465 = vpop.f32.mrf.mxu0
  %v3466 = vpop.f32.mrf.mxu0
  %v3467 = vadd.f32 %v3370, %v3466
  %v3468 = vpop.f32.mrf.mxu0
  %3469 = vmatprep.mubr.bf16.mxu0 %v1343
  %3470 = vmatmul.mubr.bf16.gmra.mxu0 %v1342
  %v3471 = vpop.f32.mrf.mxu0
  %v3472 = vadd.f32 %v3375, %v3471
  %v3473 = vpop.f32.mrf.mxu0
  %v3474 = vpop.f32.mrf.mxu0
  %v3475 = vadd.f32 %v3378, %v3474
  %v3476 = vpop.f32.mrf.mxu0
  %3477 = vmatprep.mubr.bf16.mxu0 %v1368
  %3478 = vmatmul.mubr.bf16.gmra.mxu0 %v1367
  %v3479 = vpop.f32.mrf.mxu0
  %v3480 = vadd.f32 %v3383, %v3479
  %v3481 = vpop.f32.mrf.mxu0
  %v3482 = vpop.f32.mrf.mxu0
  %v3483 = vadd.f32 %v3386, %v3482
  %v3484 = vpop.f32.mrf.mxu0
  %3485 = vmatprep.mubr.bf16.mxu0 %v1393
  %3486 = vmatmul.mubr.bf16.gmra.mxu0 %v1392
  %v3487 = vpop.f32.mrf.mxu0
  %v3488 = vadd.f32 %v3391, %v3487
  %v3489 = vpop.f32.mrf.mxu0
  %v3490 = vpop.f32.mrf.mxu0
  %v3491 = vadd.f32 %v3394, %v3490
  %v3492 = vpop.f32.mrf.mxu0
  %3493 = vmatprep.mubr.bf16.mxu0 %v1418
  %3494 = vmatmul.mubr.bf16.gmra.mxu0 %v1417
  %v3495 = vpop.f32.mrf.mxu0
  %v3496 = vadd.f32 %v3399, %v3495
  %v3497 = vpop.f32.mrf.mxu0
  %v3498 = vpop.f32.mrf.mxu0
  %v3499 = vadd.f32 %v3402, %v3498
  %v3500 = vpop.f32.mrf.mxu0
  %3501 = vdwg.mxu0
  %3502 = vmatprep.subr.bf16.mxu0 0
  %3503 = vmatpush1.bf16.msra.mxu0 %v2525
  %3504 = vmatprep.subr.bf16.mxu0 0
  %3505 = vmatpush1.bf16.msra.mxu0 %v2524
  %3506 = vmatprep.subr.bf16.mxu0 0
  %3507 = vmatpush1.bf16.msra.mxu0 %v2523
  %3508 = vmatprep.subr.bf16.mxu0 0
  %3509 = vmatpush1.bf16.msra.mxu0 %v2522
  %3510 = vmatprep.subr.bf16.mxu0 0
  %3511 = vmatpush1.bf16.msra.mxu0 %v2521
  %3512 = vmatprep.subr.bf16.mxu0 0
  %3513 = vmatpush1.bf16.msra.mxu0 %v2520
  %3514 = vmatprep.subr.bf16.mxu0 0
  %3515 = vmatpush1.bf16.msra.mxu0 %v2519
  %3516 = vmatprep.subr.bf16.mxu0 0
  %3517 = vmatpush1.bf16.msra.mxu0 %v2518
  %3518 = vmatprep.subr.bf16.mxu0 0
  %3519 = vmatpush2.bf16.msra.mxu0 %v2533
  %3520 = vmatprep.subr.bf16.mxu0 0
  %3521 = vmatpush2.bf16.msra.mxu0 %v2532
  %3522 = vmatprep.subr.bf16.mxu0 0
  %3523 = vmatpush2.bf16.msra.mxu0 %v2531
  %3524 = vmatprep.subr.bf16.mxu0 0
  %3525 = vmatpush2.bf16.msra.mxu0 %v2530
  %3526 = vmatprep.subr.bf16.mxu0 0
  %3527 = vmatpush2.bf16.msra.mxu0 %v2529
  %3528 = vmatprep.subr.bf16.mxu0 0
  %3529 = vmatpush2.bf16.msra.mxu0 %v2528
  %3530 = vmatprep.subr.bf16.mxu0 0
  %3531 = vmatpush2.bf16.msra.mxu0 %v2527
  %3532 = vmatprep.subr.bf16.mxu0 0
  %3533 = vmatpush2.bf16.msra.mxu0 %v2526
  %3534 = vmatprep.mubr.bf16.mxu0 %v1245
  %3535 = vmatmul.mubr.bf16.gmra.mxu0 %v1244
  %v3536 = vpop.f32.mrf.mxu0
  %v3537 = vadd.f32 %v3440, %v3536
  %v3538 = vpop.f32.mrf.mxu0
  %v3539 = vpop.f32.mrf.mxu0
  %v3540 = vadd.f32 %v3443, %v3539
  %v3541 = vpop.f32.mrf.mxu0
  %3542 = vmatprep.mubr.bf16.mxu0 %v1270
  %3543 = vmatmul.mubr.bf16.gmra.mxu0 %v1269
  %v3544 = vpop.f32.mrf.mxu0
  %v3545 = vadd.f32 %v3448, %v3544
  %v3546 = vpop.f32.mrf.mxu0
  %v3547 = vpop.f32.mrf.mxu0
  %v3548 = vadd.f32 %v3451, %v3547
  %v3549 = vpop.f32.mrf.mxu0
  %3550 = vmatprep.mubr.bf16.mxu0 %v1295
  %3551 = vmatmul.mubr.bf16.gmra.mxu0 %v1294
  %v3552 = vpop.f32.mrf.mxu0
  %v3553 = vadd.f32 %v3456, %v3552
  %v3554 = vpop.f32.mrf.mxu0
  %v3555 = vpop.f32.mrf.mxu0
  %v3556 = vadd.f32 %v3459, %v3555
  %v3557 = vpop.f32.mrf.mxu0
  %3558 = vmatprep.mubr.bf16.mxu0 %v1320
  %3559 = vmatmul.mubr.bf16.gmra.mxu0 %v1319
  %v3560 = vpop.f32.mrf.mxu0
  %v3561 = vadd.f32 %v3464, %v3560
  %v3562 = vpop.f32.mrf.mxu0
  %v3563 = vpop.f32.mrf.mxu0
  %v3564 = vadd.f32 %v3467, %v3563
  %v3565 = vpop.f32.mrf.mxu0
  %3566 = vmatprep.mubr.bf16.mxu0 %v1345
  %3567 = vmatmul.mubr.bf16.gmra.mxu0 %v1344
  %v3568 = vpop.f32.mrf.mxu0
  %v3569 = vadd.f32 %v3472, %v3568
  %v3570 = vpop.f32.mrf.mxu0
  %v3571 = vpop.f32.mrf.mxu0
  %v3572 = vadd.f32 %v3475, %v3571
  %v3573 = vpop.f32.mrf.mxu0
  %3574 = vmatprep.mubr.bf16.mxu0 %v1370
  %3575 = vmatmul.mubr.bf16.gmra.mxu0 %v1369
  %v3576 = vpop.f32.mrf.mxu0
  %v3577 = vadd.f32 %v3480, %v3576
  %v3578 = vpop.f32.mrf.mxu0
  %v3579 = vpop.f32.mrf.mxu0
  %v3580 = vadd.f32 %v3483, %v3579
  %v3581 = vpop.f32.mrf.mxu0
  %3582 = vmatprep.mubr.bf16.mxu0 %v1395
  %3583 = vmatmul.mubr.bf16.gmra.mxu0 %v1394
  %v3584 = vpop.f32.mrf.mxu0
  %v3585 = vadd.f32 %v3488, %v3584
  %v3586 = vpop.f32.mrf.mxu0
  %v3587 = vpop.f32.mrf.mxu0
  %v3588 = vadd.f32 %v3491, %v3587
  %v3589 = vpop.f32.mrf.mxu0
  %3590 = vmatprep.mubr.bf16.mxu0 %v1420
  %3591 = vmatmul.mubr.bf16.gmra.mxu0 %v1419
  %v3592 = vpop.f32.mrf.mxu0
  %v3593 = vadd.f32 %v3496, %v3592
  %v3594 = vpop.f32.mrf.mxu0
  %v3595 = vpop.f32.mrf.mxu0
  %v3596 = vadd.f32 %v3499, %v3595
  %v3597 = vpop.f32.mrf.mxu0
  %3598 = vdwg.mxu0
  %3599 = vmatprep.subr.bf16.mxu0 0
  %3600 = vmatpush1.bf16.msra.mxu0 %v2541
  %3601 = vmatprep.subr.bf16.mxu0 0
  %3602 = vmatpush1.bf16.msra.mxu0 %v2540
  %3603 = vmatprep.subr.bf16.mxu0 0
  %3604 = vmatpush1.bf16.msra.mxu0 %v2539
  %3605 = vmatprep.subr.bf16.mxu0 0
  %3606 = vmatpush1.bf16.msra.mxu0 %v2538
  %3607 = vmatprep.subr.bf16.mxu0 0
  %3608 = vmatpush1.bf16.msra.mxu0 %v2537
  %3609 = vmatprep.subr.bf16.mxu0 0
  %3610 = vmatpush1.bf16.msra.mxu0 %v2536
  %3611 = vmatprep.subr.bf16.mxu0 0
  %3612 = vmatpush1.bf16.msra.mxu0 %v2535
  %3613 = vmatprep.subr.bf16.mxu0 0
  %3614 = vmatpush1.bf16.msra.mxu0 %v2534
  %3615 = vmatprep.subr.bf16.mxu0 0
  %3616 = vmatpush2.bf16.msra.mxu0 %v2549
  %3617 = vmatprep.subr.bf16.mxu0 0
  %3618 = vmatpush2.bf16.msra.mxu0 %v2548
  %3619 = vmatprep.subr.bf16.mxu0 0
  %3620 = vmatpush2.bf16.msra.mxu0 %v2547
  %3621 = vmatprep.subr.bf16.mxu0 0
  %3622 = vmatpush2.bf16.msra.mxu0 %v2546
  %3623 = vmatprep.subr.bf16.mxu0 0
  %3624 = vmatpush2.bf16.msra.mxu0 %v2545
  %3625 = vmatprep.subr.bf16.mxu0 0
  %3626 = vmatpush2.bf16.msra.mxu0 %v2544
  %3627 = vmatprep.subr.bf16.mxu0 0
  %3628 = vmatpush2.bf16.msra.mxu0 %v2543
  %3629 = vmatprep.subr.bf16.mxu0 0
  %3630 = vmatpush2.bf16.msra.mxu0 %v2542
  %3631 = vmatprep.mubr.bf16.mxu0 %v1247
  %3632 = vmatmul.mubr.bf16.gmra.mxu0 %v1246
  %v3633 = vpop.f32.mrf.mxu0
  %v3634 = vadd.f32 %v3537, %v3633
  %v3635 = vpop.f32.mrf.mxu0
  %v3636 = vpop.f32.mrf.mxu0
  %v3637 = vadd.f32 %v3540, %v3636
  %v3638 = vpop.f32.mrf.mxu0
  %3639 = vmatprep.mubr.bf16.mxu0 %v1272
  %3640 = vmatmul.mubr.bf16.gmra.mxu0 %v1271
  %v3641 = vpop.f32.mrf.mxu0
  %v3642 = vadd.f32 %v3545, %v3641
  %v3643 = vpop.f32.mrf.mxu0
  %v3644 = vpop.f32.mrf.mxu0
  %v3645 = vadd.f32 %v3548, %v3644
  %v3646 = vpop.f32.mrf.mxu0
  %3647 = vmatprep.mubr.bf16.mxu0 %v1297
  %3648 = vmatmul.mubr.bf16.gmra.mxu0 %v1296
  %v3649 = vpop.f32.mrf.mxu0
  %v3650 = vadd.f32 %v3553, %v3649
  %v3651 = vpop.f32.mrf.mxu0
  %v3652 = vpop.f32.mrf.mxu0
  %v3653 = vadd.f32 %v3556, %v3652
  %v3654 = vpop.f32.mrf.mxu0
  %3655 = vmatprep.mubr.bf16.mxu0 %v1322
  %3656 = vmatmul.mubr.bf16.gmra.mxu0 %v1321
  %v3657 = vpop.f32.mrf.mxu0
  %v3658 = vadd.f32 %v3561, %v3657
  %v3659 = vpop.f32.mrf.mxu0
  %v3660 = vpop.f32.mrf.mxu0
  %v3661 = vadd.f32 %v3564, %v3660
  %v3662 = vpop.f32.mrf.mxu0
  %3663 = vmatprep.mubr.bf16.mxu0 %v1347
  %3664 = vmatmul.mubr.bf16.gmra.mxu0 %v1346
  %v3665 = vpop.f32.mrf.mxu0
  %v3666 = vadd.f32 %v3569, %v3665
  %v3667 = vpop.f32.mrf.mxu0
  %v3668 = vpop.f32.mrf.mxu0
  %v3669 = vadd.f32 %v3572, %v3668
  %v3670 = vpop.f32.mrf.mxu0
  %3671 = vmatprep.mubr.bf16.mxu0 %v1372
  %3672 = vmatmul.mubr.bf16.gmra.mxu0 %v1371
  %v3673 = vpop.f32.mrf.mxu0
  %v3674 = vadd.f32 %v3577, %v3673
  %v3675 = vpop.f32.mrf.mxu0
  %v3676 = vpop.f32.mrf.mxu0
  %v3677 = vadd.f32 %v3580, %v3676
  %v3678 = vpop.f32.mrf.mxu0
  %3679 = vmatprep.mubr.bf16.mxu0 %v1397
  %3680 = vmatmul.mubr.bf16.gmra.mxu0 %v1396
  %v3681 = vpop.f32.mrf.mxu0
  %v3682 = vadd.f32 %v3585, %v3681
  %v3683 = vpop.f32.mrf.mxu0
  %v3684 = vpop.f32.mrf.mxu0
  %v3685 = vadd.f32 %v3588, %v3684
  %v3686 = vpop.f32.mrf.mxu0
  %3687 = vmatprep.mubr.bf16.mxu0 %v1422
  %3688 = vmatmul.mubr.bf16.gmra.mxu0 %v1421
  %v3689 = vpop.f32.mrf.mxu0
  %v3690 = vadd.f32 %v3593, %v3689
  %v3691 = vpop.f32.mrf.mxu0
  %v3692 = vpop.f32.mrf.mxu0
  %v3693 = vadd.f32 %v3596, %v3692
  %v3694 = vpop.f32.mrf.mxu0
  %3695 = vdwg.mxu0
  %3696 = vmatprep.subr.bf16.mxu0 0
  %3697 = vmatpush1.bf16.msra.mxu0 %v2557
  %3698 = vmatprep.subr.bf16.mxu0 0
  %3699 = vmatpush1.bf16.msra.mxu0 %v2556
  %3700 = vmatprep.subr.bf16.mxu0 0
  %3701 = vmatpush1.bf16.msra.mxu0 %v2555
  %3702 = vmatprep.subr.bf16.mxu0 0
  %3703 = vmatpush1.bf16.msra.mxu0 %v2554
  %3704 = vmatprep.subr.bf16.mxu0 0
  %3705 = vmatpush1.bf16.msra.mxu0 %v2553
  %3706 = vmatprep.subr.bf16.mxu0 0
  %3707 = vmatpush1.bf16.msra.mxu0 %v2552
  %3708 = vmatprep.subr.bf16.mxu0 0
  %3709 = vmatpush1.bf16.msra.mxu0 %v2551
  %3710 = vmatprep.subr.bf16.mxu0 0
  %3711 = vmatpush1.bf16.msra.mxu0 %v2550
  %3712 = vmatprep.subr.bf16.mxu0 0
  %3713 = vmatpush2.bf16.msra.mxu0 %v2565
  %3714 = vmatprep.subr.bf16.mxu0 0
  %3715 = vmatpush2.bf16.msra.mxu0 %v2564
  %3716 = vmatprep.subr.bf16.mxu0 0
  %3717 = vmatpush2.bf16.msra.mxu0 %v2563
  %3718 = vmatprep.subr.bf16.mxu0 0
  %3719 = vmatpush2.bf16.msra.mxu0 %v2562
  %3720 = vmatprep.subr.bf16.mxu0 0
  %3721 = vmatpush2.bf16.msra.mxu0 %v2561
  %3722 = vmatprep.subr.bf16.mxu0 0
  %3723 = vmatpush2.bf16.msra.mxu0 %v2560
  %3724 = vmatprep.subr.bf16.mxu0 0
  %3725 = vmatpush2.bf16.msra.mxu0 %v2559
  %3726 = vmatprep.subr.bf16.mxu0 0
  %3727 = vmatpush2.bf16.msra.mxu0 %v2558
  %3728 = vmatprep.mubr.bf16.mxu0 %v1249
  %3729 = vmatmul.mubr.bf16.gmra.mxu0 %v1248
  %v3730 = vpop.f32.mrf.mxu0
  %v3731 = vadd.f32 %v3634, %v3730
  %v3732 = vpop.f32.mrf.mxu0
  %v3733 = vpop.f32.mrf.mxu0
  %v3734 = vadd.f32 %v3637, %v3733
  %v3735 = vpop.f32.mrf.mxu0
  %3736 = vmatprep.mubr.bf16.mxu0 %v1274
  %3737 = vmatmul.mubr.bf16.gmra.mxu0 %v1273
  %v3738 = vpop.f32.mrf.mxu0
  %v3739 = vadd.f32 %v3642, %v3738
  %v3740 = vpop.f32.mrf.mxu0
  %v3741 = vpop.f32.mrf.mxu0
  %v3742 = vadd.f32 %v3645, %v3741
  %v3743 = vpop.f32.mrf.mxu0
  %3744 = vmatprep.mubr.bf16.mxu0 %v1299
  %3745 = vmatmul.mubr.bf16.gmra.mxu0 %v1298
  %v3746 = vpop.f32.mrf.mxu0
  %v3747 = vadd.f32 %v3650, %v3746
  %v3748 = vpop.f32.mrf.mxu0
  %v3749 = vpop.f32.mrf.mxu0
  %v3750 = vadd.f32 %v3653, %v3749
  %v3751 = vpop.f32.mrf.mxu0
  %3752 = vmatprep.mubr.bf16.mxu0 %v1324
  %3753 = vmatmul.mubr.bf16.gmra.mxu0 %v1323
  %v3754 = vpop.f32.mrf.mxu0
  %v3755 = vadd.f32 %v3658, %v3754
  %v3756 = vpop.f32.mrf.mxu0
  %v3757 = vpop.f32.mrf.mxu0
  %v3758 = vadd.f32 %v3661, %v3757
  %v3759 = vpop.f32.mrf.mxu0
  %3760 = vmatprep.mubr.bf16.mxu0 %v1349
  %3761 = vmatmul.mubr.bf16.gmra.mxu0 %v1348
  %v3762 = vpop.f32.mrf.mxu0
  %v3763 = vadd.f32 %v3666, %v3762
  %v3764 = vpop.f32.mrf.mxu0
  %v3765 = vpop.f32.mrf.mxu0
  %v3766 = vadd.f32 %v3669, %v3765
  %v3767 = vpop.f32.mrf.mxu0
  %3768 = vmatprep.mubr.bf16.mxu0 %v1374
  %3769 = vmatmul.mubr.bf16.gmra.mxu0 %v1373
  %v3770 = vpop.f32.mrf.mxu0
  %v3771 = vadd.f32 %v3674, %v3770
  %v3772 = vpop.f32.mrf.mxu0
  %v3773 = vpop.f32.mrf.mxu0
  %v3774 = vadd.f32 %v3677, %v3773
  %v3775 = vpop.f32.mrf.mxu0
  %3776 = vmatprep.mubr.bf16.mxu0 %v1399
  %3777 = vmatmul.mubr.bf16.gmra.mxu0 %v1398
  %v3778 = vpop.f32.mrf.mxu0
  %v3779 = vadd.f32 %v3682, %v3778
  %v3780 = vpop.f32.mrf.mxu0
  %v3781 = vpop.f32.mrf.mxu0
  %v3782 = vadd.f32 %v3685, %v3781
  %v3783 = vpop.f32.mrf.mxu0
  %3784 = vmatprep.mubr.bf16.mxu0 %v1424
  %3785 = vmatmul.mubr.bf16.gmra.mxu0 %v1423
  %v3786 = vpop.f32.mrf.mxu0
  %v3787 = vadd.f32 %v3690, %v3786
  %v3788 = vpop.f32.mrf.mxu0
  %v3789 = vpop.f32.mrf.mxu0
  %v3790 = vadd.f32 %v3693, %v3789
  %v3791 = vpop.f32.mrf.mxu0
  %3792 = vdwg.mxu0
  %3793 = vmatprep.subr.bf16.mxu0 0
  %3794 = vmatpush1.bf16.msra.mxu0 %v2573
  %3795 = vmatprep.subr.bf16.mxu0 0
  %3796 = vmatpush1.bf16.msra.mxu0 %v2572
  %3797 = vmatprep.subr.bf16.mxu0 0
  %3798 = vmatpush1.bf16.msra.mxu0 %v2571
  %3799 = vmatprep.subr.bf16.mxu0 0
  %3800 = vmatpush1.bf16.msra.mxu0 %v2570
  %3801 = vmatprep.subr.bf16.mxu0 0
  %3802 = vmatpush1.bf16.msra.mxu0 %v2569
  %3803 = vmatprep.subr.bf16.mxu0 0
  %3804 = vmatpush1.bf16.msra.mxu0 %v2568
  %3805 = vmatprep.subr.bf16.mxu0 0
  %3806 = vmatpush1.bf16.msra.mxu0 %v2567
  %3807 = vmatprep.subr.bf16.mxu0 0
  %3808 = vmatpush1.bf16.msra.mxu0 %v2566
  %3809 = vmatprep.subr.bf16.mxu0 0
  %3810 = vmatpush2.bf16.msra.mxu0 %v2581
  %3811 = vmatprep.subr.bf16.mxu0 0
  %3812 = vmatpush2.bf16.msra.mxu0 %v2580
  %3813 = vmatprep.subr.bf16.mxu0 0
  %3814 = vmatpush2.bf16.msra.mxu0 %v2579
  %3815 = vmatprep.subr.bf16.mxu0 0
  %3816 = vmatpush2.bf16.msra.mxu0 %v2578
  %3817 = vmatprep.subr.bf16.mxu0 0
  %3818 = vmatpush2.bf16.msra.mxu0 %v2577
  %3819 = vmatprep.subr.bf16.mxu0 0
  %3820 = vmatpush2.bf16.msra.mxu0 %v2576
  %3821 = vmatprep.subr.bf16.mxu0 0
  %3822 = vmatpush2.bf16.msra.mxu0 %v2575
  %3823 = vmatprep.subr.bf16.mxu0 0
  %3824 = vmatpush2.bf16.msra.mxu0 %v2574
  %3825 = vmatprep.mubr.bf16.mxu0 %v1251
  %3826 = vmatmul.mubr.bf16.gmra.mxu0 %v1250
  %v3827 = vpop.f32.mrf.mxu0
  %v3828 = vadd.f32 %v3731, %v3827
  %v3829 = vpop.f32.mrf.mxu0
  %v3830 = vpop.f32.mrf.mxu0
  %v3831 = vadd.f32 %v3734, %v3830
  %v3832 = vpop.f32.mrf.mxu0
  %3833 = vmatprep.mubr.bf16.mxu0 %v1276
  %3834 = vmatmul.mubr.bf16.gmra.mxu0 %v1275
  %v3835 = vpop.f32.mrf.mxu0
  %v3836 = vadd.f32 %v3739, %v3835
  %v3837 = vpop.f32.mrf.mxu0
  %v3838 = vpop.f32.mrf.mxu0
  %v3839 = vadd.f32 %v3742, %v3838
  %v3840 = vpop.f32.mrf.mxu0
  %3841 = vmatprep.mubr.bf16.mxu0 %v1301
  %3842 = vmatmul.mubr.bf16.gmra.mxu0 %v1300
  %v3843 = vpop.f32.mrf.mxu0
  %v3844 = vadd.f32 %v3747, %v3843
  %v3845 = vpop.f32.mrf.mxu0
  %v3846 = vpop.f32.mrf.mxu0
  %v3847 = vadd.f32 %v3750, %v3846
  %v3848 = vpop.f32.mrf.mxu0
  %3849 = vmatprep.mubr.bf16.mxu0 %v1326
  %3850 = vmatmul.mubr.bf16.gmra.mxu0 %v1325
  %v3851 = vpop.f32.mrf.mxu0
  %v3852 = vadd.f32 %v3755, %v3851
  %v3853 = vpop.f32.mrf.mxu0
  %v3854 = vpop.f32.mrf.mxu0
  %v3855 = vadd.f32 %v3758, %v3854
  %v3856 = vpop.f32.mrf.mxu0
  %3857 = vmatprep.mubr.bf16.mxu0 %v1351
  %3858 = vmatmul.mubr.bf16.gmra.mxu0 %v1350
  %v3859 = vpop.f32.mrf.mxu0
  %v3860 = vadd.f32 %v3763, %v3859
  %v3861 = vpop.f32.mrf.mxu0
  %v3862 = vpop.f32.mrf.mxu0
  %v3863 = vadd.f32 %v3766, %v3862
  %v3864 = vpop.f32.mrf.mxu0
  %3865 = vmatprep.mubr.bf16.mxu0 %v1376
  %3866 = vmatmul.mubr.bf16.gmra.mxu0 %v1375
  %v3867 = vpop.f32.mrf.mxu0
  %v3868 = vadd.f32 %v3771, %v3867
  %v3869 = vpop.f32.mrf.mxu0
  %v3870 = vpop.f32.mrf.mxu0
  %v3871 = vadd.f32 %v3774, %v3870
  %v3872 = vpop.f32.mrf.mxu0
  %3873 = vmatprep.mubr.bf16.mxu0 %v1401
  %3874 = vmatmul.mubr.bf16.gmra.mxu0 %v1400
  %v3875 = vpop.f32.mrf.mxu0
  %v3876 = vadd.f32 %v3779, %v3875
  %v3877 = vpop.f32.mrf.mxu0
  %v3878 = vpop.f32.mrf.mxu0
  %v3879 = vadd.f32 %v3782, %v3878
  %v3880 = vpop.f32.mrf.mxu0
  %3881 = vmatprep.mubr.bf16.mxu0 %v1426
  %3882 = vmatmul.mubr.bf16.gmra.mxu0 %v1425
  %v3883 = vpop.f32.mrf.mxu0
  %v3884 = vadd.f32 %v3787, %v3883
  %v3885 = vpop.f32.mrf.mxu0
  %v3886 = vpop.f32.mrf.mxu0
  %v3887 = vadd.f32 %v3790, %v3886
  %v3888 = vpop.f32.mrf.mxu0
  %3889 = vdwg.mxu0
  %3890 = vmatprep.subr.bf16.mxu0 0
  %3891 = vmatpush1.bf16.msra.mxu0 %v2589
  %3892 = vmatprep.subr.bf16.mxu0 0
  %3893 = vmatpush1.bf16.msra.mxu0 %v2588
  %3894 = vmatprep.subr.bf16.mxu0 0
  %3895 = vmatpush1.bf16.msra.mxu0 %v2587
  %3896 = vmatprep.subr.bf16.mxu0 0
  %3897 = vmatpush1.bf16.msra.mxu0 %v2586
  %3898 = vmatprep.subr.bf16.mxu0 0
  %3899 = vmatpush1.bf16.msra.mxu0 %v2585
  %3900 = vmatprep.subr.bf16.mxu0 0
  %3901 = vmatpush1.bf16.msra.mxu0 %v2584
  %3902 = vmatprep.subr.bf16.mxu0 0
  %3903 = vmatpush1.bf16.msra.mxu0 %v2583
  %3904 = vmatprep.subr.bf16.mxu0 0
  %3905 = vmatpush1.bf16.msra.mxu0 %v2582
  %3906 = vmatprep.subr.bf16.mxu0 0
  %3907 = vmatpush2.bf16.msra.mxu0 %v2597
  %3908 = vmatprep.subr.bf16.mxu0 0
  %3909 = vmatpush2.bf16.msra.mxu0 %v2596
  %3910 = vmatprep.subr.bf16.mxu0 0
  %3911 = vmatpush2.bf16.msra.mxu0 %v2595
  %3912 = vmatprep.subr.bf16.mxu0 0
  %3913 = vmatpush2.bf16.msra.mxu0 %v2594
  %3914 = vmatprep.subr.bf16.mxu0 0
  %3915 = vmatpush2.bf16.msra.mxu0 %v2593
  %3916 = vmatprep.subr.bf16.mxu0 0
  %3917 = vmatpush2.bf16.msra.mxu0 %v2592
  %3918 = vmatprep.subr.bf16.mxu0 0
  %3919 = vmatpush2.bf16.msra.mxu0 %v2591
  %3920 = vmatprep.subr.bf16.mxu0 0
  %3921 = vmatpush2.bf16.msra.mxu0 %v2590
  %3922 = vmatprep.mubr.bf16.mxu0 %v1253
  %3923 = vmatmul.mubr.bf16.gmra.mxu0 %v1252
  %v3924 = vpop.f32.mrf.mxu0
  %v3925 = vadd.f32 %v3828, %v3924
  %v3926 = vpop.f32.mrf.mxu0
  %v3927 = vpop.f32.mrf.mxu0
  %v3928 = vadd.f32 %v3831, %v3927
  %v3929 = vpop.f32.mrf.mxu0
  %3930 = vmatprep.mubr.bf16.mxu0 %v1278
  %3931 = vmatmul.mubr.bf16.gmra.mxu0 %v1277
  %v3932 = vpop.f32.mrf.mxu0
  %v3933 = vadd.f32 %v3836, %v3932
  %v3934 = vpop.f32.mrf.mxu0
  %v3935 = vpop.f32.mrf.mxu0
  %v3936 = vadd.f32 %v3839, %v3935
  %v3937 = vpop.f32.mrf.mxu0
  %3938 = vmatprep.mubr.bf16.mxu0 %v1303
  %3939 = vmatmul.mubr.bf16.gmra.mxu0 %v1302
  %v3940 = vpop.f32.mrf.mxu0
  %v3941 = vadd.f32 %v3844, %v3940
  %v3942 = vpop.f32.mrf.mxu0
  %v3943 = vpop.f32.mrf.mxu0
  %v3944 = vadd.f32 %v3847, %v3943
  %v3945 = vpop.f32.mrf.mxu0
  %3946 = vmatprep.mubr.bf16.mxu0 %v1328
  %3947 = vmatmul.mubr.bf16.gmra.mxu0 %v1327
  %v3948 = vpop.f32.mrf.mxu0
  %v3949 = vadd.f32 %v3852, %v3948
  %v3950 = vpop.f32.mrf.mxu0
  %v3951 = vpop.f32.mrf.mxu0
  %v3952 = vadd.f32 %v3855, %v3951
  %v3953 = vpop.f32.mrf.mxu0
  %3954 = vmatprep.mubr.bf16.mxu0 %v1353
  %3955 = vmatmul.mubr.bf16.gmra.mxu0 %v1352
  %v3956 = vpop.f32.mrf.mxu0
  %v3957 = vadd.f32 %v3860, %v3956
  %v3958 = vpop.f32.mrf.mxu0
  %v3959 = vpop.f32.mrf.mxu0
  %v3960 = vadd.f32 %v3863, %v3959
  %v3961 = vpop.f32.mrf.mxu0
  %3962 = vmatprep.mubr.bf16.mxu0 %v1378
  %3963 = vmatmul.mubr.bf16.gmra.mxu0 %v1377
  %v3964 = vpop.f32.mrf.mxu0
  %v3965 = vadd.f32 %v3868, %v3964
  %v3966 = vpop.f32.mrf.mxu0
  %v3967 = vpop.f32.mrf.mxu0
  %v3968 = vadd.f32 %v3871, %v3967
  %v3969 = vpop.f32.mrf.mxu0
  %3970 = vmatprep.mubr.bf16.mxu0 %v1403
  %3971 = vmatmul.mubr.bf16.gmra.mxu0 %v1402
  %v3972 = vpop.f32.mrf.mxu0
  %v3973 = vadd.f32 %v3876, %v3972
  %v3974 = vpop.f32.mrf.mxu0
  %v3975 = vpop.f32.mrf.mxu0
  %v3976 = vadd.f32 %v3879, %v3975
  %v3977 = vpop.f32.mrf.mxu0
  %3978 = vmatprep.mubr.bf16.mxu0 %v1428
  %3979 = vmatmul.mubr.bf16.gmra.mxu0 %v1427
  %v3980 = vpop.f32.mrf.mxu0
  %v3981 = vadd.f32 %v3884, %v3980
  %v3982 = vpop.f32.mrf.mxu0
  %v3983 = vpop.f32.mrf.mxu0
  %v3984 = vadd.f32 %v3887, %v3983
  %v3985 = vpop.f32.mrf.mxu0
  %3986 = vdwg.mxu0
  %3987 = vmatprep.subr.bf16.mxu0 0
  %3988 = vmatpush1.bf16.msra.mxu0 0
  %3989 = vmatprep.subr.bf16.mxu0 0
  %3990 = vmatpush1.bf16.msra.mxu0 0
  %3991 = vmatprep.subr.bf16.mxu0 0
  %3992 = vmatpush1.bf16.msra.mxu0 0
  %3993 = vmatprep.subr.bf16.mxu0 0
  %3994 = vmatpush1.bf16.msra.mxu0 0
  %3995 = vmatprep.subr.bf16.mxu0 0
  %3996 = vmatpush1.bf16.msra.mxu0 %v2601
  %3997 = vmatprep.subr.bf16.mxu0 0
  %3998 = vmatpush1.bf16.msra.mxu0 %v2600
  %3999 = vmatprep.subr.bf16.mxu0 0
  %4000 = vmatpush1.bf16.msra.mxu0 %v2599
  %4001 = vmatprep.subr.bf16.mxu0 0
  %4002 = vmatpush1.bf16.msra.mxu0 %v2598
  %4003 = vmatprep.subr.bf16.mxu0 0
  %4004 = vmatpush2.bf16.msra.mxu0 0
  %4005 = vmatprep.subr.bf16.mxu0 0
  %4006 = vmatpush2.bf16.msra.mxu0 0
  %4007 = vmatprep.subr.bf16.mxu0 0
  %4008 = vmatpush2.bf16.msra.mxu0 0
  %4009 = vmatprep.subr.bf16.mxu0 0
  %4010 = vmatpush2.bf16.msra.mxu0 0
  %4011 = vmatprep.subr.bf16.mxu0 0
  %4012 = vmatpush2.bf16.msra.mxu0 0
  %4013 = vmatprep.subr.bf16.mxu0 0
  %4014 = vmatpush2.bf16.msra.mxu0 0
  %4015 = vmatprep.subr.bf16.mxu0 0
  %4016 = vmatpush2.bf16.msra.mxu0 0
  %4017 = vmatprep.subr.bf16.mxu0 0
  %4018 = vmatpush2.bf16.msra.mxu0 0
  %4019 = vmatprep.mubr.bf16.mxu0 0
  %4020 = vmatmul.mubr.bf16.gmra.mxu0 %v2800
  %v4021 = vpop.f32.mrf.mxu0
  %v4022 = vadd.f32 %v3925, %v4021
  %v4023 = vpop.f32.mrf.mxu0
  %v4024 = vpop.f32.mrf.mxu0
  %v4025 = vadd.f32 %v3928, %v4024
  %v4026 = vpop.f32.mrf.mxu0
  %4027 = vmatprep.mubr.bf16.mxu0 0
  %4028 = vmatmul.mubr.bf16.gmra.mxu0 %v2803
  %v4029 = vpop.f32.mrf.mxu0
  %v4030 = vadd.f32 %v3933, %v4029
  %v4031 = vpop.f32.mrf.mxu0
  %v4032 = vpop.f32.mrf.mxu0
  %v4033 = vadd.f32 %v3936, %v4032
  %v4034 = vpop.f32.mrf.mxu0
  %4035 = vmatprep.mubr.bf16.mxu0 0
  %4036 = vmatmul.mubr.bf16.gmra.mxu0 %v2806
  %v4037 = vpop.f32.mrf.mxu0
  %v4038 = vadd.f32 %v3941, %v4037
  %v4039 = vpop.f32.mrf.mxu0
  %v4040 = vpop.f32.mrf.mxu0
  %v4041 = vadd.f32 %v3944, %v4040
  %v4042 = vpop.f32.mrf.mxu0
  %4043 = vmatprep.mubr.bf16.mxu0 0
  %4044 = vmatmul.mubr.bf16.gmra.mxu0 %v2809
  %v4045 = vpop.f32.mrf.mxu0
  %v4046 = vadd.f32 %v3949, %v4045
  %v4047 = vpop.f32.mrf.mxu0
  %v4048 = vpop.f32.mrf.mxu0
  %v4049 = vadd.f32 %v3952, %v4048
  %v4050 = vpop.f32.mrf.mxu0
  %4051 = vmatprep.mubr.bf16.mxu0 0
  %4052 = vmatmul.mubr.bf16.gmra.mxu0 %v2812
  %v4053 = vpop.f32.mrf.mxu0
  %v4054 = vadd.f32 %v3957, %v4053
  %v4055 = vpop.f32.mrf.mxu0
  %v4056 = vpop.f32.mrf.mxu0
  %v4057 = vadd.f32 %v3960, %v4056
  %v4058 = vpop.f32.mrf.mxu0
  %4059 = vmatprep.mubr.bf16.mxu0 0
  %4060 = vmatmul.mubr.bf16.gmra.mxu0 %v2815
  %v4061 = vpop.f32.mrf.mxu0
  %v4062 = vadd.f32 %v3965, %v4061
  %v4063 = vpop.f32.mrf.mxu0
  %v4064 = vpop.f32.mrf.mxu0
  %v4065 = vadd.f32 %v3968, %v4064
  %v4066 = vpop.f32.mrf.mxu0
  %4067 = vmatprep.mubr.bf16.mxu0 0
  %4068 = vmatmul.mubr.bf16.gmra.mxu0 %v2818
  %v4069 = vpop.f32.mrf.mxu0
  %v4070 = vadd.f32 %v3973, %v4069
  %v4071 = vpop.f32.mrf.mxu0
  %v4072 = vpop.f32.mrf.mxu0
  %v4073 = vadd.f32 %v3976, %v4072
  %v4074 = vpop.f32.mrf.mxu0
  %4075 = vmatprep.mubr.bf16.mxu0 0
  %4076 = vmatmul.mubr.bf16.gmra.mxu0 %v2821
  %v4077 = vpop.f32.mrf.mxu0
  %v4078 = vadd.f32 %v3981, %v4077
  %v4079 = vpop.f32.mrf.mxu0
  %v4080 = vpop.f32.mrf.mxu0
  %v4081 = vadd.f32 %v3984, %v4080
  %v4082 = vpop.f32.mrf.mxu0
  %4083 = vdwg.mxu0
  %v4084 = vmax.f32 %v4022, 0.0
  %v4085 = vmax.f32 %v4025, 0.0
  %v4086 = vmax.f32 %v4030, 0.0
  %v4087 = vmax.f32 %v4033, 0.0
  %v4088 = vmax.f32 %v4038, 0.0
  %v4089 = vmax.f32 %v4041, 0.0
  %v4090 = vmax.f32 %v4046, 0.0
  %v4091 = vmax.f32 %v4049, 0.0
  %v4092 = vmax.f32 %v4054, 0.0
  %v4093 = vmax.f32 %v4057, 0.0
  %v4094 = vmax.f32 %v4062, 0.0
  %v4095 = vmax.f32 %v4065, 0.0
  %v4096 = vmax.f32 %v4070, 0.0
  %v4097 = vmax.f32 %v4073, 0.0
  %v4098 = vmax.f32 %v4078, 0.0
  %v4099 = vmax.f32 %v4081, 0.0
  %v4100 = vpack.c.bf16 %v4085, %v4084
  %v4101 = vpack.c.bf16 %v4087, %v4086
  %v4102 = vpack.c.bf16 %v4089, %v4088
  %v4103 = vpack.c.bf16 %v4091, %v4090
  %v4104 = vpack.c.bf16 %v4093, %v4092
  %v4105 = vpack.c.bf16 %v4095, %v4094
  %v4106 = vpack.c.bf16 %v4097, %v4096
  %v4107 = vpack.c.bf16 %v4099, %v4098
  %v4116 = vunpack.c.l.b16 %v4100
  %v4117 = vunpack.c.h.b16 %v4100
  %v4118 = vunpack.c.l.b16 %v4101
  %v4119 = vunpack.c.h.b16 %v4101
  %v4120 = vunpack.c.l.b16 %v4102
  %v4121 = vunpack.c.h.b16 %v4102
  %v4122 = vunpack.c.l.b16 %v4103
  %v4123 = vunpack.c.h.b16 %v4103
  %v4124 = vunpack.c.l.b16 %v4104
  %v4125 = vunpack.c.h.b16 %v4104
  %v4126 = vunpack.c.l.b16 %v4105
  %v4127 = vunpack.c.h.b16 %v4105
  %v4128 = vunpack.c.l.b16 %v4106
  %v4129 = vunpack.c.h.b16 %v4106
  %v4130 = vunpack.c.l.b16 %v4107
  %v4131 = vunpack.c.h.b16 %v4107
  %v4132 = vpack.c.b16 %v4116, %v4116
  %v4133 = vpack.c.b16 %v4117, %v4117
  %v4134 = vpack.c.b16 %v4118, %v4118
  %v4135 = vpack.c.b16 %v4119, %v4119
  %v4136 = vpack.c.b16 %v4120, %v4120
  %v4137 = vpack.c.b16 %v4121, %v4121
  %v4138 = vpack.c.b16 %v4122, %v4122
  %v4139 = vpack.c.b16 %v4123, %v4123
  %v4140 = vpack.c.b16 %v4124, %v4124
  %v4141 = vpack.c.b16 %v4125, %v4125
  %v4142 = vpack.c.b16 %v4126, %v4126
  %v4143 = vpack.c.b16 %v4127, %v4127
  %v4144 = vpack.c.b16 %v4128, %v4128
  %v4145 = vpack.c.b16 %v4129, %v4129
  %v4146 = vpack.c.b16 %v4130, %v4130
  %v4147 = vpack.c.b16 %v4131, %v4131
  %4164 = vst [vmem:[%s3] sm:$0xf] %v4132
  %4165 = vst [vmem:[%s3 + $0x4] sm:$0xf] %v4133
  %4166 = vst [vmem:[%s3 + $0x8] sm:$0xf] %v4134
  %4167 = vst [vmem:[%s3 + $0xc] sm:$0xf] %v4135
  %4168 = vst [vmem:[%s3 + $0x10] sm:$0xf] %v4136
  %4169 = vst [vmem:[%s3 + $0x14] sm:$0xf] %v4137
  %4170 = vst [vmem:[%s3 + $0x18] sm:$0xf] %v4138
  %4171 = vst [vmem:[%s3 + $0x1c] sm:$0xf] %v4139
  %4172 = vst [vmem:[%s3 + $0x20] sm:$0xf] %v4140
  %4173 = vst [vmem:[%s3 + $0x24] sm:$0xf] %v4141
  %4174 = vst [vmem:[%s3 + $0x28] sm:$0xf] %v4142
  %4175 = vst [vmem:[%s3 + $0x2c] sm:$0xf] %v4143
  %4176 = vst [vmem:[%s3 + $0x30] sm:$0xf] %v4144
  %4177 = vst [vmem:[%s3 + $0x34] sm:$0xf] %v4145
  %4178 = vst [vmem:[%s3 + $0x38] sm:$0xf] %v4146
  %4179 = vst [vmem:[%s3 + $0x3c] sm:$0xf] %v4147
  // Predicated region
  $region14: #{autoencoder_forward.9} parent=0 // pred_check
    _
  $region15: #{autoencoder_forward.9} parent=0 // pred_check_branch
    %4181 = sbr.rel (0) target = $region17
  $region16: #{autoencoder_forward.9} parent=0 // pred_region
    _
  $region17: #{autoencoder_forward.9} parent=0 // pred_fallthru
    _
  // Predicated region
  $region18: #{autoencoder_forward.9} parent=0 // pred_check
    _
  $region19: #{autoencoder_forward.9} parent=0 // pred_check_branch
    %4183 = sbr.rel (0) target = $region21
  $region20: #{autoencoder_forward.9} parent=0 // pred_region
    _
  $region21: #{autoencoder_forward.9} parent=0 // pred_fallthru
    _

// kernel: autoencoder_forward.10
$region0: #{autoencoder_forward.10}
  #allocation0 [shape = 'u32[]', space=smem, size = 0x4, offset = 0x4, fixed_abs, tag = 'smem constant byte address 0x4 - core index']
  #allocation1 [shape = 'u32[144,128]{1,0:T(1,128)}', space=vmem, size = 0x12000, scoped, tag = 'internal scratch']
  %s0 = inlined_call_operand.vmem [shape: bf16[512,288], index: 0, kind: input, shape index: {}]
  %s1 = inlined_call_operand.vmem [shape: bf16[288,128], index: 1, kind: input, shape index: {}]
  %s2 = inlined_call_operand.vmem [shape: f32[1,128], index: 2, kind: input, shape index: {}]
  %s3 = inlined_call_operand.vmem [shape: bf16[512,128], index: 3, kind: output, shape index: {}]
  %s4 = sld [smem:[#allocation0]]
  $region22: #{autoencoder_forward.10} parent=0
    _
  %s6 = ssub.s32 1, %s4
  %s7 = scalar_select 0, %s6, %s4
  // Predicated region
  $region2: #{autoencoder_forward.10} parent=0 // pred_check
    _
  $region3: #{autoencoder_forward.10} parent=0 // pred_check_branch
    %9 = sbr.rel (0) target = $region5
  $region4: #{autoencoder_forward.10} parent=0 // pred_region
    _
  $region5: #{autoencoder_forward.10} parent=0 // pred_fallthru
    _
  // Predicated region
  $region6: #{autoencoder_forward.10} parent=0 // pred_check
    _
  $region7: #{autoencoder_forward.10} parent=0 // pred_check_branch
    %11 = sbr.rel (0) target = $region9
  $region8: #{autoencoder_forward.10} parent=0 // pred_region
    _
  $region9: #{autoencoder_forward.10} parent=0 // pred_fallthru
    _
  // Predicated region
  $region10: #{autoencoder_forward.10} parent=0 // pred_check
    _
  $region11: #{autoencoder_forward.10} parent=0 // pred_check_branch
    %13 = sbr.rel (0) target = $region13
  $region12: #{autoencoder_forward.10} parent=0 // pred_region
    _
  $region13: #{autoencoder_forward.10} parent=0 // pred_fallthru
    _
  %v15 = vld [vmem:[%s0] sm:$0xff]
  %v16 = vld [vmem:[%s0 + $0x8] sm:$0xf]
  %v17 = vld [vmem:[%s0 + $0xc] sm:$0xff]
  %v18 = vld [vmem:[%s0 + $0x14] sm:$0xf]
  %v19 = vld [vmem:[%s0 + $0x18] sm:$0xff]
  %v20 = vld [vmem:[%s0 + $0x20] sm:$0xf]
  %v21 = vld [vmem:[%s0 + $0x24] sm:$0xff]
  %v22 = vld [vmem:[%s0 + $0x2c] sm:$0xf]
  %v23 = vld [vmem:[%s0 + $0x30] sm:$0xff]
  %v24 = vld [vmem:[%s0 + $0x38] sm:$0xf]
  %v25 = vld [vmem:[%s0 + $0x3c] sm:$0xff]
  %v26 = vld [vmem:[%s0 + $0x44] sm:$0xf]
  %v27 = vld [vmem:[%s0 + $0x48] sm:$0xff]
  %v28 = vld [vmem:[%s0 + $0x50] sm:$0xf]
  %v29 = vld [vmem:[%s0 + $0x54] sm:$0xff]
  %v30 = vld [vmem:[%s0 + $0x5c] sm:$0xf]
  %v31 = vld [vmem:[%s0 + $0x60] sm:$0xff]
  %v32 = vld [vmem:[%s0 + $0x68] sm:$0xf]
  %v33 = vld [vmem:[%s0 + $0x6c] sm:$0xff]
  %v34 = vld [vmem:[%s0 + $0x74] sm:$0xf]
  %v35 = vld [vmem:[%s0 + $0x78] sm:$0xff]
  %v36 = vld [vmem:[%s0 + $0x80] sm:$0xf]
  %v37 = vld [vmem:[%s0 + $0x84] sm:$0xff]
  %v38 = vld [vmem:[%s0 + $0x8c] sm:$0xf]
  %v39 = vld [vmem:[%s0 + $0x90] sm:$0xff]
  %v40 = vld [vmem:[%s0 + $0x98] sm:$0xf]
  %v41 = vld [vmem:[%s0 + $0x9c] sm:$0xff]
  %v42 = vld [vmem:[%s0 + $0xa4] sm:$0xf]
  %v43 = vld [vmem:[%s0 + $0xa8] sm:$0xff]
  %v44 = vld [vmem:[%s0 + $0xb0] sm:$0xf]
  %v45 = vld [vmem:[%s0 + $0xb4] sm:$0xff]
  %v46 = vld [vmem:[%s0 + $0xbc] sm:$0xf]
  %v47 = vld [vmem:[%s0 + $0xc0] sm:$0xff]
  %v48 = vld [vmem:[%s0 + $0xc8] sm:$0xf]
  %v49 = vld [vmem:[%s0 + $0xcc] sm:$0xff]
  %v50 = vld [vmem:[%s0 + $0xd4] sm:$0xf]
  %v51 = vld [vmem:[%s0 + $0xd8] sm:$0xff]
  %v52 = vld [vmem:[%s0 + $0xe0] sm:$0xf]
  %v53 = vld [vmem:[%s0 + $0xe4] sm:$0xff]
  %v54 = vld [vmem:[%s0 + $0xec] sm:$0xf]
  %v55 = vld [vmem:[%s0 + $0xf0] sm:$0xff]
  %v56 = vld [vmem:[%s0 + $0xf8] sm:$0xf]
  %v57 = vld [vmem:[%s0 + $0xfc] sm:$0xff]
  %v58 = vld [vmem:[%s0 + $0x104] sm:$0xf]
  %v59 = vld [vmem:[%s0 + $0x108] sm:$0xff]
  %v60 = vld [vmem:[%s0 + $0x110] sm:$0xf]
  %v61 = vld [vmem:[%s0 + $0x114] sm:$0xff]
  %v62 = vld [vmem:[%s0 + $0x11c] sm:$0xf]
  %v63 = vld [vmem:[%s0 + $0x120] sm:$0xff]
  %v64 = vld [vmem:[%s0 + $0x128] sm:$0xf]
  %v65 = vld [vmem:[%s0 + $0x12c] sm:$0xff]
  %v66 = vld [vmem:[%s0 + $0x134] sm:$0xf]
  %v67 = vld [vmem:[%s0 + $0x138] sm:$0xff]
  %v68 = vld [vmem:[%s0 + $0x140] sm:$0xf]
  %v69 = vld [vmem:[%s0 + $0x144] sm:$0xff]
  %v70 = vld [vmem:[%s0 + $0x14c] sm:$0xf]
  %v71 = vld [vmem:[%s0 + $0x150] sm:$0xff]
  %v72 = vld [vmem:[%s0 + $0x158] sm:$0xf]
  %v73 = vld [vmem:[%s0 + $0x15c] sm:$0xff]
  %v74 = vld [vmem:[%s0 + $0x164] sm:$0xf]
  %v75 = vld [vmem:[%s0 + $0x168] sm:$0xff]
  %v76 = vld [vmem:[%s0 + $0x170] sm:$0xf]
  %v77 = vld [vmem:[%s0 + $0x174] sm:$0xff]
  %v78 = vld [vmem:[%s0 + $0x17c] sm:$0xf]
  %v79 = vld [vmem:[%s0 + $0x180] sm:$0xff]
  %v80 = vld [vmem:[%s0 + $0x188] sm:$0xf]
  %v81 = vld [vmem:[%s0 + $0x18c] sm:$0xff]
  %v82 = vld [vmem:[%s0 + $0x194] sm:$0xf]
  %v83 = vld [vmem:[%s0 + $0x198] sm:$0xff]
  %v84 = vld [vmem:[%s0 + $0x1a0] sm:$0xf]
  %v85 = vld [vmem:[%s0 + $0x1a4] sm:$0xff]
  %v86 = vld [vmem:[%s0 + $0x1ac] sm:$0xf]
  %v87 = vld [vmem:[%s0 + $0x1b0] sm:$0xff]
  %v88 = vld [vmem:[%s0 + $0x1b8] sm:$0xf]
  %v89 = vld [vmem:[%s0 + $0x1bc] sm:$0xff]
  %v90 = vld [vmem:[%s0 + $0x1c4] sm:$0xf]
  %v91 = vld [vmem:[%s0 + $0x1c8] sm:$0xff]
  %v92 = vld [vmem:[%s0 + $0x1d0] sm:$0xf]
  %v93 = vld [vmem:[%s0 + $0x1d4] sm:$0xff]
  %v94 = vld [vmem:[%s0 + $0x1dc] sm:$0xf]
  %v95 = vld [vmem:[%s0 + $0x1e0] sm:$0xff]
  %v96 = vld [vmem:[%s0 + $0x1e8] sm:$0xf]
  %v97 = vld [vmem:[%s0 + $0x1ec] sm:$0xff]
  %v98 = vld [vmem:[%s0 + $0x1f4] sm:$0xf]
  %v99 = vld [vmem:[%s0 + $0x1f8] sm:$0xff]
  %v100 = vld [vmem:[%s0 + $0x200] sm:$0xf]
  %v101 = vld [vmem:[%s0 + $0x204] sm:$0xff]
  %v102 = vld [vmem:[%s0 + $0x20c] sm:$0xf]
  %v103 = vld [vmem:[%s0 + $0x210] sm:$0xff]
  %v104 = vld [vmem:[%s0 + $0x218] sm:$0xf]
  %v105 = vld [vmem:[%s0 + $0x21c] sm:$0xff]
  %v106 = vld [vmem:[%s0 + $0x224] sm:$0xf]
  %v107 = vld [vmem:[%s0 + $0x228] sm:$0xff]
  %v108 = vld [vmem:[%s0 + $0x230] sm:$0xf]
  %v109 = vld [vmem:[%s0 + $0x234] sm:$0xff]
  %v110 = vld [vmem:[%s0 + $0x23c] sm:$0xf]
  %v111 = vld [vmem:[%s0 + $0x240] sm:$0xff]
  %v112 = vld [vmem:[%s0 + $0x248] sm:$0xf]
  %v113 = vld [vmem:[%s0 + $0x24c] sm:$0xff]
  %v114 = vld [vmem:[%s0 + $0x254] sm:$0xf]
  %v115 = vld [vmem:[%s0 + $0x258] sm:$0xff]
  %v116 = vld [vmem:[%s0 + $0x260] sm:$0xf]
  %v117 = vld [vmem:[%s0 + $0x264] sm:$0xff]
  %v118 = vld [vmem:[%s0 + $0x26c] sm:$0xf]
  %v119 = vld [vmem:[%s0 + $0x270] sm:$0xff]
  %v120 = vld [vmem:[%s0 + $0x278] sm:$0xf]
  %v121 = vld [vmem:[%s0 + $0x27c] sm:$0xff]
  %v122 = vld [vmem:[%s0 + $0x284] sm:$0xf]
  %v123 = vld [vmem:[%s0 + $0x288] sm:$0xff]
  %v124 = vld [vmem:[%s0 + $0x290] sm:$0xf]
  %v125 = vld [vmem:[%s0 + $0x294] sm:$0xff]
  %v126 = vld [vmem:[%s0 + $0x29c] sm:$0xf]
  %v127 = vld [vmem:[%s0 + $0x2a0] sm:$0xff]
  %v128 = vld [vmem:[%s0 + $0x2a8] sm:$0xf]
  %v129 = vld [vmem:[%s0 + $0x2ac] sm:$0xff]
  %v130 = vld [vmem:[%s0 + $0x2b4] sm:$0xf]
  %v131 = vld [vmem:[%s0 + $0x2b8] sm:$0xff]
  %v132 = vld [vmem:[%s0 + $0x2c0] sm:$0xf]
  %v133 = vld [vmem:[%s0 + $0x2c4] sm:$0xff]
  %v134 = vld [vmem:[%s0 + $0x2cc] sm:$0xf]
  %v135 = vld [vmem:[%s0 + $0x2d0] sm:$0xff]
  %v136 = vld [vmem:[%s0 + $0x2d8] sm:$0xf]
  %v137 = vld [vmem:[%s0 + $0x2dc] sm:$0xff]
  %v138 = vld [vmem:[%s0 + $0x2e4] sm:$0xf]
  %v139 = vld [vmem:[%s0 + $0x2e8] sm:$0xff]
  %v140 = vld [vmem:[%s0 + $0x2f0] sm:$0xf]
  %v141 = vld [vmem:[%s0 + $0x2f4] sm:$0xff]
  %v142 = vld [vmem:[%s0 + $0x2fc] sm:$0xf]
  %v143 = vld [vmem:[%s1] sm:$0xf]
  %v144 = vld [vmem:[%s1 + $0x4] sm:$0xf]
  %v145 = vld [vmem:[%s1 + $0x8] sm:$0xf]
  %v146 = vld [vmem:[%s1 + $0xc] sm:$0xf]
  %v147 = vld [vmem:[%s1 + $0x10] sm:$0xf]
  %v148 = vld [vmem:[%s1 + $0x14] sm:$0xf]
  %v149 = vld [vmem:[%s1 + $0x18] sm:$0xf]
  %v150 = vld [vmem:[%s1 + $0x1c] sm:$0xf]
  %v151 = vld [vmem:[%s1 + $0x20] sm:$0xf]
  %v152 = vld [vmem:[%s1 + $0x24] sm:$0xf]
  %v153 = vld [vmem:[%s1 + $0x28] sm:$0xf]
  %v154 = vld [vmem:[%s1 + $0x2c] sm:$0xf]
  %v155 = vld [vmem:[%s1 + $0x30] sm:$0xf]
  %v156 = vld [vmem:[%s1 + $0x34] sm:$0xf]
  %v157 = vld [vmem:[%s1 + $0x38] sm:$0xf]
  %v158 = vld [vmem:[%s1 + $0x3c] sm:$0xf]
  %v159 = vld [vmem:[%s1 + $0x40] sm:$0xf]
  %v160 = vld [vmem:[%s1 + $0x44] sm:$0xf]
  %v161 = vld [vmem:[%s1 + $0x48] sm:$0xf]
  %v162 = vld [vmem:[%s1 + $0x4c] sm:$0xf]
  %v163 = vld [vmem:[%s1 + $0x50] sm:$0xf]
  %v164 = vld [vmem:[%s1 + $0x54] sm:$0xf]
  %v165 = vld [vmem:[%s1 + $0x58] sm:$0xf]
  %v166 = vld [vmem:[%s1 + $0x5c] sm:$0xf]
  %v167 = vld [vmem:[%s1 + $0x60] sm:$0xf]
  %v168 = vld [vmem:[%s1 + $0x64] sm:$0xf]
  %v169 = vld [vmem:[%s1 + $0x68] sm:$0xf]
  %v170 = vld [vmem:[%s1 + $0x6c] sm:$0xf]
  %v171 = vld [vmem:[%s1 + $0x70] sm:$0xf]
  %v172 = vld [vmem:[%s1 + $0x74] sm:$0xf]
  %v173 = vld [vmem:[%s1 + $0x78] sm:$0xf]
  %v174 = vld [vmem:[%s1 + $0x7c] sm:$0xf]
  %v175 = vld [vmem:[%s1 + $0x80] sm:$0xf]
  %v176 = vld [vmem:[%s1 + $0x84] sm:$0xf]
  %v177 = vld [vmem:[%s1 + $0x88] sm:$0xf]
  %v178 = vld [vmem:[%s1 + $0x8c] sm:$0xf]
  %v179 = vld [vmem:[%s2] sm:$0x1]
  %v181 = vlaneseq
  %v182 = vshrl.u32 %v181, 7
  %v183 = vsub.s32 0, %v182
  %v184 = vrot.slane %v179, %v183
  %v314 = vunpack.c.l.b16 %v15
  %v315 = vunpack.c.h.b16 %v15
  %v316 = vunpack.c.l.b16 %v16
  %v317 = vunpack.c.l.b16 %v17
  %v318 = vunpack.c.h.b16 %v17
  %v319 = vunpack.c.l.b16 %v18
  %v320 = vunpack.c.l.b16 %v19
  %v321 = vunpack.c.h.b16 %v19
  %v322 = vunpack.c.l.b16 %v20
  %v323 = vunpack.c.l.b16 %v21
  %v324 = vunpack.c.h.b16 %v21
  %v325 = vunpack.c.l.b16 %v22
  %v326 = vunpack.c.l.b16 %v23
  %v327 = vunpack.c.h.b16 %v23
  %v328 = vunpack.c.l.b16 %v24
  %v329 = vunpack.c.l.b16 %v25
  %v330 = vunpack.c.h.b16 %v25
  %v331 = vunpack.c.l.b16 %v26
  %v332 = vunpack.c.l.b16 %v27
  %v333 = vunpack.c.h.b16 %v27
  %v334 = vunpack.c.l.b16 %v28
  %v335 = vunpack.c.l.b16 %v29
  %v336 = vunpack.c.h.b16 %v29
  %v337 = vunpack.c.l.b16 %v30
  %v338 = vunpack.c.l.b16 %v31
  %v339 = vunpack.c.h.b16 %v31
  %v340 = vunpack.c.l.b16 %v32
  %v341 = vunpack.c.l.b16 %v33
  %v342 = vunpack.c.h.b16 %v33
  %v343 = vunpack.c.l.b16 %v34
  %v344 = vunpack.c.l.b16 %v35
  %v345 = vunpack.c.h.b16 %v35
  %v346 = vunpack.c.l.b16 %v36
  %v347 = vunpack.c.l.b16 %v37
  %v348 = vunpack.c.h.b16 %v37
  %v349 = vunpack.c.l.b16 %v38
  %v350 = vunpack.c.l.b16 %v39
  %v351 = vunpack.c.h.b16 %v39
  %v352 = vunpack.c.l.b16 %v40
  %v353 = vunpack.c.l.b16 %v41
  %v354 = vunpack.c.h.b16 %v41
  %v355 = vunpack.c.l.b16 %v42
  %v356 = vunpack.c.l.b16 %v43
  %v357 = vunpack.c.h.b16 %v43
  %v358 = vunpack.c.l.b16 %v44
  %v359 = vunpack.c.l.b16 %v45
  %v360 = vunpack.c.h.b16 %v45
  %v361 = vunpack.c.l.b16 %v46
  %v362 = vunpack.c.l.b16 %v47
  %v363 = vunpack.c.h.b16 %v47
  %v364 = vunpack.c.l.b16 %v48
  %v365 = vunpack.c.l.b16 %v49
  %v366 = vunpack.c.h.b16 %v49
  %v367 = vunpack.c.l.b16 %v50
  %v368 = vunpack.c.l.b16 %v51
  %v369 = vunpack.c.h.b16 %v51
  %v370 = vunpack.c.l.b16 %v52
  %v371 = vunpack.c.l.b16 %v53
  %v372 = vunpack.c.h.b16 %v53
  %v373 = vunpack.c.l.b16 %v54
  %v374 = vunpack.c.l.b16 %v55
  %v375 = vunpack.c.h.b16 %v55
  %v376 = vunpack.c.l.b16 %v56
  %v377 = vunpack.c.l.b16 %v57
  %v378 = vunpack.c.h.b16 %v57
  %v379 = vunpack.c.l.b16 %v58
  %v380 = vunpack.c.l.b16 %v59
  %v381 = vunpack.c.h.b16 %v59
  %v382 = vunpack.c.l.b16 %v60
  %v383 = vunpack.c.l.b16 %v61
  %v384 = vunpack.c.h.b16 %v61
  %v385 = vunpack.c.l.b16 %v62
  %v386 = vunpack.c.l.b16 %v63
  %v387 = vunpack.c.h.b16 %v63
  %v388 = vunpack.c.l.b16 %v64
  %v389 = vunpack.c.l.b16 %v65
  %v390 = vunpack.c.h.b16 %v65
  %v391 = vunpack.c.l.b16 %v66
  %v392 = vunpack.c.l.b16 %v67
  %v393 = vunpack.c.h.b16 %v67
  %v394 = vunpack.c.l.b16 %v68
  %v395 = vunpack.c.l.b16 %v69
  %v396 = vunpack.c.h.b16 %v69
  %v397 = vunpack.c.l.b16 %v70
  %v398 = vunpack.c.l.b16 %v71
  %v399 = vunpack.c.h.b16 %v71
  %v400 = vunpack.c.l.b16 %v72
  %v401 = vunpack.c.l.b16 %v73
  %v402 = vunpack.c.h.b16 %v73
  %v403 = vunpack.c.l.b16 %v74
  %v404 = vunpack.c.l.b16 %v75
  %v405 = vunpack.c.h.b16 %v75
  %v406 = vunpack.c.l.b16 %v76
  %v407 = vunpack.c.l.b16 %v77
  %v408 = vunpack.c.h.b16 %v77
  %v409 = vunpack.c.l.b16 %v78
  %v410 = vunpack.c.l.b16 %v79
  %v411 = vunpack.c.h.b16 %v79
  %v412 = vunpack.c.l.b16 %v80
  %v413 = vunpack.c.l.b16 %v81
  %v414 = vunpack.c.h.b16 %v81
  %v415 = vunpack.c.l.b16 %v82
  %v416 = vunpack.c.l.b16 %v83
  %v417 = vunpack.c.h.b16 %v83
  %v418 = vunpack.c.l.b16 %v84
  %v419 = vunpack.c.l.b16 %v85
  %v420 = vunpack.c.h.b16 %v85
  %v421 = vunpack.c.l.b16 %v86
  %v422 = vunpack.c.l.b16 %v87
  %v423 = vunpack.c.h.b16 %v87
  %v424 = vunpack.c.l.b16 %v88
  %v425 = vunpack.c.l.b16 %v89
  %v426 = vunpack.c.h.b16 %v89
  %v427 = vunpack.c.l.b16 %v90
  %v428 = vunpack.c.l.b16 %v91
  %v429 = vunpack.c.h.b16 %v91
  %v430 = vunpack.c.l.b16 %v92
  %v431 = vunpack.c.l.b16 %v93
  %v432 = vunpack.c.h.b16 %v93
  %v433 = vunpack.c.l.b16 %v94
  %v434 = vunpack.c.l.b16 %v95
  %v435 = vunpack.c.h.b16 %v95
  %v436 = vunpack.c.l.b16 %v96
  %v437 = vunpack.c.l.b16 %v97
  %v438 = vunpack.c.h.b16 %v97
  %v439 = vunpack.c.l.b16 %v98
  %v440 = vunpack.c.l.b16 %v99
  %v441 = vunpack.c.h.b16 %v99
  %v442 = vunpack.c.l.b16 %v100
  %v443 = vunpack.c.l.b16 %v101
  %v444 = vunpack.c.h.b16 %v101
  %v445 = vunpack.c.l.b16 %v102
  %v446 = vunpack.c.l.b16 %v103
  %v447 = vunpack.c.h.b16 %v103
  %v448 = vunpack.c.l.b16 %v104
  %v449 = vunpack.c.l.b16 %v105
  %v450 = vunpack.c.h.b16 %v105
  %v451 = vunpack.c.l.b16 %v106
  %v452 = vunpack.c.l.b16 %v107
  %v453 = vunpack.c.h.b16 %v107
  %v454 = vunpack.c.l.b16 %v108
  %v455 = vunpack.c.l.b16 %v109
  %v456 = vunpack.c.h.b16 %v109
  %v457 = vunpack.c.l.b16 %v110
  %v458 = vunpack.c.l.b16 %v111
  %v459 = vunpack.c.h.b16 %v111
  %v460 = vunpack.c.l.b16 %v112
  %v461 = vunpack.c.l.b16 %v113
  %v462 = vunpack.c.h.b16 %v113
  %v463 = vunpack.c.l.b16 %v114
  %v464 = vunpack.c.l.b16 %v115
  %v465 = vunpack.c.h.b16 %v115
  %v466 = vunpack.c.l.b16 %v116
  %v467 = vunpack.c.l.b16 %v117
  %v468 = vunpack.c.h.b16 %v117
  %v469 = vunpack.c.l.b16 %v118
  %v470 = vunpack.c.l.b16 %v119
  %v471 = vunpack.c.h.b16 %v119
  %v472 = vunpack.c.l.b16 %v120
  %v473 = vunpack.c.l.b16 %v121
  %v474 = vunpack.c.h.b16 %v121
  %v475 = vunpack.c.l.b16 %v122
  %v476 = vunpack.c.l.b16 %v123
  %v477 = vunpack.c.h.b16 %v123
  %v478 = vunpack.c.l.b16 %v124
  %v479 = vunpack.c.l.b16 %v125
  %v480 = vunpack.c.h.b16 %v125
  %v481 = vunpack.c.l.b16 %v126
  %v482 = vunpack.c.l.b16 %v127
  %v483 = vunpack.c.h.b16 %v127
  %v484 = vunpack.c.l.b16 %v128
  %v485 = vunpack.c.l.b16 %v129
  %v486 = vunpack.c.h.b16 %v129
  %v487 = vunpack.c.l.b16 %v130
  %v488 = vunpack.c.l.b16 %v131
  %v489 = vunpack.c.h.b16 %v131
  %v490 = vunpack.c.l.b16 %v132
  %v491 = vunpack.c.l.b16 %v133
  %v492 = vunpack.c.h.b16 %v133
  %v493 = vunpack.c.l.b16 %v134
  %v494 = vunpack.c.l.b16 %v135
  %v495 = vunpack.c.h.b16 %v135
  %v496 = vunpack.c.l.b16 %v136
  %v497 = vunpack.c.l.b16 %v137
  %v498 = vunpack.c.h.b16 %v137
  %v499 = vunpack.c.l.b16 %v138
  %v500 = vunpack.c.l.b16 %v139
  %v501 = vunpack.c.h.b16 %v139
  %v502 = vunpack.c.l.b16 %v140
  %v503 = vunpack.c.l.b16 %v141
  %v504 = vunpack.c.h.b16 %v141
  %v505 = vunpack.c.l.b16 %v142
  %v506 = vpack.c.b16 %v317, %v314
  %v507 = vpack.c.b16 %v318, %v315
  %v508 = vpack.c.b16 %v319, %v316
  %v509 = vpack.c.b16 %v323, %v320
  %v510 = vpack.c.b16 %v324, %v321
  %v511 = vpack.c.b16 %v325, %v322
  %v512 = vpack.c.b16 %v329, %v326
  %v513 = vpack.c.b16 %v330, %v327
  %v514 = vpack.c.b16 %v331, %v328
  %v515 = vpack.c.b16 %v335, %v332
  %v516 = vpack.c.b16 %v336, %v333
  %v517 = vpack.c.b16 %v337, %v334
  %v518 = vpack.c.b16 %v341, %v338
  %v519 = vpack.c.b16 %v342, %v339
  %v520 = vpack.c.b16 %v343, %v340
  %v521 = vpack.c.b16 %v347, %v344
  %v522 = vpack.c.b16 %v348, %v345
  %v523 = vpack.c.b16 %v349, %v346
  %v524 = vpack.c.b16 %v353, %v350
  %v525 = vpack.c.b16 %v354, %v351
  %v526 = vpack.c.b16 %v355, %v352
  %v527 = vpack.c.b16 %v359, %v356
  %v528 = vpack.c.b16 %v360, %v357
  %v529 = vpack.c.b16 %v361, %v358
  %v530 = vpack.c.b16 %v365, %v362
  %v531 = vpack.c.b16 %v366, %v363
  %v532 = vpack.c.b16 %v367, %v364
  %v533 = vpack.c.b16 %v371, %v368
  %v534 = vpack.c.b16 %v372, %v369
  %v535 = vpack.c.b16 %v373, %v370
  %v536 = vpack.c.b16 %v377, %v374
  %v537 = vpack.c.b16 %v378, %v375
  %v538 = vpack.c.b16 %v379, %v376
  %v539 = vpack.c.b16 %v383, %v380
  %v540 = vpack.c.b16 %v384, %v381
  %v541 = vpack.c.b16 %v385, %v382
  %v542 = vpack.c.b16 %v389, %v386
  %v543 = vpack.c.b16 %v390, %v387
  %v544 = vpack.c.b16 %v391, %v388
  %v545 = vpack.c.b16 %v395, %v392
  %v546 = vpack.c.b16 %v396, %v393
  %v547 = vpack.c.b16 %v397, %v394
  %v548 = vpack.c.b16 %v401, %v398
  %v549 = vpack.c.b16 %v402, %v399
  %v550 = vpack.c.b16 %v403, %v400
  %v551 = vpack.c.b16 %v407, %v404
  %v552 = vpack.c.b16 %v408, %v405
  %v553 = vpack.c.b16 %v409, %v406
  %v554 = vpack.c.b16 %v413, %v410
  %v555 = vpack.c.b16 %v414, %v411
  %v556 = vpack.c.b16 %v415, %v412
  %v557 = vpack.c.b16 %v419, %v416
  %v558 = vpack.c.b16 %v420, %v417
  %v559 = vpack.c.b16 %v421, %v418
  %v560 = vpack.c.b16 %v425, %v422
  %v561 = vpack.c.b16 %v426, %v423
  %v562 = vpack.c.b16 %v427, %v424
  %v563 = vpack.c.b16 %v431, %v428
  %v564 = vpack.c.b16 %v432, %v429
  %v565 = vpack.c.b16 %v433, %v430
  %v566 = vpack.c.b16 %v437, %v434
  %v567 = vpack.c.b16 %v438, %v435
  %v568 = vpack.c.b16 %v439, %v436
  %v569 = vpack.c.b16 %v443, %v440
  %v570 = vpack.c.b16 %v444, %v441
  %v571 = vpack.c.b16 %v445, %v442
  %v572 = vpack.c.b16 %v449, %v446
  %v573 = vpack.c.b16 %v450, %v447
  %v574 = vpack.c.b16 %v451, %v448
  %v575 = vpack.c.b16 %v455, %v452
  %v576 = vpack.c.b16 %v456, %v453
  %v577 = vpack.c.b16 %v457, %v454
  %v578 = vpack.c.b16 %v461, %v458
  %v579 = vpack.c.b16 %v462, %v459
  %v580 = vpack.c.b16 %v463, %v460
  %v581 = vpack.c.b16 %v467, %v464
  %v582 = vpack.c.b16 %v468, %v465
  %v583 = vpack.c.b16 %v469, %v466
  %v584 = vpack.c.b16 %v473, %v470
  %v585 = vpack.c.b16 %v474, %v471
  %v586 = vpack.c.b16 %v475, %v472
  %v587 = vpack.c.b16 %v479, %v476
  %v588 = vpack.c.b16 %v480, %v477
  %v589 = vpack.c.b16 %v481, %v478
  %v590 = vpack.c.b16 %v485, %v482
  %v591 = vpack.c.b16 %v486, %v483
  %v592 = vpack.c.b16 %v487, %v484
  %v593 = vpack.c.b16 %v491, %v488
  %v594 = vpack.c.b16 %v492, %v489
  %v595 = vpack.c.b16 %v493, %v490
  %v596 = vpack.c.b16 %v497, %v494
  %v597 = vpack.c.b16 %v498, %v495
  %v598 = vpack.c.b16 %v499, %v496
  %v599 = vpack.c.b16 %v503, %v500
  %v600 = vpack.c.b16 %v504, %v501
  %v601 = vpack.c.b16 %v505, %v502
  %v702 = vunpack.c.l.b16 %v143
  %v703 = vunpack.c.l.b16 %v144
  %v704 = vunpack.c.l.b16 %v145
  %v705 = vunpack.c.l.b16 %v146
  %v706 = vunpack.c.l.b16 %v147
  %v707 = vunpack.c.l.b16 %v148
  %v708 = vunpack.c.l.b16 %v149
  %v709 = vunpack.c.l.b16 %v150
  %v710 = vunpack.c.l.b16 %v151
  %v711 = vunpack.c.l.b16 %v152
  %v712 = vunpack.c.l.b16 %v153
  %v713 = vunpack.c.l.b16 %v154
  %v714 = vunpack.c.l.b16 %v155
  %v715 = vunpack.c.l.b16 %v156
  %v716 = vunpack.c.l.b16 %v157
  %v717 = vunpack.c.l.b16 %v158
  %v718 = vunpack.c.l.b16 %v159
  %v719 = vunpack.c.l.b16 %v160
  %v720 = vunpack.c.l.b16 %v161
  %v721 = vunpack.c.l.b16 %v162
  %v722 = vunpack.c.l.b16 %v163
  %v723 = vunpack.c.l.b16 %v164
  %v724 = vunpack.c.l.b16 %v165
  %v725 = vunpack.c.l.b16 %v166
  %v726 = vunpack.c.l.b16 %v167
  %v727 = vunpack.c.l.b16 %v168
  %v728 = vunpack.c.l.b16 %v169
  %v729 = vunpack.c.l.b16 %v170
  %v730 = vunpack.c.l.b16 %v171
  %v731 = vunpack.c.l.b16 %v172
  %v732 = vunpack.c.l.b16 %v173
  %v733 = vunpack.c.l.b16 %v174
  %v734 = vunpack.c.l.b16 %v175
  %v735 = vunpack.c.l.b16 %v176
  %v736 = vunpack.c.l.b16 %v177
  %v737 = vunpack.c.l.b16 %v178
  %v738 = vpack.c.b16 %v703, %v702
  %v739 = vpack.c.b16 %v705, %v704
  %v740 = vpack.c.b16 %v707, %v706
  %v741 = vpack.c.b16 %v709, %v708
  %v742 = vpack.c.b16 %v711, %v710
  %v743 = vpack.c.b16 %v713, %v712
  %v744 = vpack.c.b16 %v715, %v714
  %v745 = vpack.c.b16 %v717, %v716
  %v746 = vpack.c.b16 %v719, %v718
  %v747 = vpack.c.b16 %v721, %v720
  %v748 = vpack.c.b16 %v723, %v722
  %v749 = vpack.c.b16 %v725, %v724
  %v750 = vpack.c.b16 %v727, %v726
  %v751 = vpack.c.b16 %v729, %v728
  %v752 = vpack.c.b16 %v731, %v730
  %v753 = vpack.c.b16 %v733, %v732
  %v754 = vpack.c.b16 %v735, %v734
  %v755 = vpack.c.b16 %v737, %v736
  %vm774 = vcmask 261120
  %v776 = vsel %vm774, %v508, 0
  %v779 = vsel %vm774, %v511, 0
  %v782 = vsel %vm774, %v514, 0
  %v785 = vsel %vm774, %v517, 0
  %v788 = vsel %vm774, %v520, 0
  %v791 = vsel %vm774, %v523, 0
  %v794 = vsel %vm774, %v526, 0
  %v797 = vsel %vm774, %v529, 0
  %v800 = vsel %vm774, %v532, 0
  %v803 = vsel %vm774, %v535, 0
  %v806 = vsel %vm774, %v538, 0
  %v809 = vsel %vm774, %v541, 0
  %v812 = vsel %vm774, %v544, 0
  %v815 = vsel %vm774, %v547, 0
  %v818 = vsel %vm774, %v550, 0
  %v821 = vsel %vm774, %v553, 0
  %v824 = vsel %vm774, %v556, 0
  %v827 = vsel %vm774, %v559, 0
  %v830 = vsel %vm774, %v562, 0
  %v833 = vsel %vm774, %v565, 0
  %v836 = vsel %vm774, %v568, 0
  %v839 = vsel %vm774, %v571, 0
  %v842 = vsel %vm774, %v574, 0
  %v845 = vsel %vm774, %v577, 0
  %v848 = vsel %vm774, %v580, 0
  %v851 = vsel %vm774, %v583, 0
  %v854 = vsel %vm774, %v586, 0
  %v857 = vsel %vm774, %v589, 0
  %v860 = vsel %vm774, %v592, 0
  %v863 = vsel %vm774, %v595, 0
  %v866 = vsel %vm774, %v598, 0
  %v869 = vsel %vm774, %v601, 0
  %871 = vmatprep.subr.bf16.mxu0 0
  %872 = vmatpush1.bf16.msra.mxu0 %v745
  %873 = vmatprep.subr.bf16.mxu0 0
  %874 = vmatpush1.bf16.msra.mxu0 %v744
  %875 = vmatprep.subr.bf16.mxu0 0
  %876 = vmatpush1.bf16.msra.mxu0 %v743
  %877 = vmatprep.subr.bf16.mxu0 0
  %878 = vmatpush1.bf16.msra.mxu0 %v742
  %879 = vmatprep.subr.bf16.mxu0 0
  %880 = vmatpush1.bf16.msra.mxu0 %v741
  %881 = vmatprep.subr.bf16.mxu0 0
  %882 = vmatpush1.bf16.msra.mxu0 %v740
  %883 = vmatprep.subr.bf16.mxu0 0
  %884 = vmatpush1.bf16.msra.mxu0 %v739
  %885 = vmatprep.subr.bf16.mxu0 0
  %886 = vmatpush1.bf16.msra.mxu0 %v738
  %887 = vmatprep.subr.bf16.mxu0 0
  %888 = vmatpush2.bf16.msra.mxu0 %v753
  %889 = vmatprep.subr.bf16.mxu0 0
  %890 = vmatpush2.bf16.msra.mxu0 %v752
  %891 = vmatprep.subr.bf16.mxu0 0
  %892 = vmatpush2.bf16.msra.mxu0 %v751
  %893 = vmatprep.subr.bf16.mxu0 0
  %894 = vmatpush2.bf16.msra.mxu0 %v750
  %895 = vmatprep.subr.bf16.mxu0 0
  %896 = vmatpush2.bf16.msra.mxu0 %v749
  %897 = vmatprep.subr.bf16.mxu0 0
  %898 = vmatpush2.bf16.msra.mxu0 %v748
  %899 = vmatprep.subr.bf16.mxu0 0
  %900 = vmatpush2.bf16.msra.mxu0 %v747
  %901 = vmatprep.subr.bf16.mxu0 0
  %902 = vmatpush2.bf16.msra.mxu0 %v746
  %903 = vmatprep.mubr.bf16.mxu0 %v507
  %904 = vmatmul.mubr.bf16.gmra.mxu0 %v506
  %v905 = vpop.f32.mrf.mxu0
  %v906 = vadd.f32 %v184, %v905
  %v907 = vpop.f32.mrf.mxu0
  %v908 = vpop.f32.mrf.mxu0
  %v909 = vadd.f32 %v184, %v908
  %v910 = vpop.f32.mrf.mxu0
  %911 = vmatprep.mubr.bf16.mxu0 %v510
  %912 = vmatmul.mubr.bf16.gmra.mxu0 %v509
  %v913 = vpop.f32.mrf.mxu0
  %v914 = vadd.f32 %v184, %v913
  %v915 = vpop.f32.mrf.mxu0
  %v916 = vpop.f32.mrf.mxu0
  %v917 = vadd.f32 %v184, %v916
  %v918 = vpop.f32.mrf.mxu0
  %919 = vmatprep.mubr.bf16.mxu0 %v513
  %920 = vmatmul.mubr.bf16.gmra.mxu0 %v512
  %v921 = vpop.f32.mrf.mxu0
  %v922 = vadd.f32 %v184, %v921
  %v923 = vpop.f32.mrf.mxu0
  %v924 = vpop.f32.mrf.mxu0
  %v925 = vadd.f32 %v184, %v924
  %v926 = vpop.f32.mrf.mxu0
  %927 = vmatprep.mubr.bf16.mxu0 %v516
  %928 = vmatmul.mubr.bf16.gmra.mxu0 %v515
  %v929 = vpop.f32.mrf.mxu0
  %v930 = vadd.f32 %v184, %v929
  %v931 = vpop.f32.mrf.mxu0
  %v932 = vpop.f32.mrf.mxu0
  %v933 = vadd.f32 %v184, %v932
  %v934 = vpop.f32.mrf.mxu0
  %935 = vmatprep.mubr.bf16.mxu0 %v519
  %936 = vmatmul.mubr.bf16.gmra.mxu0 %v518
  %v937 = vpop.f32.mrf.mxu0
  %v938 = vadd.f32 %v184, %v937
  %v939 = vpop.f32.mrf.mxu0
  %v940 = vpop.f32.mrf.mxu0
  %v941 = vadd.f32 %v184, %v940
  %v942 = vpop.f32.mrf.mxu0
  %943 = vmatprep.mubr.bf16.mxu0 %v522
  %944 = vmatmul.mubr.bf16.gmra.mxu0 %v521
  %v945 = vpop.f32.mrf.mxu0
  %v946 = vadd.f32 %v184, %v945
  %v947 = vpop.f32.mrf.mxu0
  %v948 = vpop.f32.mrf.mxu0
  %v949 = vadd.f32 %v184, %v948
  %v950 = vpop.f32.mrf.mxu0
  %951 = vmatprep.mubr.bf16.mxu0 %v525
  %952 = vmatmul.mubr.bf16.gmra.mxu0 %v524
  %v953 = vpop.f32.mrf.mxu0
  %v954 = vadd.f32 %v184, %v953
  %v955 = vpop.f32.mrf.mxu0
  %v956 = vpop.f32.mrf.mxu0
  %v957 = vadd.f32 %v184, %v956
  %v958 = vpop.f32.mrf.mxu0
  %959 = vmatprep.mubr.bf16.mxu0 %v528
  %960 = vmatmul.mubr.bf16.gmra.mxu0 %v527
  %v961 = vpop.f32.mrf.mxu0
  %v962 = vadd.f32 %v184, %v961
  %v963 = vpop.f32.mrf.mxu0
  %v964 = vpop.f32.mrf.mxu0
  %v965 = vadd.f32 %v184, %v964
  %v966 = vpop.f32.mrf.mxu0
  %967 = vmatprep.mubr.bf16.mxu0 %v531
  %968 = vmatmul.mubr.bf16.gmra.mxu0 %v530
  %v969 = vpop.f32.mrf.mxu0
  %v970 = vadd.f32 %v184, %v969
  %v971 = vpop.f32.mrf.mxu0
  %v972 = vpop.f32.mrf.mxu0
  %v973 = vadd.f32 %v184, %v972
  %v974 = vpop.f32.mrf.mxu0
  %975 = vmatprep.mubr.bf16.mxu0 %v534
  %976 = vmatmul.mubr.bf16.gmra.mxu0 %v533
  %v977 = vpop.f32.mrf.mxu0
  %v978 = vadd.f32 %v184, %v977
  %v979 = vpop.f32.mrf.mxu0
  %v980 = vpop.f32.mrf.mxu0
  %v981 = vadd.f32 %v184, %v980
  %v982 = vpop.f32.mrf.mxu0
  %983 = vmatprep.mubr.bf16.mxu0 %v537
  %984 = vmatmul.mubr.bf16.gmra.mxu0 %v536
  %v985 = vpop.f32.mrf.mxu0
  %v986 = vadd.f32 %v184, %v985
  %v987 = vpop.f32.mrf.mxu0
  %v988 = vpop.f32.mrf.mxu0
  %v989 = vadd.f32 %v184, %v988
  %v990 = vpop.f32.mrf.mxu0
  %991 = vmatprep.mubr.bf16.mxu0 %v540
  %992 = vmatmul.mubr.bf16.gmra.mxu0 %v539
  %v993 = vpop.f32.mrf.mxu0
  %v994 = vadd.f32 %v184, %v993
  %v995 = vpop.f32.mrf.mxu0
  %v996 = vpop.f32.mrf.mxu0
  %v997 = vadd.f32 %v184, %v996
  %v998 = vpop.f32.mrf.mxu0
  %999 = vmatprep.mubr.bf16.mxu0 %v543
  %1000 = vmatmul.mubr.bf16.gmra.mxu0 %v542
  %v1001 = vpop.f32.mrf.mxu0
  %v1002 = vadd.f32 %v184, %v1001
  %v1003 = vpop.f32.mrf.mxu0
  %v1004 = vpop.f32.mrf.mxu0
  %v1005 = vadd.f32 %v184, %v1004
  %v1006 = vpop.f32.mrf.mxu0
  %1007 = vmatprep.mubr.bf16.mxu0 %v546
  %1008 = vmatmul.mubr.bf16.gmra.mxu0 %v545
  %v1009 = vpop.f32.mrf.mxu0
  %v1010 = vadd.f32 %v184, %v1009
  %v1011 = vpop.f32.mrf.mxu0
  %v1012 = vpop.f32.mrf.mxu0
  %v1013 = vadd.f32 %v184, %v1012
  %v1014 = vpop.f32.mrf.mxu0
  %1015 = vmatprep.mubr.bf16.mxu0 %v549
  %1016 = vmatmul.mubr.bf16.gmra.mxu0 %v548
  %v1017 = vpop.f32.mrf.mxu0
  %v1018 = vadd.f32 %v184, %v1017
  %v1019 = vpop.f32.mrf.mxu0
  %v1020 = vpop.f32.mrf.mxu0
  %v1021 = vadd.f32 %v184, %v1020
  %v1022 = vpop.f32.mrf.mxu0
  %1023 = vmatprep.mubr.bf16.mxu0 %v552
  %1024 = vmatmul.mubr.bf16.gmra.mxu0 %v551
  %v1025 = vpop.f32.mrf.mxu0
  %v1026 = vadd.f32 %v184, %v1025
  %v1027 = vpop.f32.mrf.mxu0
  %v1028 = vpop.f32.mrf.mxu0
  %v1029 = vadd.f32 %v184, %v1028
  %v1030 = vpop.f32.mrf.mxu0
  %1031 = vmatprep.mubr.bf16.mxu0 %v555
  %1032 = vmatmul.mubr.bf16.gmra.mxu0 %v554
  %v1033 = vpop.f32.mrf.mxu0
  %v1034 = vadd.f32 %v184, %v1033
  %v1035 = vpop.f32.mrf.mxu0
  %v1036 = vpop.f32.mrf.mxu0
  %v1037 = vadd.f32 %v184, %v1036
  %v1038 = vpop.f32.mrf.mxu0
  %1039 = vmatprep.mubr.bf16.mxu0 %v558
  %1040 = vmatmul.mubr.bf16.gmra.mxu0 %v557
  %v1041 = vpop.f32.mrf.mxu0
  %v1042 = vadd.f32 %v184, %v1041
  %v1043 = vpop.f32.mrf.mxu0
  %v1044 = vpop.f32.mrf.mxu0
  %v1045 = vadd.f32 %v184, %v1044
  %v1046 = vpop.f32.mrf.mxu0
  %1047 = vmatprep.mubr.bf16.mxu0 %v561
  %1048 = vmatmul.mubr.bf16.gmra.mxu0 %v560
  %v1049 = vpop.f32.mrf.mxu0
  %v1050 = vadd.f32 %v184, %v1049
  %v1051 = vpop.f32.mrf.mxu0
  %v1052 = vpop.f32.mrf.mxu0
  %v1053 = vadd.f32 %v184, %v1052
  %v1054 = vpop.f32.mrf.mxu0
  %1055 = vmatprep.mubr.bf16.mxu0 %v564
  %1056 = vmatmul.mubr.bf16.gmra.mxu0 %v563
  %v1057 = vpop.f32.mrf.mxu0
  %v1058 = vadd.f32 %v184, %v1057
  %v1059 = vpop.f32.mrf.mxu0
  %v1060 = vpop.f32.mrf.mxu0
  %v1061 = vadd.f32 %v184, %v1060
  %v1062 = vpop.f32.mrf.mxu0
  %1063 = vmatprep.mubr.bf16.mxu0 %v567
  %1064 = vmatmul.mubr.bf16.gmra.mxu0 %v566
  %v1065 = vpop.f32.mrf.mxu0
  %v1066 = vadd.f32 %v184, %v1065
  %v1067 = vpop.f32.mrf.mxu0
  %v1068 = vpop.f32.mrf.mxu0
  %v1069 = vadd.f32 %v184, %v1068
  %v1070 = vpop.f32.mrf.mxu0
  %1071 = vmatprep.mubr.bf16.mxu0 %v570
  %1072 = vmatmul.mubr.bf16.gmra.mxu0 %v569
  %v1073 = vpop.f32.mrf.mxu0
  %v1074 = vadd.f32 %v184, %v1073
  %v1075 = vpop.f32.mrf.mxu0
  %v1076 = vpop.f32.mrf.mxu0
  %v1077 = vadd.f32 %v184, %v1076
  %v1078 = vpop.f32.mrf.mxu0
  %1079 = vmatprep.mubr.bf16.mxu0 %v573
  %1080 = vmatmul.mubr.bf16.gmra.mxu0 %v572
  %v1081 = vpop.f32.mrf.mxu0
  %v1082 = vadd.f32 %v184, %v1081
  %v1083 = vpop.f32.mrf.mxu0
  %v1084 = vpop.f32.mrf.mxu0
  %v1085 = vadd.f32 %v184, %v1084
  %v1086 = vpop.f32.mrf.mxu0
  %1087 = vmatprep.mubr.bf16.mxu0 %v576
  %1088 = vmatmul.mubr.bf16.gmra.mxu0 %v575
  %v1089 = vpop.f32.mrf.mxu0
  %v1090 = vadd.f32 %v184, %v1089
  %v1091 = vpop.f32.mrf.mxu0
  %v1092 = vpop.f32.mrf.mxu0
  %v1093 = vadd.f32 %v184, %v1092
  %v1094 = vpop.f32.mrf.mxu0
  %1095 = vmatprep.mubr.bf16.mxu0 %v579
  %1096 = vmatmul.mubr.bf16.gmra.mxu0 %v578
  %v1097 = vpop.f32.mrf.mxu0
  %v1098 = vadd.f32 %v184, %v1097
  %v1099 = vpop.f32.mrf.mxu0
  %v1100 = vpop.f32.mrf.mxu0
  %v1101 = vadd.f32 %v184, %v1100
  %v1102 = vpop.f32.mrf.mxu0
  %1103 = vmatprep.mubr.bf16.mxu0 %v582
  %1104 = vmatmul.mubr.bf16.gmra.mxu0 %v581
  %v1105 = vpop.f32.mrf.mxu0
  %v1106 = vadd.f32 %v184, %v1105
  %v1107 = vpop.f32.mrf.mxu0
  %v1108 = vpop.f32.mrf.mxu0
  %v1109 = vadd.f32 %v184, %v1108
  %v1110 = vpop.f32.mrf.mxu0
  %1111 = vmatprep.mubr.bf16.mxu0 %v585
  %1112 = vmatmul.mubr.bf16.gmra.mxu0 %v584
  %v1113 = vpop.f32.mrf.mxu0
  %v1114 = vadd.f32 %v184, %v1113
  %v1115 = vpop.f32.mrf.mxu0
  %v1116 = vpop.f32.mrf.mxu0
  %v1117 = vadd.f32 %v184, %v1116
  %v1118 = vpop.f32.mrf.mxu0
  %1119 = vmatprep.mubr.bf16.mxu0 %v588
  %1120 = vmatmul.mubr.bf16.gmra.mxu0 %v587
  %v1121 = vpop.f32.mrf.mxu0
  %v1122 = vadd.f32 %v184, %v1121
  %v1123 = vpop.f32.mrf.mxu0
  %v1124 = vpop.f32.mrf.mxu0
  %v1125 = vadd.f32 %v184, %v1124
  %v1126 = vpop.f32.mrf.mxu0
  %1127 = vmatprep.mubr.bf16.mxu0 %v591
  %1128 = vmatmul.mubr.bf16.gmra.mxu0 %v590
  %v1129 = vpop.f32.mrf.mxu0
  %v1130 = vadd.f32 %v184, %v1129
  %v1131 = vpop.f32.mrf.mxu0
  %v1132 = vpop.f32.mrf.mxu0
  %v1133 = vadd.f32 %v184, %v1132
  %v1134 = vpop.f32.mrf.mxu0
  %1135 = vmatprep.mubr.bf16.mxu0 %v594
  %1136 = vmatmul.mubr.bf16.gmra.mxu0 %v593
  %v1137 = vpop.f32.mrf.mxu0
  %v1138 = vadd.f32 %v184, %v1137
  %v1139 = vpop.f32.mrf.mxu0
  %v1140 = vpop.f32.mrf.mxu0
  %v1141 = vadd.f32 %v184, %v1140
  %v1142 = vpop.f32.mrf.mxu0
  %1143 = vmatprep.mubr.bf16.mxu0 %v597
  %1144 = vmatmul.mubr.bf16.gmra.mxu0 %v596
  %v1145 = vpop.f32.mrf.mxu0
  %v1146 = vadd.f32 %v184, %v1145
  %v1147 = vpop.f32.mrf.mxu0
  %v1148 = vpop.f32.mrf.mxu0
  %v1149 = vadd.f32 %v184, %v1148
  %v1150 = vpop.f32.mrf.mxu0
  %1151 = vmatprep.mubr.bf16.mxu0 %v600
  %1152 = vmatmul.mubr.bf16.gmra.mxu0 %v599
  %v1153 = vpop.f32.mrf.mxu0
  %v1154 = vadd.f32 %v184, %v1153
  %v1155 = vpop.f32.mrf.mxu0
  %v1156 = vpop.f32.mrf.mxu0
  %v1157 = vadd.f32 %v184, %v1156
  %v1158 = vpop.f32.mrf.mxu0
  %1159 = vdwg.mxu0
  %1160 = vmatprep.subr.bf16.mxu0 0
  %1161 = vmatpush1.bf16.msra.mxu0 0
  %1162 = vmatprep.subr.bf16.mxu0 0
  %1163 = vmatpush1.bf16.msra.mxu0 0
  %1164 = vmatprep.subr.bf16.mxu0 0
  %1165 = vmatpush1.bf16.msra.mxu0 0
  %1166 = vmatprep.subr.bf16.mxu0 0
  %1167 = vmatpush1.bf16.msra.mxu0 0
  %1168 = vmatprep.subr.bf16.mxu0 0
  %1169 = vmatpush1.bf16.msra.mxu0 0
  %1170 = vmatprep.subr.bf16.mxu0 0
  %1171 = vmatpush1.bf16.msra.mxu0 0
  %1172 = vmatprep.subr.bf16.mxu0 0
  %1173 = vmatpush1.bf16.msra.mxu0 %v755
  %1174 = vmatprep.subr.bf16.mxu0 0
  %1175 = vmatpush1.bf16.msra.mxu0 %v754
  %1176 = vmatprep.subr.bf16.mxu0 0
  %1177 = vmatpush2.bf16.msra.mxu0 0
  %1178 = vmatprep.subr.bf16.mxu0 0
  %1179 = vmatpush2.bf16.msra.mxu0 0
  %1180 = vmatprep.subr.bf16.mxu0 0
  %1181 = vmatpush2.bf16.msra.mxu0 0
  %1182 = vmatprep.subr.bf16.mxu0 0
  %1183 = vmatpush2.bf16.msra.mxu0 0
  %1184 = vmatprep.subr.bf16.mxu0 0
  %1185 = vmatpush2.bf16.msra.mxu0 0
  %1186 = vmatprep.subr.bf16.mxu0 0
  %1187 = vmatpush2.bf16.msra.mxu0 0
  %1188 = vmatprep.subr.bf16.mxu0 0
  %1189 = vmatpush2.bf16.msra.mxu0 0
  %1190 = vmatprep.subr.bf16.mxu0 0
  %1191 = vmatpush2.bf16.msra.mxu0 0
  %1192 = vmatprep.mubr.bf16.mxu0 0
  %1193 = vmatmul.mubr.bf16.gmra.mxu0 %v776
  %v1194 = vpop.f32.mrf.mxu0
  %v1195 = vadd.f32 %v906, %v1194
  %v1196 = vpop.f32.mrf.mxu0
  %v1197 = vpop.f32.mrf.mxu0
  %v1198 = vadd.f32 %v909, %v1197
  %v1199 = vpop.f32.mrf.mxu0
  %1200 = vmatprep.mubr.bf16.mxu0 0
  %1201 = vmatmul.mubr.bf16.gmra.mxu0 %v779
  %v1202 = vpop.f32.mrf.mxu0
  %v1203 = vadd.f32 %v914, %v1202
  %v1204 = vpop.f32.mrf.mxu0
  %v1205 = vpop.f32.mrf.mxu0
  %v1206 = vadd.f32 %v917, %v1205
  %v1207 = vpop.f32.mrf.mxu0
  %1208 = vmatprep.mubr.bf16.mxu0 0
  %1209 = vmatmul.mubr.bf16.gmra.mxu0 %v782
  %v1210 = vpop.f32.mrf.mxu0
  %v1211 = vadd.f32 %v922, %v1210
  %v1212 = vpop.f32.mrf.mxu0
  %v1213 = vpop.f32.mrf.mxu0
  %v1214 = vadd.f32 %v925, %v1213
  %v1215 = vpop.f32.mrf.mxu0
  %1216 = vmatprep.mubr.bf16.mxu0 0
  %1217 = vmatmul.mubr.bf16.gmra.mxu0 %v785
  %v1218 = vpop.f32.mrf.mxu0
  %v1219 = vadd.f32 %v930, %v1218
  %v1220 = vpop.f32.mrf.mxu0
  %v1221 = vpop.f32.mrf.mxu0
  %v1222 = vadd.f32 %v933, %v1221
  %v1223 = vpop.f32.mrf.mxu0
  %1224 = vmatprep.mubr.bf16.mxu0 0
  %1225 = vmatmul.mubr.bf16.gmra.mxu0 %v788
  %v1226 = vpop.f32.mrf.mxu0
  %v1227 = vadd.f32 %v938, %v1226
  %v1228 = vpop.f32.mrf.mxu0
  %v1229 = vpop.f32.mrf.mxu0
  %v1230 = vadd.f32 %v941, %v1229
  %v1231 = vpop.f32.mrf.mxu0
  %1232 = vmatprep.mubr.bf16.mxu0 0
  %1233 = vmatmul.mubr.bf16.gmra.mxu0 %v791
  %v1234 = vpop.f32.mrf.mxu0
  %v1235 = vadd.f32 %v946, %v1234
  %v1236 = vpop.f32.mrf.mxu0
  %v1237 = vpop.f32.mrf.mxu0
  %v1238 = vadd.f32 %v949, %v1237
  %v1239 = vpop.f32.mrf.mxu0
  %1240 = vmatprep.mubr.bf16.mxu0 0
  %1241 = vmatmul.mubr.bf16.gmra.mxu0 %v794
  %v1242 = vpop.f32.mrf.mxu0
  %v1243 = vadd.f32 %v954, %v1242
  %v1244 = vpop.f32.mrf.mxu0
  %v1245 = vpop.f32.mrf.mxu0
  %v1246 = vadd.f32 %v957, %v1245
  %v1247 = vpop.f32.mrf.mxu0
  %1248 = vmatprep.mubr.bf16.mxu0 0
  %1249 = vmatmul.mubr.bf16.gmra.mxu0 %v797
  %v1250 = vpop.f32.mrf.mxu0
  %v1251 = vadd.f32 %v962, %v1250
  %v1252 = vpop.f32.mrf.mxu0
  %v1253 = vpop.f32.mrf.mxu0
  %v1254 = vadd.f32 %v965, %v1253
  %v1255 = vpop.f32.mrf.mxu0
  %1256 = vmatprep.mubr.bf16.mxu0 0
  %1257 = vmatmul.mubr.bf16.gmra.mxu0 %v800
  %v1258 = vpop.f32.mrf.mxu0
  %v1259 = vadd.f32 %v970, %v1258
  %v1260 = vpop.f32.mrf.mxu0
  %v1261 = vpop.f32.mrf.mxu0
  %v1262 = vadd.f32 %v973, %v1261
  %v1263 = vpop.f32.mrf.mxu0
  %1264 = vmatprep.mubr.bf16.mxu0 0
  %1265 = vmatmul.mubr.bf16.gmra.mxu0 %v803
  %v1266 = vpop.f32.mrf.mxu0
  %v1267 = vadd.f32 %v978, %v1266
  %v1268 = vpop.f32.mrf.mxu0
  %v1269 = vpop.f32.mrf.mxu0
  %v1270 = vadd.f32 %v981, %v1269
  %v1271 = vpop.f32.mrf.mxu0
  %1272 = vmatprep.mubr.bf16.mxu0 0
  %1273 = vmatmul.mubr.bf16.gmra.mxu0 %v806
  %v1274 = vpop.f32.mrf.mxu0
  %v1275 = vadd.f32 %v986, %v1274
  %v1276 = vpop.f32.mrf.mxu0
  %v1277 = vpop.f32.mrf.mxu0
  %v1278 = vadd.f32 %v989, %v1277
  %v1279 = vpop.f32.mrf.mxu0
  %1280 = vmatprep.mubr.bf16.mxu0 0
  %1281 = vmatmul.mubr.bf16.gmra.mxu0 %v809
  %v1282 = vpop.f32.mrf.mxu0
  %v1283 = vadd.f32 %v994, %v1282
  %v1284 = vpop.f32.mrf.mxu0
  %v1285 = vpop.f32.mrf.mxu0
  %v1286 = vadd.f32 %v997, %v1285
  %v1287 = vpop.f32.mrf.mxu0
  %1288 = vmatprep.mubr.bf16.mxu0 0
  %1289 = vmatmul.mubr.bf16.gmra.mxu0 %v812
  %v1290 = vpop.f32.mrf.mxu0
  %v1291 = vadd.f32 %v1002, %v1290
  %v1292 = vpop.f32.mrf.mxu0
  %v1293 = vpop.f32.mrf.mxu0
  %v1294 = vadd.f32 %v1005, %v1293
  %v1295 = vpop.f32.mrf.mxu0
  %1296 = vmatprep.mubr.bf16.mxu0 0
  %1297 = vmatmul.mubr.bf16.gmra.mxu0 %v815
  %v1298 = vpop.f32.mrf.mxu0
  %v1299 = vadd.f32 %v1010, %v1298
  %v1300 = vpop.f32.mrf.mxu0
  %v1301 = vpop.f32.mrf.mxu0
  %v1302 = vadd.f32 %v1013, %v1301
  %v1303 = vpop.f32.mrf.mxu0
  %1304 = vmatprep.mubr.bf16.mxu0 0
  %1305 = vmatmul.mubr.bf16.gmra.mxu0 %v818
  %v1306 = vpop.f32.mrf.mxu0
  %v1307 = vadd.f32 %v1018, %v1306
  %v1308 = vpop.f32.mrf.mxu0
  %v1309 = vpop.f32.mrf.mxu0
  %v1310 = vadd.f32 %v1021, %v1309
  %v1311 = vpop.f32.mrf.mxu0
  %1312 = vmatprep.mubr.bf16.mxu0 0
  %1313 = vmatmul.mubr.bf16.gmra.mxu0 %v821
  %v1314 = vpop.f32.mrf.mxu0
  %v1315 = vadd.f32 %v1026, %v1314
  %v1316 = vpop.f32.mrf.mxu0
  %v1317 = vpop.f32.mrf.mxu0
  %v1318 = vadd.f32 %v1029, %v1317
  %v1319 = vpop.f32.mrf.mxu0
  %1320 = vmatprep.mubr.bf16.mxu0 0
  %1321 = vmatmul.mubr.bf16.gmra.mxu0 %v824
  %v1322 = vpop.f32.mrf.mxu0
  %v1323 = vadd.f32 %v1034, %v1322
  %v1324 = vpop.f32.mrf.mxu0
  %v1325 = vpop.f32.mrf.mxu0
  %v1326 = vadd.f32 %v1037, %v1325
  %v1327 = vpop.f32.mrf.mxu0
  %1328 = vmatprep.mubr.bf16.mxu0 0
  %1329 = vmatmul.mubr.bf16.gmra.mxu0 %v827
  %v1330 = vpop.f32.mrf.mxu0
  %v1331 = vadd.f32 %v1042, %v1330
  %v1332 = vpop.f32.mrf.mxu0
  %v1333 = vpop.f32.mrf.mxu0
  %v1334 = vadd.f32 %v1045, %v1333
  %v1335 = vpop.f32.mrf.mxu0
  %1336 = vmatprep.mubr.bf16.mxu0 0
  %1337 = vmatmul.mubr.bf16.gmra.mxu0 %v830
  %v1338 = vpop.f32.mrf.mxu0
  %v1339 = vadd.f32 %v1050, %v1338
  %v1340 = vpop.f32.mrf.mxu0
  %v1341 = vpop.f32.mrf.mxu0
  %v1342 = vadd.f32 %v1053, %v1341
  %v1343 = vpop.f32.mrf.mxu0
  %1344 = vmatprep.mubr.bf16.mxu0 0
  %1345 = vmatmul.mubr.bf16.gmra.mxu0 %v833
  %v1346 = vpop.f32.mrf.mxu0
  %v1347 = vadd.f32 %v1058, %v1346
  %v1348 = vpop.f32.mrf.mxu0
  %v1349 = vpop.f32.mrf.mxu0
  %v1350 = vadd.f32 %v1061, %v1349
  %v1351 = vpop.f32.mrf.mxu0
  %1352 = vmatprep.mubr.bf16.mxu0 0
  %1353 = vmatmul.mubr.bf16.gmra.mxu0 %v836
  %v1354 = vpop.f32.mrf.mxu0
  %v1355 = vadd.f32 %v1066, %v1354
  %v1356 = vpop.f32.mrf.mxu0
  %v1357 = vpop.f32.mrf.mxu0
  %v1358 = vadd.f32 %v1069, %v1357
  %v1359 = vpop.f32.mrf.mxu0
  %1360 = vmatprep.mubr.bf16.mxu0 0
  %1361 = vmatmul.mubr.bf16.gmra.mxu0 %v839
  %v1362 = vpop.f32.mrf.mxu0
  %v1363 = vadd.f32 %v1074, %v1362
  %v1364 = vpop.f32.mrf.mxu0
  %v1365 = vpop.f32.mrf.mxu0
  %v1366 = vadd.f32 %v1077, %v1365
  %v1367 = vpop.f32.mrf.mxu0
  %1368 = vmatprep.mubr.bf16.mxu0 0
  %1369 = vmatmul.mubr.bf16.gmra.mxu0 %v842
  %v1370 = vpop.f32.mrf.mxu0
  %v1371 = vadd.f32 %v1082, %v1370
  %v1372 = vpop.f32.mrf.mxu0
  %v1373 = vpop.f32.mrf.mxu0
  %v1374 = vadd.f32 %v1085, %v1373
  %v1375 = vpop.f32.mrf.mxu0
  %1376 = vmatprep.mubr.bf16.mxu0 0
  %1377 = vmatmul.mubr.bf16.gmra.mxu0 %v845
  %v1378 = vpop.f32.mrf.mxu0
  %v1379 = vadd.f32 %v1090, %v1378
  %v1380 = vpop.f32.mrf.mxu0
  %v1381 = vpop.f32.mrf.mxu0
  %v1382 = vadd.f32 %v1093, %v1381
  %v1383 = vpop.f32.mrf.mxu0
  %1384 = vmatprep.mubr.bf16.mxu0 0
  %1385 = vmatmul.mubr.bf16.gmra.mxu0 %v848
  %v1386 = vpop.f32.mrf.mxu0
  %v1387 = vadd.f32 %v1098, %v1386
  %v1388 = vpop.f32.mrf.mxu0
  %v1389 = vpop.f32.mrf.mxu0
  %v1390 = vadd.f32 %v1101, %v1389
  %v1391 = vpop.f32.mrf.mxu0
  %1392 = vmatprep.mubr.bf16.mxu0 0
  %1393 = vmatmul.mubr.bf16.gmra.mxu0 %v851
  %v1394 = vpop.f32.mrf.mxu0
  %v1395 = vadd.f32 %v1106, %v1394
  %v1396 = vpop.f32.mrf.mxu0
  %v1397 = vpop.f32.mrf.mxu0
  %v1398 = vadd.f32 %v1109, %v1397
  %v1399 = vpop.f32.mrf.mxu0
  %1400 = vmatprep.mubr.bf16.mxu0 0
  %1401 = vmatmul.mubr.bf16.gmra.mxu0 %v854
  %v1402 = vpop.f32.mrf.mxu0
  %v1403 = vadd.f32 %v1114, %v1402
  %v1404 = vpop.f32.mrf.mxu0
  %v1405 = vpop.f32.mrf.mxu0
  %v1406 = vadd.f32 %v1117, %v1405
  %v1407 = vpop.f32.mrf.mxu0
  %1408 = vmatprep.mubr.bf16.mxu0 0
  %1409 = vmatmul.mubr.bf16.gmra.mxu0 %v857
  %v1410 = vpop.f32.mrf.mxu0
  %v1411 = vadd.f32 %v1122, %v1410
  %v1412 = vpop.f32.mrf.mxu0
  %v1413 = vpop.f32.mrf.mxu0
  %v1414 = vadd.f32 %v1125, %v1413
  %v1415 = vpop.f32.mrf.mxu0
  %1416 = vmatprep.mubr.bf16.mxu0 0
  %1417 = vmatmul.mubr.bf16.gmra.mxu0 %v860
  %v1418 = vpop.f32.mrf.mxu0
  %v1419 = vadd.f32 %v1130, %v1418
  %v1420 = vpop.f32.mrf.mxu0
  %v1421 = vpop.f32.mrf.mxu0
  %v1422 = vadd.f32 %v1133, %v1421
  %v1423 = vpop.f32.mrf.mxu0
  %1424 = vmatprep.mubr.bf16.mxu0 0
  %1425 = vmatmul.mubr.bf16.gmra.mxu0 %v863
  %v1426 = vpop.f32.mrf.mxu0
  %v1427 = vadd.f32 %v1138, %v1426
  %v1428 = vpop.f32.mrf.mxu0
  %v1429 = vpop.f32.mrf.mxu0
  %v1430 = vadd.f32 %v1141, %v1429
  %v1431 = vpop.f32.mrf.mxu0
  %1432 = vmatprep.mubr.bf16.mxu0 0
  %1433 = vmatmul.mubr.bf16.gmra.mxu0 %v866
  %v1434 = vpop.f32.mrf.mxu0
  %v1435 = vadd.f32 %v1146, %v1434
  %v1436 = vpop.f32.mrf.mxu0
  %v1437 = vpop.f32.mrf.mxu0
  %v1438 = vadd.f32 %v1149, %v1437
  %v1439 = vpop.f32.mrf.mxu0
  %1440 = vmatprep.mubr.bf16.mxu0 0
  %1441 = vmatmul.mubr.bf16.gmra.mxu0 %v869
  %v1442 = vpop.f32.mrf.mxu0
  %v1443 = vadd.f32 %v1154, %v1442
  %v1444 = vpop.f32.mrf.mxu0
  %v1445 = vpop.f32.mrf.mxu0
  %v1446 = vadd.f32 %v1157, %v1445
  %v1447 = vpop.f32.mrf.mxu0
  %1448 = vdwg.mxu0
  %v1449 = vmax.f32 %v1195, 0.0
  %v1450 = vmax.f32 %v1198, 0.0
  %v1451 = vmax.f32 %v1203, 0.0
  %v1452 = vmax.f32 %v1206, 0.0
  %v1453 = vmax.f32 %v1211, 0.0
  %v1454 = vmax.f32 %v1214, 0.0
  %v1455 = vmax.f32 %v1219, 0.0
  %v1456 = vmax.f32 %v1222, 0.0
  %v1457 = vmax.f32 %v1227, 0.0
  %v1458 = vmax.f32 %v1230, 0.0
  %v1459 = vmax.f32 %v1235, 0.0
  %v1460 = vmax.f32 %v1238, 0.0
  %v1461 = vmax.f32 %v1243, 0.0
  %v1462 = vmax.f32 %v1246, 0.0
  %v1463 = vmax.f32 %v1251, 0.0
  %v1464 = vmax.f32 %v1254, 0.0
  %v1465 = vmax.f32 %v1259, 0.0
  %v1466 = vmax.f32 %v1262, 0.0
  %v1467 = vmax.f32 %v1267, 0.0
  %v1468 = vmax.f32 %v1270, 0.0
  %v1469 = vmax.f32 %v1275, 0.0
  %v1470 = vmax.f32 %v1278, 0.0
  %v1471 = vmax.f32 %v1283, 0.0
  %v1472 = vmax.f32 %v1286, 0.0
  %v1473 = vmax.f32 %v1291, 0.0
  %v1474 = vmax.f32 %v1294, 0.0
  %v1475 = vmax.f32 %v1299, 0.0
  %v1476 = vmax.f32 %v1302, 0.0
  %v1477 = vmax.f32 %v1307, 0.0
  %v1478 = vmax.f32 %v1310, 0.0
  %v1479 = vmax.f32 %v1315, 0.0
  %v1480 = vmax.f32 %v1318, 0.0
  %v1481 = vmax.f32 %v1323, 0.0
  %v1482 = vmax.f32 %v1326, 0.0
  %v1483 = vmax.f32 %v1331, 0.0
  %v1484 = vmax.f32 %v1334, 0.0
  %v1485 = vmax.f32 %v1339, 0.0
  %v1486 = vmax.f32 %v1342, 0.0
  %v1487 = vmax.f32 %v1347, 0.0
  %v1488 = vmax.f32 %v1350, 0.0
  %v1489 = vmax.f32 %v1355, 0.0
  %v1490 = vmax.f32 %v1358, 0.0
  %v1491 = vmax.f32 %v1363, 0.0
  %v1492 = vmax.f32 %v1366, 0.0
  %v1493 = vmax.f32 %v1371, 0.0
  %v1494 = vmax.f32 %v1374, 0.0
  %v1495 = vmax.f32 %v1379, 0.0
  %v1496 = vmax.f32 %v1382, 0.0
  %v1497 = vmax.f32 %v1387, 0.0
  %v1498 = vmax.f32 %v1390, 0.0
  %v1499 = vmax.f32 %v1395, 0.0
  %v1500 = vmax.f32 %v1398, 0.0
  %v1501 = vmax.f32 %v1403, 0.0
  %v1502 = vmax.f32 %v1406, 0.0
  %v1503 = vmax.f32 %v1411, 0.0
  %v1504 = vmax.f32 %v1414, 0.0
  %v1505 = vmax.f32 %v1419, 0.0
  %v1506 = vmax.f32 %v1422, 0.0
  %v1507 = vmax.f32 %v1427, 0.0
  %v1508 = vmax.f32 %v1430, 0.0
  %v1509 = vmax.f32 %v1435, 0.0
  %v1510 = vmax.f32 %v1438, 0.0
  %v1511 = vmax.f32 %v1443, 0.0
  %v1512 = vmax.f32 %v1446, 0.0
  %v1513 = vpack.c.bf16 %v1450, %v1449
  %v1514 = vpack.c.bf16 %v1452, %v1451
  %v1515 = vpack.c.bf16 %v1454, %v1453
  %v1516 = vpack.c.bf16 %v1456, %v1455
  %v1517 = vpack.c.bf16 %v1458, %v1457
  %v1518 = vpack.c.bf16 %v1460, %v1459
  %v1519 = vpack.c.bf16 %v1462, %v1461
  %v1520 = vpack.c.bf16 %v1464, %v1463
  %v1521 = vpack.c.bf16 %v1466, %v1465
  %v1522 = vpack.c.bf16 %v1468, %v1467
  %v1523 = vpack.c.bf16 %v1470, %v1469
  %v1524 = vpack.c.bf16 %v1472, %v1471
  %v1525 = vpack.c.bf16 %v1474, %v1473
  %v1526 = vpack.c.bf16 %v1476, %v1475
  %v1527 = vpack.c.bf16 %v1478, %v1477
  %v1528 = vpack.c.bf16 %v1480, %v1479
  %v1529 = vpack.c.bf16 %v1482, %v1481
  %v1530 = vpack.c.bf16 %v1484, %v1483
  %v1531 = vpack.c.bf16 %v1486, %v1485
  %v1532 = vpack.c.bf16 %v1488, %v1487
  %v1533 = vpack.c.bf16 %v1490, %v1489
  %v1534 = vpack.c.bf16 %v1492, %v1491
  %v1535 = vpack.c.bf16 %v1494, %v1493
  %v1536 = vpack.c.bf16 %v1496, %v1495
  %v1537 = vpack.c.bf16 %v1498, %v1497
  %v1538 = vpack.c.bf16 %v1500, %v1499
  %v1539 = vpack.c.bf16 %v1502, %v1501
  %v1540 = vpack.c.bf16 %v1504, %v1503
  %v1541 = vpack.c.bf16 %v1506, %v1505
  %v1542 = vpack.c.bf16 %v1508, %v1507
  %v1543 = vpack.c.bf16 %v1510, %v1509
  %v1544 = vpack.c.bf16 %v1512, %v1511
  %v1577 = vunpack.c.l.b16 %v1513
  %v1578 = vunpack.c.h.b16 %v1513
  %v1579 = vunpack.c.l.b16 %v1514
  %v1580 = vunpack.c.h.b16 %v1514
  %v1581 = vunpack.c.l.b16 %v1515
  %v1582 = vunpack.c.h.b16 %v1515
  %v1583 = vunpack.c.l.b16 %v1516
  %v1584 = vunpack.c.h.b16 %v1516
  %v1585 = vunpack.c.l.b16 %v1517
  %v1586 = vunpack.c.h.b16 %v1517
  %v1587 = vunpack.c.l.b16 %v1518
  %v1588 = vunpack.c.h.b16 %v1518
  %v1589 = vunpack.c.l.b16 %v1519
  %v1590 = vunpack.c.h.b16 %v1519
  %v1591 = vunpack.c.l.b16 %v1520
  %v1592 = vunpack.c.h.b16 %v1520
  %v1593 = vunpack.c.l.b16 %v1521
  %v1594 = vunpack.c.h.b16 %v1521
  %v1595 = vunpack.c.l.b16 %v1522
  %v1596 = vunpack.c.h.b16 %v1522
  %v1597 = vunpack.c.l.b16 %v1523
  %v1598 = vunpack.c.h.b16 %v1523
  %v1599 = vunpack.c.l.b16 %v1524
  %v1600 = vunpack.c.h.b16 %v1524
  %v1601 = vunpack.c.l.b16 %v1525
  %v1602 = vunpack.c.h.b16 %v1525
  %v1603 = vunpack.c.l.b16 %v1526
  %v1604 = vunpack.c.h.b16 %v1526
  %v1605 = vunpack.c.l.b16 %v1527
  %v1606 = vunpack.c.h.b16 %v1527
  %v1607 = vunpack.c.l.b16 %v1528
  %v1608 = vunpack.c.h.b16 %v1528
  %v1609 = vunpack.c.l.b16 %v1529
  %v1610 = vunpack.c.h.b16 %v1529
  %v1611 = vunpack.c.l.b16 %v1530
  %v1612 = vunpack.c.h.b16 %v1530
  %v1613 = vunpack.c.l.b16 %v1531
  %v1614 = vunpack.c.h.b16 %v1531
  %v1615 = vunpack.c.l.b16 %v1532
  %v1616 = vunpack.c.h.b16 %v1532
  %v1617 = vunpack.c.l.b16 %v1533
  %v1618 = vunpack.c.h.b16 %v1533
  %v1619 = vunpack.c.l.b16 %v1534
  %v1620 = vunpack.c.h.b16 %v1534
  %v1621 = vunpack.c.l.b16 %v1535
  %v1622 = vunpack.c.h.b16 %v1535
  %v1623 = vunpack.c.l.b16 %v1536
  %v1624 = vunpack.c.h.b16 %v1536
  %v1625 = vunpack.c.l.b16 %v1537
  %v1626 = vunpack.c.h.b16 %v1537
  %v1627 = vunpack.c.l.b16 %v1538
  %v1628 = vunpack.c.h.b16 %v1538
  %v1629 = vunpack.c.l.b16 %v1539
  %v1630 = vunpack.c.h.b16 %v1539
  %v1631 = vunpack.c.l.b16 %v1540
  %v1632 = vunpack.c.h.b16 %v1540
  %v1633 = vunpack.c.l.b16 %v1541
  %v1634 = vunpack.c.h.b16 %v1541
  %v1635 = vunpack.c.l.b16 %v1542
  %v1636 = vunpack.c.h.b16 %v1542
  %v1637 = vunpack.c.l.b16 %v1543
  %v1638 = vunpack.c.h.b16 %v1543
  %v1639 = vunpack.c.l.b16 %v1544
  %v1640 = vunpack.c.h.b16 %v1544
  %v1641 = vpack.c.b16 %v1577, %v1577
  %v1642 = vpack.c.b16 %v1578, %v1578
  %v1643 = vpack.c.b16 %v1579, %v1579
  %v1644 = vpack.c.b16 %v1580, %v1580
  %v1645 = vpack.c.b16 %v1581, %v1581
  %v1646 = vpack.c.b16 %v1582, %v1582
  %v1647 = vpack.c.b16 %v1583, %v1583
  %v1648 = vpack.c.b16 %v1584, %v1584
  %v1649 = vpack.c.b16 %v1585, %v1585
  %v1650 = vpack.c.b16 %v1586, %v1586
  %v1651 = vpack.c.b16 %v1587, %v1587
  %v1652 = vpack.c.b16 %v1588, %v1588
  %v1653 = vpack.c.b16 %v1589, %v1589
  %v1654 = vpack.c.b16 %v1590, %v1590
  %v1655 = vpack.c.b16 %v1591, %v1591
  %v1656 = vpack.c.b16 %v1592, %v1592
  %v1657 = vpack.c.b16 %v1593, %v1593
  %v1658 = vpack.c.b16 %v1594, %v1594
  %v1659 = vpack.c.b16 %v1595, %v1595
  %v1660 = vpack.c.b16 %v1596, %v1596
  %v1661 = vpack.c.b16 %v1597, %v1597
  %v1662 = vpack.c.b16 %v1598, %v1598
  %v1663 = vpack.c.b16 %v1599, %v1599
  %v1664 = vpack.c.b16 %v1600, %v1600
  %v1665 = vpack.c.b16 %v1601, %v1601
  %v1666 = vpack.c.b16 %v1602, %v1602
  %v1667 = vpack.c.b16 %v1603, %v1603
  %v1668 = vpack.c.b16 %v1604, %v1604
  %v1669 = vpack.c.b16 %v1605, %v1605
  %v1670 = vpack.c.b16 %v1606, %v1606
  %v1671 = vpack.c.b16 %v1607, %v1607
  %v1672 = vpack.c.b16 %v1608, %v1608
  %v1673 = vpack.c.b16 %v1609, %v1609
  %v1674 = vpack.c.b16 %v1610, %v1610
  %v1675 = vpack.c.b16 %v1611, %v1611
  %v1676 = vpack.c.b16 %v1612, %v1612
  %v1677 = vpack.c.b16 %v1613, %v1613
  %v1678 = vpack.c.b16 %v1614, %v1614
  %v1679 = vpack.c.b16 %v1615, %v1615
  %v1680 = vpack.c.b16 %v1616, %v1616
  %v1681 = vpack.c.b16 %v1617, %v1617
  %v1682 = vpack.c.b16 %v1618, %v1618
  %v1683 = vpack.c.b16 %v1619, %v1619
  %v1684 = vpack.c.b16 %v1620, %v1620
  %v1685 = vpack.c.b16 %v1621, %v1621
  %v1686 = vpack.c.b16 %v1622, %v1622
  %v1687 = vpack.c.b16 %v1623, %v1623
  %v1688 = vpack.c.b16 %v1624, %v1624
  %v1689 = vpack.c.b16 %v1625, %v1625
  %v1690 = vpack.c.b16 %v1626, %v1626
  %v1691 = vpack.c.b16 %v1627, %v1627
  %v1692 = vpack.c.b16 %v1628, %v1628
  %v1693 = vpack.c.b16 %v1629, %v1629
  %v1694 = vpack.c.b16 %v1630, %v1630
  %v1695 = vpack.c.b16 %v1631, %v1631
  %v1696 = vpack.c.b16 %v1632, %v1632
  %v1697 = vpack.c.b16 %v1633, %v1633
  %v1698 = vpack.c.b16 %v1634, %v1634
  %v1699 = vpack.c.b16 %v1635, %v1635
  %v1700 = vpack.c.b16 %v1636, %v1636
  %v1701 = vpack.c.b16 %v1637, %v1637
  %v1702 = vpack.c.b16 %v1638, %v1638
  %v1703 = vpack.c.b16 %v1639, %v1639
  %v1704 = vpack.c.b16 %v1640, %v1640
  %1769 = vst [vmem:[%s3] sm:$0xf] %v1641
  %1770 = vst [vmem:[%s3 + $0x4] sm:$0xf] %v1642
  %1771 = vst [vmem:[%s3 + $0x8] sm:$0xf] %v1643
  %1772 = vst [vmem:[%s3 + $0xc] sm:$0xf] %v1644
  %1773 = vst [vmem:[%s3 + $0x10] sm:$0xf] %v1645
  %1774 = vst [vmem:[%s3 + $0x14] sm:$0xf] %v1646
  %1775 = vst [vmem:[%s3 + $0x18] sm:$0xf] %v1647
  %1776 = vst [vmem:[%s3 + $0x1c] sm:$0xf] %v1648
  %1777 = vst [vmem:[%s3 + $0x20] sm:$0xf] %v1649
  %1778 = vst [vmem:[%s3 + $0x24] sm:$0xf] %v1650
  %1779 = vst [vmem:[%s3 + $0x28] sm:$0xf] %v1651
  %1780 = vst [vmem:[%s3 + $0x2c] sm:$0xf] %v1652
  %1781 = vst [vmem:[%s3 + $0x30] sm:$0xf] %v1653
  %1782 = vst [vmem:[%s3 + $0x34] sm:$0xf] %v1654
  %1783 = vst [vmem:[%s3 + $0x38] sm:$0xf] %v1655
  %1784 = vst [vmem:[%s3 + $0x3c] sm:$0xf] %v1656
  %1785 = vst [vmem:[%s3 + $0x40] sm:$0xf] %v1657
  %1786 = vst [vmem:[%s3 + $0x44] sm:$0xf] %v1658
  %1787 = vst [vmem:[%s3 + $0x48] sm:$0xf] %v1659
  %1788 = vst [vmem:[%s3 + $0x4c] sm:$0xf] %v1660
  %1789 = vst [vmem:[%s3 + $0x50] sm:$0xf] %v1661
  %1790 = vst [vmem:[%s3 + $0x54] sm:$0xf] %v1662
  %1791 = vst [vmem:[%s3 + $0x58] sm:$0xf] %v1663
  %1792 = vst [vmem:[%s3 + $0x5c] sm:$0xf] %v1664
  %1793 = vst [vmem:[%s3 + $0x60] sm:$0xf] %v1665
  %1794 = vst [vmem:[%s3 + $0x64] sm:$0xf] %v1666
  %1795 = vst [vmem:[%s3 + $0x68] sm:$0xf] %v1667
  %1796 = vst [vmem:[%s3 + $0x6c] sm:$0xf] %v1668
  %1797 = vst [vmem:[%s3 + $0x70] sm:$0xf] %v1669
  %1798 = vst [vmem:[%s3 + $0x74] sm:$0xf] %v1670
  %1799 = vst [vmem:[%s3 + $0x78] sm:$0xf] %v1671
  %1800 = vst [vmem:[%s3 + $0x7c] sm:$0xf] %v1672
  %1801 = vst [vmem:[%s3 + $0x80] sm:$0xf] %v1673
  %1802 = vst [vmem:[%s3 + $0x84] sm:$0xf] %v1674
  %1803 = vst [vmem:[%s3 + $0x88] sm:$0xf] %v1675
  %1804 = vst [vmem:[%s3 + $0x8c] sm:$0xf] %v1676
  %1805 = vst [vmem:[%s3 + $0x90] sm:$0xf] %v1677
  %1806 = vst [vmem:[%s3 + $0x94] sm:$0xf] %v1678
  %1807 = vst [vmem:[%s3 + $0x98] sm:$0xf] %v1679
  %1808 = vst [vmem:[%s3 + $0x9c] sm:$0xf] %v1680
  %1809 = vst [vmem:[%s3 + $0xa0] sm:$0xf] %v1681
  %1810 = vst [vmem:[%s3 + $0xa4] sm:$0xf] %v1682
  %1811 = vst [vmem:[%s3 + $0xa8] sm:$0xf] %v1683
  %1812 = vst [vmem:[%s3 + $0xac] sm:$0xf] %v1684
  %1813 = vst [vmem:[%s3 + $0xb0] sm:$0xf] %v1685
  %1814 = vst [vmem:[%s3 + $0xb4] sm:$0xf] %v1686
  %1815 = vst [vmem:[%s3 + $0xb8] sm:$0xf] %v1687
  %1816 = vst [vmem:[%s3 + $0xbc] sm:$0xf] %v1688
  %1817 = vst [vmem:[%s3 + $0xc0] sm:$0xf] %v1689
  %1818 = vst [vmem:[%s3 + $0xc4] sm:$0xf] %v1690
  %1819 = vst [vmem:[%s3 + $0xc8] sm:$0xf] %v1691
  %1820 = vst [vmem:[%s3 + $0xcc] sm:$0xf] %v1692
  %1821 = vst [vmem:[%s3 + $0xd0] sm:$0xf] %v1693
  %1822 = vst [vmem:[%s3 + $0xd4] sm:$0xf] %v1694
  %1823 = vst [vmem:[%s3 + $0xd8] sm:$0xf] %v1695
  %1824 = vst [vmem:[%s3 + $0xdc] sm:$0xf] %v1696
  %1825 = vst [vmem:[%s3 + $0xe0] sm:$0xf] %v1697
  %1826 = vst [vmem:[%s3 + $0xe4] sm:$0xf] %v1698
  %1827 = vst [vmem:[%s3 + $0xe8] sm:$0xf] %v1699
  %1828 = vst [vmem:[%s3 + $0xec] sm:$0xf] %v1700
  %1829 = vst [vmem:[%s3 + $0xf0] sm:$0xf] %v1701
  %1830 = vst [vmem:[%s3 + $0xf4] sm:$0xf] %v1702
  %1831 = vst [vmem:[%s3 + $0xf8] sm:$0xf] %v1703
  %1832 = vst [vmem:[%s3 + $0xfc] sm:$0xf] %v1704
  // Predicated region
  $region14: #{autoencoder_forward.10} parent=0 // pred_check
    _
  $region15: #{autoencoder_forward.10} parent=0 // pred_check_branch
    %1834 = sbr.rel (0) target = $region17
  $region16: #{autoencoder_forward.10} parent=0 // pred_region
    _
  $region17: #{autoencoder_forward.10} parent=0 // pred_fallthru
    _
  // Predicated region
  $region18: #{autoencoder_forward.10} parent=0 // pred_check
    _
  $region19: #{autoencoder_forward.10} parent=0 // pred_check_branch
    %1836 = sbr.rel (0) target = $region21
  $region20: #{autoencoder_forward.10} parent=0 // pred_region
    _
  $region21: #{autoencoder_forward.10} parent=0 // pred_fallthru
    _

// kernel: autoencoder_forward.11
$region0: #{autoencoder_forward.11}
  #allocation0 [shape = 'u32[]', space=smem, size = 0x4, offset = 0x4, fixed_abs, tag = 'smem constant byte address 0x4 - core index']
  #allocation1 [shape = 'u32[144,128]{1,0:T(1,128)}', space=vmem, size = 0x12000, scoped, tag = 'internal scratch']
  %s0 = inlined_call_operand.vmem [shape: bf16[2048,144], index: 0, kind: input, shape index: {}]
  %s1 = inlined_call_operand.vmem [shape: bf16[144,128], index: 1, kind: input, shape index: {}]
  %s2 = inlined_call_operand.vmem [shape: f32[1,128], index: 2, kind: input, shape index: {}]
  %s3 = inlined_call_operand.vmem [shape: f32[2048,128], index: 3, kind: output, shape index: {}]
  %s4 = sld [smem:[#allocation0]]
  $region45: #{autoencoder_forward.11} parent=0
    _
  %s6 = ssub.s32 1, %s4
  %s7 = scalar_select 0, %s6, %s4
  loop: start=0, step=1, limit=4
  $region2: #{autoencoder_forward.11} parent=0 // loop_pre_header
    _
  $region3: #{autoencoder_forward.11} parent=0 // loop_header
    %s9 = sphi 0, %s13
    %p10 = scmp.ge.s32.totalorder %s9, 4
    %s19 = sphi 0, %s21
    %s22 = sphi 0, %s19
    %s23 = sphi 0, %s22
    %s39 = sphi 0, %s23
    %s43 = sphi 0, %s43
    %s45 = sphi 0, %s43
    %s46 = sphi 0, %s45
    %s60 = sphi 0, %s46
    %s64 = sphi 0, %s64
    %s66 = sphi 0, %s64
    %s67 = sphi 0, %s66
    %s81 = sphi 0, %s67
    %s87 = sphi 0, %s89
    %s90 = sphi 0, %s87
    %s91 = sphi 0, %s90
    %s107 = sphi 0, %s91
  $region4: #{autoencoder_forward.11} parent=0 // loop_header_branch
    %12 = sbr.rel (%p10) target = $region8
  $region5: #{autoencoder_forward.11} parent=0 // loop_body
    %s14 = ssub.s32 %s9, 1
    %s15 = ssub.s32 %s9, 2
    %s16 = sadd.s32 %s9, 1
    %s17 = ssub.s32 %s9, %s16
    %p18 = scmp.eq.s32.totalorder %s17, 0
    %s20 = sadd.s32 %s19, 1
    %s21 = scalar_select %p18, %s19, %s20
    %p24 = pneg %p18
    %p25 = scmp.eq.s32.totalorder %s9, 1
    %p26 = por %p24, %p25
    %p27 = scmp.ne.s32.totalorder %s19, %s22
    %p28 = scmp.eq.s32.totalorder %s9, 0
    %p29 = por %p27, %p28
    %p30 = scmp.ne.s32.totalorder %s19, %s22
    %p31 = scmp.eq.s32.totalorder %s14, 1
    %p32 = por %p30, %p31
    %p33 = scmp.ne.s32.totalorder %s22, %s23
    %p34 = scmp.eq.s32.totalorder %s14, 0
    %p35 = por %p33, %p34
    %p36 = scmp.ne.s32.totalorder %s22, %s23
    %p37 = scmp.eq.s32.totalorder %s15, 1
    %p38 = por %p36, %p37
    %p40 = scmp.ne.s32.totalorder %s23, %s39
    %p41 = scmp.eq.s32.totalorder %s15, 0
    %p42 = por %p40, %p41
    %s44 = sadd.s32 %s43, 1
    %p47 = scmp.eq.s32.totalorder %s9, 1
    %p48 = scmp.ne.s32.totalorder %s43, %s45
    %p49 = scmp.eq.s32.totalorder %s9, 0
    %p50 = por %p48, %p49
    %p51 = scmp.ne.s32.totalorder %s43, %s45
    %p52 = scmp.eq.s32.totalorder %s14, 1
    %p53 = por %p51, %p52
    %p54 = scmp.ne.s32.totalorder %s45, %s46
    %p55 = scmp.eq.s32.totalorder %s14, 0
    %p56 = por %p54, %p55
    %p57 = scmp.ne.s32.totalorder %s45, %s46
    %p58 = scmp.eq.s32.totalorder %s15, 1
    %p59 = por %p57, %p58
    %p61 = scmp.ne.s32.totalorder %s46, %s60
    %p62 = scmp.eq.s32.totalorder %s15, 0
    %p63 = por %p61, %p62
    %s65 = sadd.s32 %s64, 1
    %p68 = scmp.eq.s32.totalorder %s9, 1
    %p69 = scmp.ne.s32.totalorder %s64, %s66
    %p70 = scmp.eq.s32.totalorder %s9, 0
    %p71 = por %p69, %p70
    %p72 = scmp.ne.s32.totalorder %s64, %s66
    %p73 = scmp.eq.s32.totalorder %s14, 1
    %p74 = por %p72, %p73
    %p75 = scmp.ne.s32.totalorder %s66, %s67
    %p76 = scmp.eq.s32.totalorder %s14, 0
    %p77 = por %p75, %p76
    %p78 = scmp.ne.s32.totalorder %s66, %s67
    %p79 = scmp.eq.s32.totalorder %s15, 1
    %p80 = por %p78, %p79
    %p82 = scmp.ne.s32.totalorder %s67, %s81
    %p83 = scmp.eq.s32.totalorder %s15, 0
    %p84 = por %p82, %p83
    %s85 = ssub.s32 %s9, %s16
    %p86 = scmp.eq.s32.totalorder %s85, 0
    %s88 = sadd.s32 %s87, 1
    %s89 = scalar_select %p86, %s87, %s88
    %p92 = pneg %p86
    %p93 = scmp.eq.s32.totalorder %s9, 1
    %p94 = por %p92, %p93
    %p95 = scmp.ne.s32.totalorder %s87, %s90
    %p96 = scmp.eq.s32.totalorder %s9, 0
    %p97 = por %p95, %p96
    %p98 = scmp.ne.s32.totalorder %s87, %s90
    %p99 = scmp.eq.s32.totalorder %s14, 1
    %p100 = por %p98, %p99
    %p101 = scmp.ne.s32.totalorder %s90, %s91
    %p102 = scmp.eq.s32.totalorder %s14, 0
    %p103 = por %p101, %p102
    %p104 = scmp.ne.s32.totalorder %s90, %s91
    %p105 = scmp.eq.s32.totalorder %s15, 1
    %p106 = por %p104, %p105
    %p108 = scmp.ne.s32.totalorder %s91, %s107
    %p109 = scmp.eq.s32.totalorder %s15, 0
    %p110 = por %p108, %p109
    %p111 = scmp.le.s32.totalorder 1, %s9
    %p112 = scmp.lt.s32.totalorder %s9, 3
    %p113 = pnand %p111, %p112
    %p114 = pneg %p113
    // Predicated region
    $region9: #{autoencoder_forward.11} parent=5 // pred_check
      _
    $region10: #{autoencoder_forward.11} parent=5 // pred_check_branch
      %116 = sbr.rel (%p113) target = $region12
    $region11: #{autoencoder_forward.11} parent=5 // pred_region
      %s117 = ssub.s32 %s9, 1
      // Predicated region
      $region13: #{autoencoder_forward.11} parent=11 // pred_check
        %p118 = pneg %p56
      $region14: #{autoencoder_forward.11} parent=11 // pred_check_branch
        %120 = sbr.rel (%p118) target = $region16
      $region15: #{autoencoder_forward.11} parent=11 // pred_region
        _
      $region16: #{autoencoder_forward.11} parent=11 // pred_fallthru
        _
      // Predicated region
      $region17: #{autoencoder_forward.11} parent=11 // pred_check
        %p121 = pneg %p77
      $region18: #{autoencoder_forward.11} parent=11 // pred_check_branch
        %123 = sbr.rel (%p121) target = $region20
      $region19: #{autoencoder_forward.11} parent=11 // pred_region
        _
      $region20: #{autoencoder_forward.11} parent=11 // pred_fallthru
        _
    $region12: #{autoencoder_forward.11} parent=5 // pred_fallthru
      _
    %p124 = scmp.lt.s32.totalorder %s9, 2
    // Predicated region
    $region21: #{autoencoder_forward.11} parent=5 // pred_check
      %p125 = pneg %p124
    $region22: #{autoencoder_forward.11} parent=5 // pred_check_branch
      %127 = sbr.rel (%p125) target = $region24
    $region23: #{autoencoder_forward.11} parent=5 // pred_region
      // Predicated region
      $region25: #{autoencoder_forward.11} parent=23 // pred_check
        %p128 = pneg %p29
      $region26: #{autoencoder_forward.11} parent=23 // pred_check_branch
        %130 = sbr.rel (%p128) target = $region28
      $region27: #{autoencoder_forward.11} parent=23 // pred_region
        %s131 = smul.u32 128, %s9
        %p132 = scmp.lt.s32.totalorder %s131, 255
        %s133 = scalar_select %p132, %s131, 255
        %s134 = smul.addr %s133, 2
        %s135 = smul.addr %s134, 4
        %s136 = scalar_lea.vmem %s0, %s135
        %s137 = smul.u32 128, %s9
      $region28: #{autoencoder_forward.11} parent=23 // pred_fallthru
        _
    $region24: #{autoencoder_forward.11} parent=5 // pred_fallthru
      _
    %p138 = scmp.le.s32.totalorder 1, %s9
    %p139 = scmp.lt.s32.totalorder %s9, 3
    %p140 = pnand %p138, %p139
    %p141 = pneg %p140
    // Predicated region
    $region29: #{autoencoder_forward.11} parent=5 // pred_check
      _
    $region30: #{autoencoder_forward.11} parent=5 // pred_check_branch
      %143 = sbr.rel (%p140) target = $region32
    $region31: #{autoencoder_forward.11} parent=5 // pred_region
      %s144 = ssub.s32 %s9, 1
      %s145 = smul.u32 128, %s14
      %p146 = scmp.lt.s32.totalorder %s145, 255
      %s147 = scalar_select %p146, %s145, 255
      %s148 = smul.addr %s147, 2
      %s149 = smul.addr %s148, 4
      %s150 = scalar_lea.vmem %s0, %s149
      %p151 = pneg %p35
      %p152 = pneg %p32
      %p153 = pneg %p56
      %p154 = pneg %p53
      %p155 = pneg %p77
      %p156 = pneg %p74
      %p157 = pneg %p103
      %p158 = pneg %p100
      %s159 = smul.u32 128, %s14
      %p160 = scmp.lt.s32.totalorder %s159, 255
      %s161 = scalar_select %p160, %s159, 255
      %s162 = smul.addr %s161, 8
      %s163 = scalar_lea.vmem %s3, %s162
      %s164 = smul.u32 128, %s14
      %p165 = scmp.lt.s32.totalorder %s164, 255
      %s166 = scalar_select %p165, %s164, 255
      %s167 = smul.addr %s166, 2
      %s168 = smul.addr %s167, 4
      %s169 = scalar_lea.vmem %s0, %s168
      %s170 = smul.u32 128, %s14
      %s171 = smul.u32 128, %s14
      %p172 = scmp.lt.s32.totalorder %s171, 255
      %s173 = scalar_select %p172, %s171, 255
      %s174 = smul.addr %s173, 8
      %s175 = scalar_lea.vmem %s3, %s174
      %s176 = smul.u32 128, %s14
      %v178 = vld [vmem:[%s169] sm:$0xff]
      %v179 = vld [vmem:[%s169 + $0x8] sm:$0xff]
      %v180 = vld [vmem:[%s169 + $0x10] sm:$0xff]
      %v181 = vld [vmem:[%s169 + $0x18] sm:$0xff]
      %v182 = vld [vmem:[%s169 + $0x20] sm:$0xff]
      %v183 = vld [vmem:[%s169 + $0x28] sm:$0xff]
      %v184 = vld [vmem:[%s169 + $0x30] sm:$0xff]
      %v185 = vld [vmem:[%s169 + $0x38] sm:$0xff]
      %v186 = vld [vmem:[%s169 + $0x40] sm:$0xff]
      %v187 = vld [vmem:[%s169 + $0x48] sm:$0xff]
      %v188 = vld [vmem:[%s169 + $0x50] sm:$0xff]
      %v189 = vld [vmem:[%s169 + $0x58] sm:$0xff]
      %v190 = vld [vmem:[%s169 + $0x60] sm:$0xff]
      %v191 = vld [vmem:[%s169 + $0x68] sm:$0xff]
      %v192 = vld [vmem:[%s169 + $0x70] sm:$0xff]
      %v193 = vld [vmem:[%s169 + $0x78] sm:$0xff]
      %v194 = vld [vmem:[%s169 + $0x80] sm:$0xff]
      %v195 = vld [vmem:[%s169 + $0x88] sm:$0xff]
      %v196 = vld [vmem:[%s169 + $0x90] sm:$0xff]
      %v197 = vld [vmem:[%s169 + $0x98] sm:$0xff]
      %v198 = vld [vmem:[%s169 + $0xa0] sm:$0xff]
      %v199 = vld [vmem:[%s169 + $0xa8] sm:$0xff]
      %v200 = vld [vmem:[%s169 + $0xb0] sm:$0xff]
      %v201 = vld [vmem:[%s169 + $0xb8] sm:$0xff]
      %v202 = vld [vmem:[%s169 + $0xc0] sm:$0xff]
      %v203 = vld [vmem:[%s169 + $0xc8] sm:$0xff]
      %v204 = vld [vmem:[%s169 + $0xd0] sm:$0xff]
      %v205 = vld [vmem:[%s169 + $0xd8] sm:$0xff]
      %v206 = vld [vmem:[%s169 + $0xe0] sm:$0xff]
      %v207 = vld [vmem:[%s169 + $0xe8] sm:$0xff]
      %v208 = vld [vmem:[%s169 + $0xf0] sm:$0xff]
      %v209 = vld [vmem:[%s169 + $0xf8] sm:$0xff]
      %v210 = vld [vmem:[%s169 + $0x100] sm:$0xff]
      %v211 = vld [vmem:[%s169 + $0x108] sm:$0xff]
      %v212 = vld [vmem:[%s169 + $0x110] sm:$0xff]
      %v213 = vld [vmem:[%s169 + $0x118] sm:$0xff]
      %v214 = vld [vmem:[%s169 + $0x120] sm:$0xff]
      %v215 = vld [vmem:[%s169 + $0x128] sm:$0xff]
      %v216 = vld [vmem:[%s169 + $0x130] sm:$0xff]
      %v217 = vld [vmem:[%s169 + $0x138] sm:$0xff]
      %v218 = vld [vmem:[%s169 + $0x140] sm:$0xff]
      %v219 = vld [vmem:[%s169 + $0x148] sm:$0xff]
      %v220 = vld [vmem:[%s169 + $0x150] sm:$0xff]
      %v221 = vld [vmem:[%s169 + $0x158] sm:$0xff]
      %v222 = vld [vmem:[%s169 + $0x160] sm:$0xff]
      %v223 = vld [vmem:[%s169 + $0x168] sm:$0xff]
      %v224 = vld [vmem:[%s169 + $0x170] sm:$0xff]
      %v225 = vld [vmem:[%s169 + $0x178] sm:$0xff]
      %v226 = vld [vmem:[%s169 + $0x180] sm:$0xff]
      %v227 = vld [vmem:[%s169 + $0x188] sm:$0xff]
      %v228 = vld [vmem:[%s169 + $0x190] sm:$0xff]
      %v229 = vld [vmem:[%s169 + $0x198] sm:$0xff]
      %v230 = vld [vmem:[%s169 + $0x1a0] sm:$0xff]
      %v231 = vld [vmem:[%s169 + $0x1a8] sm:$0xff]
      %v232 = vld [vmem:[%s169 + $0x1b0] sm:$0xff]
      %v233 = vld [vmem:[%s169 + $0x1b8] sm:$0xff]
      %v234 = vld [vmem:[%s169 + $0x1c0] sm:$0xff]
      %v235 = vld [vmem:[%s169 + $0x1c8] sm:$0xff]
      %v236 = vld [vmem:[%s169 + $0x1d0] sm:$0xff]
      %v237 = vld [vmem:[%s169 + $0x1d8] sm:$0xff]
      %v238 = vld [vmem:[%s169 + $0x1e0] sm:$0xff]
      %v239 = vld [vmem:[%s169 + $0x1e8] sm:$0xff]
      %v240 = vld [vmem:[%s169 + $0x1f0] sm:$0xff]
      %v241 = vld [vmem:[%s169 + $0x1f8] sm:$0xff]
      %v242 = vld [vmem:[%s169 + $0x200] sm:$0xff]
      %v243 = vld [vmem:[%s169 + $0x208] sm:$0xff]
      %v244 = vld [vmem:[%s169 + $0x210] sm:$0xff]
      %v245 = vld [vmem:[%s169 + $0x218] sm:$0xff]
      %v246 = vld [vmem:[%s169 + $0x220] sm:$0xff]
      %v247 = vld [vmem:[%s169 + $0x228] sm:$0xff]
      %v248 = vld [vmem:[%s169 + $0x230] sm:$0xff]
      %v249 = vld [vmem:[%s169 + $0x238] sm:$0xff]
      %v250 = vld [vmem:[%s169 + $0x240] sm:$0xff]
      %v251 = vld [vmem:[%s169 + $0x248] sm:$0xff]
      %v252 = vld [vmem:[%s169 + $0x250] sm:$0xff]
      %v253 = vld [vmem:[%s169 + $0x258] sm:$0xff]
      %v254 = vld [vmem:[%s169 + $0x260] sm:$0xff]
      %v255 = vld [vmem:[%s169 + $0x268] sm:$0xff]
      %v256 = vld [vmem:[%s169 + $0x270] sm:$0xff]
      %v257 = vld [vmem:[%s169 + $0x278] sm:$0xff]
      %v258 = vld [vmem:[%s169 + $0x280] sm:$0xff]
      %v259 = vld [vmem:[%s169 + $0x288] sm:$0xff]
      %v260 = vld [vmem:[%s169 + $0x290] sm:$0xff]
      %v261 = vld [vmem:[%s169 + $0x298] sm:$0xff]
      %v262 = vld [vmem:[%s169 + $0x2a0] sm:$0xff]
      %v263 = vld [vmem:[%s169 + $0x2a8] sm:$0xff]
      %v264 = vld [vmem:[%s169 + $0x2b0] sm:$0xff]
      %v265 = vld [vmem:[%s169 + $0x2b8] sm:$0xff]
      %v266 = vld [vmem:[%s169 + $0x2c0] sm:$0xff]
      %v267 = vld [vmem:[%s169 + $0x2c8] sm:$0xff]
      %v268 = vld [vmem:[%s169 + $0x2d0] sm:$0xff]
      %v269 = vld [vmem:[%s169 + $0x2d8] sm:$0xff]
      %v270 = vld [vmem:[%s169 + $0x2e0] sm:$0xff]
      %v271 = vld [vmem:[%s169 + $0x2e8] sm:$0xff]
      %v272 = vld [vmem:[%s169 + $0x2f0] sm:$0xff]
      %v273 = vld [vmem:[%s169 + $0x2f8] sm:$0xff]
      %v274 = vld [vmem:[%s169 + $0x300] sm:$0xff]
      %v275 = vld [vmem:[%s169 + $0x308] sm:$0xff]
      %v276 = vld [vmem:[%s169 + $0x310] sm:$0xff]
      %v277 = vld [vmem:[%s169 + $0x318] sm:$0xff]
      %v278 = vld [vmem:[%s169 + $0x320] sm:$0xff]
      %v279 = vld [vmem:[%s169 + $0x328] sm:$0xff]
      %v280 = vld [vmem:[%s169 + $0x330] sm:$0xff]
      %v281 = vld [vmem:[%s169 + $0x338] sm:$0xff]
      %v282 = vld [vmem:[%s169 + $0x340] sm:$0xff]
      %v283 = vld [vmem:[%s169 + $0x348] sm:$0xff]
      %v284 = vld [vmem:[%s169 + $0x350] sm:$0xff]
      %v285 = vld [vmem:[%s169 + $0x358] sm:$0xff]
      %v286 = vld [vmem:[%s169 + $0x360] sm:$0xff]
      %v287 = vld [vmem:[%s169 + $0x368] sm:$0xff]
      %v288 = vld [vmem:[%s169 + $0x370] sm:$0xff]
      %v289 = vld [vmem:[%s169 + $0x378] sm:$0xff]
      %v290 = vld [vmem:[%s169 + $0x380] sm:$0xff]
      %v291 = vld [vmem:[%s169 + $0x388] sm:$0xff]
      %v292 = vld [vmem:[%s169 + $0x390] sm:$0xff]
      %v293 = vld [vmem:[%s169 + $0x398] sm:$0xff]
      %v294 = vld [vmem:[%s169 + $0x3a0] sm:$0xff]
      %v295 = vld [vmem:[%s169 + $0x3a8] sm:$0xff]
      %v296 = vld [vmem:[%s169 + $0x3b0] sm:$0xff]
      %v297 = vld [vmem:[%s169 + $0x3b8] sm:$0xff]
      %v298 = vld [vmem:[%s169 + $0x3c0] sm:$0xff]
      %v299 = vld [vmem:[%s169 + $0x3c8] sm:$0xff]
      %v300 = vld [vmem:[%s169 + $0x3d0] sm:$0xff]
      %v301 = vld [vmem:[%s169 + $0x3d8] sm:$0xff]
      %v302 = vld [vmem:[%s169 + $0x3e0] sm:$0xff]
      %v303 = vld [vmem:[%s169 + $0x3e8] sm:$0xff]
      %v304 = vld [vmem:[%s169 + $0x3f0] sm:$0xff]
      %v305 = vld [vmem:[%s169 + $0x3f8] sm:$0xff]
      %v306 = vld [vmem:[%s1] sm:$0xf]
      %v307 = vld [vmem:[%s1 + $0x4] sm:$0xf]
      %v308 = vld [vmem:[%s1 + $0x8] sm:$0xf]
      %v309 = vld [vmem:[%s1 + $0xc] sm:$0xf]
      %v310 = vld [vmem:[%s1 + $0x10] sm:$0xf]
      %v311 = vld [vmem:[%s1 + $0x14] sm:$0xf]
      %v312 = vld [vmem:[%s1 + $0x18] sm:$0xf]
      %v313 = vld [vmem:[%s1 + $0x1c] sm:$0xf]
      %v314 = vld [vmem:[%s1 + $0x20] sm:$0xf]
      %v315 = vld [vmem:[%s1 + $0x24] sm:$0xf]
      %v316 = vld [vmem:[%s1 + $0x28] sm:$0xf]
      %v317 = vld [vmem:[%s1 + $0x2c] sm:$0xf]
      %v318 = vld [vmem:[%s1 + $0x30] sm:$0xf]
      %v319 = vld [vmem:[%s1 + $0x34] sm:$0xf]
      %v320 = vld [vmem:[%s1 + $0x38] sm:$0xf]
      %v321 = vld [vmem:[%s1 + $0x3c] sm:$0xf]
      %v322 = vld [vmem:[%s1 + $0x40] sm:$0xf]
      %v323 = vld [vmem:[%s1 + $0x44] sm:$0xf]
      %v324 = vld [vmem:[%s2] sm:$0x1]
      %v326 = vlaneseq
      %v327 = vshrl.u32 %v326, 7
      %v328 = vsub.s32 0, %v327
      %v329 = vrot.slane %v324, %v328
      %v459 = vunpack.c.l.b16 %v178
      %v460 = vunpack.c.h.b16 %v178
      %v461 = vunpack.c.l.b16 %v179
      %v462 = vunpack.c.h.b16 %v179
      %v463 = vunpack.c.l.b16 %v180
      %v464 = vunpack.c.h.b16 %v180
      %v465 = vunpack.c.l.b16 %v181
      %v466 = vunpack.c.h.b16 %v181
      %v467 = vunpack.c.l.b16 %v182
      %v468 = vunpack.c.h.b16 %v182
      %v469 = vunpack.c.l.b16 %v183
      %v470 = vunpack.c.h.b16 %v183
      %v471 = vunpack.c.l.b16 %v184
      %v472 = vunpack.c.h.b16 %v184
      %v473 = vunpack.c.l.b16 %v185
      %v474 = vunpack.c.h.b16 %v185
      %v475 = vunpack.c.l.b16 %v186
      %v476 = vunpack.c.h.b16 %v186
      %v477 = vunpack.c.l.b16 %v187
      %v478 = vunpack.c.h.b16 %v187
      %v479 = vunpack.c.l.b16 %v188
      %v480 = vunpack.c.h.b16 %v188
      %v481 = vunpack.c.l.b16 %v189
      %v482 = vunpack.c.h.b16 %v189
      %v483 = vunpack.c.l.b16 %v190
      %v484 = vunpack.c.h.b16 %v190
      %v485 = vunpack.c.l.b16 %v191
      %v486 = vunpack.c.h.b16 %v191
      %v487 = vunpack.c.l.b16 %v192
      %v488 = vunpack.c.h.b16 %v192
      %v489 = vunpack.c.l.b16 %v193
      %v490 = vunpack.c.h.b16 %v193
      %v491 = vunpack.c.l.b16 %v194
      %v492 = vunpack.c.h.b16 %v194
      %v493 = vunpack.c.l.b16 %v195
      %v494 = vunpack.c.h.b16 %v195
      %v495 = vunpack.c.l.b16 %v196
      %v496 = vunpack.c.h.b16 %v196
      %v497 = vunpack.c.l.b16 %v197
      %v498 = vunpack.c.h.b16 %v197
      %v499 = vunpack.c.l.b16 %v198
      %v500 = vunpack.c.h.b16 %v198
      %v501 = vunpack.c.l.b16 %v199
      %v502 = vunpack.c.h.b16 %v199
      %v503 = vunpack.c.l.b16 %v200
      %v504 = vunpack.c.h.b16 %v200
      %v505 = vunpack.c.l.b16 %v201
      %v506 = vunpack.c.h.b16 %v201
      %v507 = vunpack.c.l.b16 %v202
      %v508 = vunpack.c.h.b16 %v202
      %v509 = vunpack.c.l.b16 %v203
      %v510 = vunpack.c.h.b16 %v203
      %v511 = vunpack.c.l.b16 %v204
      %v512 = vunpack.c.h.b16 %v204
      %v513 = vunpack.c.l.b16 %v205
      %v514 = vunpack.c.h.b16 %v205
      %v515 = vunpack.c.l.b16 %v206
      %v516 = vunpack.c.h.b16 %v206
      %v517 = vunpack.c.l.b16 %v207
      %v518 = vunpack.c.h.b16 %v207
      %v519 = vunpack.c.l.b16 %v208
      %v520 = vunpack.c.h.b16 %v208
      %v521 = vunpack.c.l.b16 %v209
      %v522 = vunpack.c.h.b16 %v209
      %v523 = vunpack.c.l.b16 %v210
      %v524 = vunpack.c.h.b16 %v210
      %v525 = vunpack.c.l.b16 %v211
      %v526 = vunpack.c.h.b16 %v211
      %v527 = vunpack.c.l.b16 %v212
      %v528 = vunpack.c.h.b16 %v212
      %v529 = vunpack.c.l.b16 %v213
      %v530 = vunpack.c.h.b16 %v213
      %v531 = vunpack.c.l.b16 %v214
      %v532 = vunpack.c.h.b16 %v214
      %v533 = vunpack.c.l.b16 %v215
      %v534 = vunpack.c.h.b16 %v215
      %v535 = vunpack.c.l.b16 %v216
      %v536 = vunpack.c.h.b16 %v216
      %v537 = vunpack.c.l.b16 %v217
      %v538 = vunpack.c.h.b16 %v217
      %v539 = vunpack.c.l.b16 %v218
      %v540 = vunpack.c.h.b16 %v218
      %v541 = vunpack.c.l.b16 %v219
      %v542 = vunpack.c.h.b16 %v219
      %v543 = vunpack.c.l.b16 %v220
      %v544 = vunpack.c.h.b16 %v220
      %v545 = vunpack.c.l.b16 %v221
      %v546 = vunpack.c.h.b16 %v221
      %v547 = vunpack.c.l.b16 %v222
      %v548 = vunpack.c.h.b16 %v222
      %v549 = vunpack.c.l.b16 %v223
      %v550 = vunpack.c.h.b16 %v223
      %v551 = vunpack.c.l.b16 %v224
      %v552 = vunpack.c.h.b16 %v224
      %v553 = vunpack.c.l.b16 %v225
      %v554 = vunpack.c.h.b16 %v225
      %v555 = vunpack.c.l.b16 %v226
      %v556 = vunpack.c.h.b16 %v226
      %v557 = vunpack.c.l.b16 %v227
      %v558 = vunpack.c.h.b16 %v227
      %v559 = vunpack.c.l.b16 %v228
      %v560 = vunpack.c.h.b16 %v228
      %v561 = vunpack.c.l.b16 %v229
      %v562 = vunpack.c.h.b16 %v229
      %v563 = vunpack.c.l.b16 %v230
      %v564 = vunpack.c.h.b16 %v230
      %v565 = vunpack.c.l.b16 %v231
      %v566 = vunpack.c.h.b16 %v231
      %v567 = vunpack.c.l.b16 %v232
      %v568 = vunpack.c.h.b16 %v232
      %v569 = vunpack.c.l.b16 %v233
      %v570 = vunpack.c.h.b16 %v233
      %v571 = vunpack.c.l.b16 %v234
      %v572 = vunpack.c.h.b16 %v234
      %v573 = vunpack.c.l.b16 %v235
      %v574 = vunpack.c.h.b16 %v235
      %v575 = vunpack.c.l.b16 %v236
      %v576 = vunpack.c.h.b16 %v236
      %v577 = vunpack.c.l.b16 %v237
      %v578 = vunpack.c.h.b16 %v237
      %v579 = vunpack.c.l.b16 %v238
      %v580 = vunpack.c.h.b16 %v238
      %v581 = vunpack.c.l.b16 %v239
      %v582 = vunpack.c.h.b16 %v239
      %v583 = vunpack.c.l.b16 %v240
      %v584 = vunpack.c.h.b16 %v240
      %v585 = vunpack.c.l.b16 %v241
      %v586 = vunpack.c.h.b16 %v241
      %v587 = vunpack.c.l.b16 %v242
      %v588 = vunpack.c.h.b16 %v242
      %v589 = vunpack.c.l.b16 %v243
      %v590 = vunpack.c.h.b16 %v243
      %v591 = vunpack.c.l.b16 %v244
      %v592 = vunpack.c.h.b16 %v244
      %v593 = vunpack.c.l.b16 %v245
      %v594 = vunpack.c.h.b16 %v245
      %v595 = vunpack.c.l.b16 %v246
      %v596 = vunpack.c.h.b16 %v246
      %v597 = vunpack.c.l.b16 %v247
      %v598 = vunpack.c.h.b16 %v247
      %v599 = vunpack.c.l.b16 %v248
      %v600 = vunpack.c.h.b16 %v248
      %v601 = vunpack.c.l.b16 %v249
      %v602 = vunpack.c.h.b16 %v249
      %v603 = vunpack.c.l.b16 %v250
      %v604 = vunpack.c.h.b16 %v250
      %v605 = vunpack.c.l.b16 %v251
      %v606 = vunpack.c.h.b16 %v251
      %v607 = vunpack.c.l.b16 %v252
      %v608 = vunpack.c.h.b16 %v252
      %v609 = vunpack.c.l.b16 %v253
      %v610 = vunpack.c.h.b16 %v253
      %v611 = vunpack.c.l.b16 %v254
      %v612 = vunpack.c.h.b16 %v254
      %v613 = vunpack.c.l.b16 %v255
      %v614 = vunpack.c.h.b16 %v255
      %v615 = vunpack.c.l.b16 %v256
      %v616 = vunpack.c.h.b16 %v256
      %v617 = vunpack.c.l.b16 %v257
      %v618 = vunpack.c.h.b16 %v257
      %v619 = vunpack.c.l.b16 %v258
      %v620 = vunpack.c.h.b16 %v258
      %v621 = vunpack.c.l.b16 %v259
      %v622 = vunpack.c.h.b16 %v259
      %v623 = vunpack.c.l.b16 %v260
      %v624 = vunpack.c.h.b16 %v260
      %v625 = vunpack.c.l.b16 %v261
      %v626 = vunpack.c.h.b16 %v261
      %v627 = vunpack.c.l.b16 %v262
      %v628 = vunpack.c.h.b16 %v262
      %v629 = vunpack.c.l.b16 %v263
      %v630 = vunpack.c.h.b16 %v263
      %v631 = vunpack.c.l.b16 %v264
      %v632 = vunpack.c.h.b16 %v264
      %v633 = vunpack.c.l.b16 %v265
      %v634 = vunpack.c.h.b16 %v265
      %v635 = vunpack.c.l.b16 %v266
      %v636 = vunpack.c.h.b16 %v266
      %v637 = vunpack.c.l.b16 %v267
      %v638 = vunpack.c.h.b16 %v267
      %v639 = vunpack.c.l.b16 %v268
      %v640 = vunpack.c.h.b16 %v268
      %v641 = vunpack.c.l.b16 %v269
      %v642 = vunpack.c.h.b16 %v269
      %v643 = vunpack.c.l.b16 %v270
      %v644 = vunpack.c.h.b16 %v270
      %v645 = vunpack.c.l.b16 %v271
      %v646 = vunpack.c.h.b16 %v271
      %v647 = vunpack.c.l.b16 %v272
      %v648 = vunpack.c.h.b16 %v272
      %v649 = vunpack.c.l.b16 %v273
      %v650 = vunpack.c.h.b16 %v273
      %v651 = vunpack.c.l.b16 %v274
      %v652 = vunpack.c.h.b16 %v274
      %v653 = vunpack.c.l.b16 %v275
      %v654 = vunpack.c.h.b16 %v275
      %v655 = vunpack.c.l.b16 %v276
      %v656 = vunpack.c.h.b16 %v276
      %v657 = vunpack.c.l.b16 %v277
      %v658 = vunpack.c.h.b16 %v277
      %v659 = vunpack.c.l.b16 %v278
      %v660 = vunpack.c.h.b16 %v278
      %v661 = vunpack.c.l.b16 %v279
      %v662 = vunpack.c.h.b16 %v279
      %v663 = vunpack.c.l.b16 %v280
      %v664 = vunpack.c.h.b16 %v280
      %v665 = vunpack.c.l.b16 %v281
      %v666 = vunpack.c.h.b16 %v281
      %v667 = vunpack.c.l.b16 %v282
      %v668 = vunpack.c.h.b16 %v282
      %v669 = vunpack.c.l.b16 %v283
      %v670 = vunpack.c.h.b16 %v283
      %v671 = vunpack.c.l.b16 %v284
      %v672 = vunpack.c.h.b16 %v284
      %v673 = vunpack.c.l.b16 %v285
      %v674 = vunpack.c.h.b16 %v285
      %v675 = vunpack.c.l.b16 %v286
      %v676 = vunpack.c.h.b16 %v286
      %v677 = vunpack.c.l.b16 %v287
      %v678 = vunpack.c.h.b16 %v287
      %v679 = vunpack.c.l.b16 %v288
      %v680 = vunpack.c.h.b16 %v288
      %v681 = vunpack.c.l.b16 %v289
      %v682 = vunpack.c.h.b16 %v289
      %v683 = vunpack.c.l.b16 %v290
      %v684 = vunpack.c.h.b16 %v290
      %v685 = vunpack.c.l.b16 %v291
      %v686 = vunpack.c.h.b16 %v291
      %v687 = vunpack.c.l.b16 %v292
      %v688 = vunpack.c.h.b16 %v292
      %v689 = vunpack.c.l.b16 %v293
      %v690 = vunpack.c.h.b16 %v293
      %v691 = vunpack.c.l.b16 %v294
      %v692 = vunpack.c.h.b16 %v294
      %v693 = vunpack.c.l.b16 %v295
      %v694 = vunpack.c.h.b16 %v295
      %v695 = vunpack.c.l.b16 %v296
      %v696 = vunpack.c.h.b16 %v296
      %v697 = vunpack.c.l.b16 %v297
      %v698 = vunpack.c.h.b16 %v297
      %v699 = vunpack.c.l.b16 %v298
      %v700 = vunpack.c.h.b16 %v298
      %v701 = vunpack.c.l.b16 %v299
      %v702 = vunpack.c.h.b16 %v299
      %v703 = vunpack.c.l.b16 %v300
      %v704 = vunpack.c.h.b16 %v300
      %v705 = vunpack.c.l.b16 %v301
      %v706 = vunpack.c.h.b16 %v301
      %v707 = vunpack.c.l.b16 %v302
      %v708 = vunpack.c.h.b16 %v302
      %v709 = vunpack.c.l.b16 %v303
      %v710 = vunpack.c.h.b16 %v303
      %v711 = vunpack.c.l.b16 %v304
      %v712 = vunpack.c.h.b16 %v304
      %v713 = vunpack.c.l.b16 %v305
      %v714 = vunpack.c.h.b16 %v305
      %v715 = vpack.c.b16 %v461, %v459
      %v716 = vpack.c.b16 %v462, %v460
      %v717 = vpack.c.b16 %v465, %v463
      %v718 = vpack.c.b16 %v466, %v464
      %v719 = vpack.c.b16 %v469, %v467
      %v720 = vpack.c.b16 %v470, %v468
      %v721 = vpack.c.b16 %v473, %v471
      %v722 = vpack.c.b16 %v474, %v472
      %v723 = vpack.c.b16 %v477, %v475
      %v724 = vpack.c.b16 %v478, %v476
      %v725 = vpack.c.b16 %v481, %v479
      %v726 = vpack.c.b16 %v482, %v480
      %v727 = vpack.c.b16 %v485, %v483
      %v728 = vpack.c.b16 %v486, %v484
      %v729 = vpack.c.b16 %v489, %v487
      %v730 = vpack.c.b16 %v490, %v488
      %v731 = vpack.c.b16 %v493, %v491
      %v732 = vpack.c.b16 %v494, %v492
      %v733 = vpack.c.b16 %v497, %v495
      %v734 = vpack.c.b16 %v498, %v496
      %v735 = vpack.c.b16 %v501, %v499
      %v736 = vpack.c.b16 %v502, %v500
      %v737 = vpack.c.b16 %v505, %v503
      %v738 = vpack.c.b16 %v506, %v504
      %v739 = vpack.c.b16 %v509, %v507
      %v740 = vpack.c.b16 %v510, %v508
      %v741 = vpack.c.b16 %v513, %v511
      %v742 = vpack.c.b16 %v514, %v512
      %v743 = vpack.c.b16 %v517, %v515
      %v744 = vpack.c.b16 %v518, %v516
      %v745 = vpack.c.b16 %v521, %v519
      %v746 = vpack.c.b16 %v522, %v520
      %v747 = vpack.c.b16 %v525, %v523
      %v748 = vpack.c.b16 %v526, %v524
      %v749 = vpack.c.b16 %v529, %v527
      %v750 = vpack.c.b16 %v530, %v528
      %v751 = vpack.c.b16 %v533, %v531
      %v752 = vpack.c.b16 %v534, %v532
      %v753 = vpack.c.b16 %v537, %v535
      %v754 = vpack.c.b16 %v538, %v536
      %v755 = vpack.c.b16 %v541, %v539
      %v756 = vpack.c.b16 %v542, %v540
      %v757 = vpack.c.b16 %v545, %v543
      %v758 = vpack.c.b16 %v546, %v544
      %v759 = vpack.c.b16 %v549, %v547
      %v760 = vpack.c.b16 %v550, %v548
      %v761 = vpack.c.b16 %v553, %v551
      %v762 = vpack.c.b16 %v554, %v552
      %v763 = vpack.c.b16 %v557, %v555
      %v764 = vpack.c.b16 %v558, %v556
      %v765 = vpack.c.b16 %v561, %v559
      %v766 = vpack.c.b16 %v562, %v560
      %v767 = vpack.c.b16 %v565, %v563
      %v768 = vpack.c.b16 %v566, %v564
      %v769 = vpack.c.b16 %v569, %v567
      %v770 = vpack.c.b16 %v570, %v568
      %v771 = vpack.c.b16 %v573, %v571
      %v772 = vpack.c.b16 %v574, %v572
      %v773 = vpack.c.b16 %v577, %v575
      %v774 = vpack.c.b16 %v578, %v576
      %v775 = vpack.c.b16 %v581, %v579
      %v776 = vpack.c.b16 %v582, %v580
      %v777 = vpack.c.b16 %v585, %v583
      %v778 = vpack.c.b16 %v586, %v584
      %v779 = vpack.c.b16 %v589, %v587
      %v780 = vpack.c.b16 %v590, %v588
      %v781 = vpack.c.b16 %v593, %v591
      %v782 = vpack.c.b16 %v594, %v592
      %v783 = vpack.c.b16 %v597, %v595
      %v784 = vpack.c.b16 %v598, %v596
      %v785 = vpack.c.b16 %v601, %v599
      %v786 = vpack.c.b16 %v602, %v600
      %v787 = vpack.c.b16 %v605, %v603
      %v788 = vpack.c.b16 %v606, %v604
      %v789 = vpack.c.b16 %v609, %v607
      %v790 = vpack.c.b16 %v610, %v608
      %v791 = vpack.c.b16 %v613, %v611
      %v792 = vpack.c.b16 %v614, %v612
      %v793 = vpack.c.b16 %v617, %v615
      %v794 = vpack.c.b16 %v618, %v616
      %v795 = vpack.c.b16 %v621, %v619
      %v796 = vpack.c.b16 %v622, %v620
      %v797 = vpack.c.b16 %v625, %v623
      %v798 = vpack.c.b16 %v626, %v624
      %v799 = vpack.c.b16 %v629, %v627
      %v800 = vpack.c.b16 %v630, %v628
      %v801 = vpack.c.b16 %v633, %v631
      %v802 = vpack.c.b16 %v634, %v632
      %v803 = vpack.c.b16 %v637, %v635
      %v804 = vpack.c.b16 %v638, %v636
      %v805 = vpack.c.b16 %v641, %v639
      %v806 = vpack.c.b16 %v642, %v640
      %v807 = vpack.c.b16 %v645, %v643
      %v808 = vpack.c.b16 %v646, %v644
      %v809 = vpack.c.b16 %v649, %v647
      %v810 = vpack.c.b16 %v650, %v648
      %v811 = vpack.c.b16 %v653, %v651
      %v812 = vpack.c.b16 %v654, %v652
      %v813 = vpack.c.b16 %v657, %v655
      %v814 = vpack.c.b16 %v658, %v656
      %v815 = vpack.c.b16 %v661, %v659
      %v816 = vpack.c.b16 %v662, %v660
      %v817 = vpack.c.b16 %v665, %v663
      %v818 = vpack.c.b16 %v666, %v664
      %v819 = vpack.c.b16 %v669, %v667
      %v820 = vpack.c.b16 %v670, %v668
      %v821 = vpack.c.b16 %v673, %v671
      %v822 = vpack.c.b16 %v674, %v672
      %v823 = vpack.c.b16 %v677, %v675
      %v824 = vpack.c.b16 %v678, %v676
      %v825 = vpack.c.b16 %v681, %v679
      %v826 = vpack.c.b16 %v682, %v680
      %v827 = vpack.c.b16 %v685, %v683
      %v828 = vpack.c.b16 %v686, %v684
      %v829 = vpack.c.b16 %v689, %v687
      %v830 = vpack.c.b16 %v690, %v688
      %v831 = vpack.c.b16 %v693, %v691
      %v832 = vpack.c.b16 %v694, %v692
      %v833 = vpack.c.b16 %v697, %v695
      %v834 = vpack.c.b16 %v698, %v696
      %v835 = vpack.c.b16 %v701, %v699
      %v836 = vpack.c.b16 %v702, %v700
      %v837 = vpack.c.b16 %v705, %v703
      %v838 = vpack.c.b16 %v706, %v704
      %v839 = vpack.c.b16 %v709, %v707
      %v840 = vpack.c.b16 %v710, %v708
      %v841 = vpack.c.b16 %v713, %v711
      %v842 = vpack.c.b16 %v714, %v712
      %v925 = vunpack.c.l.b16 %v306
      %v926 = vunpack.c.l.b16 %v307
      %v927 = vunpack.c.l.b16 %v308
      %v928 = vunpack.c.l.b16 %v309
      %v929 = vunpack.c.l.b16 %v310
      %v930 = vunpack.c.l.b16 %v311
      %v931 = vunpack.c.l.b16 %v312
      %v932 = vunpack.c.l.b16 %v313
      %v933 = vunpack.c.l.b16 %v314
      %v934 = vunpack.c.l.b16 %v315
      %v935 = vunpack.c.l.b16 %v316
      %v936 = vunpack.c.l.b16 %v317
      %v937 = vunpack.c.l.b16 %v318
      %v938 = vunpack.c.l.b16 %v319
      %v939 = vunpack.c.l.b16 %v320
      %v940 = vunpack.c.l.b16 %v321
      %v941 = vunpack.c.l.b16 %v322
      %v942 = vunpack.c.l.b16 %v323
      %v943 = vpack.c.b16 %v926, %v925
      %v944 = vpack.c.b16 %v928, %v927
      %v945 = vpack.c.b16 %v930, %v929
      %v946 = vpack.c.b16 %v932, %v931
      %v947 = vpack.c.b16 %v934, %v933
      %v948 = vpack.c.b16 %v936, %v935
      %v949 = vpack.c.b16 %v938, %v937
      %v950 = vpack.c.b16 %v940, %v939
      %v951 = vpack.c.b16 %v942, %v941
      %vm961 = vcmask 130048
      %v963 = vsel %vm961, %v716, 0
      %v966 = vsel %vm961, %v718, 0
      %v969 = vsel %vm961, %v720, 0
      %v972 = vsel %vm961, %v722, 0
      %v975 = vsel %vm961, %v724, 0
      %v978 = vsel %vm961, %v726, 0
      %v981 = vsel %vm961, %v728, 0
      %v984 = vsel %vm961, %v730, 0
      %v987 = vsel %vm961, %v732, 0
      %v990 = vsel %vm961, %v734, 0
      %v993 = vsel %vm961, %v736, 0
      %v996 = vsel %vm961, %v738, 0
      %v999 = vsel %vm961, %v740, 0
      %v1002 = vsel %vm961, %v742, 0
      %v1005 = vsel %vm961, %v744, 0
      %v1008 = vsel %vm961, %v746, 0
      %v1011 = vsel %vm961, %v748, 0
      %v1014 = vsel %vm961, %v750, 0
      %v1017 = vsel %vm961, %v752, 0
      %v1020 = vsel %vm961, %v754, 0
      %v1023 = vsel %vm961, %v756, 0
      %v1026 = vsel %vm961, %v758, 0
      %v1029 = vsel %vm961, %v760, 0
      %v1032 = vsel %vm961, %v762, 0
      %v1035 = vsel %vm961, %v764, 0
      %v1038 = vsel %vm961, %v766, 0
      %v1041 = vsel %vm961, %v768, 0
      %v1044 = vsel %vm961, %v770, 0
      %v1047 = vsel %vm961, %v772, 0
      %v1050 = vsel %vm961, %v774, 0
      %v1053 = vsel %vm961, %v776, 0
      %v1056 = vsel %vm961, %v778, 0
      %v1059 = vsel %vm961, %v780, 0
      %v1062 = vsel %vm961, %v782, 0
      %v1065 = vsel %vm961, %v784, 0
      %v1068 = vsel %vm961, %v786, 0
      %v1071 = vsel %vm961, %v788, 0
      %v1074 = vsel %vm961, %v790, 0
      %v1077 = vsel %vm961, %v792, 0
      %v1080 = vsel %vm961, %v794, 0
      %v1083 = vsel %vm961, %v796, 0
      %v1086 = vsel %vm961, %v798, 0
      %v1089 = vsel %vm961, %v800, 0
      %v1092 = vsel %vm961, %v802, 0
      %v1095 = vsel %vm961, %v804, 0
      %v1098 = vsel %vm961, %v806, 0
      %v1101 = vsel %vm961, %v808, 0
      %v1104 = vsel %vm961, %v810, 0
      %v1107 = vsel %vm961, %v812, 0
      %v1110 = vsel %vm961, %v814, 0
      %v1113 = vsel %vm961, %v816, 0
      %v1116 = vsel %vm961, %v818, 0
      %v1119 = vsel %vm961, %v820, 0
      %v1122 = vsel %vm961, %v822, 0
      %v1125 = vsel %vm961, %v824, 0
      %v1128 = vsel %vm961, %v826, 0
      %v1131 = vsel %vm961, %v828, 0
      %v1134 = vsel %vm961, %v830, 0
      %v1137 = vsel %vm961, %v832, 0
      %v1140 = vsel %vm961, %v834, 0
      %v1143 = vsel %vm961, %v836, 0
      %v1146 = vsel %vm961, %v838, 0
      %v1149 = vsel %vm961, %v840, 0
      %v1152 = vsel %vm961, %v842, 0
      %1154 = vmatprep.subr.bf16.mxu0 0
      %1155 = vmatpush1.bf16.msra.mxu0 %v950
      %1156 = vmatprep.subr.bf16.mxu0 0
      %1157 = vmatpush1.bf16.msra.mxu0 %v949
      %1158 = vmatprep.subr.bf16.mxu0 0
      %1159 = vmatpush1.bf16.msra.mxu0 %v948
      %1160 = vmatprep.subr.bf16.mxu0 0
      %1161 = vmatpush1.bf16.msra.mxu0 %v947
      %1162 = vmatprep.subr.bf16.mxu0 0
      %1163 = vmatpush1.bf16.msra.mxu0 %v946
      %1164 = vmatprep.subr.bf16.mxu0 0
      %1165 = vmatpush1.bf16.msra.mxu0 %v945
      %1166 = vmatprep.subr.bf16.mxu0 0
      %1167 = vmatpush1.bf16.msra.mxu0 %v944
      %1168 = vmatprep.subr.bf16.mxu0 0
      %1169 = vmatpush1.bf16.msra.mxu0 %v943
      %1170 = vmatprep.subr.bf16.mxu0 0
      %1171 = vmatpush2.bf16.msra.mxu0 0
      %1172 = vmatprep.subr.bf16.mxu0 0
      %1173 = vmatpush2.bf16.msra.mxu0 0
      %1174 = vmatprep.subr.bf16.mxu0 0
      %1175 = vmatpush2.bf16.msra.mxu0 0
      %1176 = vmatprep.subr.bf16.mxu0 0
      %1177 = vmatpush2.bf16.msra.mxu0 0
      %1178 = vmatprep.subr.bf16.mxu0 0
      %1179 = vmatpush2.bf16.msra.mxu0 0
      %1180 = vmatprep.subr.bf16.mxu0 0
      %1181 = vmatpush2.bf16.msra.mxu0 0
      %1182 = vmatprep.subr.bf16.mxu0 0
      %1183 = vmatpush2.bf16.msra.mxu0 0
      %1184 = vmatprep.subr.bf16.mxu0 0
      %1185 = vmatpush2.bf16.msra.mxu0 %v951
      %1186 = vmatprep.mubr.bf16.mxu0 %v963
      %1187 = vmatmul.mubr.bf16.gmra.mxu0 %v715
      %v1188 = vpop.f32.mrf.mxu0
      %v1189 = vadd.f32 %v329, %v1188
      %v1190 = vpop.f32.mrf.mxu0
      %v1191 = vpop.f32.mrf.mxu0
      %v1192 = vadd.f32 %v329, %v1191
      %v1193 = vpop.f32.mrf.mxu0
      %1194 = vmatprep.mubr.bf16.mxu0 %v966
      %1195 = vmatmul.mubr.bf16.gmra.mxu0 %v717
      %v1196 = vpop.f32.mrf.mxu0
      %v1197 = vadd.f32 %v329, %v1196
      %v1198 = vpop.f32.mrf.mxu0
      %v1199 = vpop.f32.mrf.mxu0
      %v1200 = vadd.f32 %v329, %v1199
      %v1201 = vpop.f32.mrf.mxu0
      %1202 = vmatprep.mubr.bf16.mxu0 %v969
      %1203 = vmatmul.mubr.bf16.gmra.mxu0 %v719
      %v1204 = vpop.f32.mrf.mxu0
      %v1205 = vadd.f32 %v329, %v1204
      %v1206 = vpop.f32.mrf.mxu0
      %v1207 = vpop.f32.mrf.mxu0
      %v1208 = vadd.f32 %v329, %v1207
      %v1209 = vpop.f32.mrf.mxu0
      %1210 = vmatprep.mubr.bf16.mxu0 %v972
      %1211 = vmatmul.mubr.bf16.gmra.mxu0 %v721
      %v1212 = vpop.f32.mrf.mxu0
      %v1213 = vadd.f32 %v329, %v1212
      %v1214 = vpop.f32.mrf.mxu0
      %v1215 = vpop.f32.mrf.mxu0
      %v1216 = vadd.f32 %v329, %v1215
      %v1217 = vpop.f32.mrf.mxu0
      %1218 = vmatprep.mubr.bf16.mxu0 %v975
      %1219 = vmatmul.mubr.bf16.gmra.mxu0 %v723
      %v1220 = vpop.f32.mrf.mxu0
      %v1221 = vadd.f32 %v329, %v1220
      %v1222 = vpop.f32.mrf.mxu0
      %v1223 = vpop.f32.mrf.mxu0
      %v1224 = vadd.f32 %v329, %v1223
      %v1225 = vpop.f32.mrf.mxu0
      %1226 = vmatprep.mubr.bf16.mxu0 %v978
      %1227 = vmatmul.mubr.bf16.gmra.mxu0 %v725
      %v1228 = vpop.f32.mrf.mxu0
      %v1229 = vadd.f32 %v329, %v1228
      %v1230 = vpop.f32.mrf.mxu0
      %v1231 = vpop.f32.mrf.mxu0
      %v1232 = vadd.f32 %v329, %v1231
      %v1233 = vpop.f32.mrf.mxu0
      %1234 = vmatprep.mubr.bf16.mxu0 %v981
      %1235 = vmatmul.mubr.bf16.gmra.mxu0 %v727
      %v1236 = vpop.f32.mrf.mxu0
      %v1237 = vadd.f32 %v329, %v1236
      %v1238 = vpop.f32.mrf.mxu0
      %v1239 = vpop.f32.mrf.mxu0
      %v1240 = vadd.f32 %v329, %v1239
      %v1241 = vpop.f32.mrf.mxu0
      %1242 = vmatprep.mubr.bf16.mxu0 %v984
      %1243 = vmatmul.mubr.bf16.gmra.mxu0 %v729
      %v1244 = vpop.f32.mrf.mxu0
      %v1245 = vadd.f32 %v329, %v1244
      %v1246 = vpop.f32.mrf.mxu0
      %v1247 = vpop.f32.mrf.mxu0
      %v1248 = vadd.f32 %v329, %v1247
      %v1249 = vpop.f32.mrf.mxu0
      %1250 = vmatprep.mubr.bf16.mxu0 %v987
      %1251 = vmatmul.mubr.bf16.gmra.mxu0 %v731
      %v1252 = vpop.f32.mrf.mxu0
      %v1253 = vadd.f32 %v329, %v1252
      %v1254 = vpop.f32.mrf.mxu0
      %v1255 = vpop.f32.mrf.mxu0
      %v1256 = vadd.f32 %v329, %v1255
      %v1257 = vpop.f32.mrf.mxu0
      %1258 = vmatprep.mubr.bf16.mxu0 %v990
      %1259 = vmatmul.mubr.bf16.gmra.mxu0 %v733
      %v1260 = vpop.f32.mrf.mxu0
      %v1261 = vadd.f32 %v329, %v1260
      %v1262 = vpop.f32.mrf.mxu0
      %v1263 = vpop.f32.mrf.mxu0
      %v1264 = vadd.f32 %v329, %v1263
      %v1265 = vpop.f32.mrf.mxu0
      %1266 = vmatprep.mubr.bf16.mxu0 %v993
      %1267 = vmatmul.mubr.bf16.gmra.mxu0 %v735
      %v1268 = vpop.f32.mrf.mxu0
      %v1269 = vadd.f32 %v329, %v1268
      %v1270 = vpop.f32.mrf.mxu0
      %v1271 = vpop.f32.mrf.mxu0
      %v1272 = vadd.f32 %v329, %v1271
      %v1273 = vpop.f32.mrf.mxu0
      %1274 = vmatprep.mubr.bf16.mxu0 %v996
      %1275 = vmatmul.mubr.bf16.gmra.mxu0 %v737
      %v1276 = vpop.f32.mrf.mxu0
      %v1277 = vadd.f32 %v329, %v1276
      %v1278 = vpop.f32.mrf.mxu0
      %v1279 = vpop.f32.mrf.mxu0
      %v1280 = vadd.f32 %v329, %v1279
      %v1281 = vpop.f32.mrf.mxu0
      %1282 = vmatprep.mubr.bf16.mxu0 %v999
      %1283 = vmatmul.mubr.bf16.gmra.mxu0 %v739
      %v1284 = vpop.f32.mrf.mxu0
      %v1285 = vadd.f32 %v329, %v1284
      %v1286 = vpop.f32.mrf.mxu0
      %v1287 = vpop.f32.mrf.mxu0
      %v1288 = vadd.f32 %v329, %v1287
      %v1289 = vpop.f32.mrf.mxu0
      %1290 = vmatprep.mubr.bf16.mxu0 %v1002
      %1291 = vmatmul.mubr.bf16.gmra.mxu0 %v741
      %v1292 = vpop.f32.mrf.mxu0
      %v1293 = vadd.f32 %v329, %v1292
      %v1294 = vpop.f32.mrf.mxu0
      %v1295 = vpop.f32.mrf.mxu0
      %v1296 = vadd.f32 %v329, %v1295
      %v1297 = vpop.f32.mrf.mxu0
      %1298 = vmatprep.mubr.bf16.mxu0 %v1005
      %1299 = vmatmul.mubr.bf16.gmra.mxu0 %v743
      %v1300 = vpop.f32.mrf.mxu0
      %v1301 = vadd.f32 %v329, %v1300
      %v1302 = vpop.f32.mrf.mxu0
      %v1303 = vpop.f32.mrf.mxu0
      %v1304 = vadd.f32 %v329, %v1303
      %v1305 = vpop.f32.mrf.mxu0
      %1306 = vmatprep.mubr.bf16.mxu0 %v1008
      %1307 = vmatmul.mubr.bf16.gmra.mxu0 %v745
      %v1308 = vpop.f32.mrf.mxu0
      %v1309 = vadd.f32 %v329, %v1308
      %v1310 = vpop.f32.mrf.mxu0
      %v1311 = vpop.f32.mrf.mxu0
      %v1312 = vadd.f32 %v329, %v1311
      %v1313 = vpop.f32.mrf.mxu0
      %1314 = vmatprep.mubr.bf16.mxu0 %v1011
      %1315 = vmatmul.mubr.bf16.gmra.mxu0 %v747
      %v1316 = vpop.f32.mrf.mxu0
      %v1317 = vadd.f32 %v329, %v1316
      %v1318 = vpop.f32.mrf.mxu0
      %v1319 = vpop.f32.mrf.mxu0
      %v1320 = vadd.f32 %v329, %v1319
      %v1321 = vpop.f32.mrf.mxu0
      %1322 = vmatprep.mubr.bf16.mxu0 %v1014
      %1323 = vmatmul.mubr.bf16.gmra.mxu0 %v749
      %v1324 = vpop.f32.mrf.mxu0
      %v1325 = vadd.f32 %v329, %v1324
      %v1326 = vpop.f32.mrf.mxu0
      %v1327 = vpop.f32.mrf.mxu0
      %v1328 = vadd.f32 %v329, %v1327
      %v1329 = vpop.f32.mrf.mxu0
      %1330 = vmatprep.mubr.bf16.mxu0 %v1017
      %1331 = vmatmul.mubr.bf16.gmra.mxu0 %v751
      %v1332 = vpop.f32.mrf.mxu0
      %v1333 = vadd.f32 %v329, %v1332
      %v1334 = vpop.f32.mrf.mxu0
      %v1335 = vpop.f32.mrf.mxu0
      %v1336 = vadd.f32 %v329, %v1335
      %v1337 = vpop.f32.mrf.mxu0
      %1338 = vmatprep.mubr.bf16.mxu0 %v1020
      %1339 = vmatmul.mubr.bf16.gmra.mxu0 %v753
      %v1340 = vpop.f32.mrf.mxu0
      %v1341 = vadd.f32 %v329, %v1340
      %v1342 = vpop.f32.mrf.mxu0
      %v1343 = vpop.f32.mrf.mxu0
      %v1344 = vadd.f32 %v329, %v1343
      %v1345 = vpop.f32.mrf.mxu0
      %1346 = vmatprep.mubr.bf16.mxu0 %v1023
      %1347 = vmatmul.mubr.bf16.gmra.mxu0 %v755
      %v1348 = vpop.f32.mrf.mxu0
      %v1349 = vadd.f32 %v329, %v1348
      %v1350 = vpop.f32.mrf.mxu0
      %v1351 = vpop.f32.mrf.mxu0
      %v1352 = vadd.f32 %v329, %v1351
      %v1353 = vpop.f32.mrf.mxu0
      %1354 = vmatprep.mubr.bf16.mxu0 %v1026
      %1355 = vmatmul.mubr.bf16.gmra.mxu0 %v757
      %v1356 = vpop.f32.mrf.mxu0
      %v1357 = vadd.f32 %v329, %v1356
      %v1358 = vpop.f32.mrf.mxu0
      %v1359 = vpop.f32.mrf.mxu0
      %v1360 = vadd.f32 %v329, %v1359
      %v1361 = vpop.f32.mrf.mxu0
      %1362 = vmatprep.mubr.bf16.mxu0 %v1029
      %1363 = vmatmul.mubr.bf16.gmra.mxu0 %v759
      %v1364 = vpop.f32.mrf.mxu0
      %v1365 = vadd.f32 %v329, %v1364
      %v1366 = vpop.f32.mrf.mxu0
      %v1367 = vpop.f32.mrf.mxu0
      %v1368 = vadd.f32 %v329, %v1367
      %v1369 = vpop.f32.mrf.mxu0
      %1370 = vmatprep.mubr.bf16.mxu0 %v1032
      %1371 = vmatmul.mubr.bf16.gmra.mxu0 %v761
      %v1372 = vpop.f32.mrf.mxu0
      %v1373 = vadd.f32 %v329, %v1372
      %v1374 = vpop.f32.mrf.mxu0
      %v1375 = vpop.f32.mrf.mxu0
      %v1376 = vadd.f32 %v329, %v1375
      %v1377 = vpop.f32.mrf.mxu0
      %1378 = vmatprep.mubr.bf16.mxu0 %v1035
      %1379 = vmatmul.mubr.bf16.gmra.mxu0 %v763
      %v1380 = vpop.f32.mrf.mxu0
      %v1381 = vadd.f32 %v329, %v1380
      %v1382 = vpop.f32.mrf.mxu0
      %v1383 = vpop.f32.mrf.mxu0
      %v1384 = vadd.f32 %v329, %v1383
      %v1385 = vpop.f32.mrf.mxu0
      %1386 = vmatprep.mubr.bf16.mxu0 %v1038
      %1387 = vmatmul.mubr.bf16.gmra.mxu0 %v765
      %v1388 = vpop.f32.mrf.mxu0
      %v1389 = vadd.f32 %v329, %v1388
      %v1390 = vpop.f32.mrf.mxu0
      %v1391 = vpop.f32.mrf.mxu0
      %v1392 = vadd.f32 %v329, %v1391
      %v1393 = vpop.f32.mrf.mxu0
      %1394 = vmatprep.mubr.bf16.mxu0 %v1041
      %1395 = vmatmul.mubr.bf16.gmra.mxu0 %v767
      %v1396 = vpop.f32.mrf.mxu0
      %v1397 = vadd.f32 %v329, %v1396
      %v1398 = vpop.f32.mrf.mxu0
      %v1399 = vpop.f32.mrf.mxu0
      %v1400 = vadd.f32 %v329, %v1399
      %v1401 = vpop.f32.mrf.mxu0
      %1402 = vmatprep.mubr.bf16.mxu0 %v1044
      %1403 = vmatmul.mubr.bf16.gmra.mxu0 %v769
      %v1404 = vpop.f32.mrf.mxu0
      %v1405 = vadd.f32 %v329, %v1404
      %v1406 = vpop.f32.mrf.mxu0
      %v1407 = vpop.f32.mrf.mxu0
      %v1408 = vadd.f32 %v329, %v1407
      %v1409 = vpop.f32.mrf.mxu0
      %1410 = vmatprep.mubr.bf16.mxu0 %v1047
      %1411 = vmatmul.mubr.bf16.gmra.mxu0 %v771
      %v1412 = vpop.f32.mrf.mxu0
      %v1413 = vadd.f32 %v329, %v1412
      %v1414 = vpop.f32.mrf.mxu0
      %v1415 = vpop.f32.mrf.mxu0
      %v1416 = vadd.f32 %v329, %v1415
      %v1417 = vpop.f32.mrf.mxu0
      %1418 = vmatprep.mubr.bf16.mxu0 %v1050
      %1419 = vmatmul.mubr.bf16.gmra.mxu0 %v773
      %v1420 = vpop.f32.mrf.mxu0
      %v1421 = vadd.f32 %v329, %v1420
      %v1422 = vpop.f32.mrf.mxu0
      %v1423 = vpop.f32.mrf.mxu0
      %v1424 = vadd.f32 %v329, %v1423
      %v1425 = vpop.f32.mrf.mxu0
      %1426 = vmatprep.mubr.bf16.mxu0 %v1053
      %1427 = vmatmul.mubr.bf16.gmra.mxu0 %v775
      %v1428 = vpop.f32.mrf.mxu0
      %v1429 = vadd.f32 %v329, %v1428
      %v1430 = vpop.f32.mrf.mxu0
      %v1431 = vpop.f32.mrf.mxu0
      %v1432 = vadd.f32 %v329, %v1431
      %v1433 = vpop.f32.mrf.mxu0
      %1434 = vmatprep.mubr.bf16.mxu0 %v1056
      %1435 = vmatmul.mubr.bf16.gmra.mxu0 %v777
      %v1436 = vpop.f32.mrf.mxu0
      %v1437 = vadd.f32 %v329, %v1436
      %v1438 = vpop.f32.mrf.mxu0
      %v1439 = vpop.f32.mrf.mxu0
      %v1440 = vadd.f32 %v329, %v1439
      %v1441 = vpop.f32.mrf.mxu0
      %1442 = vmatprep.mubr.bf16.mxu0 %v1059
      %1443 = vmatmul.mubr.bf16.gmra.mxu0 %v779
      %v1444 = vpop.f32.mrf.mxu0
      %v1445 = vadd.f32 %v329, %v1444
      %v1446 = vpop.f32.mrf.mxu0
      %v1447 = vpop.f32.mrf.mxu0
      %v1448 = vadd.f32 %v329, %v1447
      %v1449 = vpop.f32.mrf.mxu0
      %1450 = vmatprep.mubr.bf16.mxu0 %v1062
      %1451 = vmatmul.mubr.bf16.gmra.mxu0 %v781
      %v1452 = vpop.f32.mrf.mxu0
      %v1453 = vadd.f32 %v329, %v1452
      %v1454 = vpop.f32.mrf.mxu0
      %v1455 = vpop.f32.mrf.mxu0
      %v1456 = vadd.f32 %v329, %v1455
      %v1457 = vpop.f32.mrf.mxu0
      %1458 = vmatprep.mubr.bf16.mxu0 %v1065
      %1459 = vmatmul.mubr.bf16.gmra.mxu0 %v783
      %v1460 = vpop.f32.mrf.mxu0
      %v1461 = vadd.f32 %v329, %v1460
      %v1462 = vpop.f32.mrf.mxu0
      %v1463 = vpop.f32.mrf.mxu0
      %v1464 = vadd.f32 %v329, %v1463
      %v1465 = vpop.f32.mrf.mxu0
      %1466 = vmatprep.mubr.bf16.mxu0 %v1068
      %1467 = vmatmul.mubr.bf16.gmra.mxu0 %v785
      %v1468 = vpop.f32.mrf.mxu0
      %v1469 = vadd.f32 %v329, %v1468
      %v1470 = vpop.f32.mrf.mxu0
      %v1471 = vpop.f32.mrf.mxu0
      %v1472 = vadd.f32 %v329, %v1471
      %v1473 = vpop.f32.mrf.mxu0
      %1474 = vmatprep.mubr.bf16.mxu0 %v1071
      %1475 = vmatmul.mubr.bf16.gmra.mxu0 %v787
      %v1476 = vpop.f32.mrf.mxu0
      %v1477 = vadd.f32 %v329, %v1476
      %v1478 = vpop.f32.mrf.mxu0
      %v1479 = vpop.f32.mrf.mxu0
      %v1480 = vadd.f32 %v329, %v1479
      %v1481 = vpop.f32.mrf.mxu0
      %1482 = vmatprep.mubr.bf16.mxu0 %v1074
      %1483 = vmatmul.mubr.bf16.gmra.mxu0 %v789
      %v1484 = vpop.f32.mrf.mxu0
      %v1485 = vadd.f32 %v329, %v1484
      %v1486 = vpop.f32.mrf.mxu0
      %v1487 = vpop.f32.mrf.mxu0
      %v1488 = vadd.f32 %v329, %v1487
      %v1489 = vpop.f32.mrf.mxu0
      %1490 = vmatprep.mubr.bf16.mxu0 %v1077
      %1491 = vmatmul.mubr.bf16.gmra.mxu0 %v791
      %v1492 = vpop.f32.mrf.mxu0
      %v1493 = vadd.f32 %v329, %v1492
      %v1494 = vpop.f32.mrf.mxu0
      %v1495 = vpop.f32.mrf.mxu0
      %v1496 = vadd.f32 %v329, %v1495
      %v1497 = vpop.f32.mrf.mxu0
      %1498 = vmatprep.mubr.bf16.mxu0 %v1080
      %1499 = vmatmul.mubr.bf16.gmra.mxu0 %v793
      %v1500 = vpop.f32.mrf.mxu0
      %v1501 = vadd.f32 %v329, %v1500
      %v1502 = vpop.f32.mrf.mxu0
      %v1503 = vpop.f32.mrf.mxu0
      %v1504 = vadd.f32 %v329, %v1503
      %v1505 = vpop.f32.mrf.mxu0
      %1506 = vmatprep.mubr.bf16.mxu0 %v1083
      %1507 = vmatmul.mubr.bf16.gmra.mxu0 %v795
      %v1508 = vpop.f32.mrf.mxu0
      %v1509 = vadd.f32 %v329, %v1508
      %v1510 = vpop.f32.mrf.mxu0
      %v1511 = vpop.f32.mrf.mxu0
      %v1512 = vadd.f32 %v329, %v1511
      %v1513 = vpop.f32.mrf.mxu0
      %1514 = vmatprep.mubr.bf16.mxu0 %v1086
      %1515 = vmatmul.mubr.bf16.gmra.mxu0 %v797
      %v1516 = vpop.f32.mrf.mxu0
      %v1517 = vadd.f32 %v329, %v1516
      %v1518 = vpop.f32.mrf.mxu0
      %v1519 = vpop.f32.mrf.mxu0
      %v1520 = vadd.f32 %v329, %v1519
      %v1521 = vpop.f32.mrf.mxu0
      %1522 = vmatprep.mubr.bf16.mxu0 %v1089
      %1523 = vmatmul.mubr.bf16.gmra.mxu0 %v799
      %v1524 = vpop.f32.mrf.mxu0
      %v1525 = vadd.f32 %v329, %v1524
      %v1526 = vpop.f32.mrf.mxu0
      %v1527 = vpop.f32.mrf.mxu0
      %v1528 = vadd.f32 %v329, %v1527
      %v1529 = vpop.f32.mrf.mxu0
      %1530 = vmatprep.mubr.bf16.mxu0 %v1092
      %1531 = vmatmul.mubr.bf16.gmra.mxu0 %v801
      %v1532 = vpop.f32.mrf.mxu0
      %v1533 = vadd.f32 %v329, %v1532
      %v1534 = vpop.f32.mrf.mxu0
      %v1535 = vpop.f32.mrf.mxu0
      %v1536 = vadd.f32 %v329, %v1535
      %v1537 = vpop.f32.mrf.mxu0
      %1538 = vmatprep.mubr.bf16.mxu0 %v1095
      %1539 = vmatmul.mubr.bf16.gmra.mxu0 %v803
      %v1540 = vpop.f32.mrf.mxu0
      %v1541 = vadd.f32 %v329, %v1540
      %v1542 = vpop.f32.mrf.mxu0
      %v1543 = vpop.f32.mrf.mxu0
      %v1544 = vadd.f32 %v329, %v1543
      %v1545 = vpop.f32.mrf.mxu0
      %1546 = vmatprep.mubr.bf16.mxu0 %v1098
      %1547 = vmatmul.mubr.bf16.gmra.mxu0 %v805
      %v1548 = vpop.f32.mrf.mxu0
      %v1549 = vadd.f32 %v329, %v1548
      %v1550 = vpop.f32.mrf.mxu0
      %v1551 = vpop.f32.mrf.mxu0
      %v1552 = vadd.f32 %v329, %v1551
      %v1553 = vpop.f32.mrf.mxu0
      %1554 = vmatprep.mubr.bf16.mxu0 %v1101
      %1555 = vmatmul.mubr.bf16.gmra.mxu0 %v807
      %v1556 = vpop.f32.mrf.mxu0
      %v1557 = vadd.f32 %v329, %v1556
      %v1558 = vpop.f32.mrf.mxu0
      %v1559 = vpop.f32.mrf.mxu0
      %v1560 = vadd.f32 %v329, %v1559
      %v1561 = vpop.f32.mrf.mxu0
      %1562 = vmatprep.mubr.bf16.mxu0 %v1104
      %1563 = vmatmul.mubr.bf16.gmra.mxu0 %v809
      %v1564 = vpop.f32.mrf.mxu0
      %v1565 = vadd.f32 %v329, %v1564
      %v1566 = vpop.f32.mrf.mxu0
      %v1567 = vpop.f32.mrf.mxu0
      %v1568 = vadd.f32 %v329, %v1567
      %v1569 = vpop.f32.mrf.mxu0
      %1570 = vmatprep.mubr.bf16.mxu0 %v1107
      %1571 = vmatmul.mubr.bf16.gmra.mxu0 %v811
      %v1572 = vpop.f32.mrf.mxu0
      %v1573 = vadd.f32 %v329, %v1572
      %v1574 = vpop.f32.mrf.mxu0
      %v1575 = vpop.f32.mrf.mxu0
      %v1576 = vadd.f32 %v329, %v1575
      %v1577 = vpop.f32.mrf.mxu0
      %1578 = vmatprep.mubr.bf16.mxu0 %v1110
      %1579 = vmatmul.mubr.bf16.gmra.mxu0 %v813
      %v1580 = vpop.f32.mrf.mxu0
      %v1581 = vadd.f32 %v329, %v1580
      %v1582 = vpop.f32.mrf.mxu0
      %v1583 = vpop.f32.mrf.mxu0
      %v1584 = vadd.f32 %v329, %v1583
      %v1585 = vpop.f32.mrf.mxu0
      %1586 = vmatprep.mubr.bf16.mxu0 %v1113
      %1587 = vmatmul.mubr.bf16.gmra.mxu0 %v815
      %v1588 = vpop.f32.mrf.mxu0
      %v1589 = vadd.f32 %v329, %v1588
      %v1590 = vpop.f32.mrf.mxu0
      %v1591 = vpop.f32.mrf.mxu0
      %v1592 = vadd.f32 %v329, %v1591
      %v1593 = vpop.f32.mrf.mxu0
      %1594 = vmatprep.mubr.bf16.mxu0 %v1116
      %1595 = vmatmul.mubr.bf16.gmra.mxu0 %v817
      %v1596 = vpop.f32.mrf.mxu0
      %v1597 = vadd.f32 %v329, %v1596
      %v1598 = vpop.f32.mrf.mxu0
      %v1599 = vpop.f32.mrf.mxu0
      %v1600 = vadd.f32 %v329, %v1599
      %v1601 = vpop.f32.mrf.mxu0
      %1602 = vmatprep.mubr.bf16.mxu0 %v1119
      %1603 = vmatmul.mubr.bf16.gmra.mxu0 %v819
      %v1604 = vpop.f32.mrf.mxu0
      %v1605 = vadd.f32 %v329, %v1604
      %v1606 = vpop.f32.mrf.mxu0
      %v1607 = vpop.f32.mrf.mxu0
      %v1608 = vadd.f32 %v329, %v1607
      %v1609 = vpop.f32.mrf.mxu0
      %1610 = vmatprep.mubr.bf16.mxu0 %v1122
      %1611 = vmatmul.mubr.bf16.gmra.mxu0 %v821
      %v1612 = vpop.f32.mrf.mxu0
      %v1613 = vadd.f32 %v329, %v1612
      %v1614 = vpop.f32.mrf.mxu0
      %v1615 = vpop.f32.mrf.mxu0
      %v1616 = vadd.f32 %v329, %v1615
      %v1617 = vpop.f32.mrf.mxu0
      %1618 = vmatprep.mubr.bf16.mxu0 %v1125
      %1619 = vmatmul.mubr.bf16.gmra.mxu0 %v823
      %v1620 = vpop.f32.mrf.mxu0
      %v1621 = vadd.f32 %v329, %v1620
      %v1622 = vpop.f32.mrf.mxu0
      %v1623 = vpop.f32.mrf.mxu0
      %v1624 = vadd.f32 %v329, %v1623
      %v1625 = vpop.f32.mrf.mxu0
      %1626 = vmatprep.mubr.bf16.mxu0 %v1128
      %1627 = vmatmul.mubr.bf16.gmra.mxu0 %v825
      %v1628 = vpop.f32.mrf.mxu0
      %v1629 = vadd.f32 %v329, %v1628
      %v1630 = vpop.f32.mrf.mxu0
      %v1631 = vpop.f32.mrf.mxu0
      %v1632 = vadd.f32 %v329, %v1631
      %v1633 = vpop.f32.mrf.mxu0
      %1634 = vmatprep.mubr.bf16.mxu0 %v1131
      %1635 = vmatmul.mubr.bf16.gmra.mxu0 %v827
      %v1636 = vpop.f32.mrf.mxu0
      %v1637 = vadd.f32 %v329, %v1636
      %v1638 = vpop.f32.mrf.mxu0
      %v1639 = vpop.f32.mrf.mxu0
      %v1640 = vadd.f32 %v329, %v1639
      %v1641 = vpop.f32.mrf.mxu0
      %1642 = vmatprep.mubr.bf16.mxu0 %v1134
      %1643 = vmatmul.mubr.bf16.gmra.mxu0 %v829
      %v1644 = vpop.f32.mrf.mxu0
      %v1645 = vadd.f32 %v329, %v1644
      %v1646 = vpop.f32.mrf.mxu0
      %v1647 = vpop.f32.mrf.mxu0
      %v1648 = vadd.f32 %v329, %v1647
      %v1649 = vpop.f32.mrf.mxu0
      %1650 = vmatprep.mubr.bf16.mxu0 %v1137
      %1651 = vmatmul.mubr.bf16.gmra.mxu0 %v831
      %v1652 = vpop.f32.mrf.mxu0
      %v1653 = vadd.f32 %v329, %v1652
      %v1654 = vpop.f32.mrf.mxu0
      %v1655 = vpop.f32.mrf.mxu0
      %v1656 = vadd.f32 %v329, %v1655
      %v1657 = vpop.f32.mrf.mxu0
      %1658 = vmatprep.mubr.bf16.mxu0 %v1140
      %1659 = vmatmul.mubr.bf16.gmra.mxu0 %v833
      %v1660 = vpop.f32.mrf.mxu0
      %v1661 = vadd.f32 %v329, %v1660
      %v1662 = vpop.f32.mrf.mxu0
      %v1663 = vpop.f32.mrf.mxu0
      %v1664 = vadd.f32 %v329, %v1663
      %v1665 = vpop.f32.mrf.mxu0
      %1666 = vmatprep.mubr.bf16.mxu0 %v1143
      %1667 = vmatmul.mubr.bf16.gmra.mxu0 %v835
      %v1668 = vpop.f32.mrf.mxu0
      %v1669 = vadd.f32 %v329, %v1668
      %v1670 = vpop.f32.mrf.mxu0
      %v1671 = vpop.f32.mrf.mxu0
      %v1672 = vadd.f32 %v329, %v1671
      %v1673 = vpop.f32.mrf.mxu0
      %1674 = vmatprep.mubr.bf16.mxu0 %v1146
      %1675 = vmatmul.mubr.bf16.gmra.mxu0 %v837
      %v1676 = vpop.f32.mrf.mxu0
      %v1677 = vadd.f32 %v329, %v1676
      %v1678 = vpop.f32.mrf.mxu0
      %v1679 = vpop.f32.mrf.mxu0
      %v1680 = vadd.f32 %v329, %v1679
      %v1681 = vpop.f32.mrf.mxu0
      %1682 = vmatprep.mubr.bf16.mxu0 %v1149
      %1683 = vmatmul.mubr.bf16.gmra.mxu0 %v839
      %v1684 = vpop.f32.mrf.mxu0
      %v1685 = vadd.f32 %v329, %v1684
      %v1686 = vpop.f32.mrf.mxu0
      %v1687 = vpop.f32.mrf.mxu0
      %v1688 = vadd.f32 %v329, %v1687
      %v1689 = vpop.f32.mrf.mxu0
      %1690 = vmatprep.mubr.bf16.mxu0 %v1152
      %1691 = vmatmul.mubr.bf16.gmra.mxu0 %v841
      %v1692 = vpop.f32.mrf.mxu0
      %v1693 = vadd.f32 %v329, %v1692
      %v1694 = vpop.f32.mrf.mxu0
      %v1695 = vpop.f32.mrf.mxu0
      %v1696 = vadd.f32 %v329, %v1695
      %v1697 = vpop.f32.mrf.mxu0
      %1698 = vdwg.mxu0
      %v1699 = vxor.u32 %v1189, 2147483648
      %v1700 = vxor.u32 %v1192, 2147483648
      %v1701 = vxor.u32 %v1197, 2147483648
      %v1702 = vxor.u32 %v1200, 2147483648
      %v1703 = vxor.u32 %v1205, 2147483648
      %v1704 = vxor.u32 %v1208, 2147483648
      %v1705 = vxor.u32 %v1213, 2147483648
      %v1706 = vxor.u32 %v1216, 2147483648
      %v1707 = vxor.u32 %v1221, 2147483648
      %v1708 = vxor.u32 %v1224, 2147483648
      %v1709 = vxor.u32 %v1229, 2147483648
      %v1710 = vxor.u32 %v1232, 2147483648
      %v1711 = vxor.u32 %v1237, 2147483648
      %v1712 = vxor.u32 %v1240, 2147483648
      %v1713 = vxor.u32 %v1245, 2147483648
      %v1714 = vxor.u32 %v1248, 2147483648
      %v1715 = vxor.u32 %v1253, 2147483648
      %v1716 = vxor.u32 %v1256, 2147483648
      %v1717 = vxor.u32 %v1261, 2147483648
      %v1718 = vxor.u32 %v1264, 2147483648
      %v1719 = vxor.u32 %v1269, 2147483648
      %v1720 = vxor.u32 %v1272, 2147483648
      %v1721 = vxor.u32 %v1277, 2147483648
      %v1722 = vxor.u32 %v1280, 2147483648
      %v1723 = vxor.u32 %v1285, 2147483648
      %v1724 = vxor.u32 %v1288, 2147483648
      %v1725 = vxor.u32 %v1293, 2147483648
      %v1726 = vxor.u32 %v1296, 2147483648
      %v1727 = vxor.u32 %v1301, 2147483648
      %v1728 = vxor.u32 %v1304, 2147483648
      %v1729 = vxor.u32 %v1309, 2147483648
      %v1730 = vxor.u32 %v1312, 2147483648
      %v1731 = vxor.u32 %v1317, 2147483648
      %v1732 = vxor.u32 %v1320, 2147483648
      %v1733 = vxor.u32 %v1325, 2147483648
      %v1734 = vxor.u32 %v1328, 2147483648
      %v1735 = vxor.u32 %v1333, 2147483648
      %v1736 = vxor.u32 %v1336, 2147483648
      %v1737 = vxor.u32 %v1341, 2147483648
      %v1738 = vxor.u32 %v1344, 2147483648
      %v1739 = vxor.u32 %v1349, 2147483648
      %v1740 = vxor.u32 %v1352, 2147483648
      %v1741 = vxor.u32 %v1357, 2147483648
      %v1742 = vxor.u32 %v1360, 2147483648
      %v1743 = vxor.u32 %v1365, 2147483648
      %v1744 = vxor.u32 %v1368, 2147483648
      %v1745 = vxor.u32 %v1373, 2147483648
      %v1746 = vxor.u32 %v1376, 2147483648
      %v1747 = vxor.u32 %v1381, 2147483648
      %v1748 = vxor.u32 %v1384, 2147483648
      %v1749 = vxor.u32 %v1389, 2147483648
      %v1750 = vxor.u32 %v1392, 2147483648
      %v1751 = vxor.u32 %v1397, 2147483648
      %v1752 = vxor.u32 %v1400, 2147483648
      %v1753 = vxor.u32 %v1405, 2147483648
      %v1754 = vxor.u32 %v1408, 2147483648
      %v1755 = vxor.u32 %v1413, 2147483648
      %v1756 = vxor.u32 %v1416, 2147483648
      %v1757 = vxor.u32 %v1421, 2147483648
      %v1758 = vxor.u32 %v1424, 2147483648
      %v1759 = vxor.u32 %v1429, 2147483648
      %v1760 = vxor.u32 %v1432, 2147483648
      %v1761 = vxor.u32 %v1437, 2147483648
      %v1762 = vxor.u32 %v1440, 2147483648
      %v1763 = vxor.u32 %v1445, 2147483648
      %v1764 = vxor.u32 %v1448, 2147483648
      %v1765 = vxor.u32 %v1453, 2147483648
      %v1766 = vxor.u32 %v1456, 2147483648
      %v1767 = vxor.u32 %v1461, 2147483648
      %v1768 = vxor.u32 %v1464, 2147483648
      %v1769 = vxor.u32 %v1469, 2147483648
      %v1770 = vxor.u32 %v1472, 2147483648
      %v1771 = vxor.u32 %v1477, 2147483648
      %v1772 = vxor.u32 %v1480, 2147483648
      %v1773 = vxor.u32 %v1485, 2147483648
      %v1774 = vxor.u32 %v1488, 2147483648
      %v1775 = vxor.u32 %v1493, 2147483648
      %v1776 = vxor.u32 %v1496, 2147483648
      %v1777 = vxor.u32 %v1501, 2147483648
      %v1778 = vxor.u32 %v1504, 2147483648
      %v1779 = vxor.u32 %v1509, 2147483648
      %v1780 = vxor.u32 %v1512, 2147483648
      %v1781 = vxor.u32 %v1517, 2147483648
      %v1782 = vxor.u32 %v1520, 2147483648
      %v1783 = vxor.u32 %v1525, 2147483648
      %v1784 = vxor.u32 %v1528, 2147483648
      %v1785 = vxor.u32 %v1533, 2147483648
      %v1786 = vxor.u32 %v1536, 2147483648
      %v1787 = vxor.u32 %v1541, 2147483648
      %v1788 = vxor.u32 %v1544, 2147483648
      %v1789 = vxor.u32 %v1549, 2147483648
      %v1790 = vxor.u32 %v1552, 2147483648
      %v1791 = vxor.u32 %v1557, 2147483648
      %v1792 = vxor.u32 %v1560, 2147483648
      %v1793 = vxor.u32 %v1565, 2147483648
      %v1794 = vxor.u32 %v1568, 2147483648
      %v1795 = vxor.u32 %v1573, 2147483648
      %v1796 = vxor.u32 %v1576, 2147483648
      %v1797 = vxor.u32 %v1581, 2147483648
      %v1798 = vxor.u32 %v1584, 2147483648
      %v1799 = vxor.u32 %v1589, 2147483648
      %v1800 = vxor.u32 %v1592, 2147483648
      %v1801 = vxor.u32 %v1597, 2147483648
      %v1802 = vxor.u32 %v1600, 2147483648
      %v1803 = vxor.u32 %v1605, 2147483648
      %v1804 = vxor.u32 %v1608, 2147483648
      %v1805 = vxor.u32 %v1613, 2147483648
      %v1806 = vxor.u32 %v1616, 2147483648
      %v1807 = vxor.u32 %v1621, 2147483648
      %v1808 = vxor.u32 %v1624, 2147483648
      %v1809 = vxor.u32 %v1629, 2147483648
      %v1810 = vxor.u32 %v1632, 2147483648
      %v1811 = vxor.u32 %v1637, 2147483648
      %v1812 = vxor.u32 %v1640, 2147483648
      %v1813 = vxor.u32 %v1645, 2147483648
      %v1814 = vxor.u32 %v1648, 2147483648
      %v1815 = vxor.u32 %v1653, 2147483648
      %v1816 = vxor.u32 %v1656, 2147483648
      %v1817 = vxor.u32 %v1661, 2147483648
      %v1818 = vxor.u32 %v1664, 2147483648
      %v1819 = vxor.u32 %v1669, 2147483648
      %v1820 = vxor.u32 %v1672, 2147483648
      %v1821 = vxor.u32 %v1677, 2147483648
      %v1822 = vxor.u32 %v1680, 2147483648
      %v1823 = vxor.u32 %v1685, 2147483648
      %v1824 = vxor.u32 %v1688, 2147483648
      %v1825 = vxor.u32 %v1693, 2147483648
      %v1826 = vxor.u32 %v1696, 2147483648
      %v1827 = vmul.f32 %v1699, 1.442695
      %v1828 = vpow.pop %v1827
      %v1829 = vmul.f32 %v1700, 1.442695
      %v1830 = vpow.pop %v1829
      %v1831 = vmul.f32 %v1701, 1.442695
      %v1832 = vpow.pop %v1831
      %v1833 = vmul.f32 %v1702, 1.442695
      %v1834 = vpow.pop %v1833
      %v1835 = vmul.f32 %v1703, 1.442695
      %v1836 = vpow.pop %v1835
      %v1837 = vmul.f32 %v1704, 1.442695
      %v1838 = vpow.pop %v1837
      %v1839 = vmul.f32 %v1705, 1.442695
      %v1840 = vpow.pop %v1839
      %v1841 = vmul.f32 %v1706, 1.442695
      %v1842 = vpow.pop %v1841
      %v1843 = vmul.f32 %v1707, 1.442695
      %v1844 = vpow.pop %v1843
      %v1845 = vmul.f32 %v1708, 1.442695
      %v1846 = vpow.pop %v1845
      %v1847 = vmul.f32 %v1709, 1.442695
      %v1848 = vpow.pop %v1847
      %v1849 = vmul.f32 %v1710, 1.442695
      %v1850 = vpow.pop %v1849
      %v1851 = vmul.f32 %v1711, 1.442695
      %v1852 = vpow.pop %v1851
      %v1853 = vmul.f32 %v1712, 1.442695
      %v1854 = vpow.pop %v1853
      %v1855 = vmul.f32 %v1713, 1.442695
      %v1856 = vpow.pop %v1855
      %v1857 = vmul.f32 %v1714, 1.442695
      %v1858 = vpow.pop %v1857
      %v1859 = vmul.f32 %v1715, 1.442695
      %v1860 = vpow.pop %v1859
      %v1861 = vmul.f32 %v1716, 1.442695
      %v1862 = vpow.pop %v1861
      %v1863 = vmul.f32 %v1717, 1.442695
      %v1864 = vpow.pop %v1863
      %v1865 = vmul.f32 %v1718, 1.442695
      %v1866 = vpow.pop %v1865
      %v1867 = vmul.f32 %v1719, 1.442695
      %v1868 = vpow.pop %v1867
      %v1869 = vmul.f32 %v1720, 1.442695
      %v1870 = vpow.pop %v1869
      %v1871 = vmul.f32 %v1721, 1.442695
      %v1872 = vpow.pop %v1871
      %v1873 = vmul.f32 %v1722, 1.442695
      %v1874 = vpow.pop %v1873
      %v1875 = vmul.f32 %v1723, 1.442695
      %v1876 = vpow.pop %v1875
      %v1877 = vmul.f32 %v1724, 1.442695
      %v1878 = vpow.pop %v1877
      %v1879 = vmul.f32 %v1725, 1.442695
      %v1880 = vpow.pop %v1879
      %v1881 = vmul.f32 %v1726, 1.442695
      %v1882 = vpow.pop %v1881
      %v1883 = vmul.f32 %v1727, 1.442695
      %v1884 = vpow.pop %v1883
      %v1885 = vmul.f32 %v1728, 1.442695
      %v1886 = vpow.pop %v1885
      %v1887 = vmul.f32 %v1729, 1.442695
      %v1888 = vpow.pop %v1887
      %v1889 = vmul.f32 %v1730, 1.442695
      %v1890 = vpow.pop %v1889
      %v1891 = vmul.f32 %v1731, 1.442695
      %v1892 = vpow.pop %v1891
      %v1893 = vmul.f32 %v1732, 1.442695
      %v1894 = vpow.pop %v1893
      %v1895 = vmul.f32 %v1733, 1.442695
      %v1896 = vpow.pop %v1895
      %v1897 = vmul.f32 %v1734, 1.442695
      %v1898 = vpow.pop %v1897
      %v1899 = vmul.f32 %v1735, 1.442695
      %v1900 = vpow.pop %v1899
      %v1901 = vmul.f32 %v1736, 1.442695
      %v1902 = vpow.pop %v1901
      %v1903 = vmul.f32 %v1737, 1.442695
      %v1904 = vpow.pop %v1903
      %v1905 = vmul.f32 %v1738, 1.442695
      %v1906 = vpow.pop %v1905
      %v1907 = vmul.f32 %v1739, 1.442695
      %v1908 = vpow.pop %v1907
      %v1909 = vmul.f32 %v1740, 1.442695
      %v1910 = vpow.pop %v1909
      %v1911 = vmul.f32 %v1741, 1.442695
      %v1912 = vpow.pop %v1911
      %v1913 = vmul.f32 %v1742, 1.442695
      %v1914 = vpow.pop %v1913
      %v1915 = vmul.f32 %v1743, 1.442695
      %v1916 = vpow.pop %v1915
      %v1917 = vmul.f32 %v1744, 1.442695
      %v1918 = vpow.pop %v1917
      %v1919 = vmul.f32 %v1745, 1.442695
      %v1920 = vpow.pop %v1919
      %v1921 = vmul.f32 %v1746, 1.442695
      %v1922 = vpow.pop %v1921
      %v1923 = vmul.f32 %v1747, 1.442695
      %v1924 = vpow.pop %v1923
      %v1925 = vmul.f32 %v1748, 1.442695
      %v1926 = vpow.pop %v1925
      %v1927 = vmul.f32 %v1749, 1.442695
      %v1928 = vpow.pop %v1927
      %v1929 = vmul.f32 %v1750, 1.442695
      %v1930 = vpow.pop %v1929
      %v1931 = vmul.f32 %v1751, 1.442695
      %v1932 = vpow.pop %v1931
      %v1933 = vmul.f32 %v1752, 1.442695
      %v1934 = vpow.pop %v1933
      %v1935 = vmul.f32 %v1753, 1.442695
      %v1936 = vpow.pop %v1935
      %v1937 = vmul.f32 %v1754, 1.442695
      %v1938 = vpow.pop %v1937
      %v1939 = vmul.f32 %v1755, 1.442695
      %v1940 = vpow.pop %v1939
      %v1941 = vmul.f32 %v1756, 1.442695
      %v1942 = vpow.pop %v1941
      %v1943 = vmul.f32 %v1757, 1.442695
      %v1944 = vpow.pop %v1943
      %v1945 = vmul.f32 %v1758, 1.442695
      %v1946 = vpow.pop %v1945
      %v1947 = vmul.f32 %v1759, 1.442695
      %v1948 = vpow.pop %v1947
      %v1949 = vmul.f32 %v1760, 1.442695
      %v1950 = vpow.pop %v1949
      %v1951 = vmul.f32 %v1761, 1.442695
      %v1952 = vpow.pop %v1951
      %v1953 = vmul.f32 %v1762, 1.442695
      %v1954 = vpow.pop %v1953
      %v1955 = vmul.f32 %v1763, 1.442695
      %v1956 = vpow.pop %v1955
      %v1957 = vmul.f32 %v1764, 1.442695
      %v1958 = vpow.pop %v1957
      %v1959 = vmul.f32 %v1765, 1.442695
      %v1960 = vpow.pop %v1959
      %v1961 = vmul.f32 %v1766, 1.442695
      %v1962 = vpow.pop %v1961
      %v1963 = vmul.f32 %v1767, 1.442695
      %v1964 = vpow.pop %v1963
      %v1965 = vmul.f32 %v1768, 1.442695
      %v1966 = vpow.pop %v1965
      %v1967 = vmul.f32 %v1769, 1.442695
      %v1968 = vpow.pop %v1967
      %v1969 = vmul.f32 %v1770, 1.442695
      %v1970 = vpow.pop %v1969
      %v1971 = vmul.f32 %v1771, 1.442695
      %v1972 = vpow.pop %v1971
      %v1973 = vmul.f32 %v1772, 1.442695
      %v1974 = vpow.pop %v1973
      %v1975 = vmul.f32 %v1773, 1.442695
      %v1976 = vpow.pop %v1975
      %v1977 = vmul.f32 %v1774, 1.442695
      %v1978 = vpow.pop %v1977
      %v1979 = vmul.f32 %v1775, 1.442695
      %v1980 = vpow.pop %v1979
      %v1981 = vmul.f32 %v1776, 1.442695
      %v1982 = vpow.pop %v1981
      %v1983 = vmul.f32 %v1777, 1.442695
      %v1984 = vpow.pop %v1983
      %v1985 = vmul.f32 %v1778, 1.442695
      %v1986 = vpow.pop %v1985
      %v1987 = vmul.f32 %v1779, 1.442695
      %v1988 = vpow.pop %v1987
      %v1989 = vmul.f32 %v1780, 1.442695
      %v1990 = vpow.pop %v1989
      %v1991 = vmul.f32 %v1781, 1.442695
      %v1992 = vpow.pop %v1991
      %v1993 = vmul.f32 %v1782, 1.442695
      %v1994 = vpow.pop %v1993
      %v1995 = vmul.f32 %v1783, 1.442695
      %v1996 = vpow.pop %v1995
      %v1997 = vmul.f32 %v1784, 1.442695
      %v1998 = vpow.pop %v1997
      %v1999 = vmul.f32 %v1785, 1.442695
      %v2000 = vpow.pop %v1999
      %v2001 = vmul.f32 %v1786, 1.442695
      %v2002 = vpow.pop %v2001
      %v2003 = vmul.f32 %v1787, 1.442695
      %v2004 = vpow.pop %v2003
      %v2005 = vmul.f32 %v1788, 1.442695
      %v2006 = vpow.pop %v2005
      %v2007 = vmul.f32 %v1789, 1.442695
      %v2008 = vpow.pop %v2007
      %v2009 = vmul.f32 %v1790, 1.442695
      %v2010 = vpow.pop %v2009
      %v2011 = vmul.f32 %v1791, 1.442695
      %v2012 = vpow.pop %v2011
      %v2013 = vmul.f32 %v1792, 1.442695
      %v2014 = vpow.pop %v2013
      %v2015 = vmul.f32 %v1793, 1.442695
      %v2016 = vpow.pop %v2015
      %v2017 = vmul.f32 %v1794, 1.442695
      %v2018 = vpow.pop %v2017
      %v2019 = vmul.f32 %v1795, 1.442695
      %v2020 = vpow.pop %v2019
      %v2021 = vmul.f32 %v1796, 1.442695
      %v2022 = vpow.pop %v2021
      %v2023 = vmul.f32 %v1797, 1.442695
      %v2024 = vpow.pop %v2023
      %v2025 = vmul.f32 %v1798, 1.442695
      %v2026 = vpow.pop %v2025
      %v2027 = vmul.f32 %v1799, 1.442695
      %v2028 = vpow.pop %v2027
      %v2029 = vmul.f32 %v1800, 1.442695
      %v2030 = vpow.pop %v2029
      %v2031 = vmul.f32 %v1801, 1.442695
      %v2032 = vpow.pop %v2031
      %v2033 = vmul.f32 %v1802, 1.442695
      %v2034 = vpow.pop %v2033
      %v2035 = vmul.f32 %v1803, 1.442695
      %v2036 = vpow.pop %v2035
      %v2037 = vmul.f32 %v1804, 1.442695
      %v2038 = vpow.pop %v2037
      %v2039 = vmul.f32 %v1805, 1.442695
      %v2040 = vpow.pop %v2039
      %v2041 = vmul.f32 %v1806, 1.442695
      %v2042 = vpow.pop %v2041
      %v2043 = vmul.f32 %v1807, 1.442695
      %v2044 = vpow.pop %v2043
      %v2045 = vmul.f32 %v1808, 1.442695
      %v2046 = vpow.pop %v2045
      %v2047 = vmul.f32 %v1809, 1.442695
      %v2048 = vpow.pop %v2047
      %v2049 = vmul.f32 %v1810, 1.442695
      %v2050 = vpow.pop %v2049
      %v2051 = vmul.f32 %v1811, 1.442695
      %v2052 = vpow.pop %v2051
      %v2053 = vmul.f32 %v1812, 1.442695
      %v2054 = vpow.pop %v2053
      %v2055 = vmul.f32 %v1813, 1.442695
      %v2056 = vpow.pop %v2055
      %v2057 = vmul.f32 %v1814, 1.442695
      %v2058 = vpow.pop %v2057
      %v2059 = vmul.f32 %v1815, 1.442695
      %v2060 = vpow.pop %v2059
      %v2061 = vmul.f32 %v1816, 1.442695
      %v2062 = vpow.pop %v2061
      %v2063 = vmul.f32 %v1817, 1.442695
      %v2064 = vpow.pop %v2063
      %v2065 = vmul.f32 %v1818, 1.442695
      %v2066 = vpow.pop %v2065
      %v2067 = vmul.f32 %v1819, 1.442695
      %v2068 = vpow.pop %v2067
      %v2069 = vmul.f32 %v1820, 1.442695
      %v2070 = vpow.pop %v2069
      %v2071 = vmul.f32 %v1821, 1.442695
      %v2072 = vpow.pop %v2071
      %v2073 = vmul.f32 %v1822, 1.442695
      %v2074 = vpow.pop %v2073
      %v2075 = vmul.f32 %v1823, 1.442695
      %v2076 = vpow.pop %v2075
      %v2077 = vmul.f32 %v1824, 1.442695
      %v2078 = vpow.pop %v2077
      %v2079 = vmul.f32 %v1825, 1.442695
      %v2080 = vpow.pop %v2079
      %v2081 = vmul.f32 %v1826, 1.442695
      %v2082 = vpow.pop %v2081
      %v2083 = vadd.f32 %v1828, 1.0
      %v2084 = vadd.f32 %v1830, 1.0
      %v2085 = vadd.f32 %v1832, 1.0
      %v2086 = vadd.f32 %v1834, 1.0
      %v2087 = vadd.f32 %v1836, 1.0
      %v2088 = vadd.f32 %v1838, 1.0
      %v2089 = vadd.f32 %v1840, 1.0
      %v2090 = vadd.f32 %v1842, 1.0
      %v2091 = vadd.f32 %v1844, 1.0
      %v2092 = vadd.f32 %v1846, 1.0
      %v2093 = vadd.f32 %v1848, 1.0
      %v2094 = vadd.f32 %v1850, 1.0
      %v2095 = vadd.f32 %v1852, 1.0
      %v2096 = vadd.f32 %v1854, 1.0
      %v2097 = vadd.f32 %v1856, 1.0
      %v2098 = vadd.f32 %v1858, 1.0
      %v2099 = vadd.f32 %v1860, 1.0
      %v2100 = vadd.f32 %v1862, 1.0
      %v2101 = vadd.f32 %v1864, 1.0
      %v2102 = vadd.f32 %v1866, 1.0
      %v2103 = vadd.f32 %v1868, 1.0
      %v2104 = vadd.f32 %v1870, 1.0
      %v2105 = vadd.f32 %v1872, 1.0
      %v2106 = vadd.f32 %v1874, 1.0
      %v2107 = vadd.f32 %v1876, 1.0
      %v2108 = vadd.f32 %v1878, 1.0
      %v2109 = vadd.f32 %v1880, 1.0
      %v2110 = vadd.f32 %v1882, 1.0
      %v2111 = vadd.f32 %v1884, 1.0
      %v2112 = vadd.f32 %v1886, 1.0
      %v2113 = vadd.f32 %v1888, 1.0
      %v2114 = vadd.f32 %v1890, 1.0
      %v2115 = vadd.f32 %v1892, 1.0
      %v2116 = vadd.f32 %v1894, 1.0
      %v2117 = vadd.f32 %v1896, 1.0
      %v2118 = vadd.f32 %v1898, 1.0
      %v2119 = vadd.f32 %v1900, 1.0
      %v2120 = vadd.f32 %v1902, 1.0
      %v2121 = vadd.f32 %v1904, 1.0
      %v2122 = vadd.f32 %v1906, 1.0
      %v2123 = vadd.f32 %v1908, 1.0
      %v2124 = vadd.f32 %v1910, 1.0
      %v2125 = vadd.f32 %v1912, 1.0
      %v2126 = vadd.f32 %v1914, 1.0
      %v2127 = vadd.f32 %v1916, 1.0
      %v2128 = vadd.f32 %v1918, 1.0
      %v2129 = vadd.f32 %v1920, 1.0
      %v2130 = vadd.f32 %v1922, 1.0
      %v2131 = vadd.f32 %v1924, 1.0
      %v2132 = vadd.f32 %v1926, 1.0
      %v2133 = vadd.f32 %v1928, 1.0
      %v2134 = vadd.f32 %v1930, 1.0
      %v2135 = vadd.f32 %v1932, 1.0
      %v2136 = vadd.f32 %v1934, 1.0
      %v2137 = vadd.f32 %v1936, 1.0
      %v2138 = vadd.f32 %v1938, 1.0
      %v2139 = vadd.f32 %v1940, 1.0
      %v2140 = vadd.f32 %v1942, 1.0
      %v2141 = vadd.f32 %v1944, 1.0
      %v2142 = vadd.f32 %v1946, 1.0
      %v2143 = vadd.f32 %v1948, 1.0
      %v2144 = vadd.f32 %v1950, 1.0
      %v2145 = vadd.f32 %v1952, 1.0
      %v2146 = vadd.f32 %v1954, 1.0
      %v2147 = vadd.f32 %v1956, 1.0
      %v2148 = vadd.f32 %v1958, 1.0
      %v2149 = vadd.f32 %v1960, 1.0
      %v2150 = vadd.f32 %v1962, 1.0
      %v2151 = vadd.f32 %v1964, 1.0
      %v2152 = vadd.f32 %v1966, 1.0
      %v2153 = vadd.f32 %v1968, 1.0
      %v2154 = vadd.f32 %v1970, 1.0
      %v2155 = vadd.f32 %v1972, 1.0
      %v2156 = vadd.f32 %v1974, 1.0
      %v2157 = vadd.f32 %v1976, 1.0
      %v2158 = vadd.f32 %v1978, 1.0
      %v2159 = vadd.f32 %v1980, 1.0
      %v2160 = vadd.f32 %v1982, 1.0
      %v2161 = vadd.f32 %v1984, 1.0
      %v2162 = vadd.f32 %v1986, 1.0
      %v2163 = vadd.f32 %v1988, 1.0
      %v2164 = vadd.f32 %v1990, 1.0
      %v2165 = vadd.f32 %v1992, 1.0
      %v2166 = vadd.f32 %v1994, 1.0
      %v2167 = vadd.f32 %v1996, 1.0
      %v2168 = vadd.f32 %v1998, 1.0
      %v2169 = vadd.f32 %v2000, 1.0
      %v2170 = vadd.f32 %v2002, 1.0
      %v2171 = vadd.f32 %v2004, 1.0
      %v2172 = vadd.f32 %v2006, 1.0
      %v2173 = vadd.f32 %v2008, 1.0
      %v2174 = vadd.f32 %v2010, 1.0
      %v2175 = vadd.f32 %v2012, 1.0
      %v2176 = vadd.f32 %v2014, 1.0
      %v2177 = vadd.f32 %v2016, 1.0
      %v2178 = vadd.f32 %v2018, 1.0
      %v2179 = vadd.f32 %v2020, 1.0
      %v2180 = vadd.f32 %v2022, 1.0
      %v2181 = vadd.f32 %v2024, 1.0
      %v2182 = vadd.f32 %v2026, 1.0
      %v2183 = vadd.f32 %v2028, 1.0
      %v2184 = vadd.f32 %v2030, 1.0
      %v2185 = vadd.f32 %v2032, 1.0
      %v2186 = vadd.f32 %v2034, 1.0
      %v2187 = vadd.f32 %v2036, 1.0
      %v2188 = vadd.f32 %v2038, 1.0
      %v2189 = vadd.f32 %v2040, 1.0
      %v2190 = vadd.f32 %v2042, 1.0
      %v2191 = vadd.f32 %v2044, 1.0
      %v2192 = vadd.f32 %v2046, 1.0
      %v2193 = vadd.f32 %v2048, 1.0
      %v2194 = vadd.f32 %v2050, 1.0
      %v2195 = vadd.f32 %v2052, 1.0
      %v2196 = vadd.f32 %v2054, 1.0
      %v2197 = vadd.f32 %v2056, 1.0
      %v2198 = vadd.f32 %v2058, 1.0
      %v2199 = vadd.f32 %v2060, 1.0
      %v2200 = vadd.f32 %v2062, 1.0
      %v2201 = vadd.f32 %v2064, 1.0
      %v2202 = vadd.f32 %v2066, 1.0
      %v2203 = vadd.f32 %v2068, 1.0
      %v2204 = vadd.f32 %v2070, 1.0
      %v2205 = vadd.f32 %v2072, 1.0
      %v2206 = vadd.f32 %v2074, 1.0
      %v2207 = vadd.f32 %v2076, 1.0
      %v2208 = vadd.f32 %v2078, 1.0
      %v2209 = vadd.f32 %v2080, 1.0
      %v2210 = vadd.f32 %v2082, 1.0
      %v2211 = vrcp.pop %v2083
      %v2212 = vmul.f32 1.0, %v2211
      %v2213 = vrcp.pop %v2084
      %v2214 = vmul.f32 1.0, %v2213
      %v2215 = vrcp.pop %v2085
      %v2216 = vmul.f32 1.0, %v2215
      %v2217 = vrcp.pop %v2086
      %v2218 = vmul.f32 1.0, %v2217
      %v2219 = vrcp.pop %v2087
      %v2220 = vmul.f32 1.0, %v2219
      %v2221 = vrcp.pop %v2088
      %v2222 = vmul.f32 1.0, %v2221
      %v2223 = vrcp.pop %v2089
      %v2224 = vmul.f32 1.0, %v2223
      %v2225 = vrcp.pop %v2090
      %v2226 = vmul.f32 1.0, %v2225
      %v2227 = vrcp.pop %v2091
      %v2228 = vmul.f32 1.0, %v2227
      %v2229 = vrcp.pop %v2092
      %v2230 = vmul.f32 1.0, %v2229
      %v2231 = vrcp.pop %v2093
      %v2232 = vmul.f32 1.0, %v2231
      %v2233 = vrcp.pop %v2094
      %v2234 = vmul.f32 1.0, %v2233
      %v2235 = vrcp.pop %v2095
      %v2236 = vmul.f32 1.0, %v2235
      %v2237 = vrcp.pop %v2096
      %v2238 = vmul.f32 1.0, %v2237
      %v2239 = vrcp.pop %v2097
      %v2240 = vmul.f32 1.0, %v2239
      %v2241 = vrcp.pop %v2098
      %v2242 = vmul.f32 1.0, %v2241
      %v2243 = vrcp.pop %v2099
      %v2244 = vmul.f32 1.0, %v2243
      %v2245 = vrcp.pop %v2100
      %v2246 = vmul.f32 1.0, %v2245
      %v2247 = vrcp.pop %v2101
      %v2248 = vmul.f32 1.0, %v2247
      %v2249 = vrcp.pop %v2102
      %v2250 = vmul.f32 1.0, %v2249
      %v2251 = vrcp.pop %v2103
      %v2252 = vmul.f32 1.0, %v2251
      %v2253 = vrcp.pop %v2104
      %v2254 = vmul.f32 1.0, %v2253
      %v2255 = vrcp.pop %v2105
      %v2256 = vmul.f32 1.0, %v2255
      %v2257 = vrcp.pop %v2106
      %v2258 = vmul.f32 1.0, %v2257
      %v2259 = vrcp.pop %v2107
      %v2260 = vmul.f32 1.0, %v2259
      %v2261 = vrcp.pop %v2108
      %v2262 = vmul.f32 1.0, %v2261
      %v2263 = vrcp.pop %v2109
      %v2264 = vmul.f32 1.0, %v2263
      %v2265 = vrcp.pop %v2110
      %v2266 = vmul.f32 1.0, %v2265
      %v2267 = vrcp.pop %v2111
      %v2268 = vmul.f32 1.0, %v2267
      %v2269 = vrcp.pop %v2112
      %v2270 = vmul.f32 1.0, %v2269
      %v2271 = vrcp.pop %v2113
      %v2272 = vmul.f32 1.0, %v2271
      %v2273 = vrcp.pop %v2114
      %v2274 = vmul.f32 1.0, %v2273
      %v2275 = vrcp.pop %v2115
      %v2276 = vmul.f32 1.0, %v2275
      %v2277 = vrcp.pop %v2116
      %v2278 = vmul.f32 1.0, %v2277
      %v2279 = vrcp.pop %v2117
      %v2280 = vmul.f32 1.0, %v2279
      %v2281 = vrcp.pop %v2118
      %v2282 = vmul.f32 1.0, %v2281
      %v2283 = vrcp.pop %v2119
      %v2284 = vmul.f32 1.0, %v2283
      %v2285 = vrcp.pop %v2120
      %v2286 = vmul.f32 1.0, %v2285
      %v2287 = vrcp.pop %v2121
      %v2288 = vmul.f32 1.0, %v2287
      %v2289 = vrcp.pop %v2122
      %v2290 = vmul.f32 1.0, %v2289
      %v2291 = vrcp.pop %v2123
      %v2292 = vmul.f32 1.0, %v2291
      %v2293 = vrcp.pop %v2124
      %v2294 = vmul.f32 1.0, %v2293
      %v2295 = vrcp.pop %v2125
      %v2296 = vmul.f32 1.0, %v2295
      %v2297 = vrcp.pop %v2126
      %v2298 = vmul.f32 1.0, %v2297
      %v2299 = vrcp.pop %v2127
      %v2300 = vmul.f32 1.0, %v2299
      %v2301 = vrcp.pop %v2128
      %v2302 = vmul.f32 1.0, %v2301
      %v2303 = vrcp.pop %v2129
      %v2304 = vmul.f32 1.0, %v2303
      %v2305 = vrcp.pop %v2130
      %v2306 = vmul.f32 1.0, %v2305
      %v2307 = vrcp.pop %v2131
      %v2308 = vmul.f32 1.0, %v2307
      %v2309 = vrcp.pop %v2132
      %v2310 = vmul.f32 1.0, %v2309
      %v2311 = vrcp.pop %v2133
      %v2312 = vmul.f32 1.0, %v2311
      %v2313 = vrcp.pop %v2134
      %v2314 = vmul.f32 1.0, %v2313
      %v2315 = vrcp.pop %v2135
      %v2316 = vmul.f32 1.0, %v2315
      %v2317 = vrcp.pop %v2136
      %v2318 = vmul.f32 1.0, %v2317
      %v2319 = vrcp.pop %v2137
      %v2320 = vmul.f32 1.0, %v2319
      %v2321 = vrcp.pop %v2138
      %v2322 = vmul.f32 1.0, %v2321
      %v2323 = vrcp.pop %v2139
      %v2324 = vmul.f32 1.0, %v2323
      %v2325 = vrcp.pop %v2140
      %v2326 = vmul.f32 1.0, %v2325
      %v2327 = vrcp.pop %v2141
      %v2328 = vmul.f32 1.0, %v2327
      %v2329 = vrcp.pop %v2142
      %v2330 = vmul.f32 1.0, %v2329
      %v2331 = vrcp.pop %v2143
      %v2332 = vmul.f32 1.0, %v2331
      %v2333 = vrcp.pop %v2144
      %v2334 = vmul.f32 1.0, %v2333
      %v2335 = vrcp.pop %v2145
      %v2336 = vmul.f32 1.0, %v2335
      %v2337 = vrcp.pop %v2146
      %v2338 = vmul.f32 1.0, %v2337
      %v2339 = vrcp.pop %v2147
      %v2340 = vmul.f32 1.0, %v2339
      %v2341 = vrcp.pop %v2148
      %v2342 = vmul.f32 1.0, %v2341
      %v2343 = vrcp.pop %v2149
      %v2344 = vmul.f32 1.0, %v2343
      %v2345 = vrcp.pop %v2150
      %v2346 = vmul.f32 1.0, %v2345
      %v2347 = vrcp.pop %v2151
      %v2348 = vmul.f32 1.0, %v2347
      %v2349 = vrcp.pop %v2152
      %v2350 = vmul.f32 1.0, %v2349
      %v2351 = vrcp.pop %v2153
      %v2352 = vmul.f32 1.0, %v2351
      %v2353 = vrcp.pop %v2154
      %v2354 = vmul.f32 1.0, %v2353
      %v2355 = vrcp.pop %v2155
      %v2356 = vmul.f32 1.0, %v2355
      %v2357 = vrcp.pop %v2156
      %v2358 = vmul.f32 1.0, %v2357
      %v2359 = vrcp.pop %v2157
      %v2360 = vmul.f32 1.0, %v2359
      %v2361 = vrcp.pop %v2158
      %v2362 = vmul.f32 1.0, %v2361
      %v2363 = vrcp.pop %v2159
      %v2364 = vmul.f32 1.0, %v2363
      %v2365 = vrcp.pop %v2160
      %v2366 = vmul.f32 1.0, %v2365
      %v2367 = vrcp.pop %v2161
      %v2368 = vmul.f32 1.0, %v2367
      %v2369 = vrcp.pop %v2162
      %v2370 = vmul.f32 1.0, %v2369
      %v2371 = vrcp.pop %v2163
      %v2372 = vmul.f32 1.0, %v2371
      %v2373 = vrcp.pop %v2164
      %v2374 = vmul.f32 1.0, %v2373
      %v2375 = vrcp.pop %v2165
      %v2376 = vmul.f32 1.0, %v2375
      %v2377 = vrcp.pop %v2166
      %v2378 = vmul.f32 1.0, %v2377
      %v2379 = vrcp.pop %v2167
      %v2380 = vmul.f32 1.0, %v2379
      %v2381 = vrcp.pop %v2168
      %v2382 = vmul.f32 1.0, %v2381
      %v2383 = vrcp.pop %v2169
      %v2384 = vmul.f32 1.0, %v2383
      %v2385 = vrcp.pop %v2170
      %v2386 = vmul.f32 1.0, %v2385
      %v2387 = vrcp.pop %v2171
      %v2388 = vmul.f32 1.0, %v2387
      %v2389 = vrcp.pop %v2172
      %v2390 = vmul.f32 1.0, %v2389
      %v2391 = vrcp.pop %v2173
      %v2392 = vmul.f32 1.0, %v2391
      %v2393 = vrcp.pop %v2174
      %v2394 = vmul.f32 1.0, %v2393
      %v2395 = vrcp.pop %v2175
      %v2396 = vmul.f32 1.0, %v2395
      %v2397 = vrcp.pop %v2176
      %v2398 = vmul.f32 1.0, %v2397
      %v2399 = vrcp.pop %v2177
      %v2400 = vmul.f32 1.0, %v2399
      %v2401 = vrcp.pop %v2178
      %v2402 = vmul.f32 1.0, %v2401
      %v2403 = vrcp.pop %v2179
      %v2404 = vmul.f32 1.0, %v2403
      %v2405 = vrcp.pop %v2180
      %v2406 = vmul.f32 1.0, %v2405
      %v2407 = vrcp.pop %v2181
      %v2408 = vmul.f32 1.0, %v2407
      %v2409 = vrcp.pop %v2182
      %v2410 = vmul.f32 1.0, %v2409
      %v2411 = vrcp.pop %v2183
      %v2412 = vmul.f32 1.0, %v2411
      %v2413 = vrcp.pop %v2184
      %v2414 = vmul.f32 1.0, %v2413
      %v2415 = vrcp.pop %v2185
      %v2416 = vmul.f32 1.0, %v2415
      %v2417 = vrcp.pop %v2186
      %v2418 = vmul.f32 1.0, %v2417
      %v2419 = vrcp.pop %v2187
      %v2420 = vmul.f32 1.0, %v2419
      %v2421 = vrcp.pop %v2188
      %v2422 = vmul.f32 1.0, %v2421
      %v2423 = vrcp.pop %v2189
      %v2424 = vmul.f32 1.0, %v2423
      %v2425 = vrcp.pop %v2190
      %v2426 = vmul.f32 1.0, %v2425
      %v2427 = vrcp.pop %v2191
      %v2428 = vmul.f32 1.0, %v2427
      %v2429 = vrcp.pop %v2192
      %v2430 = vmul.f32 1.0, %v2429
      %v2431 = vrcp.pop %v2193
      %v2432 = vmul.f32 1.0, %v2431
      %v2433 = vrcp.pop %v2194
      %v2434 = vmul.f32 1.0, %v2433
      %v2435 = vrcp.pop %v2195
      %v2436 = vmul.f32 1.0, %v2435
      %v2437 = vrcp.pop %v2196
      %v2438 = vmul.f32 1.0, %v2437
      %v2439 = vrcp.pop %v2197
      %v2440 = vmul.f32 1.0, %v2439
      %v2441 = vrcp.pop %v2198
      %v2442 = vmul.f32 1.0, %v2441
      %v2443 = vrcp.pop %v2199
      %v2444 = vmul.f32 1.0, %v2443
      %v2445 = vrcp.pop %v2200
      %v2446 = vmul.f32 1.0, %v2445
      %v2447 = vrcp.pop %v2201
      %v2448 = vmul.f32 1.0, %v2447
      %v2449 = vrcp.pop %v2202
      %v2450 = vmul.f32 1.0, %v2449
      %v2451 = vrcp.pop %v2203
      %v2452 = vmul.f32 1.0, %v2451
      %v2453 = vrcp.pop %v2204
      %v2454 = vmul.f32 1.0, %v2453
      %v2455 = vrcp.pop %v2205
      %v2456 = vmul.f32 1.0, %v2455
      %v2457 = vrcp.pop %v2206
      %v2458 = vmul.f32 1.0, %v2457
      %v2459 = vrcp.pop %v2207
      %v2460 = vmul.f32 1.0, %v2459
      %v2461 = vrcp.pop %v2208
      %v2462 = vmul.f32 1.0, %v2461
      %v2463 = vrcp.pop %v2209
      %v2464 = vmul.f32 1.0, %v2463
      %v2465 = vrcp.pop %v2210
      %v2466 = vmul.f32 1.0, %v2465
      %2467 = vst [vmem:[%s175] sm:$0xff] %v2212
      %2468 = vst [vmem:[%s175 + $0x8] sm:$0xff] %v2214
      %2469 = vst [vmem:[%s175 + $0x10] sm:$0xff] %v2216
      %2470 = vst [vmem:[%s175 + $0x18] sm:$0xff] %v2218
      %2471 = vst [vmem:[%s175 + $0x20] sm:$0xff] %v2220
      %2472 = vst [vmem:[%s175 + $0x28] sm:$0xff] %v2222
      %2473 = vst [vmem:[%s175 + $0x30] sm:$0xff] %v2224
      %2474 = vst [vmem:[%s175 + $0x38] sm:$0xff] %v2226
      %2475 = vst [vmem:[%s175 + $0x40] sm:$0xff] %v2228
      %2476 = vst [vmem:[%s175 + $0x48] sm:$0xff] %v2230
      %2477 = vst [vmem:[%s175 + $0x50] sm:$0xff] %v2232
      %2478 = vst [vmem:[%s175 + $0x58] sm:$0xff] %v2234
      %2479 = vst [vmem:[%s175 + $0x60] sm:$0xff] %v2236
      %2480 = vst [vmem:[%s175 + $0x68] sm:$0xff] %v2238
      %2481 = vst [vmem:[%s175 + $0x70] sm:$0xff] %v2240
      %2482 = vst [vmem:[%s175 + $0x78] sm:$0xff] %v2242
      %2483 = vst [vmem:[%s175 + $0x80] sm:$0xff] %v2244
      %2484 = vst [vmem:[%s175 + $0x88] sm:$0xff] %v2246
      %2485 = vst [vmem:[%s175 + $0x90] sm:$0xff] %v2248
      %2486 = vst [vmem:[%s175 + $0x98] sm:$0xff] %v2250
      %2487 = vst [vmem:[%s175 + $0xa0] sm:$0xff] %v2252
      %2488 = vst [vmem:[%s175 + $0xa8] sm:$0xff] %v2254
      %2489 = vst [vmem:[%s175 + $0xb0] sm:$0xff] %v2256
      %2490 = vst [vmem:[%s175 + $0xb8] sm:$0xff] %v2258
      %2491 = vst [vmem:[%s175 + $0xc0] sm:$0xff] %v2260
      %2492 = vst [vmem:[%s175 + $0xc8] sm:$0xff] %v2262
      %2493 = vst [vmem:[%s175 + $0xd0] sm:$0xff] %v2264
      %2494 = vst [vmem:[%s175 + $0xd8] sm:$0xff] %v2266
      %2495 = vst [vmem:[%s175 + $0xe0] sm:$0xff] %v2268
      %2496 = vst [vmem:[%s175 + $0xe8] sm:$0xff] %v2270
      %2497 = vst [vmem:[%s175 + $0xf0] sm:$0xff] %v2272
      %2498 = vst [vmem:[%s175 + $0xf8] sm:$0xff] %v2274
      %2499 = vst [vmem:[%s175 + $0x100] sm:$0xff] %v2276
      %2500 = vst [vmem:[%s175 + $0x108] sm:$0xff] %v2278
      %2501 = vst [vmem:[%s175 + $0x110] sm:$0xff] %v2280
      %2502 = vst [vmem:[%s175 + $0x118] sm:$0xff] %v2282
      %2503 = vst [vmem:[%s175 + $0x120] sm:$0xff] %v2284
      %2504 = vst [vmem:[%s175 + $0x128] sm:$0xff] %v2286
      %2505 = vst [vmem:[%s175 + $0x130] sm:$0xff] %v2288
      %2506 = vst [vmem:[%s175 + $0x138] sm:$0xff] %v2290
      %2507 = vst [vmem:[%s175 + $0x140] sm:$0xff] %v2292
      %2508 = vst [vmem:[%s175 + $0x148] sm:$0xff] %v2294
      %2509 = vst [vmem:[%s175 + $0x150] sm:$0xff] %v2296
      %2510 = vst [vmem:[%s175 + $0x158] sm:$0xff] %v2298
      %2511 = vst [vmem:[%s175 + $0x160] sm:$0xff] %v2300
      %2512 = vst [vmem:[%s175 + $0x168] sm:$0xff] %v2302
      %2513 = vst [vmem:[%s175 + $0x170] sm:$0xff] %v2304
      %2514 = vst [vmem:[%s175 + $0x178] sm:$0xff] %v2306
      %2515 = vst [vmem:[%s175 + $0x180] sm:$0xff] %v2308
      %2516 = vst [vmem:[%s175 + $0x188] sm:$0xff] %v2310
      %2517 = vst [vmem:[%s175 + $0x190] sm:$0xff] %v2312
      %2518 = vst [vmem:[%s175 + $0x198] sm:$0xff] %v2314
      %2519 = vst [vmem:[%s175 + $0x1a0] sm:$0xff] %v2316
      %2520 = vst [vmem:[%s175 + $0x1a8] sm:$0xff] %v2318
      %2521 = vst [vmem:[%s175 + $0x1b0] sm:$0xff] %v2320
      %2522 = vst [vmem:[%s175 + $0x1b8] sm:$0xff] %v2322
      %2523 = vst [vmem:[%s175 + $0x1c0] sm:$0xff] %v2324
      %2524 = vst [vmem:[%s175 + $0x1c8] sm:$0xff] %v2326
      %2525 = vst [vmem:[%s175 + $0x1d0] sm:$0xff] %v2328
      %2526 = vst [vmem:[%s175 + $0x1d8] sm:$0xff] %v2330
      %2527 = vst [vmem:[%s175 + $0x1e0] sm:$0xff] %v2332
      %2528 = vst [vmem:[%s175 + $0x1e8] sm:$0xff] %v2334
      %2529 = vst [vmem:[%s175 + $0x1f0] sm:$0xff] %v2336
      %2530 = vst [vmem:[%s175 + $0x1f8] sm:$0xff] %v2338
      %2531 = vst [vmem:[%s175 + $0x200] sm:$0xff] %v2340
      %2532 = vst [vmem:[%s175 + $0x208] sm:$0xff] %v2342
      %2533 = vst [vmem:[%s175 + $0x210] sm:$0xff] %v2344
      %2534 = vst [vmem:[%s175 + $0x218] sm:$0xff] %v2346
      %2535 = vst [vmem:[%s175 + $0x220] sm:$0xff] %v2348
      %2536 = vst [vmem:[%s175 + $0x228] sm:$0xff] %v2350
      %2537 = vst [vmem:[%s175 + $0x230] sm:$0xff] %v2352
      %2538 = vst [vmem:[%s175 + $0x238] sm:$0xff] %v2354
      %2539 = vst [vmem:[%s175 + $0x240] sm:$0xff] %v2356
      %2540 = vst [vmem:[%s175 + $0x248] sm:$0xff] %v2358
      %2541 = vst [vmem:[%s175 + $0x250] sm:$0xff] %v2360
      %2542 = vst [vmem:[%s175 + $0x258] sm:$0xff] %v2362
      %2543 = vst [vmem:[%s175 + $0x260] sm:$0xff] %v2364
      %2544 = vst [vmem:[%s175 + $0x268] sm:$0xff] %v2366
      %2545 = vst [vmem:[%s175 + $0x270] sm:$0xff] %v2368
      %2546 = vst [vmem:[%s175 + $0x278] sm:$0xff] %v2370
      %2547 = vst [vmem:[%s175 + $0x280] sm:$0xff] %v2372
      %2548 = vst [vmem:[%s175 + $0x288] sm:$0xff] %v2374
      %2549 = vst [vmem:[%s175 + $0x290] sm:$0xff] %v2376
      %2550 = vst [vmem:[%s175 + $0x298] sm:$0xff] %v2378
      %2551 = vst [vmem:[%s175 + $0x2a0] sm:$0xff] %v2380
      %2552 = vst [vmem:[%s175 + $0x2a8] sm:$0xff] %v2382
      %2553 = vst [vmem:[%s175 + $0x2b0] sm:$0xff] %v2384
      %2554 = vst [vmem:[%s175 + $0x2b8] sm:$0xff] %v2386
      %2555 = vst [vmem:[%s175 + $0x2c0] sm:$0xff] %v2388
      %2556 = vst [vmem:[%s175 + $0x2c8] sm:$0xff] %v2390
      %2557 = vst [vmem:[%s175 + $0x2d0] sm:$0xff] %v2392
      %2558 = vst [vmem:[%s175 + $0x2d8] sm:$0xff] %v2394
      %2559 = vst [vmem:[%s175 + $0x2e0] sm:$0xff] %v2396
      %2560 = vst [vmem:[%s175 + $0x2e8] sm:$0xff] %v2398
      %2561 = vst [vmem:[%s175 + $0x2f0] sm:$0xff] %v2400
      %2562 = vst [vmem:[%s175 + $0x2f8] sm:$0xff] %v2402
      %2563 = vst [vmem:[%s175 + $0x300] sm:$0xff] %v2404
      %2564 = vst [vmem:[%s175 + $0x308] sm:$0xff] %v2406
      %2565 = vst [vmem:[%s175 + $0x310] sm:$0xff] %v2408
      %2566 = vst [vmem:[%s175 + $0x318] sm:$0xff] %v2410
      %2567 = vst [vmem:[%s175 + $0x320] sm:$0xff] %v2412
      %2568 = vst [vmem:[%s175 + $0x328] sm:$0xff] %v2414
      %2569 = vst [vmem:[%s175 + $0x330] sm:$0xff] %v2416
      %2570 = vst [vmem:[%s175 + $0x338] sm:$0xff] %v2418
      %2571 = vst [vmem:[%s175 + $0x340] sm:$0xff] %v2420
      %2572 = vst [vmem:[%s175 + $0x348] sm:$0xff] %v2422
      %2573 = vst [vmem:[%s175 + $0x350] sm:$0xff] %v2424
      %2574 = vst [vmem:[%s175 + $0x358] sm:$0xff] %v2426
      %2575 = vst [vmem:[%s175 + $0x360] sm:$0xff] %v2428
      %2576 = vst [vmem:[%s175 + $0x368] sm:$0xff] %v2430
      %2577 = vst [vmem:[%s175 + $0x370] sm:$0xff] %v2432
      %2578 = vst [vmem:[%s175 + $0x378] sm:$0xff] %v2434
      %2579 = vst [vmem:[%s175 + $0x380] sm:$0xff] %v2436
      %2580 = vst [vmem:[%s175 + $0x388] sm:$0xff] %v2438
      %2581 = vst [vmem:[%s175 + $0x390] sm:$0xff] %v2440
      %2582 = vst [vmem:[%s175 + $0x398] sm:$0xff] %v2442
      %2583 = vst [vmem:[%s175 + $0x3a0] sm:$0xff] %v2444
      %2584 = vst [vmem:[%s175 + $0x3a8] sm:$0xff] %v2446
      %2585 = vst [vmem:[%s175 + $0x3b0] sm:$0xff] %v2448
      %2586 = vst [vmem:[%s175 + $0x3b8] sm:$0xff] %v2450
      %2587 = vst [vmem:[%s175 + $0x3c0] sm:$0xff] %v2452
      %2588 = vst [vmem:[%s175 + $0x3c8] sm:$0xff] %v2454
      %2589 = vst [vmem:[%s175 + $0x3d0] sm:$0xff] %v2456
      %2590 = vst [vmem:[%s175 + $0x3d8] sm:$0xff] %v2458
      %2591 = vst [vmem:[%s175 + $0x3e0] sm:$0xff] %v2460
      %2592 = vst [vmem:[%s175 + $0x3e8] sm:$0xff] %v2462
      %2593 = vst [vmem:[%s175 + $0x3f0] sm:$0xff] %v2464
      %2594 = vst [vmem:[%s175 + $0x3f8] sm:$0xff] %v2466
      %s2595 = smul.u32 128, %s14
      %p2596 = scmp.lt.s32.totalorder %s2595, 255
      %s2597 = scalar_select %p2596, %s2595, 255
      %s2598 = smul.addr %s2597, 8
      %s2599 = scalar_lea.vmem %s3, %s2598
      // Predicated region
      $region33: #{autoencoder_forward.11} parent=31 // pred_check
        %p2600 = pneg %p100
      $region34: #{autoencoder_forward.11} parent=31 // pred_check_branch
        %2602 = sbr.rel (%p2600) target = $region36
      $region35: #{autoencoder_forward.11} parent=31 // pred_region
        %s2603 = smul.u32 128, %s14
      $region36: #{autoencoder_forward.11} parent=31 // pred_fallthru
        _
    $region32: #{autoencoder_forward.11} parent=5 // pred_fallthru
      _
    %p2604 = scmp.le.s32.totalorder 2, %s9
    // Predicated region
    $region37: #{autoencoder_forward.11} parent=5 // pred_check
      %p2605 = pneg %p2604
    $region38: #{autoencoder_forward.11} parent=5 // pred_check_branch
      %2607 = sbr.rel (%p2605) target = $region40
    $region39: #{autoencoder_forward.11} parent=5 // pred_region
      %s2608 = ssub.s32 %s9, 2
      // Predicated region
      $region41: #{autoencoder_forward.11} parent=39 // pred_check
        %p2609 = pneg %p106
      $region42: #{autoencoder_forward.11} parent=39 // pred_check_branch
        %2611 = sbr.rel (%p2609) target = $region44
      $region43: #{autoencoder_forward.11} parent=39 // pred_region
        %s2612 = smul.u32 128, %s15
        %p2613 = scmp.lt.s32.totalorder %s2612, 255
        %s2614 = scalar_select %p2613, %s2612, 255
        %s2615 = smul.addr %s2614, 8
        %s2616 = scalar_lea.vmem %s3, %s2615
      $region44: #{autoencoder_forward.11} parent=39 // pred_fallthru
        _
    $region40: #{autoencoder_forward.11} parent=5 // pred_fallthru
      _
  $region6: #{autoencoder_forward.11} parent=0 // loop_footer
    %s13 = sadd.s32 1, %s9
  $region7: #{autoencoder_forward.11} parent=0 // loop_footer_branch
    %8 = sbr.rel target = $region3
  $region8: #{autoencoder_forward.11} parent=0 // loop_exit
    _

</llo_original>
